<compile_context>
chip_gen: v7x
topology: tpu7x:2x2x1
jax: 0.10.0
libtpu: 0.0.40
codegen_flags: <defaults>
</compile_context>

<pallas_src>
import functools

import jax
import jax.numpy as jnp
from jax import lax
from jax.experimental import pallas as pl
from jax.experimental.pallas import tpu as pltpu

_NEG = -1e30  # finite "-inf" so masked tiles never produce NaN


def _round_up(x, m):
    return ((x + m - 1) // m) * m


# ----------------------------- Pallas kernel ------------------------------- #

def _cpc_lse_kernel(tm, tn, nvalid_ref, c_ref, rwt_ref, out_ref, m_sc, l_sc):
    """Fused online-logsumexp over all (direction, length) pairs.

    Grid = (pair, row-tile, col-tile); col-tile is the reduction axis.

    nvalid_ref : SMEM (P,) int32     valid rows/cols per pair (scalar prefetch)
    c_ref      : (1, tm, Dh) bf16    context rows for this (pair, row-tile)
    rwt_ref    : (1, Dh, tn) bf16    (r @ W).T columns for this (pair, col-tile)
    out_ref    : (1, 1, 8, 128) f32  per-(pair,row-tile) sum of row logsumexps
    m_sc, l_sc : VMEM (tm, 1) f32    online logsumexp state
    """
    p = pl.program_id(0)
    i = pl.program_id(1)
    j = pl.program_id(2)
    n_col = pl.num_programs(2)

    nv = nvalid_ref[p]
    row_start = i * tm
    col_start = j * tn

    @pl.when(j == 0)
    def _():
        m_sc[...] = jnp.full_like(m_sc, _NEG)
        l_sc[...] = jnp.zeros_like(l_sc)

    # Skip tiles that are entirely padding for this pair (ragged N).
    @pl.when(jnp.logical_and(row_start < nv, col_start < nv))
    def _():
        c = c_ref[0]        # (tm, Dh) bf16
        rwt = rwt_ref[0]    # (Dh, tn) bf16
        # Reassociated logits: s[a, b] = c[a] . (r[b] @ W) -- single MXU op.
        s = jnp.dot(c, rwt, preferred_element_type=jnp.float32)   # (tm, tn) f32

        def online_update(sv):
            m_prev = m_sc[...]
            m_new = jnp.maximum(m_prev, jnp.max(sv, axis=-1, keepdims=True))
            l_sc[...] = (l_sc[...] * jnp.exp(m_prev - m_new)
                         + jnp.sum(jnp.exp(sv - m_new), axis=-1, keepdims=True))
            m_sc[...] = m_new

        full_tile = col_start + tn <= nv

        @pl.when(full_tile)            # interior tile: no masking work at all
        def _():
            online_update(s)

        @pl.when(jnp.logical_not(full_tile))   # ragged edge: cheap (1, tn) mask
        def _():
            col_ids = col_start + lax.broadcasted_iota(jnp.int32, (1, tn), 1)
            online_update(jnp.where(col_ids < nv, s, _NEG))

    @pl.when(j == n_col - 1)
    def _():
        lse = m_sc[...] + jnp.log(jnp.maximum(l_sc[...], 1e-37))   # (tm, 1)
        row_ids = row_start + lax.broadcasted_iota(jnp.int32, (tm, 1), 0)
        tile_sum = jnp.sum(jnp.where(row_ids < nv, lse, 0.0))
        out_ref[...] = jnp.broadcast_to(tile_sum, out_ref.shape)


def cpc_pair_losses(c_list, w_list, r_list, max_tile=1024):
    """All pair losses in one pallas_call.

    c_list[k]: (N_k, Dh), w_list[k]: (C, Dh) [PyTorch Linear weight],
    r_list[k]: (N_k, C). Returns (P,) f32 vector of per-pair mean CE losses.
    """
    n_pairs = len(c_list)
    dh = c_list[0].shape[1]
    n_valid = [int(c.shape[0]) for c in c_list]
    n_max = max(n_valid)

    # Single square tile up to 1024 (fits v7x VMEM comfortably with f32 temps).
    tile = min(max_tile, _round_up(n_max, 128))
    n_pad = _round_up(n_max, tile)
    rg = n_pad // tile
    cg = n_pad // tile

    def pad_rows(x):
        return jnp.pad(x, ((0, n_pad - x.shape[0]), (0, 0)))

    # Reassociated operand: rw = r @ W  (N, Dh); logits = c @ rw.T.
    c_all = jnp.stack([pad_rows(c) for c in c_list])                     # (P, n_pad, Dh)
    rw_all = jnp.stack([pad_rows(r @ w) for r, w in zip(r_list, w_list)])  # (P, n_pad, Dh)

    # Streamed operands in bf16 (native MXU path, half the HBM/VMEM traffic).
    c_bf = c_all.astype(jnp.bfloat16)
    rw_bf = rw_all.astype(jnp.bfloat16)
    rwt_bf = jnp.transpose(rw_bf, (0, 2, 1))                             # (P, Dh, n_pad)

    nvalid_arr = jnp.asarray(n_valid, jnp.int32)                         # (P,)

    kernel = functools.partial(_cpc_lse_kernel, tile, tile)

    out = pl.pallas_call(
        kernel,
        out_shape=jax.ShapeDtypeStruct((n_pairs, rg, 8, 128), jnp.float32),
        grid_spec=pltpu.PrefetchScalarGridSpec(
            num_scalar_prefetch=1,
            grid=(n_pairs, rg, cg),
            in_specs=[
                pl.BlockSpec((1, tile, dh), lambda p, i, j, nv: (p, i, 0)),
                pl.BlockSpec((1, dh, tile), lambda p, i, j, nv: (p, 0, j)),
            ],
            out_specs=pl.BlockSpec((1, 1, 8, 128),
                                   lambda p, i, j, nv: (p, i, 0, 0)),
            scratch_shapes=[pltpu.VMEM((tile, 1), jnp.float32),
                            pltpu.VMEM((tile, 1), jnp.float32)],
        ),
        compiler_params=pltpu.CompilerParams(
            dimension_semantics=("parallel", "parallel", "arbitrary"),
            vmem_limit_bytes=48 * 1024 * 1024),
    )(nvalid_arr, c_bf, rwt_bf)

    lse_sums = jnp.sum(out[:, :, 0, 0], axis=1)                          # (P,)

    # Positive (diagonal) logits summed per pair, computed with the SAME
    # bf16-rounded operands as the kernel's logits (padded rows are zero).
    diag_sums = jnp.einsum('pnd,pnd->p',
                           c_bf.astype(jnp.float32), rw_bf.astype(jnp.float32))

    nvf = jnp.asarray(n_valid, jnp.float32)
    return (lse_sums - diag_sums) / nvf                                  # mean over rows


# ------------------------- Autoregressor (plain JAX) ------------------------ #
# TODO(synk): the reference GatedPixelCNN class is not provided in the source
# file; this is a deterministic stand-in (masked 3x3 convs with tanh*sigmoid
# gating, mask 'A' on the first layer) mapping in_dim -> hidden_dims[-1].

def _masked_conv_weight(key, out_c, in_c, ksize, mask_type):
    w = jax.random.normal(key, (out_c, in_c, ksize, ksize), jnp.float32) * 0.1
    kc = ksize // 2
    mask = jnp.ones((ksize, ksize), jnp.float32)
    mask = mask.at[kc + 1:, :].set(0.0)
    mask = mask.at[kc, kc + 1:].set(0.0)
    if mask_type == "A":
        mask = mask.at[kc, kc].set(0.0)
    return w * mask[None, None, :, :]


def init_autoregressor_params(key, in_dim, hidden_dims, ksize=3):
    params = []
    chans = [in_dim] + list(hidden_dims)
    for i in range(len(hidden_dims)):
        key, sub = jax.random.split(key)
        mask_type = "A" if i == 0 else "B"
        params.append(_masked_conv_weight(sub, 2 * chans[i + 1], chans[i],
                                          ksize, mask_type))
    return params


def gated_pixelcnn(ar_params, x):
    h = x
    for w in ar_params:
        y = lax.conv_general_dilated(
            h, w, window_strides=(1, 1), padding="SAME",
            dimension_numbers=("NCHW", "OIHW", "NCHW"))
        a, b = jnp.split(y, 2, axis=1)
        h = jnp.tanh(a) * jax.nn.sigmoid(b)
    return h  # (B, hidden_dims[-1], H, W)


# ------------------------------ CPC forward -------------------------------- #

def _collect_pairs(ar_params, linear_weights, encoding, lengths, n_directions):
    c_list, w_list, r_list = [], [], []
    enc = encoding
    for direction in range(n_directions):
        if direction > 0:
            enc = jnp.rot90(enc, k=1, axes=(2, 3))
        context = gated_pixelcnn(ar_params, enc)
        ctx = jnp.transpose(context, (0, 2, 3, 1))    # NHWC
        real = jnp.transpose(enc, (0, 2, 3, 1))
        for length in lengths:
            c_list.append(ctx[:, :-length, :, :].reshape(-1, ctx.shape[-1]))
            r_list.append(real[:, length:, :, :].reshape(-1, real.shape[-1]))
            w_list.append(linear_weights[direction][length])   # (in_dim, hidden)
    return c_list, w_list, r_list


def cpc_forward(ar_params, linear_weights, encoding, lengths, n_directions):
    """Mirrors ContrastivePredictiveCoding.forward. encoding: NCHW float32."""
    c_list, w_list, r_list = _collect_pairs(
        ar_params, linear_weights, encoding, lengths, n_directions)
    pair_losses = cpc_pair_losses(c_list, w_list, r_list)       # (P,)
    pair_losses = pair_losses.reshape(n_directions, len(lengths))
    return jnp.mean(jnp.mean(pair_losses, axis=1))


# Pure-JAX reference (sanity check only).
def _ref_pair_loss(c, w, r):
    pred = c @ w.T
    prod = pred @ r.T
    lse = jax.nn.logsumexp(prod, axis=-1)
    diag = jnp.diagonal(prod)
    return jnp.mean(lse - diag)


def cpc_forward_ref(ar_params, linear_weights, encoding, lengths, n_directions):
    c_list, w_list, r_list = _collect_pairs(
        ar_params, linear_weights, encoding, lengths, n_directions)
    losses = jnp.stack([_ref_pair_loss(c, w, r)
                        for c, w, r in zip(c_list, w_list, r_list)])
    losses = losses.reshape(n_directions, len(lengths))
    return jnp.mean(jnp.mean(losses, axis=1))


# --------------------------------- main ------------------------------------ #

if __name__ == "__main__":
    key = jax.random.PRNGKey(0)
    B, in_dim, H, W = 2, 4, 16, 16          # square spatial so rot90 keeps shape
    hidden_dims = (8, 16)
    lengths = (1, 2)
    n_directions = 4

    k_enc, k_ar, k_lin = jax.random.split(key, 3)
    encoding = jax.random.normal(k_enc, (B, in_dim, H, W), jnp.float32)

    ar_params = init_autoregressor_params(k_ar, in_dim, hidden_dims)

    linear_weights = []
    for _ in range(n_directions):
        dw = {}
        for L in lengths:
            k_lin, sub = jax.random.split(k_lin)
            # nn.Linear(hidden_dims[-1], in_dim, bias=False).weight : (in_dim, hidden)
            dw[L] = jax.random.normal(sub, (in_dim, hidden_dims[-1]),
                                      jnp.float32) * 0.1
        linear_weights.append(dw)

    # Per-pair sanity check: fused Pallas kernel vs pure-JAX f32 reference.
    # Tolerance is loosened vs the all-f32 version because streamed operands
    # are bf16 (logsumexp state stays f32).
    c_l, w_l, r_l = _collect_pairs(ar_params, linear_weights, encoding,
                                   lengths, n_directions)
    got_pairs = jax.block_until_ready(cpc_pair_losses(c_l, w_l, r_l))
    want_pairs = jnp.stack([_ref_pair_loss(c, w, r)
                            for c, w, r in zip(c_l, w_l, r_l)])
    assert jnp.all(jnp.isfinite(got_pairs))
    assert jnp.allclose(got_pairs, want_pairs, atol=1e-2, rtol=1e-2), (
        got_pairs, want_pairs)

    # Full forward.
    loss = cpc_forward(ar_params, linear_weights, encoding, lengths, n_directions)
    loss = jax.block_until_ready(loss)
    want = cpc_forward_ref(ar_params, linear_weights, encoding, lengths,
                           n_directions)
    assert jnp.isfinite(loss)
    assert jnp.allclose(loss, want, atol=1e-2, rtol=1e-2), (loss, want)
    print("KERNEL_OK")
</pallas_src>

<mosaic_0001>
module attributes {stable_mosaic.version = 11 : i64} {
  func.func @_cpc_lse_kernel(%arg0: i32, %arg1: i32, %arg2: i32, %arg3: memref<8xi32, #tpu.memory_space<smem>>, %arg4: memref<1x512x16xbf16, #tpu.memory_space<vmem>>, %arg5: memref<1x16x512xbf16, #tpu.memory_space<vmem>>, %arg6: memref<1x1x8x128xf32, #tpu.memory_space<vmem>>, %arg7: memref<512x1xf32, #tpu.memory_space<vmem>>, %arg8: memref<512x1xf32, #tpu.memory_space<vmem>>) attributes {dimension_semantics = [#tpu.dimension_semantics<parallel>, #tpu.dimension_semantics<parallel>, #tpu.dimension_semantics<arbitrary>], iteration_bounds = array<i64: 8, 1, 1>, scalar_prefetch = 1 : i64, scratch_operands = 2 : i64, tpu.core_type = #tpu.core_type<tc>, window_params = [{transform_indices = @transform_0, window_bounds = array<i64: 1, 512, 16>}, {transform_indices = @transform_1, window_bounds = array<i64: 1, 16, 512>}, {transform_indices = @transform_2, window_bounds = array<i64: 1, 1, 8, 128>}]} {
    %0 = arith.index_cast %arg0 : i32 to index
    %1 = memref.load %arg3[%0] : memref<8xi32, #tpu.memory_space<smem>>
    %c512_i32 = arith.constant 512 : i32
    %2 = arith.muli %arg1, %c512_i32 : i32
    %c512_i32_0 = arith.constant 512 : i32
    %3 = arith.muli %arg2, %c512_i32_0 : i32
    %c0_i32 = arith.constant 0 : i32
    %4 = arith.cmpi eq, %arg2, %c0_i32 : i32
    %5 = arith.extui %4 : i1 to i32
    %c0_i32_1 = arith.constant 0 : i32
    %6 = arith.cmpi ne, %5, %c0_i32_1 : i32
    scf.if %6 {
      %cst = arith.constant -1.000000e+30 : f32
      %15 = vector.broadcast %cst : f32 to vector<512x1xf32>
      %c0 = arith.constant 0 : index
      %c0_5 = arith.constant 0 : index
      %16 = vector.load %arg7[%c0, %c0_5] : memref<512x1xf32, #tpu.memory_space<vmem>>, vector<512x1xf32>
      tpu.vector_store %arg7[%c0, %c0_5], %15 {strides = array<i32>} : memref<512x1xf32, #tpu.memory_space<vmem>>, vector<512x1xf32>,
      %cst_6 = arith.constant 0.000000e+00 : f32
      %17 = vector.broadcast %cst_6 : f32 to vector<512x1xf32>
      %c0_7 = arith.constant 0 : index
      %c0_8 = arith.constant 0 : index
      %18 = vector.load %arg8[%c0_7, %c0_8] : memref<512x1xf32, #tpu.memory_space<vmem>>, vector<512x1xf32>
      tpu.vector_store %arg8[%c0_7, %c0_8], %17 {strides = array<i32>} : memref<512x1xf32, #tpu.memory_space<vmem>>, vector<512x1xf32>,
    } else {
    }
    %7 = arith.cmpi slt, %2, %1 : i32
    %8 = arith.cmpi slt, %3, %1 : i32
    %9 = arith.andi %7, %8 : i1
    %10 = arith.extui %9 : i1 to i32
    %c0_i32_2 = arith.constant 0 : i32
    %11 = arith.cmpi ne, %10, %c0_i32_2 : i32
    scf.if %11 {
      %c0 = arith.constant 0 : index
      %c0_5 = arith.constant 0 : index
      %c0_6 = arith.constant 0 : index
      %15 = vector.load %arg4[%c0, %c0_5, %c0_6] : memref<1x512x16xbf16, #tpu.memory_space<vmem>>, vector<1x512x16xbf16>
      %16 = vector.shape_cast %15 : vector<1x512x16xbf16> to vector<512x16xbf16>
      %c0_7 = arith.constant 0 : index
      %c0_8 = arith.constant 0 : index
      %c0_9 = arith.constant 0 : index
      %17 = vector.load %arg5[%c0_7, %c0_8, %c0_9] : memref<1x16x512xbf16, #tpu.memory_space<vmem>>, vector<1x16x512xbf16>
      %18 = vector.shape_cast %17 : vector<1x16x512xbf16> to vector<16x512xbf16>
      %cst = arith.constant dense<0.000000e+00> : vector<512x512xf32>
      %19 = tpu.matmul %16, %18, %cst {dimension_numbers = #tpu.dot_dimension_numbers<[1], [0], [0], [1], [0, 0, 1, 1], [], []>} : vector<512x16xbf16>, vector<16x512xbf16>, vector<512x512xf32> -> vector<512x512xf32>
      %c512_i32_10 = arith.constant 512 : i32
      %20 = arith.addi %3, %c512_i32_10 : i32
      %21 = arith.cmpi sle, %20, %1 : i32
      %22 = arith.extui %21 : i1 to i32
      %c0_i32_11 = arith.constant 0 : i32
      %23 = arith.cmpi ne, %22, %c0_i32_11 : i32
      scf.if %23 {
        %c0_13 = arith.constant 0 : index
        %c0_14 = arith.constant 0 : index
        %27 = vector.load %arg7[%c0_13, %c0_14] : memref<512x1xf32, #tpu.memory_space<vmem>>, vector<512x1xf32>
        %cst_15 = arith.constant dense<0xFF800000> : vector<512xf32>
        %28 = vector.multi_reduction <maximumf>, %19, %cst_15 [1] : vector<512x512xf32> to vector<512xf32>
        %29 = vector.shape_cast %28 : vector<512xf32> to vector<512x1xf32>
        %30 = arith.maximumf %27, %29 : vector<512x1xf32>
        %c0_16 = arith.constant 0 : index
        %c0_17 = arith.constant 0 : index
        %31 = vector.load %arg8[%c0_16, %c0_17] : memref<512x1xf32, #tpu.memory_space<vmem>>, vector<512x1xf32>
        %32 = arith.subf %27, %30 : vector<512x1xf32>
        %33 = math.exp %32 : vector<512x1xf32>
        %34 = arith.mulf %31, %33 : vector<512x1xf32>
        %35 = vector.broadcast %30 : vector<512x1xf32> to vector<512x512xf32>
        %36 = arith.subf %19, %35 : vector<512x512xf32>
        %37 = math.exp %36 : vector<512x512xf32>
        %cst_18 = arith.constant dense<0.000000e+00> : vector<512xf32>
        %38 = vector.multi_reduction <add>, %37, %cst_18 [1] : vector<512x512xf32> to vector<512xf32>
        %39 = vector.shape_cast %38 : vector<512xf32> to vector<512x1xf32>
        %40 = arith.addf %34, %39 : vector<512x1xf32>
        %c0_19 = arith.constant 0 : index
        %c0_20 = arith.constant 0 : index
        %41 = vector.load %arg8[%c0_19, %c0_20] : memref<512x1xf32, #tpu.memory_space<vmem>>, vector<512x1xf32>
        tpu.vector_store %arg8[%c0_19, %c0_20], %40 {strides = array<i32>} : memref<512x1xf32, #tpu.memory_space<vmem>>, vector<512x1xf32>,
        %c0_21 = arith.constant 0 : index
        %c0_22 = arith.constant 0 : index
        %42 = vector.load %arg7[%c0_21, %c0_22] : memref<512x1xf32, #tpu.memory_space<vmem>>, vector<512x1xf32>
        tpu.vector_store %arg7[%c0_21, %c0_22], %30 {strides = array<i32>} : memref<512x1xf32, #tpu.memory_space<vmem>>, vector<512x1xf32>,
      } else {
      }
      %true = arith.constant true
      %24 = arith.xori %21, %true : i1
      %25 = arith.extui %24 : i1 to i32
      %c0_i32_12 = arith.constant 0 : i32
      %26 = arith.cmpi ne, %25, %c0_i32_12 : i32
      scf.if %26 {
        %27 = tpu.iota {dimensions = array<i32: 1>} : vector<1x512xi32>
        %28 = vector.broadcast %3 : i32 to vector<1x512xi32>
        %29 = arith.addi %28, %27 : vector<1x512xi32>
        %30 = vector.broadcast %1 : i32 to vector<1x512xi32>
        %31 = arith.cmpi slt, %29, %30 : vector<1x512xi32>
        %cst_13 = arith.constant -1.000000e+30 : f32
        %32 = vector.shape_cast %31 : vector<1x512xi1> to vector<1x512xi1>
        %33 = vector.broadcast %32 : vector<1x512xi1> to vector<512x512xi1>
        %34 = vector.broadcast %cst_13 : f32 to vector<512x512xf32>
        %35 = arith.select %33, %19, %34 : vector<512x512xi1>, vector<512x512xf32>
        %c0_14 = arith.constant 0 : index
        %c0_15 = arith.constant 0 : index
        %36 = vector.load %arg7[%c0_14, %c0_15] : memref<512x1xf32, #tpu.memory_space<vmem>>, vector<512x1xf32>
        %cst_16 = arith.constant dense<0xFF800000> : vector<512xf32>
        %37 = vector.multi_reduction <maximumf>, %35, %cst_16 [1] : vector<512x512xf32> to vector<512xf32>
        %38 = vector.shape_cast %37 : vector<512xf32> to vector<512x1xf32>
        %39 = arith.maximumf %36, %38 : vector<512x1xf32>
        %c0_17 = arith.constant 0 : index
        %c0_18 = arith.constant 0 : index
        %40 = vector.load %arg8[%c0_17, %c0_18] : memref<512x1xf32, #tpu.memory_space<vmem>>, vector<512x1xf32>
        %41 = arith.subf %36, %39 : vector<512x1xf32>
        %42 = math.exp %41 : vector<512x1xf32>
        %43 = arith.mulf %40, %42 : vector<512x1xf32>
        %44 = vector.broadcast %39 : vector<512x1xf32> to vector<512x512xf32>
        %45 = arith.subf %35, %44 : vector<512x512xf32>
        %46 = math.exp %45 : vector<512x512xf32>
        %cst_19 = arith.constant dense<0.000000e+00> : vector<512xf32>
        %47 = vector.multi_reduction <add>, %46, %cst_19 [1] : vector<512x512xf32> to vector<512xf32>
        %48 = vector.shape_cast %47 : vector<512xf32> to vector<512x1xf32>
        %49 = arith.addf %43, %48 : vector<512x1xf32>
        %c0_20 = arith.constant 0 : index
        %c0_21 = arith.constant 0 : index
        %50 = vector.load %arg8[%c0_20, %c0_21] : memref<512x1xf32, #tpu.memory_space<vmem>>, vector<512x1xf32>
        tpu.vector_store %arg8[%c0_20, %c0_21], %49 {strides = array<i32>} : memref<512x1xf32, #tpu.memory_space<vmem>>, vector<512x1xf32>,
        %c0_22 = arith.constant 0 : index
        %c0_23 = arith.constant 0 : index
        %51 = vector.load %arg7[%c0_22, %c0_23] : memref<512x1xf32, #tpu.memory_space<vmem>>, vector<512x1xf32>
        tpu.vector_store %arg7[%c0_22, %c0_23], %39 {strides = array<i32>} : memref<512x1xf32, #tpu.memory_space<vmem>>, vector<512x1xf32>,
      } else {
      }
    } else {
    }
    %c0_i32_3 = arith.constant 0 : i32
    %12 = arith.cmpi eq, %arg2, %c0_i32_3 : i32
    %13 = arith.extui %12 : i1 to i32
    %c0_i32_4 = arith.constant 0 : i32
    %14 = arith.cmpi ne, %13, %c0_i32_4 : i32
    scf.if %14 {
      %c0 = arith.constant 0 : index
      %c0_5 = arith.constant 0 : index
      %15 = vector.load %arg7[%c0, %c0_5] : memref<512x1xf32, #tpu.memory_space<vmem>>, vector<512x1xf32>
      %c0_6 = arith.constant 0 : index
      %c0_7 = arith.constant 0 : index
      %16 = vector.load %arg8[%c0_6, %c0_7] : memref<512x1xf32, #tpu.memory_space<vmem>>, vector<512x1xf32>
      %cst = arith.constant 9.99999991E-38 : f32
      %17 = vector.broadcast %cst : f32 to vector<512x1xf32>
      %18 = arith.maximumf %16, %17 : vector<512x1xf32>
      %19 = math.log %18 : vector<512x1xf32>
      %20 = arith.addf %15, %19 : vector<512x1xf32>
      %21 = tpu.iota {dimensions = array<i32: 0>} : vector<512x1xi32>
      %22 = vector.broadcast %2 : i32 to vector<512x1xi32>
      %23 = arith.addi %22, %21 : vector<512x1xi32>
      %24 = vector.broadcast %1 : i32 to vector<512x1xi32>
      %25 = arith.cmpi slt, %23, %24 : vector<512x1xi32>
      %cst_8 = arith.constant 0.000000e+00 : f32
      %26 = vector.broadcast %cst_8 : f32 to vector<512x1xf32>
      %27 = arith.select %25, %20, %26 : vector<512x1xi1>, vector<512x1xf32>
      %28 = vector.shape_cast %27 : vector<512x1xf32> to vector<1x512x1xf32>
      %cst_9 = arith.constant dense<0.000000e+00> : vector<1xf32>
      %29 = vector.multi_reduction <add>, %28, %cst_9 [1, 2] : vector<1x512x1xf32> to vector<1xf32>
      %30 = vector.shape_cast %29 : vector<1xf32> to vector<1x1x1xf32>
      %31 = vector.extract %30[0, 0, 0] : f32 from vector<1x1x1xf32>
      %32 = vector.broadcast %31 : f32 to vector<1x1x8x128xf32>
      %c0_10 = arith.constant 0 : index
      %c0_11 = arith.constant 0 : index
      %c0_12 = arith.constant 0 : index
      %c0_13 = arith.constant 0 : index
      %33 = vector.load %arg6[%c0_10, %c0_11, %c0_12, %c0_13] : memref<1x1x8x128xf32, #tpu.memory_space<vmem>>, vector<1x1x8x128xf32>
      tpu.vector_store %arg6[%c0_10, %c0_11, %c0_12, %c0_13], %32 {strides = array<i32>} : memref<1x1x8x128xf32, #tpu.memory_space<vmem>>, vector<1x1x8x128xf32>,
    } else {
    }
    return
  }
  func.func @transform_0(%arg0: i32, %arg1: i32, %arg2: i32, %arg3: memref<8xi32, #tpu.memory_space<smem>>) -> (i32, i32, i32) {
    %c0_i32 = arith.constant 0 : i32
    %c0_i32_0 = arith.constant 0 : i32
    return %arg0, %arg1, %c0_i32 : i32, i32, i32
  }
  func.func @transform_1(%arg0: i32, %arg1: i32, %arg2: i32, %arg3: memref<8xi32, #tpu.memory_space<smem>>) -> (i32, i32, i32) {
    %c0_i32 = arith.constant 0 : i32
    %c0_i32_0 = arith.constant 0 : i32
    return %arg0, %c0_i32, %arg2 : i32, i32, i32
  }
  func.func @transform_2(%arg0: i32, %arg1: i32, %arg2: i32, %arg3: memref<8xi32, #tpu.memory_space<smem>>) -> (i32, i32, i32, i32) {
    %c0_i32 = arith.constant 0 : i32
    %c0_i32_0 = arith.constant 0 : i32
    %c0_i32_1 = arith.constant 0 : i32
    return %arg0, %arg1, %c0_i32, %c0_i32_0 : i32, i32, i32, i32
  }
}

</mosaic_0001>

<llo_original>
// kernel: tpu_custom_call.1
$region0: #{tpu_custom_call.1}
  #allocation0 [shape = 'u32[]', space=smem, size = 0x4, offset = 0x4, fixed_abs, tag = 'smem constant byte address 0x4 - core index']
  #allocation1 [shape = 'u32[144,128]{1,0:T(1,128)}', space=vmem, size = 0x12000, scoped, tag = 'internal scratch']
  #allocation2 [shape = 'f32[512,1]{1,0:T(8,128)}', space=vmem, size = 0x40000, scoped, tag = 'scratch operand']
  #allocation3 [shape = 'f32[512,1]{1,0:T(8,128)}', space=vmem, size = 0x40000, scoped, tag = 'scratch operand']
  #allocation4 [shape = 's32[1]{0}', space=sflag, size = 0x4, scoped, tag = 'scoped memory for tpu_custom_call.1']
  #allocation5 [shape = 'u8[512]{0}', space=smem, size = 0x200, scoped, tag = 'prefetched SMEM operand 0']
  %s0 = inlined_call_operand.vmem [shape: s32[8], index: 0, kind: input, shape index: {}]
  %s1 = inlined_call_operand.vmem [shape: bf16[8,512,16], index: 1, kind: input, shape index: {}]
  %s2 = inlined_call_operand.vmem [shape: bf16[8,16,512], index: 2, kind: input, shape index: {}]
  %s3 = inlined_call_operand.hbm [shape: f32[8,1,8,128], index: 3, kind: output, shape index: {}]
  %s4 = sld [smem:[#allocation0]]
  $region61: #{tpu_custom_call.1} parent=0
    _
  %s6 = ssub.s32 1, %s4
  %s7 = scalar_select 0, %s6, %s4
  %s8 = sshll.u32 %s0, 4
  %s9 = int_to_ptr.vmem [resolvable:$true] %s8
  %11 = dma.vmem_to_smem %s9, 16, [#allocation5], [#allocation4]
  %12 = dma.done [#allocation4], 16
  %13 = sfence
  $region1: #{tpu_custom_call.1} parent=0
    #allocation6 [shape = 'u8[8192]{0}', space=vmem, size = 0x2000, scoped, tag = 'output window, operand 0']
    #allocation7 [shape = 's32[2]{0}', space=sflag, size = 0x8, scoped, tag = 'scoped memory for tpu_custom_call.1']
    %14 = vsyncpa [#allocation7], 0
    %s15 = scalar_lea.sflag [#allocation7], 1
    %16 = vsyncpa %s15, 0
    loop: start=0, step=1, limit=10
    $region2: #{tpu_custom_call.1} parent=1 // loop_pre_header
      _
    $region3: #{tpu_custom_call.1} parent=1 // loop_header
      %s18 = sphi 0, %s22
      %p19 = scmp.ge.s32.totalorder %s18, 10
      %s25 = sphi 0, %s44
      %s26 = sphi 0, %s40
      %s27 = sphi 0, %s36
      %s28 = sphi 0, %s25
      %s29 = sphi 0, %s26
      %s30 = sphi 0, %s27
      %s31 = sphi 0, %s28
      %s32 = sphi 0, %s29
      %s33 = sphi 0, %s30
      %s49 = sphi 0, %s51
      %s52 = sphi 0, %s49
      %s53 = sphi 0, %s52
      %s69 = sphi 0, %s53
      %s77 = sphi 0, %s79
      %s80 = sphi 0, %s77
      %s81 = sphi 0, %s80
      %s97 = sphi 0, %s81
      %s105 = sphi 0, %s107
      %s108 = sphi 0, %s105
      %s109 = sphi 0, %s108
      %s125 = sphi 0, %s109
    $region4: #{tpu_custom_call.1} parent=1 // loop_header_branch
      %21 = sbr.rel (%p19) target = $region8
    $region5: #{tpu_custom_call.1} parent=1 // loop_body
      %s23 = ssub.s32 %s18, 1
      %s24 = ssub.s32 %s18, 2
      %s34 = sadd.s32 1, %s27
      %p35 = scmp.ge.s32.totalorder %s34, 1
      %s36 = scalar_select %p35, 0, %s34
      %s37 = sadd.s32 1, %s26
      %s38 = scalar_select %p35, %s37, %s26
      %p39 = scmp.ge.s32.totalorder %s38, 1
      %s40 = scalar_select %p39, 0, %s38
      %s41 = sadd.s32 1, %s25
      %s42 = scalar_select %p39, %s41, %s25
      %p43 = scmp.ge.s32.totalorder %s42, 8
      %s44 = scalar_select %p43, 0, %s42
      %s45 = ssub.s32 %s25, %s44
      %s46 = ssub.s32 %s26, %s40
      %s47 = sor.u32 %s45, %s46
      %p48 = scmp.eq.s32.totalorder %s47, 0
      %s50 = sadd.s32 %s49, 1
      %s51 = scalar_select %p48, %s49, %s50
      %p54 = pneg %p48
      %p55 = scmp.eq.s32.totalorder %s18, 7
      %p56 = por %p54, %p55
      %p57 = scmp.ne.s32.totalorder %s49, %s52
      %p58 = scmp.eq.s32.totalorder %s18, 0
      %p59 = por %p57, %p58
      %p60 = scmp.ne.s32.totalorder %s49, %s52
      %p61 = scmp.eq.s32.totalorder %s23, 7
      %p62 = por %p60, %p61
      %p63 = scmp.ne.s32.totalorder %s52, %s53
      %p64 = scmp.eq.s32.totalorder %s23, 0
      %p65 = por %p63, %p64
      %p66 = scmp.ne.s32.totalorder %s52, %s53
      %p67 = scmp.eq.s32.totalorder %s24, 7
      %p68 = por %p66, %p67
      %p70 = scmp.ne.s32.totalorder %s53, %s69
      %p71 = scmp.eq.s32.totalorder %s24, 0
      %p72 = por %p70, %p71
      %s73 = ssub.s32 %s25, %s44
      %s74 = ssub.s32 %s27, %s36
      %s75 = sor.u32 %s73, %s74
      %p76 = scmp.eq.s32.totalorder %s75, 0
      %s78 = sadd.s32 %s77, 1
      %s79 = scalar_select %p76, %s77, %s78
      %p82 = pneg %p76
      %p83 = scmp.eq.s32.totalorder %s18, 7
      %p84 = por %p82, %p83
      %p85 = scmp.ne.s32.totalorder %s77, %s80
      %p86 = scmp.eq.s32.totalorder %s18, 0
      %p87 = por %p85, %p86
      %p88 = scmp.ne.s32.totalorder %s77, %s80
      %p89 = scmp.eq.s32.totalorder %s23, 7
      %p90 = por %p88, %p89
      %p91 = scmp.ne.s32.totalorder %s80, %s81
      %p92 = scmp.eq.s32.totalorder %s23, 0
      %p93 = por %p91, %p92
      %p94 = scmp.ne.s32.totalorder %s80, %s81
      %p95 = scmp.eq.s32.totalorder %s24, 7
      %p96 = por %p94, %p95
      %p98 = scmp.ne.s32.totalorder %s81, %s97
      %p99 = scmp.eq.s32.totalorder %s24, 0
      %p100 = por %p98, %p99
      %s101 = ssub.s32 %s25, %s44
      %s102 = ssub.s32 %s26, %s40
      %s103 = sor.u32 %s101, %s102
      %p104 = scmp.eq.s32.totalorder %s103, 0
      %s106 = sadd.s32 %s105, 1
      %s107 = scalar_select %p104, %s105, %s106
      %p110 = pneg %p104
      %p111 = scmp.eq.s32.totalorder %s18, 7
      %p112 = por %p110, %p111
      %p113 = scmp.ne.s32.totalorder %s105, %s108
      %p114 = scmp.eq.s32.totalorder %s18, 0
      %p115 = por %p113, %p114
      %p116 = scmp.ne.s32.totalorder %s105, %s108
      %p117 = scmp.eq.s32.totalorder %s23, 7
      %p118 = por %p116, %p117
      %p119 = scmp.ne.s32.totalorder %s108, %s109
      %p120 = scmp.eq.s32.totalorder %s23, 0
      %p121 = por %p119, %p120
      %p122 = scmp.ne.s32.totalorder %s108, %s109
      %p123 = scmp.eq.s32.totalorder %s24, 7
      %p124 = por %p122, %p123
      %p126 = scmp.ne.s32.totalorder %s109, %s125
      %p127 = scmp.eq.s32.totalorder %s24, 0
      %p128 = por %p126, %p127
      %p129 = scmp.le.s32.totalorder 1, %s18
      %p130 = scmp.lt.s32.totalorder %s18, 9
      %p131 = pnand %p129, %p130
      %p132 = pneg %p131
      // Predicated region
      $region9: #{tpu_custom_call.1} parent=5 // pred_check
        _
      $region10: #{tpu_custom_call.1} parent=5 // pred_check_branch
        %134 = sbr.rel (%p131) target = $region12
      $region11: #{tpu_custom_call.1} parent=5 // pred_region
        %s135 = ssub.s32 %s18, 1
      $region12: #{tpu_custom_call.1} parent=5 // pred_fallthru
        _
      %p136 = scmp.lt.s32.totalorder %s18, 8
      // Predicated region
      $region13: #{tpu_custom_call.1} parent=5 // pred_check
        %p137 = pneg %p136
      $region14: #{tpu_custom_call.1} parent=5 // pred_check_branch
        %139 = sbr.rel (%p137) target = $region16
      $region15: #{tpu_custom_call.1} parent=5 // pred_region
        // Predicated region
        $region17: #{tpu_custom_call.1} parent=15 // pred_check
          %p140 = pneg %p59
        $region18: #{tpu_custom_call.1} parent=15 // pred_check_branch
          %142 = sbr.rel (%p140) target = $region20
        $region19: #{tpu_custom_call.1} parent=15 // pred_region
          %s143 = smul.u32 64, %s26
          %p144 = scmp.lt.s32.totalorder %s25, 7
          %s145 = scalar_select %p144, %s25, 7
          %p146 = scmp.lt.s32.totalorder %s143, 63
          %s147 = scalar_select %p146, %s143, 63
          %s148 = smul.addr %s145, 64
          %s149 = sadd.s32 %s147, %s148
          %s150 = smul.addr %s149, 4
          %s151 = scalar_lea.vmem %s1, %s150
          %s152 = smul.u32 64, %s26
        $region20: #{tpu_custom_call.1} parent=15 // pred_fallthru
          _
        // Predicated region
        $region21: #{tpu_custom_call.1} parent=15 // pred_check
          %p153 = pneg %p87
        $region22: #{tpu_custom_call.1} parent=15 // pred_check_branch
          %155 = sbr.rel (%p153) target = $region24
        $region23: #{tpu_custom_call.1} parent=15 // pred_region
          %s156 = smul.u32 4, %s27
          %p157 = scmp.lt.s32.totalorder %s25, 7
          %s158 = scalar_select %p157, %s25, 7
          %p159 = scmp.lt.s32.totalorder %s156, 3
          %s160 = scalar_select %p159, %s156, 3
          %s161 = smul.addr %s158, 8
          %s162 = sadd.s32 %s160, %s161
          %s163 = smul.addr %s162, 4
          %s164 = scalar_lea.vmem %s2, %s163
          %s165 = smul.u32 4, %s27
        $region24: #{tpu_custom_call.1} parent=15 // pred_fallthru
          _
      $region16: #{tpu_custom_call.1} parent=5 // pred_fallthru
        _
      %p166 = scmp.le.s32.totalorder 1, %s18
      %p167 = scmp.lt.s32.totalorder %s18, 9
      %p168 = pnand %p166, %p167
      %p169 = pneg %p168
      // Predicated region
      $region25: #{tpu_custom_call.1} parent=5 // pred_check
        _
      $region26: #{tpu_custom_call.1} parent=5 // pred_check_branch
        %171 = sbr.rel (%p168) target = $region28
      $region27: #{tpu_custom_call.1} parent=5 // pred_region
        %s172 = ssub.s32 %s18, 1
        %s173 = smul.u32 64, %s29
        %p174 = scmp.lt.s32.totalorder %s28, 7
        %s175 = scalar_select %p174, %s28, 7
        %p176 = scmp.lt.s32.totalorder %s173, 63
        %s177 = scalar_select %p176, %s173, 63
        %s178 = smul.addr %s175, 64
        %s179 = sadd.s32 %s177, %s178
        %s180 = smul.addr %s179, 4
        %s181 = scalar_lea.vmem %s1, %s180
        %p182 = pneg %p65
        %p183 = pneg %p62
        %s184 = smul.u32 4, %s30
        %p185 = scmp.lt.s32.totalorder %s28, 7
        %s186 = scalar_select %p185, %s28, 7
        %p187 = scmp.lt.s32.totalorder %s184, 3
        %s188 = scalar_select %p187, %s184, 3
        %s189 = smul.addr %s186, 8
        %s190 = sadd.s32 %s188, %s189
        %s191 = smul.addr %s190, 4
        %s192 = scalar_lea.vmem %s2, %s191
        %p193 = pneg %p93
        %p194 = pneg %p90
        %p195 = pneg %p121
        %p196 = pneg %p118
        %s197 = sand.u32 %s108, 1
        %s198 = scalar_lea.sflag [#allocation7], %s197
        %s199 = sand.u32 %s108, 1
        %s200 = smul.addr %s199, 8
        %s201 = scalar_lea.vmem [#allocation6], %s200
        %s202 = smul.u32 64, %s29
        %p203 = scmp.lt.s32.totalorder %s28, 7
        %s204 = scalar_select %p203, %s28, 7
        %p205 = scmp.lt.s32.totalorder %s202, 63
        %s206 = scalar_select %p205, %s202, 63
        %s207 = smul.addr %s204, 64
        %s208 = sadd.s32 %s206, %s207
        %s209 = smul.addr %s208, 4
        %s210 = scalar_lea.vmem %s1, %s209
        %s211 = smul.u32 64, %s29
        %s212 = smul.u32 4, %s30
        %p213 = scmp.lt.s32.totalorder %s28, 7
        %s214 = scalar_select %p213, %s28, 7
        %p215 = scmp.lt.s32.totalorder %s212, 3
        %s216 = scalar_select %p215, %s212, 3
        %s217 = smul.addr %s214, 8
        %s218 = sadd.s32 %s216, %s217
        %s219 = smul.addr %s218, 4
        %s220 = scalar_lea.vmem %s2, %s219
        %s221 = smul.u32 4, %s30
        %s223 = sld [smem:[#allocation5 + %s28]]
        %s224 = smul.u32 %s29, 512
        %s225 = smul.u32 %s30, 512
        %p226 = scmp.eq.s32.totalorder %s30, 0
        // Predicated region
        $region29: #{tpu_custom_call.1} parent=27 // pred_check
          %p227 = pneg %p226
        $region30: #{tpu_custom_call.1} parent=27 // pred_check_branch
          %229 = sbr.rel (%p227) target = $region32
        $region31: #{tpu_custom_call.1} parent=27 // pred_region
          %vm230 = vcmask 7168
          %231 = vst.msk [vmem:[#allocation2] sm:$0xff] %vm230, -1e+30
          %232 = vst.msk [vmem:[#allocation2 + $0x8] sm:$0xff] %vm230, -1e+30
          %233 = vst.msk [vmem:[#allocation2 + $0x10] sm:$0xff] %vm230, -1e+30
          %234 = vst.msk [vmem:[#allocation2 + $0x18] sm:$0xff] %vm230, -1e+30
          %235 = vst.msk [vmem:[#allocation2 + $0x20] sm:$0xff] %vm230, -1e+30
          %236 = vst.msk [vmem:[#allocation2 + $0x28] sm:$0xff] %vm230, -1e+30
          %237 = vst.msk [vmem:[#allocation2 + $0x30] sm:$0xff] %vm230, -1e+30
          %238 = vst.msk [vmem:[#allocation2 + $0x38] sm:$0xff] %vm230, -1e+30
          %239 = vst.msk [vmem:[#allocation2 + $0x40] sm:$0xff] %vm230, -1e+30
          %240 = vst.msk [vmem:[#allocation2 + $0x48] sm:$0xff] %vm230, -1e+30
          %241 = vst.msk [vmem:[#allocation2 + $0x50] sm:$0xff] %vm230, -1e+30
          %242 = vst.msk [vmem:[#allocation2 + $0x58] sm:$0xff] %vm230, -1e+30
          %243 = vst.msk [vmem:[#allocation2 + $0x60] sm:$0xff] %vm230, -1e+30
          %244 = vst.msk [vmem:[#allocation2 + $0x68] sm:$0xff] %vm230, -1e+30
          %245 = vst.msk [vmem:[#allocation2 + $0x70] sm:$0xff] %vm230, -1e+30
          %246 = vst.msk [vmem:[#allocation2 + $0x78] sm:$0xff] %vm230, -1e+30
          %247 = vst.msk [vmem:[#allocation2 + $0x80] sm:$0xff] %vm230, -1e+30
          %248 = vst.msk [vmem:[#allocation2 + $0x88] sm:$0xff] %vm230, -1e+30
          %249 = vst.msk [vmem:[#allocation2 + $0x90] sm:$0xff] %vm230, -1e+30
          %250 = vst.msk [vmem:[#allocation2 + $0x98] sm:$0xff] %vm230, -1e+30
          %251 = vst.msk [vmem:[#allocation2 + $0xa0] sm:$0xff] %vm230, -1e+30
          %252 = vst.msk [vmem:[#allocation2 + $0xa8] sm:$0xff] %vm230, -1e+30
          %253 = vst.msk [vmem:[#allocation2 + $0xb0] sm:$0xff] %vm230, -1e+30
          %254 = vst.msk [vmem:[#allocation2 + $0xb8] sm:$0xff] %vm230, -1e+30
          %255 = vst.msk [vmem:[#allocation2 + $0xc0] sm:$0xff] %vm230, -1e+30
          %256 = vst.msk [vmem:[#allocation2 + $0xc8] sm:$0xff] %vm230, -1e+30
          %257 = vst.msk [vmem:[#allocation2 + $0xd0] sm:$0xff] %vm230, -1e+30
          %258 = vst.msk [vmem:[#allocation2 + $0xd8] sm:$0xff] %vm230, -1e+30
          %259 = vst.msk [vmem:[#allocation2 + $0xe0] sm:$0xff] %vm230, -1e+30
          %260 = vst.msk [vmem:[#allocation2 + $0xe8] sm:$0xff] %vm230, -1e+30
          %261 = vst.msk [vmem:[#allocation2 + $0xf0] sm:$0xff] %vm230, -1e+30
          %262 = vst.msk [vmem:[#allocation2 + $0xf8] sm:$0xff] %vm230, -1e+30
          %263 = vst.msk [vmem:[#allocation2 + $0x100] sm:$0xff] %vm230, -1e+30
          %264 = vst.msk [vmem:[#allocation2 + $0x108] sm:$0xff] %vm230, -1e+30
          %265 = vst.msk [vmem:[#allocation2 + $0x110] sm:$0xff] %vm230, -1e+30
          %266 = vst.msk [vmem:[#allocation2 + $0x118] sm:$0xff] %vm230, -1e+30
          %267 = vst.msk [vmem:[#allocation2 + $0x120] sm:$0xff] %vm230, -1e+30
          %268 = vst.msk [vmem:[#allocation2 + $0x128] sm:$0xff] %vm230, -1e+30
          %269 = vst.msk [vmem:[#allocation2 + $0x130] sm:$0xff] %vm230, -1e+30
          %270 = vst.msk [vmem:[#allocation2 + $0x138] sm:$0xff] %vm230, -1e+30
          %271 = vst.msk [vmem:[#allocation2 + $0x140] sm:$0xff] %vm230, -1e+30
          %272 = vst.msk [vmem:[#allocation2 + $0x148] sm:$0xff] %vm230, -1e+30
          %273 = vst.msk [vmem:[#allocation2 + $0x150] sm:$0xff] %vm230, -1e+30
          %274 = vst.msk [vmem:[#allocation2 + $0x158] sm:$0xff] %vm230, -1e+30
          %275 = vst.msk [vmem:[#allocation2 + $0x160] sm:$0xff] %vm230, -1e+30
          %276 = vst.msk [vmem:[#allocation2 + $0x168] sm:$0xff] %vm230, -1e+30
          %277 = vst.msk [vmem:[#allocation2 + $0x170] sm:$0xff] %vm230, -1e+30
          %278 = vst.msk [vmem:[#allocation2 + $0x178] sm:$0xff] %vm230, -1e+30
          %279 = vst.msk [vmem:[#allocation2 + $0x180] sm:$0xff] %vm230, -1e+30
          %280 = vst.msk [vmem:[#allocation2 + $0x188] sm:$0xff] %vm230, -1e+30
          %281 = vst.msk [vmem:[#allocation2 + $0x190] sm:$0xff] %vm230, -1e+30
          %282 = vst.msk [vmem:[#allocation2 + $0x198] sm:$0xff] %vm230, -1e+30
          %283 = vst.msk [vmem:[#allocation2 + $0x1a0] sm:$0xff] %vm230, -1e+30
          %284 = vst.msk [vmem:[#allocation2 + $0x1a8] sm:$0xff] %vm230, -1e+30
          %285 = vst.msk [vmem:[#allocation2 + $0x1b0] sm:$0xff] %vm230, -1e+30
          %286 = vst.msk [vmem:[#allocation2 + $0x1b8] sm:$0xff] %vm230, -1e+30
          %287 = vst.msk [vmem:[#allocation2 + $0x1c0] sm:$0xff] %vm230, -1e+30
          %288 = vst.msk [vmem:[#allocation2 + $0x1c8] sm:$0xff] %vm230, -1e+30
          %289 = vst.msk [vmem:[#allocation2 + $0x1d0] sm:$0xff] %vm230, -1e+30
          %290 = vst.msk [vmem:[#allocation2 + $0x1d8] sm:$0xff] %vm230, -1e+30
          %291 = vst.msk [vmem:[#allocation2 + $0x1e0] sm:$0xff] %vm230, -1e+30
          %292 = vst.msk [vmem:[#allocation2 + $0x1e8] sm:$0xff] %vm230, -1e+30
          %293 = vst.msk [vmem:[#allocation2 + $0x1f0] sm:$0xff] %vm230, -1e+30
          %294 = vst.msk [vmem:[#allocation2 + $0x1f8] sm:$0xff] %vm230, -1e+30
          %295 = vst.msk [vmem:[#allocation3] sm:$0xff] %vm230, 0.0
          %296 = vst.msk [vmem:[#allocation3 + $0x8] sm:$0xff] %vm230, 0.0
          %297 = vst.msk [vmem:[#allocation3 + $0x10] sm:$0xff] %vm230, 0.0
          %298 = vst.msk [vmem:[#allocation3 + $0x18] sm:$0xff] %vm230, 0.0
          %299 = vst.msk [vmem:[#allocation3 + $0x20] sm:$0xff] %vm230, 0.0
          %300 = vst.msk [vmem:[#allocation3 + $0x28] sm:$0xff] %vm230, 0.0
          %301 = vst.msk [vmem:[#allocation3 + $0x30] sm:$0xff] %vm230, 0.0
          %302 = vst.msk [vmem:[#allocation3 + $0x38] sm:$0xff] %vm230, 0.0
          %303 = vst.msk [vmem:[#allocation3 + $0x40] sm:$0xff] %vm230, 0.0
          %304 = vst.msk [vmem:[#allocation3 + $0x48] sm:$0xff] %vm230, 0.0
          %305 = vst.msk [vmem:[#allocation3 + $0x50] sm:$0xff] %vm230, 0.0
          %306 = vst.msk [vmem:[#allocation3 + $0x58] sm:$0xff] %vm230, 0.0
          %307 = vst.msk [vmem:[#allocation3 + $0x60] sm:$0xff] %vm230, 0.0
          %308 = vst.msk [vmem:[#allocation3 + $0x68] sm:$0xff] %vm230, 0.0
          %309 = vst.msk [vmem:[#allocation3 + $0x70] sm:$0xff] %vm230, 0.0
          %310 = vst.msk [vmem:[#allocation3 + $0x78] sm:$0xff] %vm230, 0.0
          %311 = vst.msk [vmem:[#allocation3 + $0x80] sm:$0xff] %vm230, 0.0
          %312 = vst.msk [vmem:[#allocation3 + $0x88] sm:$0xff] %vm230, 0.0
          %313 = vst.msk [vmem:[#allocation3 + $0x90] sm:$0xff] %vm230, 0.0
          %314 = vst.msk [vmem:[#allocation3 + $0x98] sm:$0xff] %vm230, 0.0
          %315 = vst.msk [vmem:[#allocation3 + $0xa0] sm:$0xff] %vm230, 0.0
          %316 = vst.msk [vmem:[#allocation3 + $0xa8] sm:$0xff] %vm230, 0.0
          %317 = vst.msk [vmem:[#allocation3 + $0xb0] sm:$0xff] %vm230, 0.0
          %318 = vst.msk [vmem:[#allocation3 + $0xb8] sm:$0xff] %vm230, 0.0
          %319 = vst.msk [vmem:[#allocation3 + $0xc0] sm:$0xff] %vm230, 0.0
          %320 = vst.msk [vmem:[#allocation3 + $0xc8] sm:$0xff] %vm230, 0.0
          %321 = vst.msk [vmem:[#allocation3 + $0xd0] sm:$0xff] %vm230, 0.0
          %322 = vst.msk [vmem:[#allocation3 + $0xd8] sm:$0xff] %vm230, 0.0
          %323 = vst.msk [vmem:[#allocation3 + $0xe0] sm:$0xff] %vm230, 0.0
          %324 = vst.msk [vmem:[#allocation3 + $0xe8] sm:$0xff] %vm230, 0.0
          %325 = vst.msk [vmem:[#allocation3 + $0xf0] sm:$0xff] %vm230, 0.0
          %326 = vst.msk [vmem:[#allocation3 + $0xf8] sm:$0xff] %vm230, 0.0
          %327 = vst.msk [vmem:[#allocation3 + $0x100] sm:$0xff] %vm230, 0.0
          %328 = vst.msk [vmem:[#allocation3 + $0x108] sm:$0xff] %vm230, 0.0
          %329 = vst.msk [vmem:[#allocation3 + $0x110] sm:$0xff] %vm230, 0.0
          %330 = vst.msk [vmem:[#allocation3 + $0x118] sm:$0xff] %vm230, 0.0
          %331 = vst.msk [vmem:[#allocation3 + $0x120] sm:$0xff] %vm230, 0.0
          %332 = vst.msk [vmem:[#allocation3 + $0x128] sm:$0xff] %vm230, 0.0
          %333 = vst.msk [vmem:[#allocation3 + $0x130] sm:$0xff] %vm230, 0.0
          %334 = vst.msk [vmem:[#allocation3 + $0x138] sm:$0xff] %vm230, 0.0
          %335 = vst.msk [vmem:[#allocation3 + $0x140] sm:$0xff] %vm230, 0.0
          %336 = vst.msk [vmem:[#allocation3 + $0x148] sm:$0xff] %vm230, 0.0
          %337 = vst.msk [vmem:[#allocation3 + $0x150] sm:$0xff] %vm230, 0.0
          %338 = vst.msk [vmem:[#allocation3 + $0x158] sm:$0xff] %vm230, 0.0
          %339 = vst.msk [vmem:[#allocation3 + $0x160] sm:$0xff] %vm230, 0.0
          %340 = vst.msk [vmem:[#allocation3 + $0x168] sm:$0xff] %vm230, 0.0
          %341 = vst.msk [vmem:[#allocation3 + $0x170] sm:$0xff] %vm230, 0.0
          %342 = vst.msk [vmem:[#allocation3 + $0x178] sm:$0xff] %vm230, 0.0
          %343 = vst.msk [vmem:[#allocation3 + $0x180] sm:$0xff] %vm230, 0.0
          %344 = vst.msk [vmem:[#allocation3 + $0x188] sm:$0xff] %vm230, 0.0
          %345 = vst.msk [vmem:[#allocation3 + $0x190] sm:$0xff] %vm230, 0.0
          %346 = vst.msk [vmem:[#allocation3 + $0x198] sm:$0xff] %vm230, 0.0
          %347 = vst.msk [vmem:[#allocation3 + $0x1a0] sm:$0xff] %vm230, 0.0
          %348 = vst.msk [vmem:[#allocation3 + $0x1a8] sm:$0xff] %vm230, 0.0
          %349 = vst.msk [vmem:[#allocation3 + $0x1b0] sm:$0xff] %vm230, 0.0
          %350 = vst.msk [vmem:[#allocation3 + $0x1b8] sm:$0xff] %vm230, 0.0
          %351 = vst.msk [vmem:[#allocation3 + $0x1c0] sm:$0xff] %vm230, 0.0
          %352 = vst.msk [vmem:[#allocation3 + $0x1c8] sm:$0xff] %vm230, 0.0
          %353 = vst.msk [vmem:[#allocation3 + $0x1d0] sm:$0xff] %vm230, 0.0
          %354 = vst.msk [vmem:[#allocation3 + $0x1d8] sm:$0xff] %vm230, 0.0
          %355 = vst.msk [vmem:[#allocation3 + $0x1e0] sm:$0xff] %vm230, 0.0
          %356 = vst.msk [vmem:[#allocation3 + $0x1e8] sm:$0xff] %vm230, 0.0
          %357 = vst.msk [vmem:[#allocation3 + $0x1f0] sm:$0xff] %vm230, 0.0
          %358 = vst.msk [vmem:[#allocation3 + $0x1f8] sm:$0xff] %vm230, 0.0
        $region32: #{tpu_custom_call.1} parent=27 // pred_fallthru
          _
        %p359 = scmp.lt.s32.totalorder %s224, %s223
        %p360 = scmp.lt.s32.totalorder %s225, %s223
        %p361 = pnand %p359, %p360
        %p362 = pneg %p361
        // Predicated region
        $region33: #{tpu_custom_call.1} parent=27 // pred_check
          _
        $region34: #{tpu_custom_call.1} parent=27 // pred_check_branch
          %364 = sbr.rel (%p361) target = $region36
        $region35: #{tpu_custom_call.1} parent=27 // pred_region
          %v365 = vld [vmem:[%s210] sm:$0xf]
          %v366 = vld [vmem:[%s210 + $0x4] sm:$0xf]
          %v367 = vld [vmem:[%s210 + $0x8] sm:$0xf]
          %v368 = vld [vmem:[%s210 + $0xc] sm:$0xf]
          %v369 = vld [vmem:[%s210 + $0x10] sm:$0xf]
          %v370 = vld [vmem:[%s210 + $0x14] sm:$0xf]
          %v371 = vld [vmem:[%s210 + $0x18] sm:$0xf]
          %v372 = vld [vmem:[%s210 + $0x1c] sm:$0xf]
          %v373 = vld [vmem:[%s210 + $0x20] sm:$0xf]
          %v374 = vld [vmem:[%s210 + $0x24] sm:$0xf]
          %v375 = vld [vmem:[%s210 + $0x28] sm:$0xf]
          %v376 = vld [vmem:[%s210 + $0x2c] sm:$0xf]
          %v377 = vld [vmem:[%s210 + $0x30] sm:$0xf]
          %v378 = vld [vmem:[%s210 + $0x34] sm:$0xf]
          %v379 = vld [vmem:[%s210 + $0x38] sm:$0xf]
          %v380 = vld [vmem:[%s210 + $0x3c] sm:$0xf]
          %v381 = vld [vmem:[%s210 + $0x40] sm:$0xf]
          %v382 = vld [vmem:[%s210 + $0x44] sm:$0xf]
          %v383 = vld [vmem:[%s210 + $0x48] sm:$0xf]
          %v384 = vld [vmem:[%s210 + $0x4c] sm:$0xf]
          %v385 = vld [vmem:[%s210 + $0x50] sm:$0xf]
          %v386 = vld [vmem:[%s210 + $0x54] sm:$0xf]
          %v387 = vld [vmem:[%s210 + $0x58] sm:$0xf]
          %v388 = vld [vmem:[%s210 + $0x5c] sm:$0xf]
          %v389 = vld [vmem:[%s210 + $0x60] sm:$0xf]
          %v390 = vld [vmem:[%s210 + $0x64] sm:$0xf]
          %v391 = vld [vmem:[%s210 + $0x68] sm:$0xf]
          %v392 = vld [vmem:[%s210 + $0x6c] sm:$0xf]
          %v393 = vld [vmem:[%s210 + $0x70] sm:$0xf]
          %v394 = vld [vmem:[%s210 + $0x74] sm:$0xf]
          %v395 = vld [vmem:[%s210 + $0x78] sm:$0xf]
          %v396 = vld [vmem:[%s210 + $0x7c] sm:$0xf]
          %v397 = vld [vmem:[%s210 + $0x80] sm:$0xf]
          %v398 = vld [vmem:[%s210 + $0x84] sm:$0xf]
          %v399 = vld [vmem:[%s210 + $0x88] sm:$0xf]
          %v400 = vld [vmem:[%s210 + $0x8c] sm:$0xf]
          %v401 = vld [vmem:[%s210 + $0x90] sm:$0xf]
          %v402 = vld [vmem:[%s210 + $0x94] sm:$0xf]
          %v403 = vld [vmem:[%s210 + $0x98] sm:$0xf]
          %v404 = vld [vmem:[%s210 + $0x9c] sm:$0xf]
          %v405 = vld [vmem:[%s210 + $0xa0] sm:$0xf]
          %v406 = vld [vmem:[%s210 + $0xa4] sm:$0xf]
          %v407 = vld [vmem:[%s210 + $0xa8] sm:$0xf]
          %v408 = vld [vmem:[%s210 + $0xac] sm:$0xf]
          %v409 = vld [vmem:[%s210 + $0xb0] sm:$0xf]
          %v410 = vld [vmem:[%s210 + $0xb4] sm:$0xf]
          %v411 = vld [vmem:[%s210 + $0xb8] sm:$0xf]
          %v412 = vld [vmem:[%s210 + $0xbc] sm:$0xf]
          %v413 = vld [vmem:[%s210 + $0xc0] sm:$0xf]
          %v414 = vld [vmem:[%s210 + $0xc4] sm:$0xf]
          %v415 = vld [vmem:[%s210 + $0xc8] sm:$0xf]
          %v416 = vld [vmem:[%s210 + $0xcc] sm:$0xf]
          %v417 = vld [vmem:[%s210 + $0xd0] sm:$0xf]
          %v418 = vld [vmem:[%s210 + $0xd4] sm:$0xf]
          %v419 = vld [vmem:[%s210 + $0xd8] sm:$0xf]
          %v420 = vld [vmem:[%s210 + $0xdc] sm:$0xf]
          %v421 = vld [vmem:[%s210 + $0xe0] sm:$0xf]
          %v422 = vld [vmem:[%s210 + $0xe4] sm:$0xf]
          %v423 = vld [vmem:[%s210 + $0xe8] sm:$0xf]
          %v424 = vld [vmem:[%s210 + $0xec] sm:$0xf]
          %v425 = vld [vmem:[%s210 + $0xf0] sm:$0xf]
          %v426 = vld [vmem:[%s210 + $0xf4] sm:$0xf]
          %v427 = vld [vmem:[%s210 + $0xf8] sm:$0xf]
          %v428 = vld [vmem:[%s210 + $0xfc] sm:$0xf]
          %v429 = vld [vmem:[%s220] sm:$0xff]
          %v430 = vld [vmem:[%s220 + $0x8] sm:$0xff]
          %v431 = vld [vmem:[%s220 + $0x10] sm:$0xff]
          %v432 = vld [vmem:[%s220 + $0x18] sm:$0xff]
          %v497 = vunpack.c.l.b16 %v365
          %v498 = vunpack.c.l.b16 %v366
          %v499 = vunpack.c.l.b16 %v367
          %v500 = vunpack.c.l.b16 %v368
          %v501 = vunpack.c.l.b16 %v369
          %v502 = vunpack.c.l.b16 %v370
          %v503 = vunpack.c.l.b16 %v371
          %v504 = vunpack.c.l.b16 %v372
          %v505 = vunpack.c.l.b16 %v373
          %v506 = vunpack.c.l.b16 %v374
          %v507 = vunpack.c.l.b16 %v375
          %v508 = vunpack.c.l.b16 %v376
          %v509 = vunpack.c.l.b16 %v377
          %v510 = vunpack.c.l.b16 %v378
          %v511 = vunpack.c.l.b16 %v379
          %v512 = vunpack.c.l.b16 %v380
          %v513 = vunpack.c.l.b16 %v381
          %v514 = vunpack.c.l.b16 %v382
          %v515 = vunpack.c.l.b16 %v383
          %v516 = vunpack.c.l.b16 %v384
          %v517 = vunpack.c.l.b16 %v385
          %v518 = vunpack.c.l.b16 %v386
          %v519 = vunpack.c.l.b16 %v387
          %v520 = vunpack.c.l.b16 %v388
          %v521 = vunpack.c.l.b16 %v389
          %v522 = vunpack.c.l.b16 %v390
          %v523 = vunpack.c.l.b16 %v391
          %v524 = vunpack.c.l.b16 %v392
          %v525 = vunpack.c.l.b16 %v393
          %v526 = vunpack.c.l.b16 %v394
          %v527 = vunpack.c.l.b16 %v395
          %v528 = vunpack.c.l.b16 %v396
          %v529 = vunpack.c.l.b16 %v397
          %v530 = vunpack.c.l.b16 %v398
          %v531 = vunpack.c.l.b16 %v399
          %v532 = vunpack.c.l.b16 %v400
          %v533 = vunpack.c.l.b16 %v401
          %v534 = vunpack.c.l.b16 %v402
          %v535 = vunpack.c.l.b16 %v403
          %v536 = vunpack.c.l.b16 %v404
          %v537 = vunpack.c.l.b16 %v405
          %v538 = vunpack.c.l.b16 %v406
          %v539 = vunpack.c.l.b16 %v407
          %v540 = vunpack.c.l.b16 %v408
          %v541 = vunpack.c.l.b16 %v409
          %v542 = vunpack.c.l.b16 %v410
          %v543 = vunpack.c.l.b16 %v411
          %v544 = vunpack.c.l.b16 %v412
          %v545 = vunpack.c.l.b16 %v413
          %v546 = vunpack.c.l.b16 %v414
          %v547 = vunpack.c.l.b16 %v415
          %v548 = vunpack.c.l.b16 %v416
          %v549 = vunpack.c.l.b16 %v417
          %v550 = vunpack.c.l.b16 %v418
          %v551 = vunpack.c.l.b16 %v419
          %v552 = vunpack.c.l.b16 %v420
          %v553 = vunpack.c.l.b16 %v421
          %v554 = vunpack.c.l.b16 %v422
          %v555 = vunpack.c.l.b16 %v423
          %v556 = vunpack.c.l.b16 %v424
          %v557 = vunpack.c.l.b16 %v425
          %v558 = vunpack.c.l.b16 %v426
          %v559 = vunpack.c.l.b16 %v427
          %v560 = vunpack.c.l.b16 %v428
          %v561 = vpack.c.b16 %v498, %v497
          %v562 = vpack.c.b16 %v500, %v499
          %v563 = vpack.c.b16 %v502, %v501
          %v564 = vpack.c.b16 %v504, %v503
          %v565 = vpack.c.b16 %v506, %v505
          %v566 = vpack.c.b16 %v508, %v507
          %v567 = vpack.c.b16 %v510, %v509
          %v568 = vpack.c.b16 %v512, %v511
          %v569 = vpack.c.b16 %v514, %v513
          %v570 = vpack.c.b16 %v516, %v515
          %v571 = vpack.c.b16 %v518, %v517
          %v572 = vpack.c.b16 %v520, %v519
          %v573 = vpack.c.b16 %v522, %v521
          %v574 = vpack.c.b16 %v524, %v523
          %v575 = vpack.c.b16 %v526, %v525
          %v576 = vpack.c.b16 %v528, %v527
          %v577 = vpack.c.b16 %v530, %v529
          %v578 = vpack.c.b16 %v532, %v531
          %v579 = vpack.c.b16 %v534, %v533
          %v580 = vpack.c.b16 %v536, %v535
          %v581 = vpack.c.b16 %v538, %v537
          %v582 = vpack.c.b16 %v540, %v539
          %v583 = vpack.c.b16 %v542, %v541
          %v584 = vpack.c.b16 %v544, %v543
          %v585 = vpack.c.b16 %v546, %v545
          %v586 = vpack.c.b16 %v548, %v547
          %v587 = vpack.c.b16 %v550, %v549
          %v588 = vpack.c.b16 %v552, %v551
          %v589 = vpack.c.b16 %v554, %v553
          %v590 = vpack.c.b16 %v556, %v555
          %v591 = vpack.c.b16 %v558, %v557
          %v592 = vpack.c.b16 %v560, %v559
          %v597 = vunpack.c.l.b16 %v429
          %v598 = vunpack.c.h.b16 %v429
          %v599 = vunpack.c.l.b16 %v430
          %v600 = vunpack.c.h.b16 %v430
          %v601 = vunpack.c.l.b16 %v431
          %v602 = vunpack.c.h.b16 %v431
          %v603 = vunpack.c.l.b16 %v432
          %v604 = vunpack.c.h.b16 %v432
          %v605 = vpack.c.b16 %v601, %v597
          %v606 = vpack.c.b16 %v602, %v598
          %v607 = vpack.c.b16 %v603, %v599
          %v608 = vpack.c.b16 %v604, %v600
          %vm613 = vcmask 130048
          %v615 = vsel %vm613, %v561, 0
          %v618 = vsel %vm613, %v562, 0
          %v621 = vsel %vm613, %v563, 0
          %v624 = vsel %vm613, %v564, 0
          %v627 = vsel %vm613, %v565, 0
          %v630 = vsel %vm613, %v566, 0
          %v633 = vsel %vm613, %v567, 0
          %v636 = vsel %vm613, %v568, 0
          %v639 = vsel %vm613, %v569, 0
          %v642 = vsel %vm613, %v570, 0
          %v645 = vsel %vm613, %v571, 0
          %v648 = vsel %vm613, %v572, 0
          %v651 = vsel %vm613, %v573, 0
          %v654 = vsel %vm613, %v574, 0
          %v657 = vsel %vm613, %v575, 0
          %v660 = vsel %vm613, %v576, 0
          %v663 = vsel %vm613, %v577, 0
          %v666 = vsel %vm613, %v578, 0
          %v669 = vsel %vm613, %v579, 0
          %v672 = vsel %vm613, %v580, 0
          %v675 = vsel %vm613, %v581, 0
          %v678 = vsel %vm613, %v582, 0
          %v681 = vsel %vm613, %v583, 0
          %v684 = vsel %vm613, %v584, 0
          %v687 = vsel %vm613, %v585, 0
          %v690 = vsel %vm613, %v586, 0
          %v693 = vsel %vm613, %v587, 0
          %v696 = vsel %vm613, %v588, 0
          %v699 = vsel %vm613, %v589, 0
          %v702 = vsel %vm613, %v590, 0
          %v705 = vsel %vm613, %v591, 0
          %v708 = vsel %vm613, %v592, 0
          %710 = vmatprep.subr.bf16.mxu0 %v606
          %711 = vmatpush1.bf16.msra.mxu0 %v605
          %712 = vmatprep.subr.bf16.mxu0 0
          %713 = vmatpush1.bf16.msra.mxu0 0
          %714 = vmatprep.subr.bf16.mxu0 0
          %715 = vmatpush1.bf16.msra.mxu0 0
          %716 = vmatprep.subr.bf16.mxu0 0
          %717 = vmatpush1.bf16.msra.mxu0 0
          %718 = vmatprep.subr.bf16.mxu0 0
          %719 = vmatpush1.bf16.msra.mxu0 0
          %720 = vmatprep.subr.bf16.mxu0 0
          %721 = vmatpush1.bf16.msra.mxu0 0
          %722 = vmatprep.subr.bf16.mxu0 0
          %723 = vmatpush1.bf16.msra.mxu0 0
          %724 = vmatprep.subr.bf16.mxu0 0
          %725 = vmatpush1.bf16.msra.mxu0 0
          %726 = vmatprep.subr.bf16.mxu0 0
          %727 = vmatpush1.bf16.msra.mxu0 0
          %728 = vmatprep.subr.bf16.mxu0 0
          %729 = vmatpush1.bf16.msra.mxu0 0
          %730 = vmatprep.subr.bf16.mxu0 0
          %731 = vmatpush1.bf16.msra.mxu0 0
          %732 = vmatprep.subr.bf16.mxu0 0
          %733 = vmatpush1.bf16.msra.mxu0 0
          %734 = vmatprep.subr.bf16.mxu0 0
          %735 = vmatpush1.bf16.msra.mxu0 0
          %736 = vmatprep.subr.bf16.mxu0 0
          %737 = vmatpush1.bf16.msra.mxu0 0
          %738 = vmatprep.subr.bf16.mxu0 0
          %739 = vmatpush1.bf16.msra.mxu0 0
          %740 = vmatprep.subr.bf16.mxu0 0
          %741 = vmatpush1.bf16.msra.mxu0 0
          %742 = vmatprep.mubr.bf16.mxu0 0
          %743 = vmatmul.mubr.bf16.gmra.mrb[0].mxu0 %v615
          %v744 = vpop.f32.mrb[0].mxu0
          %v745 = vadd.f32 0.0, %v744
          %v746 = vpop.f32.mrb[0].mxu0
          %v747 = vadd.f32 0.0, %v746
          %v748 = vpop.f32.mrb[0].mxu0
          %v749 = vadd.f32 0.0, %v748
          %v750 = vpop.f32.mrb[0].mxu0
          %v751 = vadd.f32 0.0, %v750
          %752 = vmatprep.mubr.bf16.mxu0 0
          %753 = vmatmul.mubr.bf16.gmra.mrb[0].mxu0 %v618
          %v754 = vpop.f32.mrb[0].mxu0
          %v755 = vadd.f32 0.0, %v754
          %v756 = vpop.f32.mrb[0].mxu0
          %v757 = vadd.f32 0.0, %v756
          %v758 = vpop.f32.mrb[0].mxu0
          %v759 = vadd.f32 0.0, %v758
          %v760 = vpop.f32.mrb[0].mxu0
          %v761 = vadd.f32 0.0, %v760
          %762 = vmatprep.mubr.bf16.mxu0 0
          %763 = vmatmul.mubr.bf16.gmra.mrb[0].mxu0 %v621
          %v764 = vpop.f32.mrb[0].mxu0
          %v765 = vadd.f32 0.0, %v764
          %v766 = vpop.f32.mrb[0].mxu0
          %v767 = vadd.f32 0.0, %v766
          %v768 = vpop.f32.mrb[0].mxu0
          %v769 = vadd.f32 0.0, %v768
          %v770 = vpop.f32.mrb[0].mxu0
          %v771 = vadd.f32 0.0, %v770
          %772 = vmatprep.mubr.bf16.mxu0 0
          %773 = vmatmul.mubr.bf16.gmra.mrb[0].mxu0 %v624
          %v774 = vpop.f32.mrb[0].mxu0
          %v775 = vadd.f32 0.0, %v774
          %v776 = vpop.f32.mrb[0].mxu0
          %v777 = vadd.f32 0.0, %v776
          %v778 = vpop.f32.mrb[0].mxu0
          %v779 = vadd.f32 0.0, %v778
          %v780 = vpop.f32.mrb[0].mxu0
          %v781 = vadd.f32 0.0, %v780
          %782 = vmatprep.mubr.bf16.mxu0 0
          %783 = vmatmul.mubr.bf16.gmra.mrb[0].mxu0 %v627
          %v784 = vpop.f32.mrb[0].mxu0
          %v785 = vadd.f32 0.0, %v784
          %v786 = vpop.f32.mrb[0].mxu0
          %v787 = vadd.f32 0.0, %v786
          %v788 = vpop.f32.mrb[0].mxu0
          %v789 = vadd.f32 0.0, %v788
          %v790 = vpop.f32.mrb[0].mxu0
          %v791 = vadd.f32 0.0, %v790
          %792 = vmatprep.mubr.bf16.mxu0 0
          %793 = vmatmul.mubr.bf16.gmra.mrb[0].mxu0 %v630
          %v794 = vpop.f32.mrb[0].mxu0
          %v795 = vadd.f32 0.0, %v794
          %v796 = vpop.f32.mrb[0].mxu0
          %v797 = vadd.f32 0.0, %v796
          %v798 = vpop.f32.mrb[0].mxu0
          %v799 = vadd.f32 0.0, %v798
          %v800 = vpop.f32.mrb[0].mxu0
          %v801 = vadd.f32 0.0, %v800
          %802 = vmatprep.mubr.bf16.mxu0 0
          %803 = vmatmul.mubr.bf16.gmra.mrb[0].mxu0 %v633
          %v804 = vpop.f32.mrb[0].mxu0
          %v805 = vadd.f32 0.0, %v804
          %v806 = vpop.f32.mrb[0].mxu0
          %v807 = vadd.f32 0.0, %v806
          %v808 = vpop.f32.mrb[0].mxu0
          %v809 = vadd.f32 0.0, %v808
          %v810 = vpop.f32.mrb[0].mxu0
          %v811 = vadd.f32 0.0, %v810
          %812 = vmatprep.mubr.bf16.mxu0 0
          %813 = vmatmul.mubr.bf16.gmra.mrb[0].mxu0 %v636
          %v814 = vpop.f32.mrb[0].mxu0
          %v815 = vadd.f32 0.0, %v814
          %v816 = vpop.f32.mrb[0].mxu0
          %v817 = vadd.f32 0.0, %v816
          %v818 = vpop.f32.mrb[0].mxu0
          %v819 = vadd.f32 0.0, %v818
          %v820 = vpop.f32.mrb[0].mxu0
          %v821 = vadd.f32 0.0, %v820
          %822 = vmatprep.mubr.bf16.mxu0 0
          %823 = vmatmul.mubr.bf16.gmra.mrb[0].mxu0 %v639
          %v824 = vpop.f32.mrb[0].mxu0
          %v825 = vadd.f32 0.0, %v824
          %v826 = vpop.f32.mrb[0].mxu0
          %v827 = vadd.f32 0.0, %v826
          %v828 = vpop.f32.mrb[0].mxu0
          %v829 = vadd.f32 0.0, %v828
          %v830 = vpop.f32.mrb[0].mxu0
          %v831 = vadd.f32 0.0, %v830
          %832 = vmatprep.mubr.bf16.mxu0 0
          %833 = vmatmul.mubr.bf16.gmra.mrb[0].mxu0 %v642
          %v834 = vpop.f32.mrb[0].mxu0
          %v835 = vadd.f32 0.0, %v834
          %v836 = vpop.f32.mrb[0].mxu0
          %v837 = vadd.f32 0.0, %v836
          %v838 = vpop.f32.mrb[0].mxu0
          %v839 = vadd.f32 0.0, %v838
          %v840 = vpop.f32.mrb[0].mxu0
          %v841 = vadd.f32 0.0, %v840
          %842 = vmatprep.mubr.bf16.mxu0 0
          %843 = vmatmul.mubr.bf16.gmra.mrb[0].mxu0 %v645
          %v844 = vpop.f32.mrb[0].mxu0
          %v845 = vadd.f32 0.0, %v844
          %v846 = vpop.f32.mrb[0].mxu0
          %v847 = vadd.f32 0.0, %v846
          %v848 = vpop.f32.mrb[0].mxu0
          %v849 = vadd.f32 0.0, %v848
          %v850 = vpop.f32.mrb[0].mxu0
          %v851 = vadd.f32 0.0, %v850
          %852 = vmatprep.mubr.bf16.mxu0 0
          %853 = vmatmul.mubr.bf16.gmra.mrb[0].mxu0 %v648
          %v854 = vpop.f32.mrb[0].mxu0
          %v855 = vadd.f32 0.0, %v854
          %v856 = vpop.f32.mrb[0].mxu0
          %v857 = vadd.f32 0.0, %v856
          %v858 = vpop.f32.mrb[0].mxu0
          %v859 = vadd.f32 0.0, %v858
          %v860 = vpop.f32.mrb[0].mxu0
          %v861 = vadd.f32 0.0, %v860
          %862 = vmatprep.mubr.bf16.mxu0 0
          %863 = vmatmul.mubr.bf16.gmra.mrb[0].mxu0 %v651
          %v864 = vpop.f32.mrb[0].mxu0
          %v865 = vadd.f32 0.0, %v864
          %v866 = vpop.f32.mrb[0].mxu0
          %v867 = vadd.f32 0.0, %v866
          %v868 = vpop.f32.mrb[0].mxu0
          %v869 = vadd.f32 0.0, %v868
          %v870 = vpop.f32.mrb[0].mxu0
          %v871 = vadd.f32 0.0, %v870
          %872 = vmatprep.mubr.bf16.mxu0 0
          %873 = vmatmul.mubr.bf16.gmra.mrb[0].mxu0 %v654
          %v874 = vpop.f32.mrb[0].mxu0
          %v875 = vadd.f32 0.0, %v874
          %v876 = vpop.f32.mrb[0].mxu0
          %v877 = vadd.f32 0.0, %v876
          %v878 = vpop.f32.mrb[0].mxu0
          %v879 = vadd.f32 0.0, %v878
          %v880 = vpop.f32.mrb[0].mxu0
          %v881 = vadd.f32 0.0, %v880
          %882 = vmatprep.mubr.bf16.mxu0 0
          %883 = vmatmul.mubr.bf16.gmra.mrb[0].mxu0 %v657
          %v884 = vpop.f32.mrb[0].mxu0
          %v885 = vadd.f32 0.0, %v884
          %v886 = vpop.f32.mrb[0].mxu0
          %v887 = vadd.f32 0.0, %v886
          %v888 = vpop.f32.mrb[0].mxu0
          %v889 = vadd.f32 0.0, %v888
          %v890 = vpop.f32.mrb[0].mxu0
          %v891 = vadd.f32 0.0, %v890
          %892 = vmatprep.mubr.bf16.mxu0 0
          %893 = vmatmul.mubr.bf16.gmra.mrb[0].mxu0 %v660
          %v894 = vpop.f32.mrb[0].mxu0
          %v895 = vadd.f32 0.0, %v894
          %v896 = vpop.f32.mrb[0].mxu0
          %v897 = vadd.f32 0.0, %v896
          %v898 = vpop.f32.mrb[0].mxu0
          %v899 = vadd.f32 0.0, %v898
          %v900 = vpop.f32.mrb[0].mxu0
          %v901 = vadd.f32 0.0, %v900
          %902 = vmatprep.mubr.bf16.mxu0 0
          %903 = vmatmul.mubr.bf16.gmra.mrb[0].mxu0 %v663
          %v904 = vpop.f32.mrb[0].mxu0
          %v905 = vadd.f32 0.0, %v904
          %v906 = vpop.f32.mrb[0].mxu0
          %v907 = vadd.f32 0.0, %v906
          %v908 = vpop.f32.mrb[0].mxu0
          %v909 = vadd.f32 0.0, %v908
          %v910 = vpop.f32.mrb[0].mxu0
          %v911 = vadd.f32 0.0, %v910
          %912 = vmatprep.mubr.bf16.mxu0 0
          %913 = vmatmul.mubr.bf16.gmra.mrb[0].mxu0 %v666
          %v914 = vpop.f32.mrb[0].mxu0
          %v915 = vadd.f32 0.0, %v914
          %v916 = vpop.f32.mrb[0].mxu0
          %v917 = vadd.f32 0.0, %v916
          %v918 = vpop.f32.mrb[0].mxu0
          %v919 = vadd.f32 0.0, %v918
          %v920 = vpop.f32.mrb[0].mxu0
          %v921 = vadd.f32 0.0, %v920
          %922 = vmatprep.mubr.bf16.mxu0 0
          %923 = vmatmul.mubr.bf16.gmra.mrb[0].mxu0 %v669
          %v924 = vpop.f32.mrb[0].mxu0
          %v925 = vadd.f32 0.0, %v924
          %v926 = vpop.f32.mrb[0].mxu0
          %v927 = vadd.f32 0.0, %v926
          %v928 = vpop.f32.mrb[0].mxu0
          %v929 = vadd.f32 0.0, %v928
          %v930 = vpop.f32.mrb[0].mxu0
          %v931 = vadd.f32 0.0, %v930
          %932 = vmatprep.mubr.bf16.mxu0 0
          %933 = vmatmul.mubr.bf16.gmra.mrb[0].mxu0 %v672
          %v934 = vpop.f32.mrb[0].mxu0
          %v935 = vadd.f32 0.0, %v934
          %v936 = vpop.f32.mrb[0].mxu0
          %v937 = vadd.f32 0.0, %v936
          %v938 = vpop.f32.mrb[0].mxu0
          %v939 = vadd.f32 0.0, %v938
          %v940 = vpop.f32.mrb[0].mxu0
          %v941 = vadd.f32 0.0, %v940
          %942 = vmatprep.mubr.bf16.mxu0 0
          %943 = vmatmul.mubr.bf16.gmra.mrb[0].mxu0 %v675
          %v944 = vpop.f32.mrb[0].mxu0
          %v945 = vadd.f32 0.0, %v944
          %v946 = vpop.f32.mrb[0].mxu0
          %v947 = vadd.f32 0.0, %v946
          %v948 = vpop.f32.mrb[0].mxu0
          %v949 = vadd.f32 0.0, %v948
          %v950 = vpop.f32.mrb[0].mxu0
          %v951 = vadd.f32 0.0, %v950
          %952 = vmatprep.mubr.bf16.mxu0 0
          %953 = vmatmul.mubr.bf16.gmra.mrb[0].mxu0 %v678
          %v954 = vpop.f32.mrb[0].mxu0
          %v955 = vadd.f32 0.0, %v954
          %v956 = vpop.f32.mrb[0].mxu0
          %v957 = vadd.f32 0.0, %v956
          %v958 = vpop.f32.mrb[0].mxu0
          %v959 = vadd.f32 0.0, %v958
          %v960 = vpop.f32.mrb[0].mxu0
          %v961 = vadd.f32 0.0, %v960
          %962 = vmatprep.mubr.bf16.mxu0 0
          %963 = vmatmul.mubr.bf16.gmra.mrb[0].mxu0 %v681
          %v964 = vpop.f32.mrb[0].mxu0
          %v965 = vadd.f32 0.0, %v964
          %v966 = vpop.f32.mrb[0].mxu0
          %v967 = vadd.f32 0.0, %v966
          %v968 = vpop.f32.mrb[0].mxu0
          %v969 = vadd.f32 0.0, %v968
          %v970 = vpop.f32.mrb[0].mxu0
          %v971 = vadd.f32 0.0, %v970
          %972 = vmatprep.mubr.bf16.mxu0 0
          %973 = vmatmul.mubr.bf16.gmra.mrb[0].mxu0 %v684
          %v974 = vpop.f32.mrb[0].mxu0
          %v975 = vadd.f32 0.0, %v974
          %v976 = vpop.f32.mrb[0].mxu0
          %v977 = vadd.f32 0.0, %v976
          %v978 = vpop.f32.mrb[0].mxu0
          %v979 = vadd.f32 0.0, %v978
          %v980 = vpop.f32.mrb[0].mxu0
          %v981 = vadd.f32 0.0, %v980
          %982 = vmatprep.mubr.bf16.mxu0 0
          %983 = vmatmul.mubr.bf16.gmra.mrb[0].mxu0 %v687
          %v984 = vpop.f32.mrb[0].mxu0
          %v985 = vadd.f32 0.0, %v984
          %v986 = vpop.f32.mrb[0].mxu0
          %v987 = vadd.f32 0.0, %v986
          %v988 = vpop.f32.mrb[0].mxu0
          %v989 = vadd.f32 0.0, %v988
          %v990 = vpop.f32.mrb[0].mxu0
          %v991 = vadd.f32 0.0, %v990
          %992 = vmatprep.mubr.bf16.mxu0 0
          %993 = vmatmul.mubr.bf16.gmra.mrb[0].mxu0 %v690
          %v994 = vpop.f32.mrb[0].mxu0
          %v995 = vadd.f32 0.0, %v994
          %v996 = vpop.f32.mrb[0].mxu0
          %v997 = vadd.f32 0.0, %v996
          %v998 = vpop.f32.mrb[0].mxu0
          %v999 = vadd.f32 0.0, %v998
          %v1000 = vpop.f32.mrb[0].mxu0
          %v1001 = vadd.f32 0.0, %v1000
          %1002 = vmatprep.mubr.bf16.mxu0 0
          %1003 = vmatmul.mubr.bf16.gmra.mrb[0].mxu0 %v693
          %v1004 = vpop.f32.mrb[0].mxu0
          %v1005 = vadd.f32 0.0, %v1004
          %v1006 = vpop.f32.mrb[0].mxu0
          %v1007 = vadd.f32 0.0, %v1006
          %v1008 = vpop.f32.mrb[0].mxu0
          %v1009 = vadd.f32 0.0, %v1008
          %v1010 = vpop.f32.mrb[0].mxu0
          %v1011 = vadd.f32 0.0, %v1010
          %1012 = vmatprep.mubr.bf16.mxu0 0
          %1013 = vmatmul.mubr.bf16.gmra.mrb[0].mxu0 %v696
          %v1014 = vpop.f32.mrb[0].mxu0
          %v1015 = vadd.f32 0.0, %v1014
          %v1016 = vpop.f32.mrb[0].mxu0
          %v1017 = vadd.f32 0.0, %v1016
          %v1018 = vpop.f32.mrb[0].mxu0
          %v1019 = vadd.f32 0.0, %v1018
          %v1020 = vpop.f32.mrb[0].mxu0
          %v1021 = vadd.f32 0.0, %v1020
          %1022 = vmatprep.mubr.bf16.mxu0 0
          %1023 = vmatmul.mubr.bf16.gmra.mrb[0].mxu0 %v699
          %v1024 = vpop.f32.mrb[0].mxu0
          %v1025 = vadd.f32 0.0, %v1024
          %v1026 = vpop.f32.mrb[0].mxu0
          %v1027 = vadd.f32 0.0, %v1026
          %v1028 = vpop.f32.mrb[0].mxu0
          %v1029 = vadd.f32 0.0, %v1028
          %v1030 = vpop.f32.mrb[0].mxu0
          %v1031 = vadd.f32 0.0, %v1030
          %1032 = vmatprep.mubr.bf16.mxu0 0
          %1033 = vmatmul.mubr.bf16.gmra.mrb[0].mxu0 %v702
          %v1034 = vpop.f32.mrb[0].mxu0
          %v1035 = vadd.f32 0.0, %v1034
          %v1036 = vpop.f32.mrb[0].mxu0
          %v1037 = vadd.f32 0.0, %v1036
          %v1038 = vpop.f32.mrb[0].mxu0
          %v1039 = vadd.f32 0.0, %v1038
          %v1040 = vpop.f32.mrb[0].mxu0
          %v1041 = vadd.f32 0.0, %v1040
          %1042 = vmatprep.mubr.bf16.mxu0 0
          %1043 = vmatmul.mubr.bf16.gmra.mrb[0].mxu0 %v705
          %v1044 = vpop.f32.mrb[0].mxu0
          %v1045 = vadd.f32 0.0, %v1044
          %v1046 = vpop.f32.mrb[0].mxu0
          %v1047 = vadd.f32 0.0, %v1046
          %v1048 = vpop.f32.mrb[0].mxu0
          %v1049 = vadd.f32 0.0, %v1048
          %v1050 = vpop.f32.mrb[0].mxu0
          %v1051 = vadd.f32 0.0, %v1050
          %1052 = vmatprep.mubr.bf16.mxu0 0
          %1053 = vmatmul.mubr.bf16.gmra.mrb[0].mxu0 %v708
          %v1054 = vpop.f32.mrb[0].mxu0
          %v1055 = vadd.f32 0.0, %v1054
          %v1056 = vpop.f32.mrb[0].mxu0
          %v1057 = vadd.f32 0.0, %v1056
          %v1058 = vpop.f32.mrb[0].mxu0
          %v1059 = vadd.f32 0.0, %v1058
          %v1060 = vpop.f32.mrb[0].mxu0
          %v1061 = vadd.f32 0.0, %v1060
          %1062 = vdwg.mxu0
          %1063 = vmatprep.subr.bf16.mxu0 %v608
          %1064 = vmatpush1.bf16.msra.mxu0 %v607
          %1065 = vmatprep.subr.bf16.mxu0 0
          %1066 = vmatpush1.bf16.msra.mxu0 0
          %1067 = vmatprep.subr.bf16.mxu0 0
          %1068 = vmatpush1.bf16.msra.mxu0 0
          %1069 = vmatprep.subr.bf16.mxu0 0
          %1070 = vmatpush1.bf16.msra.mxu0 0
          %1071 = vmatprep.subr.bf16.mxu0 0
          %1072 = vmatpush1.bf16.msra.mxu0 0
          %1073 = vmatprep.subr.bf16.mxu0 0
          %1074 = vmatpush1.bf16.msra.mxu0 0
          %1075 = vmatprep.subr.bf16.mxu0 0
          %1076 = vmatpush1.bf16.msra.mxu0 0
          %1077 = vmatprep.subr.bf16.mxu0 0
          %1078 = vmatpush1.bf16.msra.mxu0 0
          %1079 = vmatprep.subr.bf16.mxu0 0
          %1080 = vmatpush1.bf16.msra.mxu0 0
          %1081 = vmatprep.subr.bf16.mxu0 0
          %1082 = vmatpush1.bf16.msra.mxu0 0
          %1083 = vmatprep.subr.bf16.mxu0 0
          %1084 = vmatpush1.bf16.msra.mxu0 0
          %1085 = vmatprep.subr.bf16.mxu0 0
          %1086 = vmatpush1.bf16.msra.mxu0 0
          %1087 = vmatprep.subr.bf16.mxu0 0
          %1088 = vmatpush1.bf16.msra.mxu0 0
          %1089 = vmatprep.subr.bf16.mxu0 0
          %1090 = vmatpush1.bf16.msra.mxu0 0
          %1091 = vmatprep.subr.bf16.mxu0 0
          %1092 = vmatpush1.bf16.msra.mxu0 0
          %1093 = vmatprep.subr.bf16.mxu0 0
          %1094 = vmatpush1.bf16.msra.mxu0 0
          %1095 = vmatprep.mubr.bf16.mxu0 0
          %1096 = vmatmul.mubr.bf16.gmra.mrb[0].mxu0 %v615
          %v1097 = vpop.f32.mrb[0].mxu0
          %v1098 = vadd.f32 0.0, %v1097
          %v1099 = vpop.f32.mrb[0].mxu0
          %v1100 = vadd.f32 0.0, %v1099
          %v1101 = vpop.f32.mrb[0].mxu0
          %v1102 = vadd.f32 0.0, %v1101
          %v1103 = vpop.f32.mrb[0].mxu0
          %v1104 = vadd.f32 0.0, %v1103
          %1105 = vmatprep.mubr.bf16.mxu0 0
          %1106 = vmatmul.mubr.bf16.gmra.mrb[0].mxu0 %v618
          %v1107 = vpop.f32.mrb[0].mxu0
          %v1108 = vadd.f32 0.0, %v1107
          %v1109 = vpop.f32.mrb[0].mxu0
          %v1110 = vadd.f32 0.0, %v1109
          %v1111 = vpop.f32.mrb[0].mxu0
          %v1112 = vadd.f32 0.0, %v1111
          %v1113 = vpop.f32.mrb[0].mxu0
          %v1114 = vadd.f32 0.0, %v1113
          %1115 = vmatprep.mubr.bf16.mxu0 0
          %1116 = vmatmul.mubr.bf16.gmra.mrb[0].mxu0 %v621
          %v1117 = vpop.f32.mrb[0].mxu0
          %v1118 = vadd.f32 0.0, %v1117
          %v1119 = vpop.f32.mrb[0].mxu0
          %v1120 = vadd.f32 0.0, %v1119
          %v1121 = vpop.f32.mrb[0].mxu0
          %v1122 = vadd.f32 0.0, %v1121
          %v1123 = vpop.f32.mrb[0].mxu0
          %v1124 = vadd.f32 0.0, %v1123
          %1125 = vmatprep.mubr.bf16.mxu0 0
          %1126 = vmatmul.mubr.bf16.gmra.mrb[0].mxu0 %v624
          %v1127 = vpop.f32.mrb[0].mxu0
          %v1128 = vadd.f32 0.0, %v1127
          %v1129 = vpop.f32.mrb[0].mxu0
          %v1130 = vadd.f32 0.0, %v1129
          %v1131 = vpop.f32.mrb[0].mxu0
          %v1132 = vadd.f32 0.0, %v1131
          %v1133 = vpop.f32.mrb[0].mxu0
          %v1134 = vadd.f32 0.0, %v1133
          %1135 = vmatprep.mubr.bf16.mxu0 0
          %1136 = vmatmul.mubr.bf16.gmra.mrb[0].mxu0 %v627
          %v1137 = vpop.f32.mrb[0].mxu0
          %v1138 = vadd.f32 0.0, %v1137
          %v1139 = vpop.f32.mrb[0].mxu0
          %v1140 = vadd.f32 0.0, %v1139
          %v1141 = vpop.f32.mrb[0].mxu0
          %v1142 = vadd.f32 0.0, %v1141
          %v1143 = vpop.f32.mrb[0].mxu0
          %v1144 = vadd.f32 0.0, %v1143
          %1145 = vmatprep.mubr.bf16.mxu0 0
          %1146 = vmatmul.mubr.bf16.gmra.mrb[0].mxu0 %v630
          %v1147 = vpop.f32.mrb[0].mxu0
          %v1148 = vadd.f32 0.0, %v1147
          %v1149 = vpop.f32.mrb[0].mxu0
          %v1150 = vadd.f32 0.0, %v1149
          %v1151 = vpop.f32.mrb[0].mxu0
          %v1152 = vadd.f32 0.0, %v1151
          %v1153 = vpop.f32.mrb[0].mxu0
          %v1154 = vadd.f32 0.0, %v1153
          %1155 = vmatprep.mubr.bf16.mxu0 0
          %1156 = vmatmul.mubr.bf16.gmra.mrb[0].mxu0 %v633
          %v1157 = vpop.f32.mrb[0].mxu0
          %v1158 = vadd.f32 0.0, %v1157
          %v1159 = vpop.f32.mrb[0].mxu0
          %v1160 = vadd.f32 0.0, %v1159
          %v1161 = vpop.f32.mrb[0].mxu0
          %v1162 = vadd.f32 0.0, %v1161
          %v1163 = vpop.f32.mrb[0].mxu0
          %v1164 = vadd.f32 0.0, %v1163
          %1165 = vmatprep.mubr.bf16.mxu0 0
          %1166 = vmatmul.mubr.bf16.gmra.mrb[0].mxu0 %v636
          %v1167 = vpop.f32.mrb[0].mxu0
          %v1168 = vadd.f32 0.0, %v1167
          %v1169 = vpop.f32.mrb[0].mxu0
          %v1170 = vadd.f32 0.0, %v1169
          %v1171 = vpop.f32.mrb[0].mxu0
          %v1172 = vadd.f32 0.0, %v1171
          %v1173 = vpop.f32.mrb[0].mxu0
          %v1174 = vadd.f32 0.0, %v1173
          %1175 = vmatprep.mubr.bf16.mxu0 0
          %1176 = vmatmul.mubr.bf16.gmra.mrb[0].mxu0 %v639
          %v1177 = vpop.f32.mrb[0].mxu0
          %v1178 = vadd.f32 0.0, %v1177
          %v1179 = vpop.f32.mrb[0].mxu0
          %v1180 = vadd.f32 0.0, %v1179
          %v1181 = vpop.f32.mrb[0].mxu0
          %v1182 = vadd.f32 0.0, %v1181
          %v1183 = vpop.f32.mrb[0].mxu0
          %v1184 = vadd.f32 0.0, %v1183
          %1185 = vmatprep.mubr.bf16.mxu0 0
          %1186 = vmatmul.mubr.bf16.gmra.mrb[0].mxu0 %v642
          %v1187 = vpop.f32.mrb[0].mxu0
          %v1188 = vadd.f32 0.0, %v1187
          %v1189 = vpop.f32.mrb[0].mxu0
          %v1190 = vadd.f32 0.0, %v1189
          %v1191 = vpop.f32.mrb[0].mxu0
          %v1192 = vadd.f32 0.0, %v1191
          %v1193 = vpop.f32.mrb[0].mxu0
          %v1194 = vadd.f32 0.0, %v1193
          %1195 = vmatprep.mubr.bf16.mxu0 0
          %1196 = vmatmul.mubr.bf16.gmra.mrb[0].mxu0 %v645
          %v1197 = vpop.f32.mrb[0].mxu0
          %v1198 = vadd.f32 0.0, %v1197
          %v1199 = vpop.f32.mrb[0].mxu0
          %v1200 = vadd.f32 0.0, %v1199
          %v1201 = vpop.f32.mrb[0].mxu0
          %v1202 = vadd.f32 0.0, %v1201
          %v1203 = vpop.f32.mrb[0].mxu0
          %v1204 = vadd.f32 0.0, %v1203
          %1205 = vmatprep.mubr.bf16.mxu0 0
          %1206 = vmatmul.mubr.bf16.gmra.mrb[0].mxu0 %v648
          %v1207 = vpop.f32.mrb[0].mxu0
          %v1208 = vadd.f32 0.0, %v1207
          %v1209 = vpop.f32.mrb[0].mxu0
          %v1210 = vadd.f32 0.0, %v1209
          %v1211 = vpop.f32.mrb[0].mxu0
          %v1212 = vadd.f32 0.0, %v1211
          %v1213 = vpop.f32.mrb[0].mxu0
          %v1214 = vadd.f32 0.0, %v1213
          %1215 = vmatprep.mubr.bf16.mxu0 0
          %1216 = vmatmul.mubr.bf16.gmra.mrb[0].mxu0 %v651
          %v1217 = vpop.f32.mrb[0].mxu0
          %v1218 = vadd.f32 0.0, %v1217
          %v1219 = vpop.f32.mrb[0].mxu0
          %v1220 = vadd.f32 0.0, %v1219
          %v1221 = vpop.f32.mrb[0].mxu0
          %v1222 = vadd.f32 0.0, %v1221
          %v1223 = vpop.f32.mrb[0].mxu0
          %v1224 = vadd.f32 0.0, %v1223
          %1225 = vmatprep.mubr.bf16.mxu0 0
          %1226 = vmatmul.mubr.bf16.gmra.mrb[0].mxu0 %v654
          %v1227 = vpop.f32.mrb[0].mxu0
          %v1228 = vadd.f32 0.0, %v1227
          %v1229 = vpop.f32.mrb[0].mxu0
          %v1230 = vadd.f32 0.0, %v1229
          %v1231 = vpop.f32.mrb[0].mxu0
          %v1232 = vadd.f32 0.0, %v1231
          %v1233 = vpop.f32.mrb[0].mxu0
          %v1234 = vadd.f32 0.0, %v1233
          %1235 = vmatprep.mubr.bf16.mxu0 0
          %1236 = vmatmul.mubr.bf16.gmra.mrb[0].mxu0 %v657
          %v1237 = vpop.f32.mrb[0].mxu0
          %v1238 = vadd.f32 0.0, %v1237
          %v1239 = vpop.f32.mrb[0].mxu0
          %v1240 = vadd.f32 0.0, %v1239
          %v1241 = vpop.f32.mrb[0].mxu0
          %v1242 = vadd.f32 0.0, %v1241
          %v1243 = vpop.f32.mrb[0].mxu0
          %v1244 = vadd.f32 0.0, %v1243
          %1245 = vmatprep.mubr.bf16.mxu0 0
          %1246 = vmatmul.mubr.bf16.gmra.mrb[0].mxu0 %v660
          %v1247 = vpop.f32.mrb[0].mxu0
          %v1248 = vadd.f32 0.0, %v1247
          %v1249 = vpop.f32.mrb[0].mxu0
          %v1250 = vadd.f32 0.0, %v1249
          %v1251 = vpop.f32.mrb[0].mxu0
          %v1252 = vadd.f32 0.0, %v1251
          %v1253 = vpop.f32.mrb[0].mxu0
          %v1254 = vadd.f32 0.0, %v1253
          %1255 = vmatprep.mubr.bf16.mxu0 0
          %1256 = vmatmul.mubr.bf16.gmra.mrb[0].mxu0 %v663
          %v1257 = vpop.f32.mrb[0].mxu0
          %v1258 = vadd.f32 0.0, %v1257
          %v1259 = vpop.f32.mrb[0].mxu0
          %v1260 = vadd.f32 0.0, %v1259
          %v1261 = vpop.f32.mrb[0].mxu0
          %v1262 = vadd.f32 0.0, %v1261
          %v1263 = vpop.f32.mrb[0].mxu0
          %v1264 = vadd.f32 0.0, %v1263
          %1265 = vmatprep.mubr.bf16.mxu0 0
          %1266 = vmatmul.mubr.bf16.gmra.mrb[0].mxu0 %v666
          %v1267 = vpop.f32.mrb[0].mxu0
          %v1268 = vadd.f32 0.0, %v1267
          %v1269 = vpop.f32.mrb[0].mxu0
          %v1270 = vadd.f32 0.0, %v1269
          %v1271 = vpop.f32.mrb[0].mxu0
          %v1272 = vadd.f32 0.0, %v1271
          %v1273 = vpop.f32.mrb[0].mxu0
          %v1274 = vadd.f32 0.0, %v1273
          %1275 = vmatprep.mubr.bf16.mxu0 0
          %1276 = vmatmul.mubr.bf16.gmra.mrb[0].mxu0 %v669
          %v1277 = vpop.f32.mrb[0].mxu0
          %v1278 = vadd.f32 0.0, %v1277
          %v1279 = vpop.f32.mrb[0].mxu0
          %v1280 = vadd.f32 0.0, %v1279
          %v1281 = vpop.f32.mrb[0].mxu0
          %v1282 = vadd.f32 0.0, %v1281
          %v1283 = vpop.f32.mrb[0].mxu0
          %v1284 = vadd.f32 0.0, %v1283
          %1285 = vmatprep.mubr.bf16.mxu0 0
          %1286 = vmatmul.mubr.bf16.gmra.mrb[0].mxu0 %v672
          %v1287 = vpop.f32.mrb[0].mxu0
          %v1288 = vadd.f32 0.0, %v1287
          %v1289 = vpop.f32.mrb[0].mxu0
          %v1290 = vadd.f32 0.0, %v1289
          %v1291 = vpop.f32.mrb[0].mxu0
          %v1292 = vadd.f32 0.0, %v1291
          %v1293 = vpop.f32.mrb[0].mxu0
          %v1294 = vadd.f32 0.0, %v1293
          %1295 = vmatprep.mubr.bf16.mxu0 0
          %1296 = vmatmul.mubr.bf16.gmra.mrb[0].mxu0 %v675
          %v1297 = vpop.f32.mrb[0].mxu0
          %v1298 = vadd.f32 0.0, %v1297
          %v1299 = vpop.f32.mrb[0].mxu0
          %v1300 = vadd.f32 0.0, %v1299
          %v1301 = vpop.f32.mrb[0].mxu0
          %v1302 = vadd.f32 0.0, %v1301
          %v1303 = vpop.f32.mrb[0].mxu0
          %v1304 = vadd.f32 0.0, %v1303
          %1305 = vmatprep.mubr.bf16.mxu0 0
          %1306 = vmatmul.mubr.bf16.gmra.mrb[0].mxu0 %v678
          %v1307 = vpop.f32.mrb[0].mxu0
          %v1308 = vadd.f32 0.0, %v1307
          %v1309 = vpop.f32.mrb[0].mxu0
          %v1310 = vadd.f32 0.0, %v1309
          %v1311 = vpop.f32.mrb[0].mxu0
          %v1312 = vadd.f32 0.0, %v1311
          %v1313 = vpop.f32.mrb[0].mxu0
          %v1314 = vadd.f32 0.0, %v1313
          %1315 = vmatprep.mubr.bf16.mxu0 0
          %1316 = vmatmul.mubr.bf16.gmra.mrb[0].mxu0 %v681
          %v1317 = vpop.f32.mrb[0].mxu0
          %v1318 = vadd.f32 0.0, %v1317
          %v1319 = vpop.f32.mrb[0].mxu0
          %v1320 = vadd.f32 0.0, %v1319
          %v1321 = vpop.f32.mrb[0].mxu0
          %v1322 = vadd.f32 0.0, %v1321
          %v1323 = vpop.f32.mrb[0].mxu0
          %v1324 = vadd.f32 0.0, %v1323
          %1325 = vmatprep.mubr.bf16.mxu0 0
          %1326 = vmatmul.mubr.bf16.gmra.mrb[0].mxu0 %v684
          %v1327 = vpop.f32.mrb[0].mxu0
          %v1328 = vadd.f32 0.0, %v1327
          %v1329 = vpop.f32.mrb[0].mxu0
          %v1330 = vadd.f32 0.0, %v1329
          %v1331 = vpop.f32.mrb[0].mxu0
          %v1332 = vadd.f32 0.0, %v1331
          %v1333 = vpop.f32.mrb[0].mxu0
          %v1334 = vadd.f32 0.0, %v1333
          %1335 = vmatprep.mubr.bf16.mxu0 0
          %1336 = vmatmul.mubr.bf16.gmra.mrb[0].mxu0 %v687
          %v1337 = vpop.f32.mrb[0].mxu0
          %v1338 = vadd.f32 0.0, %v1337
          %v1339 = vpop.f32.mrb[0].mxu0
          %v1340 = vadd.f32 0.0, %v1339
          %v1341 = vpop.f32.mrb[0].mxu0
          %v1342 = vadd.f32 0.0, %v1341
          %v1343 = vpop.f32.mrb[0].mxu0
          %v1344 = vadd.f32 0.0, %v1343
          %1345 = vmatprep.mubr.bf16.mxu0 0
          %1346 = vmatmul.mubr.bf16.gmra.mrb[0].mxu0 %v690
          %v1347 = vpop.f32.mrb[0].mxu0
          %v1348 = vadd.f32 0.0, %v1347
          %v1349 = vpop.f32.mrb[0].mxu0
          %v1350 = vadd.f32 0.0, %v1349
          %v1351 = vpop.f32.mrb[0].mxu0
          %v1352 = vadd.f32 0.0, %v1351
          %v1353 = vpop.f32.mrb[0].mxu0
          %v1354 = vadd.f32 0.0, %v1353
          %1355 = vmatprep.mubr.bf16.mxu0 0
          %1356 = vmatmul.mubr.bf16.gmra.mrb[0].mxu0 %v693
          %v1357 = vpop.f32.mrb[0].mxu0
          %v1358 = vadd.f32 0.0, %v1357
          %v1359 = vpop.f32.mrb[0].mxu0
          %v1360 = vadd.f32 0.0, %v1359
          %v1361 = vpop.f32.mrb[0].mxu0
          %v1362 = vadd.f32 0.0, %v1361
          %v1363 = vpop.f32.mrb[0].mxu0
          %v1364 = vadd.f32 0.0, %v1363
          %1365 = vmatprep.mubr.bf16.mxu0 0
          %1366 = vmatmul.mubr.bf16.gmra.mrb[0].mxu0 %v696
          %v1367 = vpop.f32.mrb[0].mxu0
          %v1368 = vadd.f32 0.0, %v1367
          %v1369 = vpop.f32.mrb[0].mxu0
          %v1370 = vadd.f32 0.0, %v1369
          %v1371 = vpop.f32.mrb[0].mxu0
          %v1372 = vadd.f32 0.0, %v1371
          %v1373 = vpop.f32.mrb[0].mxu0
          %v1374 = vadd.f32 0.0, %v1373
          %1375 = vmatprep.mubr.bf16.mxu0 0
          %1376 = vmatmul.mubr.bf16.gmra.mrb[0].mxu0 %v699
          %v1377 = vpop.f32.mrb[0].mxu0
          %v1378 = vadd.f32 0.0, %v1377
          %v1379 = vpop.f32.mrb[0].mxu0
          %v1380 = vadd.f32 0.0, %v1379
          %v1381 = vpop.f32.mrb[0].mxu0
          %v1382 = vadd.f32 0.0, %v1381
          %v1383 = vpop.f32.mrb[0].mxu0
          %v1384 = vadd.f32 0.0, %v1383
          %1385 = vmatprep.mubr.bf16.mxu0 0
          %1386 = vmatmul.mubr.bf16.gmra.mrb[0].mxu0 %v702
          %v1387 = vpop.f32.mrb[0].mxu0
          %v1388 = vadd.f32 0.0, %v1387
          %v1389 = vpop.f32.mrb[0].mxu0
          %v1390 = vadd.f32 0.0, %v1389
          %v1391 = vpop.f32.mrb[0].mxu0
          %v1392 = vadd.f32 0.0, %v1391
          %v1393 = vpop.f32.mrb[0].mxu0
          %v1394 = vadd.f32 0.0, %v1393
          %1395 = vmatprep.mubr.bf16.mxu0 0
          %1396 = vmatmul.mubr.bf16.gmra.mrb[0].mxu0 %v705
          %v1397 = vpop.f32.mrb[0].mxu0
          %v1398 = vadd.f32 0.0, %v1397
          %v1399 = vpop.f32.mrb[0].mxu0
          %v1400 = vadd.f32 0.0, %v1399
          %v1401 = vpop.f32.mrb[0].mxu0
          %v1402 = vadd.f32 0.0, %v1401
          %v1403 = vpop.f32.mrb[0].mxu0
          %v1404 = vadd.f32 0.0, %v1403
          %1405 = vmatprep.mubr.bf16.mxu0 0
          %1406 = vmatmul.mubr.bf16.gmra.mrb[0].mxu0 %v708
          %v1407 = vpop.f32.mrb[0].mxu0
          %v1408 = vadd.f32 0.0, %v1407
          %v1409 = vpop.f32.mrb[0].mxu0
          %v1410 = vadd.f32 0.0, %v1409
          %v1411 = vpop.f32.mrb[0].mxu0
          %v1412 = vadd.f32 0.0, %v1411
          %v1413 = vpop.f32.mrb[0].mxu0
          %v1414 = vadd.f32 0.0, %v1413
          %1415 = vdwg.mxu0
          %s1416 = sadd.s32 %s225, 512
          %p1417 = scmp.le.s32.totalorder %s1416, %s223
          // Predicated region
          $region37: #{tpu_custom_call.1} parent=35 // pred_check
            %p1418 = pneg %p1417
          $region38: #{tpu_custom_call.1} parent=35 // pred_check_branch
            %1420 = sbr.rel (%p1418) target = $region40
          $region39: #{tpu_custom_call.1} parent=35 // pred_region
            %v1421 = vld [vmem:[#allocation2] sm:$0xff]
            %v1422 = vld [vmem:[#allocation2 + $0x8] sm:$0xff]
            %v1423 = vld [vmem:[#allocation2 + $0x10] sm:$0xff]
            %v1424 = vld [vmem:[#allocation2 + $0x18] sm:$0xff]
            %v1425 = vld [vmem:[#allocation2 + $0x20] sm:$0xff]
            %v1426 = vld [vmem:[#allocation2 + $0x28] sm:$0xff]
            %v1427 = vld [vmem:[#allocation2 + $0x30] sm:$0xff]
            %v1428 = vld [vmem:[#allocation2 + $0x38] sm:$0xff]
            %v1429 = vld [vmem:[#allocation2 + $0x40] sm:$0xff]
            %v1430 = vld [vmem:[#allocation2 + $0x48] sm:$0xff]
            %v1431 = vld [vmem:[#allocation2 + $0x50] sm:$0xff]
            %v1432 = vld [vmem:[#allocation2 + $0x58] sm:$0xff]
            %v1433 = vld [vmem:[#allocation2 + $0x60] sm:$0xff]
            %v1434 = vld [vmem:[#allocation2 + $0x68] sm:$0xff]
            %v1435 = vld [vmem:[#allocation2 + $0x70] sm:$0xff]
            %v1436 = vld [vmem:[#allocation2 + $0x78] sm:$0xff]
            %v1437 = vld [vmem:[#allocation2 + $0x80] sm:$0xff]
            %v1438 = vld [vmem:[#allocation2 + $0x88] sm:$0xff]
            %v1439 = vld [vmem:[#allocation2 + $0x90] sm:$0xff]
            %v1440 = vld [vmem:[#allocation2 + $0x98] sm:$0xff]
            %v1441 = vld [vmem:[#allocation2 + $0xa0] sm:$0xff]
            %v1442 = vld [vmem:[#allocation2 + $0xa8] sm:$0xff]
            %v1443 = vld [vmem:[#allocation2 + $0xb0] sm:$0xff]
            %v1444 = vld [vmem:[#allocation2 + $0xb8] sm:$0xff]
            %v1445 = vld [vmem:[#allocation2 + $0xc0] sm:$0xff]
            %v1446 = vld [vmem:[#allocation2 + $0xc8] sm:$0xff]
            %v1447 = vld [vmem:[#allocation2 + $0xd0] sm:$0xff]
            %v1448 = vld [vmem:[#allocation2 + $0xd8] sm:$0xff]
            %v1449 = vld [vmem:[#allocation2 + $0xe0] sm:$0xff]
            %v1450 = vld [vmem:[#allocation2 + $0xe8] sm:$0xff]
            %v1451 = vld [vmem:[#allocation2 + $0xf0] sm:$0xff]
            %v1452 = vld [vmem:[#allocation2 + $0xf8] sm:$0xff]
            %v1453 = vld [vmem:[#allocation2 + $0x100] sm:$0xff]
            %v1454 = vld [vmem:[#allocation2 + $0x108] sm:$0xff]
            %v1455 = vld [vmem:[#allocation2 + $0x110] sm:$0xff]
            %v1456 = vld [vmem:[#allocation2 + $0x118] sm:$0xff]
            %v1457 = vld [vmem:[#allocation2 + $0x120] sm:$0xff]
            %v1458 = vld [vmem:[#allocation2 + $0x128] sm:$0xff]
            %v1459 = vld [vmem:[#allocation2 + $0x130] sm:$0xff]
            %v1460 = vld [vmem:[#allocation2 + $0x138] sm:$0xff]
            %v1461 = vld [vmem:[#allocation2 + $0x140] sm:$0xff]
            %v1462 = vld [vmem:[#allocation2 + $0x148] sm:$0xff]
            %v1463 = vld [vmem:[#allocation2 + $0x150] sm:$0xff]
            %v1464 = vld [vmem:[#allocation2 + $0x158] sm:$0xff]
            %v1465 = vld [vmem:[#allocation2 + $0x160] sm:$0xff]
            %v1466 = vld [vmem:[#allocation2 + $0x168] sm:$0xff]
            %v1467 = vld [vmem:[#allocation2 + $0x170] sm:$0xff]
            %v1468 = vld [vmem:[#allocation2 + $0x178] sm:$0xff]
            %v1469 = vld [vmem:[#allocation2 + $0x180] sm:$0xff]
            %v1470 = vld [vmem:[#allocation2 + $0x188] sm:$0xff]
            %v1471 = vld [vmem:[#allocation2 + $0x190] sm:$0xff]
            %v1472 = vld [vmem:[#allocation2 + $0x198] sm:$0xff]
            %v1473 = vld [vmem:[#allocation2 + $0x1a0] sm:$0xff]
            %v1474 = vld [vmem:[#allocation2 + $0x1a8] sm:$0xff]
            %v1475 = vld [vmem:[#allocation2 + $0x1b0] sm:$0xff]
            %v1476 = vld [vmem:[#allocation2 + $0x1b8] sm:$0xff]
            %v1477 = vld [vmem:[#allocation2 + $0x1c0] sm:$0xff]
            %v1478 = vld [vmem:[#allocation2 + $0x1c8] sm:$0xff]
            %v1479 = vld [vmem:[#allocation2 + $0x1d0] sm:$0xff]
            %v1480 = vld [vmem:[#allocation2 + $0x1d8] sm:$0xff]
            %v1481 = vld [vmem:[#allocation2 + $0x1e0] sm:$0xff]
            %v1482 = vld [vmem:[#allocation2 + $0x1e8] sm:$0xff]
            %v1483 = vld [vmem:[#allocation2 + $0x1f0] sm:$0xff]
            %v1484 = vld [vmem:[#allocation2 + $0x1f8] sm:$0xff]
            %v1485 = vmax.f32 %v745, %v747
            %v1486 = vmax.f32 %v1485, %v1098
            %v1487 = vmax.f32 %v1486, %v1100
            %1488 = vmax.xlane.f32.xlu0 %v1487
            %v1489 = vpop.xlane.xlu0 %1488
            %v1490 = vmax.f32 %v749, %v751
            %v1491 = vmax.f32 %v1490, %v1102
            %v1492 = vmax.f32 %v1491, %v1104
            %1493 = vmax.xlane.f32.xlu0 %v1492
            %v1494 = vpop.xlane.xlu0 %1493
            %v1495 = vmax.f32 %v755, %v757
            %v1496 = vmax.f32 %v1495, %v1108
            %v1497 = vmax.f32 %v1496, %v1110
            %1498 = vmax.xlane.f32.xlu0 %v1497
            %v1499 = vpop.xlane.xlu0 %1498
            %v1500 = vmax.f32 %v759, %v761
            %v1501 = vmax.f32 %v1500, %v1112
            %v1502 = vmax.f32 %v1501, %v1114
            %1503 = vmax.xlane.f32.xlu0 %v1502
            %v1504 = vpop.xlane.xlu0 %1503
            %v1505 = vmax.f32 %v765, %v767
            %v1506 = vmax.f32 %v1505, %v1118
            %v1507 = vmax.f32 %v1506, %v1120
            %1508 = vmax.xlane.f32.xlu0 %v1507
            %v1509 = vpop.xlane.xlu0 %1508
            %v1510 = vmax.f32 %v769, %v771
            %v1511 = vmax.f32 %v1510, %v1122
            %v1512 = vmax.f32 %v1511, %v1124
            %1513 = vmax.xlane.f32.xlu0 %v1512
            %v1514 = vpop.xlane.xlu0 %1513
            %v1515 = vmax.f32 %v775, %v777
            %v1516 = vmax.f32 %v1515, %v1128
            %v1517 = vmax.f32 %v1516, %v1130
            %1518 = vmax.xlane.f32.xlu0 %v1517
            %v1519 = vpop.xlane.xlu0 %1518
            %v1520 = vmax.f32 %v779, %v781
            %v1521 = vmax.f32 %v1520, %v1132
            %v1522 = vmax.f32 %v1521, %v1134
            %1523 = vmax.xlane.f32.xlu0 %v1522
            %v1524 = vpop.xlane.xlu0 %1523
            %v1525 = vmax.f32 %v785, %v787
            %v1526 = vmax.f32 %v1525, %v1138
            %v1527 = vmax.f32 %v1526, %v1140
            %1528 = vmax.xlane.f32.xlu0 %v1527
            %v1529 = vpop.xlane.xlu0 %1528
            %v1530 = vmax.f32 %v789, %v791
            %v1531 = vmax.f32 %v1530, %v1142
            %v1532 = vmax.f32 %v1531, %v1144
            %1533 = vmax.xlane.f32.xlu0 %v1532
            %v1534 = vpop.xlane.xlu0 %1533
            %v1535 = vmax.f32 %v795, %v797
            %v1536 = vmax.f32 %v1535, %v1148
            %v1537 = vmax.f32 %v1536, %v1150
            %1538 = vmax.xlane.f32.xlu0 %v1537
            %v1539 = vpop.xlane.xlu0 %1538
            %v1540 = vmax.f32 %v799, %v801
            %v1541 = vmax.f32 %v1540, %v1152
            %v1542 = vmax.f32 %v1541, %v1154
            %1543 = vmax.xlane.f32.xlu0 %v1542
            %v1544 = vpop.xlane.xlu0 %1543
            %v1545 = vmax.f32 %v805, %v807
            %v1546 = vmax.f32 %v1545, %v1158
            %v1547 = vmax.f32 %v1546, %v1160
            %1548 = vmax.xlane.f32.xlu0 %v1547
            %v1549 = vpop.xlane.xlu0 %1548
            %v1550 = vmax.f32 %v809, %v811
            %v1551 = vmax.f32 %v1550, %v1162
            %v1552 = vmax.f32 %v1551, %v1164
            %1553 = vmax.xlane.f32.xlu0 %v1552
            %v1554 = vpop.xlane.xlu0 %1553
            %v1555 = vmax.f32 %v815, %v817
            %v1556 = vmax.f32 %v1555, %v1168
            %v1557 = vmax.f32 %v1556, %v1170
            %1558 = vmax.xlane.f32.xlu0 %v1557
            %v1559 = vpop.xlane.xlu0 %1558
            %v1560 = vmax.f32 %v819, %v821
            %v1561 = vmax.f32 %v1560, %v1172
            %v1562 = vmax.f32 %v1561, %v1174
            %1563 = vmax.xlane.f32.xlu0 %v1562
            %v1564 = vpop.xlane.xlu0 %1563
            %v1565 = vmax.f32 %v825, %v827
            %v1566 = vmax.f32 %v1565, %v1178
            %v1567 = vmax.f32 %v1566, %v1180
            %1568 = vmax.xlane.f32.xlu0 %v1567
            %v1569 = vpop.xlane.xlu0 %1568
            %v1570 = vmax.f32 %v829, %v831
            %v1571 = vmax.f32 %v1570, %v1182
            %v1572 = vmax.f32 %v1571, %v1184
            %1573 = vmax.xlane.f32.xlu0 %v1572
            %v1574 = vpop.xlane.xlu0 %1573
            %v1575 = vmax.f32 %v835, %v837
            %v1576 = vmax.f32 %v1575, %v1188
            %v1577 = vmax.f32 %v1576, %v1190
            %1578 = vmax.xlane.f32.xlu0 %v1577
            %v1579 = vpop.xlane.xlu0 %1578
            %v1580 = vmax.f32 %v839, %v841
            %v1581 = vmax.f32 %v1580, %v1192
            %v1582 = vmax.f32 %v1581, %v1194
            %1583 = vmax.xlane.f32.xlu0 %v1582
            %v1584 = vpop.xlane.xlu0 %1583
            %v1585 = vmax.f32 %v845, %v847
            %v1586 = vmax.f32 %v1585, %v1198
            %v1587 = vmax.f32 %v1586, %v1200
            %1588 = vmax.xlane.f32.xlu0 %v1587
            %v1589 = vpop.xlane.xlu0 %1588
            %v1590 = vmax.f32 %v849, %v851
            %v1591 = vmax.f32 %v1590, %v1202
            %v1592 = vmax.f32 %v1591, %v1204
            %1593 = vmax.xlane.f32.xlu0 %v1592
            %v1594 = vpop.xlane.xlu0 %1593
            %v1595 = vmax.f32 %v855, %v857
            %v1596 = vmax.f32 %v1595, %v1208
            %v1597 = vmax.f32 %v1596, %v1210
            %1598 = vmax.xlane.f32.xlu0 %v1597
            %v1599 = vpop.xlane.xlu0 %1598
            %v1600 = vmax.f32 %v859, %v861
            %v1601 = vmax.f32 %v1600, %v1212
            %v1602 = vmax.f32 %v1601, %v1214
            %1603 = vmax.xlane.f32.xlu0 %v1602
            %v1604 = vpop.xlane.xlu0 %1603
            %v1605 = vmax.f32 %v865, %v867
            %v1606 = vmax.f32 %v1605, %v1218
            %v1607 = vmax.f32 %v1606, %v1220
            %1608 = vmax.xlane.f32.xlu0 %v1607
            %v1609 = vpop.xlane.xlu0 %1608
            %v1610 = vmax.f32 %v869, %v871
            %v1611 = vmax.f32 %v1610, %v1222
            %v1612 = vmax.f32 %v1611, %v1224
            %1613 = vmax.xlane.f32.xlu0 %v1612
            %v1614 = vpop.xlane.xlu0 %1613
            %v1615 = vmax.f32 %v875, %v877
            %v1616 = vmax.f32 %v1615, %v1228
            %v1617 = vmax.f32 %v1616, %v1230
            %1618 = vmax.xlane.f32.xlu0 %v1617
            %v1619 = vpop.xlane.xlu0 %1618
            %v1620 = vmax.f32 %v879, %v881
            %v1621 = vmax.f32 %v1620, %v1232
            %v1622 = vmax.f32 %v1621, %v1234
            %1623 = vmax.xlane.f32.xlu0 %v1622
            %v1624 = vpop.xlane.xlu0 %1623
            %v1625 = vmax.f32 %v885, %v887
            %v1626 = vmax.f32 %v1625, %v1238
            %v1627 = vmax.f32 %v1626, %v1240
            %1628 = vmax.xlane.f32.xlu0 %v1627
            %v1629 = vpop.xlane.xlu0 %1628
            %v1630 = vmax.f32 %v889, %v891
            %v1631 = vmax.f32 %v1630, %v1242
            %v1632 = vmax.f32 %v1631, %v1244
            %1633 = vmax.xlane.f32.xlu0 %v1632
            %v1634 = vpop.xlane.xlu0 %1633
            %v1635 = vmax.f32 %v895, %v897
            %v1636 = vmax.f32 %v1635, %v1248
            %v1637 = vmax.f32 %v1636, %v1250
            %1638 = vmax.xlane.f32.xlu0 %v1637
            %v1639 = vpop.xlane.xlu0 %1638
            %v1640 = vmax.f32 %v899, %v901
            %v1641 = vmax.f32 %v1640, %v1252
            %v1642 = vmax.f32 %v1641, %v1254
            %1643 = vmax.xlane.f32.xlu0 %v1642
            %v1644 = vpop.xlane.xlu0 %1643
            %v1645 = vmax.f32 %v905, %v907
            %v1646 = vmax.f32 %v1645, %v1258
            %v1647 = vmax.f32 %v1646, %v1260
            %1648 = vmax.xlane.f32.xlu0 %v1647
            %v1649 = vpop.xlane.xlu0 %1648
            %v1650 = vmax.f32 %v909, %v911
            %v1651 = vmax.f32 %v1650, %v1262
            %v1652 = vmax.f32 %v1651, %v1264
            %1653 = vmax.xlane.f32.xlu0 %v1652
            %v1654 = vpop.xlane.xlu0 %1653
            %v1655 = vmax.f32 %v915, %v917
            %v1656 = vmax.f32 %v1655, %v1268
            %v1657 = vmax.f32 %v1656, %v1270
            %1658 = vmax.xlane.f32.xlu0 %v1657
            %v1659 = vpop.xlane.xlu0 %1658
            %v1660 = vmax.f32 %v919, %v921
            %v1661 = vmax.f32 %v1660, %v1272
            %v1662 = vmax.f32 %v1661, %v1274
            %1663 = vmax.xlane.f32.xlu0 %v1662
            %v1664 = vpop.xlane.xlu0 %1663
            %v1665 = vmax.f32 %v925, %v927
            %v1666 = vmax.f32 %v1665, %v1278
            %v1667 = vmax.f32 %v1666, %v1280
            %1668 = vmax.xlane.f32.xlu0 %v1667
            %v1669 = vpop.xlane.xlu0 %1668
            %v1670 = vmax.f32 %v929, %v931
            %v1671 = vmax.f32 %v1670, %v1282
            %v1672 = vmax.f32 %v1671, %v1284
            %1673 = vmax.xlane.f32.xlu0 %v1672
            %v1674 = vpop.xlane.xlu0 %1673
            %v1675 = vmax.f32 %v935, %v937
            %v1676 = vmax.f32 %v1675, %v1288
            %v1677 = vmax.f32 %v1676, %v1290
            %1678 = vmax.xlane.f32.xlu0 %v1677
            %v1679 = vpop.xlane.xlu0 %1678
            %v1680 = vmax.f32 %v939, %v941
            %v1681 = vmax.f32 %v1680, %v1292
            %v1682 = vmax.f32 %v1681, %v1294
            %1683 = vmax.xlane.f32.xlu0 %v1682
            %v1684 = vpop.xlane.xlu0 %1683
            %v1685 = vmax.f32 %v945, %v947
            %v1686 = vmax.f32 %v1685, %v1298
            %v1687 = vmax.f32 %v1686, %v1300
            %1688 = vmax.xlane.f32.xlu0 %v1687
            %v1689 = vpop.xlane.xlu0 %1688
            %v1690 = vmax.f32 %v949, %v951
            %v1691 = vmax.f32 %v1690, %v1302
            %v1692 = vmax.f32 %v1691, %v1304
            %1693 = vmax.xlane.f32.xlu0 %v1692
            %v1694 = vpop.xlane.xlu0 %1693
            %v1695 = vmax.f32 %v955, %v957
            %v1696 = vmax.f32 %v1695, %v1308
            %v1697 = vmax.f32 %v1696, %v1310
            %1698 = vmax.xlane.f32.xlu0 %v1697
            %v1699 = vpop.xlane.xlu0 %1698
            %v1700 = vmax.f32 %v959, %v961
            %v1701 = vmax.f32 %v1700, %v1312
            %v1702 = vmax.f32 %v1701, %v1314
            %1703 = vmax.xlane.f32.xlu0 %v1702
            %v1704 = vpop.xlane.xlu0 %1703
            %v1705 = vmax.f32 %v965, %v967
            %v1706 = vmax.f32 %v1705, %v1318
            %v1707 = vmax.f32 %v1706, %v1320
            %1708 = vmax.xlane.f32.xlu0 %v1707
            %v1709 = vpop.xlane.xlu0 %1708
            %v1710 = vmax.f32 %v969, %v971
            %v1711 = vmax.f32 %v1710, %v1322
            %v1712 = vmax.f32 %v1711, %v1324
            %1713 = vmax.xlane.f32.xlu0 %v1712
            %v1714 = vpop.xlane.xlu0 %1713
            %v1715 = vmax.f32 %v975, %v977
            %v1716 = vmax.f32 %v1715, %v1328
            %v1717 = vmax.f32 %v1716, %v1330
            %1718 = vmax.xlane.f32.xlu0 %v1717
            %v1719 = vpop.xlane.xlu0 %1718
            %v1720 = vmax.f32 %v979, %v981
            %v1721 = vmax.f32 %v1720, %v1332
            %v1722 = vmax.f32 %v1721, %v1334
            %1723 = vmax.xlane.f32.xlu0 %v1722
            %v1724 = vpop.xlane.xlu0 %1723
            %v1725 = vmax.f32 %v985, %v987
            %v1726 = vmax.f32 %v1725, %v1338
            %v1727 = vmax.f32 %v1726, %v1340
            %1728 = vmax.xlane.f32.xlu0 %v1727
            %v1729 = vpop.xlane.xlu0 %1728
            %v1730 = vmax.f32 %v989, %v991
            %v1731 = vmax.f32 %v1730, %v1342
            %v1732 = vmax.f32 %v1731, %v1344
            %1733 = vmax.xlane.f32.xlu0 %v1732
            %v1734 = vpop.xlane.xlu0 %1733
            %v1735 = vmax.f32 %v995, %v997
            %v1736 = vmax.f32 %v1735, %v1348
            %v1737 = vmax.f32 %v1736, %v1350
            %1738 = vmax.xlane.f32.xlu0 %v1737
            %v1739 = vpop.xlane.xlu0 %1738
            %v1740 = vmax.f32 %v999, %v1001
            %v1741 = vmax.f32 %v1740, %v1352
            %v1742 = vmax.f32 %v1741, %v1354
            %1743 = vmax.xlane.f32.xlu0 %v1742
            %v1744 = vpop.xlane.xlu0 %1743
            %v1745 = vmax.f32 %v1005, %v1007
            %v1746 = vmax.f32 %v1745, %v1358
            %v1747 = vmax.f32 %v1746, %v1360
            %1748 = vmax.xlane.f32.xlu0 %v1747
            %v1749 = vpop.xlane.xlu0 %1748
            %v1750 = vmax.f32 %v1009, %v1011
            %v1751 = vmax.f32 %v1750, %v1362
            %v1752 = vmax.f32 %v1751, %v1364
            %1753 = vmax.xlane.f32.xlu0 %v1752
            %v1754 = vpop.xlane.xlu0 %1753
            %v1755 = vmax.f32 %v1015, %v1017
            %v1756 = vmax.f32 %v1755, %v1368
            %v1757 = vmax.f32 %v1756, %v1370
            %1758 = vmax.xlane.f32.xlu0 %v1757
            %v1759 = vpop.xlane.xlu0 %1758
            %v1760 = vmax.f32 %v1019, %v1021
            %v1761 = vmax.f32 %v1760, %v1372
            %v1762 = vmax.f32 %v1761, %v1374
            %1763 = vmax.xlane.f32.xlu0 %v1762
            %v1764 = vpop.xlane.xlu0 %1763
            %v1765 = vmax.f32 %v1025, %v1027
            %v1766 = vmax.f32 %v1765, %v1378
            %v1767 = vmax.f32 %v1766, %v1380
            %1768 = vmax.xlane.f32.xlu0 %v1767
            %v1769 = vpop.xlane.xlu0 %1768
            %v1770 = vmax.f32 %v1029, %v1031
            %v1771 = vmax.f32 %v1770, %v1382
            %v1772 = vmax.f32 %v1771, %v1384
            %1773 = vmax.xlane.f32.xlu0 %v1772
            %v1774 = vpop.xlane.xlu0 %1773
            %v1775 = vmax.f32 %v1035, %v1037
            %v1776 = vmax.f32 %v1775, %v1388
            %v1777 = vmax.f32 %v1776, %v1390
            %1778 = vmax.xlane.f32.xlu0 %v1777
            %v1779 = vpop.xlane.xlu0 %1778
            %v1780 = vmax.f32 %v1039, %v1041
            %v1781 = vmax.f32 %v1780, %v1392
            %v1782 = vmax.f32 %v1781, %v1394
            %1783 = vmax.xlane.f32.xlu0 %v1782
            %v1784 = vpop.xlane.xlu0 %1783
            %v1785 = vmax.f32 %v1045, %v1047
            %v1786 = vmax.f32 %v1785, %v1398
            %v1787 = vmax.f32 %v1786, %v1400
            %1788 = vmax.xlane.f32.xlu0 %v1787
            %v1789 = vpop.xlane.xlu0 %1788
            %v1790 = vmax.f32 %v1049, %v1051
            %v1791 = vmax.f32 %v1790, %v1402
            %v1792 = vmax.f32 %v1791, %v1404
            %1793 = vmax.xlane.f32.xlu0 %v1792
            %v1794 = vpop.xlane.xlu0 %1793
            %v1795 = vmax.f32 %v1055, %v1057
            %v1796 = vmax.f32 %v1795, %v1408
            %v1797 = vmax.f32 %v1796, %v1410
            %1798 = vmax.xlane.f32.xlu0 %v1797
            %v1799 = vpop.xlane.xlu0 %1798
            %v1800 = vmax.f32 %v1059, %v1061
            %v1801 = vmax.f32 %v1800, %v1412
            %v1802 = vmax.f32 %v1801, %v1414
            %1803 = vmax.xlane.f32.xlu0 %v1802
            %v1804 = vpop.xlane.xlu0 %1803
            %v1805 = vmax.f32 %v1421, %v1489
            %v1806 = vmax.f32 %v1422, %v1494
            %v1807 = vmax.f32 %v1423, %v1499
            %v1808 = vmax.f32 %v1424, %v1504
            %v1809 = vmax.f32 %v1425, %v1509
            %v1810 = vmax.f32 %v1426, %v1514
            %v1811 = vmax.f32 %v1427, %v1519
            %v1812 = vmax.f32 %v1428, %v1524
            %v1813 = vmax.f32 %v1429, %v1529
            %v1814 = vmax.f32 %v1430, %v1534
            %v1815 = vmax.f32 %v1431, %v1539
            %v1816 = vmax.f32 %v1432, %v1544
            %v1817 = vmax.f32 %v1433, %v1549
            %v1818 = vmax.f32 %v1434, %v1554
            %v1819 = vmax.f32 %v1435, %v1559
            %v1820 = vmax.f32 %v1436, %v1564
            %v1821 = vmax.f32 %v1437, %v1569
            %v1822 = vmax.f32 %v1438, %v1574
            %v1823 = vmax.f32 %v1439, %v1579
            %v1824 = vmax.f32 %v1440, %v1584
            %v1825 = vmax.f32 %v1441, %v1589
            %v1826 = vmax.f32 %v1442, %v1594
            %v1827 = vmax.f32 %v1443, %v1599
            %v1828 = vmax.f32 %v1444, %v1604
            %v1829 = vmax.f32 %v1445, %v1609
            %v1830 = vmax.f32 %v1446, %v1614
            %v1831 = vmax.f32 %v1447, %v1619
            %v1832 = vmax.f32 %v1448, %v1624
            %v1833 = vmax.f32 %v1449, %v1629
            %v1834 = vmax.f32 %v1450, %v1634
            %v1835 = vmax.f32 %v1451, %v1639
            %v1836 = vmax.f32 %v1452, %v1644
            %v1837 = vmax.f32 %v1453, %v1649
            %v1838 = vmax.f32 %v1454, %v1654
            %v1839 = vmax.f32 %v1455, %v1659
            %v1840 = vmax.f32 %v1456, %v1664
            %v1841 = vmax.f32 %v1457, %v1669
            %v1842 = vmax.f32 %v1458, %v1674
            %v1843 = vmax.f32 %v1459, %v1679
            %v1844 = vmax.f32 %v1460, %v1684
            %v1845 = vmax.f32 %v1461, %v1689
            %v1846 = vmax.f32 %v1462, %v1694
            %v1847 = vmax.f32 %v1463, %v1699
            %v1848 = vmax.f32 %v1464, %v1704
            %v1849 = vmax.f32 %v1465, %v1709
            %v1850 = vmax.f32 %v1466, %v1714
            %v1851 = vmax.f32 %v1467, %v1719
            %v1852 = vmax.f32 %v1468, %v1724
            %v1853 = vmax.f32 %v1469, %v1729
            %v1854 = vmax.f32 %v1470, %v1734
            %v1855 = vmax.f32 %v1471, %v1739
            %v1856 = vmax.f32 %v1472, %v1744
            %v1857 = vmax.f32 %v1473, %v1749
            %v1858 = vmax.f32 %v1474, %v1754
            %v1859 = vmax.f32 %v1475, %v1759
            %v1860 = vmax.f32 %v1476, %v1764
            %v1861 = vmax.f32 %v1477, %v1769
            %v1862 = vmax.f32 %v1478, %v1774
            %v1863 = vmax.f32 %v1479, %v1779
            %v1864 = vmax.f32 %v1480, %v1784
            %v1865 = vmax.f32 %v1481, %v1789
            %v1866 = vmax.f32 %v1482, %v1794
            %v1867 = vmax.f32 %v1483, %v1799
            %v1868 = vmax.f32 %v1484, %v1804
            %v1869 = vld [vmem:[#allocation3] sm:$0xff]
            %v1870 = vld [vmem:[#allocation3 + $0x8] sm:$0xff]
            %v1871 = vld [vmem:[#allocation3 + $0x10] sm:$0xff]
            %v1872 = vld [vmem:[#allocation3 + $0x18] sm:$0xff]
            %v1873 = vld [vmem:[#allocation3 + $0x20] sm:$0xff]
            %v1874 = vld [vmem:[#allocation3 + $0x28] sm:$0xff]
            %v1875 = vld [vmem:[#allocation3 + $0x30] sm:$0xff]
            %v1876 = vld [vmem:[#allocation3 + $0x38] sm:$0xff]
            %v1877 = vld [vmem:[#allocation3 + $0x40] sm:$0xff]
            %v1878 = vld [vmem:[#allocation3 + $0x48] sm:$0xff]
            %v1879 = vld [vmem:[#allocation3 + $0x50] sm:$0xff]
            %v1880 = vld [vmem:[#allocation3 + $0x58] sm:$0xff]
            %v1881 = vld [vmem:[#allocation3 + $0x60] sm:$0xff]
            %v1882 = vld [vmem:[#allocation3 + $0x68] sm:$0xff]
            %v1883 = vld [vmem:[#allocation3 + $0x70] sm:$0xff]
            %v1884 = vld [vmem:[#allocation3 + $0x78] sm:$0xff]
            %v1885 = vld [vmem:[#allocation3 + $0x80] sm:$0xff]
            %v1886 = vld [vmem:[#allocation3 + $0x88] sm:$0xff]
            %v1887 = vld [vmem:[#allocation3 + $0x90] sm:$0xff]
            %v1888 = vld [vmem:[#allocation3 + $0x98] sm:$0xff]
            %v1889 = vld [vmem:[#allocation3 + $0xa0] sm:$0xff]
            %v1890 = vld [vmem:[#allocation3 + $0xa8] sm:$0xff]
            %v1891 = vld [vmem:[#allocation3 + $0xb0] sm:$0xff]
            %v1892 = vld [vmem:[#allocation3 + $0xb8] sm:$0xff]
            %v1893 = vld [vmem:[#allocation3 + $0xc0] sm:$0xff]
            %v1894 = vld [vmem:[#allocation3 + $0xc8] sm:$0xff]
            %v1895 = vld [vmem:[#allocation3 + $0xd0] sm:$0xff]
            %v1896 = vld [vmem:[#allocation3 + $0xd8] sm:$0xff]
            %v1897 = vld [vmem:[#allocation3 + $0xe0] sm:$0xff]
            %v1898 = vld [vmem:[#allocation3 + $0xe8] sm:$0xff]
            %v1899 = vld [vmem:[#allocation3 + $0xf0] sm:$0xff]
            %v1900 = vld [vmem:[#allocation3 + $0xf8] sm:$0xff]
            %v1901 = vld [vmem:[#allocation3 + $0x100] sm:$0xff]
            %v1902 = vld [vmem:[#allocation3 + $0x108] sm:$0xff]
            %v1903 = vld [vmem:[#allocation3 + $0x110] sm:$0xff]
            %v1904 = vld [vmem:[#allocation3 + $0x118] sm:$0xff]
            %v1905 = vld [vmem:[#allocation3 + $0x120] sm:$0xff]
            %v1906 = vld [vmem:[#allocation3 + $0x128] sm:$0xff]
            %v1907 = vld [vmem:[#allocation3 + $0x130] sm:$0xff]
            %v1908 = vld [vmem:[#allocation3 + $0x138] sm:$0xff]
            %v1909 = vld [vmem:[#allocation3 + $0x140] sm:$0xff]
            %v1910 = vld [vmem:[#allocation3 + $0x148] sm:$0xff]
            %v1911 = vld [vmem:[#allocation3 + $0x150] sm:$0xff]
            %v1912 = vld [vmem:[#allocation3 + $0x158] sm:$0xff]
            %v1913 = vld [vmem:[#allocation3 + $0x160] sm:$0xff]
            %v1914 = vld [vmem:[#allocation3 + $0x168] sm:$0xff]
            %v1915 = vld [vmem:[#allocation3 + $0x170] sm:$0xff]
            %v1916 = vld [vmem:[#allocation3 + $0x178] sm:$0xff]
            %v1917 = vld [vmem:[#allocation3 + $0x180] sm:$0xff]
            %v1918 = vld [vmem:[#allocation3 + $0x188] sm:$0xff]
            %v1919 = vld [vmem:[#allocation3 + $0x190] sm:$0xff]
            %v1920 = vld [vmem:[#allocation3 + $0x198] sm:$0xff]
            %v1921 = vld [vmem:[#allocation3 + $0x1a0] sm:$0xff]
            %v1922 = vld [vmem:[#allocation3 + $0x1a8] sm:$0xff]
            %v1923 = vld [vmem:[#allocation3 + $0x1b0] sm:$0xff]
            %v1924 = vld [vmem:[#allocation3 + $0x1b8] sm:$0xff]
            %v1925 = vld [vmem:[#allocation3 + $0x1c0] sm:$0xff]
            %v1926 = vld [vmem:[#allocation3 + $0x1c8] sm:$0xff]
            %v1927 = vld [vmem:[#allocation3 + $0x1d0] sm:$0xff]
            %v1928 = vld [vmem:[#allocation3 + $0x1d8] sm:$0xff]
            %v1929 = vld [vmem:[#allocation3 + $0x1e0] sm:$0xff]
            %v1930 = vld [vmem:[#allocation3 + $0x1e8] sm:$0xff]
            %v1931 = vld [vmem:[#allocation3 + $0x1f0] sm:$0xff]
            %v1932 = vld [vmem:[#allocation3 + $0x1f8] sm:$0xff]
            %v1933 = vsub.f32 %v1421, %v1805
            %v1934 = vsub.f32 %v1422, %v1806
            %v1935 = vsub.f32 %v1423, %v1807
            %v1936 = vsub.f32 %v1424, %v1808
            %v1937 = vsub.f32 %v1425, %v1809
            %v1938 = vsub.f32 %v1426, %v1810
            %v1939 = vsub.f32 %v1427, %v1811
            %v1940 = vsub.f32 %v1428, %v1812
            %v1941 = vsub.f32 %v1429, %v1813
            %v1942 = vsub.f32 %v1430, %v1814
            %v1943 = vsub.f32 %v1431, %v1815
            %v1944 = vsub.f32 %v1432, %v1816
            %v1945 = vsub.f32 %v1433, %v1817
            %v1946 = vsub.f32 %v1434, %v1818
            %v1947 = vsub.f32 %v1435, %v1819
            %v1948 = vsub.f32 %v1436, %v1820
            %v1949 = vsub.f32 %v1437, %v1821
            %v1950 = vsub.f32 %v1438, %v1822
            %v1951 = vsub.f32 %v1439, %v1823
            %v1952 = vsub.f32 %v1440, %v1824
            %v1953 = vsub.f32 %v1441, %v1825
            %v1954 = vsub.f32 %v1442, %v1826
            %v1955 = vsub.f32 %v1443, %v1827
            %v1956 = vsub.f32 %v1444, %v1828
            %v1957 = vsub.f32 %v1445, %v1829
            %v1958 = vsub.f32 %v1446, %v1830
            %v1959 = vsub.f32 %v1447, %v1831
            %v1960 = vsub.f32 %v1448, %v1832
            %v1961 = vsub.f32 %v1449, %v1833
            %v1962 = vsub.f32 %v1450, %v1834
            %v1963 = vsub.f32 %v1451, %v1835
            %v1964 = vsub.f32 %v1452, %v1836
            %v1965 = vsub.f32 %v1453, %v1837
            %v1966 = vsub.f32 %v1454, %v1838
            %v1967 = vsub.f32 %v1455, %v1839
            %v1968 = vsub.f32 %v1456, %v1840
            %v1969 = vsub.f32 %v1457, %v1841
            %v1970 = vsub.f32 %v1458, %v1842
            %v1971 = vsub.f32 %v1459, %v1843
            %v1972 = vsub.f32 %v1460, %v1844
            %v1973 = vsub.f32 %v1461, %v1845
            %v1974 = vsub.f32 %v1462, %v1846
            %v1975 = vsub.f32 %v1463, %v1847
            %v1976 = vsub.f32 %v1464, %v1848
            %v1977 = vsub.f32 %v1465, %v1849
            %v1978 = vsub.f32 %v1466, %v1850
            %v1979 = vsub.f32 %v1467, %v1851
            %v1980 = vsub.f32 %v1468, %v1852
            %v1981 = vsub.f32 %v1469, %v1853
            %v1982 = vsub.f32 %v1470, %v1854
            %v1983 = vsub.f32 %v1471, %v1855
            %v1984 = vsub.f32 %v1472, %v1856
            %v1985 = vsub.f32 %v1473, %v1857
            %v1986 = vsub.f32 %v1474, %v1858
            %v1987 = vsub.f32 %v1475, %v1859
            %v1988 = vsub.f32 %v1476, %v1860
            %v1989 = vsub.f32 %v1477, %v1861
            %v1990 = vsub.f32 %v1478, %v1862
            %v1991 = vsub.f32 %v1479, %v1863
            %v1992 = vsub.f32 %v1480, %v1864
            %v1993 = vsub.f32 %v1481, %v1865
            %v1994 = vsub.f32 %v1482, %v1866
            %v1995 = vsub.f32 %v1483, %v1867
            %v1996 = vsub.f32 %v1484, %v1868
            %v1997 = vmul.f32 %v1933, 1.442695
            %v1998 = vpow.pop %v1997
            %v1999 = vmul.f32 %v1934, 1.442695
            %v2000 = vpow.pop %v1999
            %v2001 = vmul.f32 %v1935, 1.442695
            %v2002 = vpow.pop %v2001
            %v2003 = vmul.f32 %v1936, 1.442695
            %v2004 = vpow.pop %v2003
            %v2005 = vmul.f32 %v1937, 1.442695
            %v2006 = vpow.pop %v2005
            %v2007 = vmul.f32 %v1938, 1.442695
            %v2008 = vpow.pop %v2007
            %v2009 = vmul.f32 %v1939, 1.442695
            %v2010 = vpow.pop %v2009
            %v2011 = vmul.f32 %v1940, 1.442695
            %v2012 = vpow.pop %v2011
            %v2013 = vmul.f32 %v1941, 1.442695
            %v2014 = vpow.pop %v2013
            %v2015 = vmul.f32 %v1942, 1.442695
            %v2016 = vpow.pop %v2015
            %v2017 = vmul.f32 %v1943, 1.442695
            %v2018 = vpow.pop %v2017
            %v2019 = vmul.f32 %v1944, 1.442695
            %v2020 = vpow.pop %v2019
            %v2021 = vmul.f32 %v1945, 1.442695
            %v2022 = vpow.pop %v2021
            %v2023 = vmul.f32 %v1946, 1.442695
            %v2024 = vpow.pop %v2023
            %v2025 = vmul.f32 %v1947, 1.442695
            %v2026 = vpow.pop %v2025
            %v2027 = vmul.f32 %v1948, 1.442695
            %v2028 = vpow.pop %v2027
            %v2029 = vmul.f32 %v1949, 1.442695
            %v2030 = vpow.pop %v2029
            %v2031 = vmul.f32 %v1950, 1.442695
            %v2032 = vpow.pop %v2031
            %v2033 = vmul.f32 %v1951, 1.442695
            %v2034 = vpow.pop %v2033
            %v2035 = vmul.f32 %v1952, 1.442695
            %v2036 = vpow.pop %v2035
            %v2037 = vmul.f32 %v1953, 1.442695
            %v2038 = vpow.pop %v2037
            %v2039 = vmul.f32 %v1954, 1.442695
            %v2040 = vpow.pop %v2039
            %v2041 = vmul.f32 %v1955, 1.442695
            %v2042 = vpow.pop %v2041
            %v2043 = vmul.f32 %v1956, 1.442695
            %v2044 = vpow.pop %v2043
            %v2045 = vmul.f32 %v1957, 1.442695
            %v2046 = vpow.pop %v2045
            %v2047 = vmul.f32 %v1958, 1.442695
            %v2048 = vpow.pop %v2047
            %v2049 = vmul.f32 %v1959, 1.442695
            %v2050 = vpow.pop %v2049
            %v2051 = vmul.f32 %v1960, 1.442695
            %v2052 = vpow.pop %v2051
            %v2053 = vmul.f32 %v1961, 1.442695
            %v2054 = vpow.pop %v2053
            %v2055 = vmul.f32 %v1962, 1.442695
            %v2056 = vpow.pop %v2055
            %v2057 = vmul.f32 %v1963, 1.442695
            %v2058 = vpow.pop %v2057
            %v2059 = vmul.f32 %v1964, 1.442695
            %v2060 = vpow.pop %v2059
            %v2061 = vmul.f32 %v1965, 1.442695
            %v2062 = vpow.pop %v2061
            %v2063 = vmul.f32 %v1966, 1.442695
            %v2064 = vpow.pop %v2063
            %v2065 = vmul.f32 %v1967, 1.442695
            %v2066 = vpow.pop %v2065
            %v2067 = vmul.f32 %v1968, 1.442695
            %v2068 = vpow.pop %v2067
            %v2069 = vmul.f32 %v1969, 1.442695
            %v2070 = vpow.pop %v2069
            %v2071 = vmul.f32 %v1970, 1.442695
            %v2072 = vpow.pop %v2071
            %v2073 = vmul.f32 %v1971, 1.442695
            %v2074 = vpow.pop %v2073
            %v2075 = vmul.f32 %v1972, 1.442695
            %v2076 = vpow.pop %v2075
            %v2077 = vmul.f32 %v1973, 1.442695
            %v2078 = vpow.pop %v2077
            %v2079 = vmul.f32 %v1974, 1.442695
            %v2080 = vpow.pop %v2079
            %v2081 = vmul.f32 %v1975, 1.442695
            %v2082 = vpow.pop %v2081
            %v2083 = vmul.f32 %v1976, 1.442695
            %v2084 = vpow.pop %v2083
            %v2085 = vmul.f32 %v1977, 1.442695
            %v2086 = vpow.pop %v2085
            %v2087 = vmul.f32 %v1978, 1.442695
            %v2088 = vpow.pop %v2087
            %v2089 = vmul.f32 %v1979, 1.442695
            %v2090 = vpow.pop %v2089
            %v2091 = vmul.f32 %v1980, 1.442695
            %v2092 = vpow.pop %v2091
            %v2093 = vmul.f32 %v1981, 1.442695
            %v2094 = vpow.pop %v2093
            %v2095 = vmul.f32 %v1982, 1.442695
            %v2096 = vpow.pop %v2095
            %v2097 = vmul.f32 %v1983, 1.442695
            %v2098 = vpow.pop %v2097
            %v2099 = vmul.f32 %v1984, 1.442695
            %v2100 = vpow.pop %v2099
            %v2101 = vmul.f32 %v1985, 1.442695
            %v2102 = vpow.pop %v2101
            %v2103 = vmul.f32 %v1986, 1.442695
            %v2104 = vpow.pop %v2103
            %v2105 = vmul.f32 %v1987, 1.442695
            %v2106 = vpow.pop %v2105
            %v2107 = vmul.f32 %v1988, 1.442695
            %v2108 = vpow.pop %v2107
            %v2109 = vmul.f32 %v1989, 1.442695
            %v2110 = vpow.pop %v2109
            %v2111 = vmul.f32 %v1990, 1.442695
            %v2112 = vpow.pop %v2111
            %v2113 = vmul.f32 %v1991, 1.442695
            %v2114 = vpow.pop %v2113
            %v2115 = vmul.f32 %v1992, 1.442695
            %v2116 = vpow.pop %v2115
            %v2117 = vmul.f32 %v1993, 1.442695
            %v2118 = vpow.pop %v2117
            %v2119 = vmul.f32 %v1994, 1.442695
            %v2120 = vpow.pop %v2119
            %v2121 = vmul.f32 %v1995, 1.442695
            %v2122 = vpow.pop %v2121
            %v2123 = vmul.f32 %v1996, 1.442695
            %v2124 = vpow.pop %v2123
            %v2125 = vmul.f32 %v1869, %v1998
            %v2126 = vmul.f32 %v1870, %v2000
            %v2127 = vmul.f32 %v1871, %v2002
            %v2128 = vmul.f32 %v1872, %v2004
            %v2129 = vmul.f32 %v1873, %v2006
            %v2130 = vmul.f32 %v1874, %v2008
            %v2131 = vmul.f32 %v1875, %v2010
            %v2132 = vmul.f32 %v1876, %v2012
            %v2133 = vmul.f32 %v1877, %v2014
            %v2134 = vmul.f32 %v1878, %v2016
            %v2135 = vmul.f32 %v1879, %v2018
            %v2136 = vmul.f32 %v1880, %v2020
            %v2137 = vmul.f32 %v1881, %v2022
            %v2138 = vmul.f32 %v1882, %v2024
            %v2139 = vmul.f32 %v1883, %v2026
            %v2140 = vmul.f32 %v1884, %v2028
            %v2141 = vmul.f32 %v1885, %v2030
            %v2142 = vmul.f32 %v1886, %v2032
            %v2143 = vmul.f32 %v1887, %v2034
            %v2144 = vmul.f32 %v1888, %v2036
            %v2145 = vmul.f32 %v1889, %v2038
            %v2146 = vmul.f32 %v1890, %v2040
            %v2147 = vmul.f32 %v1891, %v2042
            %v2148 = vmul.f32 %v1892, %v2044
            %v2149 = vmul.f32 %v1893, %v2046
            %v2150 = vmul.f32 %v1894, %v2048
            %v2151 = vmul.f32 %v1895, %v2050
            %v2152 = vmul.f32 %v1896, %v2052
            %v2153 = vmul.f32 %v1897, %v2054
            %v2154 = vmul.f32 %v1898, %v2056
            %v2155 = vmul.f32 %v1899, %v2058
            %v2156 = vmul.f32 %v1900, %v2060
            %v2157 = vmul.f32 %v1901, %v2062
            %v2158 = vmul.f32 %v1902, %v2064
            %v2159 = vmul.f32 %v1903, %v2066
            %v2160 = vmul.f32 %v1904, %v2068
            %v2161 = vmul.f32 %v1905, %v2070
            %v2162 = vmul.f32 %v1906, %v2072
            %v2163 = vmul.f32 %v1907, %v2074
            %v2164 = vmul.f32 %v1908, %v2076
            %v2165 = vmul.f32 %v1909, %v2078
            %v2166 = vmul.f32 %v1910, %v2080
            %v2167 = vmul.f32 %v1911, %v2082
            %v2168 = vmul.f32 %v1912, %v2084
            %v2169 = vmul.f32 %v1913, %v2086
            %v2170 = vmul.f32 %v1914, %v2088
            %v2171 = vmul.f32 %v1915, %v2090
            %v2172 = vmul.f32 %v1916, %v2092
            %v2173 = vmul.f32 %v1917, %v2094
            %v2174 = vmul.f32 %v1918, %v2096
            %v2175 = vmul.f32 %v1919, %v2098
            %v2176 = vmul.f32 %v1920, %v2100
            %v2177 = vmul.f32 %v1921, %v2102
            %v2178 = vmul.f32 %v1922, %v2104
            %v2179 = vmul.f32 %v1923, %v2106
            %v2180 = vmul.f32 %v1924, %v2108
            %v2181 = vmul.f32 %v1925, %v2110
            %v2182 = vmul.f32 %v1926, %v2112
            %v2183 = vmul.f32 %v1927, %v2114
            %v2184 = vmul.f32 %v1928, %v2116
            %v2185 = vmul.f32 %v1929, %v2118
            %v2186 = vmul.f32 %v1930, %v2120
            %v2187 = vmul.f32 %v1931, %v2122
            %v2188 = vmul.f32 %v1932, %v2124
            %2190 = vset.pattern.permute.xlu0 0
            %2191 = vperm.xlu0 %2190, %v1805
            %v2192 = vpop.permute.xlu0 %2191
            %2195 = vset.pattern.permute.xlu0 0
            %2196 = vperm.xlu0 %2195, %v1806
            %v2197 = vpop.permute.xlu0 %2196
            %2200 = vset.pattern.permute.xlu0 0
            %2201 = vperm.xlu0 %2200, %v1807
            %v2202 = vpop.permute.xlu0 %2201
            %2205 = vset.pattern.permute.xlu0 0
            %2206 = vperm.xlu0 %2205, %v1808
            %v2207 = vpop.permute.xlu0 %2206
            %2210 = vset.pattern.permute.xlu0 0
            %2211 = vperm.xlu0 %2210, %v1809
            %v2212 = vpop.permute.xlu0 %2211
            %2215 = vset.pattern.permute.xlu0 0
            %2216 = vperm.xlu0 %2215, %v1810
            %v2217 = vpop.permute.xlu0 %2216
            %2220 = vset.pattern.permute.xlu0 0
            %2221 = vperm.xlu0 %2220, %v1811
            %v2222 = vpop.permute.xlu0 %2221
            %2225 = vset.pattern.permute.xlu0 0
            %2226 = vperm.xlu0 %2225, %v1812
            %v2227 = vpop.permute.xlu0 %2226
            %2230 = vset.pattern.permute.xlu0 0
            %2231 = vperm.xlu0 %2230, %v1813
            %v2232 = vpop.permute.xlu0 %2231
            %2235 = vset.pattern.permute.xlu0 0
            %2236 = vperm.xlu0 %2235, %v1814
            %v2237 = vpop.permute.xlu0 %2236
            %2240 = vset.pattern.permute.xlu0 0
            %2241 = vperm.xlu0 %2240, %v1815
            %v2242 = vpop.permute.xlu0 %2241
            %2245 = vset.pattern.permute.xlu0 0
            %2246 = vperm.xlu0 %2245, %v1816
            %v2247 = vpop.permute.xlu0 %2246
            %2250 = vset.pattern.permute.xlu0 0
            %2251 = vperm.xlu0 %2250, %v1817
            %v2252 = vpop.permute.xlu0 %2251
            %2255 = vset.pattern.permute.xlu0 0
            %2256 = vperm.xlu0 %2255, %v1818
            %v2257 = vpop.permute.xlu0 %2256
            %2260 = vset.pattern.permute.xlu0 0
            %2261 = vperm.xlu0 %2260, %v1819
            %v2262 = vpop.permute.xlu0 %2261
            %2265 = vset.pattern.permute.xlu0 0
            %2266 = vperm.xlu0 %2265, %v1820
            %v2267 = vpop.permute.xlu0 %2266
            %2270 = vset.pattern.permute.xlu0 0
            %2271 = vperm.xlu0 %2270, %v1821
            %v2272 = vpop.permute.xlu0 %2271
            %2275 = vset.pattern.permute.xlu0 0
            %2276 = vperm.xlu0 %2275, %v1822
            %v2277 = vpop.permute.xlu0 %2276
            %2280 = vset.pattern.permute.xlu0 0
            %2281 = vperm.xlu0 %2280, %v1823
            %v2282 = vpop.permute.xlu0 %2281
            %2285 = vset.pattern.permute.xlu0 0
            %2286 = vperm.xlu0 %2285, %v1824
            %v2287 = vpop.permute.xlu0 %2286
            %2290 = vset.pattern.permute.xlu0 0
            %2291 = vperm.xlu0 %2290, %v1825
            %v2292 = vpop.permute.xlu0 %2291
            %2295 = vset.pattern.permute.xlu0 0
            %2296 = vperm.xlu0 %2295, %v1826
            %v2297 = vpop.permute.xlu0 %2296
            %2300 = vset.pattern.permute.xlu0 0
            %2301 = vperm.xlu0 %2300, %v1827
            %v2302 = vpop.permute.xlu0 %2301
            %2305 = vset.pattern.permute.xlu0 0
            %2306 = vperm.xlu0 %2305, %v1828
            %v2307 = vpop.permute.xlu0 %2306
            %2310 = vset.pattern.permute.xlu0 0
            %2311 = vperm.xlu0 %2310, %v1829
            %v2312 = vpop.permute.xlu0 %2311
            %2315 = vset.pattern.permute.xlu0 0
            %2316 = vperm.xlu0 %2315, %v1830
            %v2317 = vpop.permute.xlu0 %2316
            %2320 = vset.pattern.permute.xlu0 0
            %2321 = vperm.xlu0 %2320, %v1831
            %v2322 = vpop.permute.xlu0 %2321
            %2325 = vset.pattern.permute.xlu0 0
            %2326 = vperm.xlu0 %2325, %v1832
            %v2327 = vpop.permute.xlu0 %2326
            %2330 = vset.pattern.permute.xlu0 0
            %2331 = vperm.xlu0 %2330, %v1833
            %v2332 = vpop.permute.xlu0 %2331
            %2335 = vset.pattern.permute.xlu0 0
            %2336 = vperm.xlu0 %2335, %v1834
            %v2337 = vpop.permute.xlu0 %2336
            %2340 = vset.pattern.permute.xlu0 0
            %2341 = vperm.xlu0 %2340, %v1835
            %v2342 = vpop.permute.xlu0 %2341
            %2345 = vset.pattern.permute.xlu0 0
            %2346 = vperm.xlu0 %2345, %v1836
            %v2347 = vpop.permute.xlu0 %2346
            %2350 = vset.pattern.permute.xlu0 0
            %2351 = vperm.xlu0 %2350, %v1837
            %v2352 = vpop.permute.xlu0 %2351
            %2355 = vset.pattern.permute.xlu0 0
            %2356 = vperm.xlu0 %2355, %v1838
            %v2357 = vpop.permute.xlu0 %2356
            %2360 = vset.pattern.permute.xlu0 0
            %2361 = vperm.xlu0 %2360, %v1839
            %v2362 = vpop.permute.xlu0 %2361
            %2365 = vset.pattern.permute.xlu0 0
            %2366 = vperm.xlu0 %2365, %v1840
            %v2367 = vpop.permute.xlu0 %2366
            %2370 = vset.pattern.permute.xlu0 0
            %2371 = vperm.xlu0 %2370, %v1841
            %v2372 = vpop.permute.xlu0 %2371
            %2375 = vset.pattern.permute.xlu0 0
            %2376 = vperm.xlu0 %2375, %v1842
            %v2377 = vpop.permute.xlu0 %2376
            %2380 = vset.pattern.permute.xlu0 0
            %2381 = vperm.xlu0 %2380, %v1843
            %v2382 = vpop.permute.xlu0 %2381
            %2385 = vset.pattern.permute.xlu0 0
            %2386 = vperm.xlu0 %2385, %v1844
            %v2387 = vpop.permute.xlu0 %2386
            %2390 = vset.pattern.permute.xlu0 0
            %2391 = vperm.xlu0 %2390, %v1845
            %v2392 = vpop.permute.xlu0 %2391
            %2395 = vset.pattern.permute.xlu0 0
            %2396 = vperm.xlu0 %2395, %v1846
            %v2397 = vpop.permute.xlu0 %2396
            %2400 = vset.pattern.permute.xlu0 0
            %2401 = vperm.xlu0 %2400, %v1847
            %v2402 = vpop.permute.xlu0 %2401
            %2405 = vset.pattern.permute.xlu0 0
            %2406 = vperm.xlu0 %2405, %v1848
            %v2407 = vpop.permute.xlu0 %2406
            %2410 = vset.pattern.permute.xlu0 0
            %2411 = vperm.xlu0 %2410, %v1849
            %v2412 = vpop.permute.xlu0 %2411
            %2415 = vset.pattern.permute.xlu0 0
            %2416 = vperm.xlu0 %2415, %v1850
            %v2417 = vpop.permute.xlu0 %2416
            %2420 = vset.pattern.permute.xlu0 0
            %2421 = vperm.xlu0 %2420, %v1851
            %v2422 = vpop.permute.xlu0 %2421
            %2425 = vset.pattern.permute.xlu0 0
            %2426 = vperm.xlu0 %2425, %v1852
            %v2427 = vpop.permute.xlu0 %2426
            %2430 = vset.pattern.permute.xlu0 0
            %2431 = vperm.xlu0 %2430, %v1853
            %v2432 = vpop.permute.xlu0 %2431
            %2435 = vset.pattern.permute.xlu0 0
            %2436 = vperm.xlu0 %2435, %v1854
            %v2437 = vpop.permute.xlu0 %2436
            %2440 = vset.pattern.permute.xlu0 0
            %2441 = vperm.xlu0 %2440, %v1855
            %v2442 = vpop.permute.xlu0 %2441
            %2445 = vset.pattern.permute.xlu0 0
            %2446 = vperm.xlu0 %2445, %v1856
            %v2447 = vpop.permute.xlu0 %2446
            %2450 = vset.pattern.permute.xlu0 0
            %2451 = vperm.xlu0 %2450, %v1857
            %v2452 = vpop.permute.xlu0 %2451
            %2455 = vset.pattern.permute.xlu0 0
            %2456 = vperm.xlu0 %2455, %v1858
            %v2457 = vpop.permute.xlu0 %2456
            %2460 = vset.pattern.permute.xlu0 0
            %2461 = vperm.xlu0 %2460, %v1859
            %v2462 = vpop.permute.xlu0 %2461
            %2465 = vset.pattern.permute.xlu0 0
            %2466 = vperm.xlu0 %2465, %v1860
            %v2467 = vpop.permute.xlu0 %2466
            %2470 = vset.pattern.permute.xlu0 0
            %2471 = vperm.xlu0 %2470, %v1861
            %v2472 = vpop.permute.xlu0 %2471
            %2475 = vset.pattern.permute.xlu0 0
            %2476 = vperm.xlu0 %2475, %v1862
            %v2477 = vpop.permute.xlu0 %2476
            %2480 = vset.pattern.permute.xlu0 0
            %2481 = vperm.xlu0 %2480, %v1863
            %v2482 = vpop.permute.xlu0 %2481
            %2485 = vset.pattern.permute.xlu0 0
            %2486 = vperm.xlu0 %2485, %v1864
            %v2487 = vpop.permute.xlu0 %2486
            %2490 = vset.pattern.permute.xlu0 0
            %2491 = vperm.xlu0 %2490, %v1865
            %v2492 = vpop.permute.xlu0 %2491
            %2495 = vset.pattern.permute.xlu0 0
            %2496 = vperm.xlu0 %2495, %v1866
            %v2497 = vpop.permute.xlu0 %2496
            %2500 = vset.pattern.permute.xlu0 0
            %2501 = vperm.xlu0 %2500, %v1867
            %v2502 = vpop.permute.xlu0 %2501
            %2505 = vset.pattern.permute.xlu0 0
            %2506 = vperm.xlu0 %2505, %v1868
            %v2507 = vpop.permute.xlu0 %2506
            %v2509 = vsub.f32 %v745, %v2192
            %v2510 = vsub.f32 %v747, %v2192
            %v2511 = vsub.f32 %v1098, %v2192
            %v2512 = vsub.f32 %v1100, %v2192
            %v2513 = vsub.f32 %v749, %v2197
            %v2514 = vsub.f32 %v751, %v2197
            %v2515 = vsub.f32 %v1102, %v2197
            %v2516 = vsub.f32 %v1104, %v2197
            %v2517 = vsub.f32 %v755, %v2202
            %v2518 = vsub.f32 %v757, %v2202
            %v2519 = vsub.f32 %v1108, %v2202
            %v2520 = vsub.f32 %v1110, %v2202
            %v2521 = vsub.f32 %v759, %v2207
            %v2522 = vsub.f32 %v761, %v2207
            %v2523 = vsub.f32 %v1112, %v2207
            %v2524 = vsub.f32 %v1114, %v2207
            %v2525 = vsub.f32 %v765, %v2212
            %v2526 = vsub.f32 %v767, %v2212
            %v2527 = vsub.f32 %v1118, %v2212
            %v2528 = vsub.f32 %v1120, %v2212
            %v2529 = vsub.f32 %v769, %v2217
            %v2530 = vsub.f32 %v771, %v2217
            %v2531 = vsub.f32 %v1122, %v2217
            %v2532 = vsub.f32 %v1124, %v2217
            %v2533 = vsub.f32 %v775, %v2222
            %v2534 = vsub.f32 %v777, %v2222
            %v2535 = vsub.f32 %v1128, %v2222
            %v2536 = vsub.f32 %v1130, %v2222
            %v2537 = vsub.f32 %v779, %v2227
            %v2538 = vsub.f32 %v781, %v2227
            %v2539 = vsub.f32 %v1132, %v2227
            %v2540 = vsub.f32 %v1134, %v2227
            %v2541 = vsub.f32 %v785, %v2232
            %v2542 = vsub.f32 %v787, %v2232
            %v2543 = vsub.f32 %v1138, %v2232
            %v2544 = vsub.f32 %v1140, %v2232
            %v2545 = vsub.f32 %v789, %v2237
            %v2546 = vsub.f32 %v791, %v2237
            %v2547 = vsub.f32 %v1142, %v2237
            %v2548 = vsub.f32 %v1144, %v2237
            %v2549 = vsub.f32 %v795, %v2242
            %v2550 = vsub.f32 %v797, %v2242
            %v2551 = vsub.f32 %v1148, %v2242
            %v2552 = vsub.f32 %v1150, %v2242
            %v2553 = vsub.f32 %v799, %v2247
            %v2554 = vsub.f32 %v801, %v2247
            %v2555 = vsub.f32 %v1152, %v2247
            %v2556 = vsub.f32 %v1154, %v2247
            %v2557 = vsub.f32 %v805, %v2252
            %v2558 = vsub.f32 %v807, %v2252
            %v2559 = vsub.f32 %v1158, %v2252
            %v2560 = vsub.f32 %v1160, %v2252
            %v2561 = vsub.f32 %v809, %v2257
            %v2562 = vsub.f32 %v811, %v2257
            %v2563 = vsub.f32 %v1162, %v2257
            %v2564 = vsub.f32 %v1164, %v2257
            %v2565 = vsub.f32 %v815, %v2262
            %v2566 = vsub.f32 %v817, %v2262
            %v2567 = vsub.f32 %v1168, %v2262
            %v2568 = vsub.f32 %v1170, %v2262
            %v2569 = vsub.f32 %v819, %v2267
            %v2570 = vsub.f32 %v821, %v2267
            %v2571 = vsub.f32 %v1172, %v2267
            %v2572 = vsub.f32 %v1174, %v2267
            %v2573 = vsub.f32 %v825, %v2272
            %v2574 = vsub.f32 %v827, %v2272
            %v2575 = vsub.f32 %v1178, %v2272
            %v2576 = vsub.f32 %v1180, %v2272
            %v2577 = vsub.f32 %v829, %v2277
            %v2578 = vsub.f32 %v831, %v2277
            %v2579 = vsub.f32 %v1182, %v2277
            %v2580 = vsub.f32 %v1184, %v2277
            %v2581 = vsub.f32 %v835, %v2282
            %v2582 = vsub.f32 %v837, %v2282
            %v2583 = vsub.f32 %v1188, %v2282
            %v2584 = vsub.f32 %v1190, %v2282
            %v2585 = vsub.f32 %v839, %v2287
            %v2586 = vsub.f32 %v841, %v2287
            %v2587 = vsub.f32 %v1192, %v2287
            %v2588 = vsub.f32 %v1194, %v2287
            %v2589 = vsub.f32 %v845, %v2292
            %v2590 = vsub.f32 %v847, %v2292
            %v2591 = vsub.f32 %v1198, %v2292
            %v2592 = vsub.f32 %v1200, %v2292
            %v2593 = vsub.f32 %v849, %v2297
            %v2594 = vsub.f32 %v851, %v2297
            %v2595 = vsub.f32 %v1202, %v2297
            %v2596 = vsub.f32 %v1204, %v2297
            %v2597 = vsub.f32 %v855, %v2302
            %v2598 = vsub.f32 %v857, %v2302
            %v2599 = vsub.f32 %v1208, %v2302
            %v2600 = vsub.f32 %v1210, %v2302
            %v2601 = vsub.f32 %v859, %v2307
            %v2602 = vsub.f32 %v861, %v2307
            %v2603 = vsub.f32 %v1212, %v2307
            %v2604 = vsub.f32 %v1214, %v2307
            %v2605 = vsub.f32 %v865, %v2312
            %v2606 = vsub.f32 %v867, %v2312
            %v2607 = vsub.f32 %v1218, %v2312
            %v2608 = vsub.f32 %v1220, %v2312
            %v2609 = vsub.f32 %v869, %v2317
            %v2610 = vsub.f32 %v871, %v2317
            %v2611 = vsub.f32 %v1222, %v2317
            %v2612 = vsub.f32 %v1224, %v2317
            %v2613 = vsub.f32 %v875, %v2322
            %v2614 = vsub.f32 %v877, %v2322
            %v2615 = vsub.f32 %v1228, %v2322
            %v2616 = vsub.f32 %v1230, %v2322
            %v2617 = vsub.f32 %v879, %v2327
            %v2618 = vsub.f32 %v881, %v2327
            %v2619 = vsub.f32 %v1232, %v2327
            %v2620 = vsub.f32 %v1234, %v2327
            %v2621 = vsub.f32 %v885, %v2332
            %v2622 = vsub.f32 %v887, %v2332
            %v2623 = vsub.f32 %v1238, %v2332
            %v2624 = vsub.f32 %v1240, %v2332
            %v2625 = vsub.f32 %v889, %v2337
            %v2626 = vsub.f32 %v891, %v2337
            %v2627 = vsub.f32 %v1242, %v2337
            %v2628 = vsub.f32 %v1244, %v2337
            %v2629 = vsub.f32 %v895, %v2342
            %v2630 = vsub.f32 %v897, %v2342
            %v2631 = vsub.f32 %v1248, %v2342
            %v2632 = vsub.f32 %v1250, %v2342
            %v2633 = vsub.f32 %v899, %v2347
            %v2634 = vsub.f32 %v901, %v2347
            %v2635 = vsub.f32 %v1252, %v2347
            %v2636 = vsub.f32 %v1254, %v2347
            %v2637 = vsub.f32 %v905, %v2352
            %v2638 = vsub.f32 %v907, %v2352
            %v2639 = vsub.f32 %v1258, %v2352
            %v2640 = vsub.f32 %v1260, %v2352
            %v2641 = vsub.f32 %v909, %v2357
            %v2642 = vsub.f32 %v911, %v2357
            %v2643 = vsub.f32 %v1262, %v2357
            %v2644 = vsub.f32 %v1264, %v2357
            %v2645 = vsub.f32 %v915, %v2362
            %v2646 = vsub.f32 %v917, %v2362
            %v2647 = vsub.f32 %v1268, %v2362
            %v2648 = vsub.f32 %v1270, %v2362
            %v2649 = vsub.f32 %v919, %v2367
            %v2650 = vsub.f32 %v921, %v2367
            %v2651 = vsub.f32 %v1272, %v2367
            %v2652 = vsub.f32 %v1274, %v2367
            %v2653 = vsub.f32 %v925, %v2372
            %v2654 = vsub.f32 %v927, %v2372
            %v2655 = vsub.f32 %v1278, %v2372
            %v2656 = vsub.f32 %v1280, %v2372
            %v2657 = vsub.f32 %v929, %v2377
            %v2658 = vsub.f32 %v931, %v2377
            %v2659 = vsub.f32 %v1282, %v2377
            %v2660 = vsub.f32 %v1284, %v2377
            %v2661 = vsub.f32 %v935, %v2382
            %v2662 = vsub.f32 %v937, %v2382
            %v2663 = vsub.f32 %v1288, %v2382
            %v2664 = vsub.f32 %v1290, %v2382
            %v2665 = vsub.f32 %v939, %v2387
            %v2666 = vsub.f32 %v941, %v2387
            %v2667 = vsub.f32 %v1292, %v2387
            %v2668 = vsub.f32 %v1294, %v2387
            %v2669 = vsub.f32 %v945, %v2392
            %v2670 = vsub.f32 %v947, %v2392
            %v2671 = vsub.f32 %v1298, %v2392
            %v2672 = vsub.f32 %v1300, %v2392
            %v2673 = vsub.f32 %v949, %v2397
            %v2674 = vsub.f32 %v951, %v2397
            %v2675 = vsub.f32 %v1302, %v2397
            %v2676 = vsub.f32 %v1304, %v2397
            %v2677 = vsub.f32 %v955, %v2402
            %v2678 = vsub.f32 %v957, %v2402
            %v2679 = vsub.f32 %v1308, %v2402
            %v2680 = vsub.f32 %v1310, %v2402
            %v2681 = vsub.f32 %v959, %v2407
            %v2682 = vsub.f32 %v961, %v2407
            %v2683 = vsub.f32 %v1312, %v2407
            %v2684 = vsub.f32 %v1314, %v2407
            %v2685 = vsub.f32 %v965, %v2412
            %v2686 = vsub.f32 %v967, %v2412
            %v2687 = vsub.f32 %v1318, %v2412
            %v2688 = vsub.f32 %v1320, %v2412
            %v2689 = vsub.f32 %v969, %v2417
            %v2690 = vsub.f32 %v971, %v2417
            %v2691 = vsub.f32 %v1322, %v2417
            %v2692 = vsub.f32 %v1324, %v2417
            %v2693 = vsub.f32 %v975, %v2422
            %v2694 = vsub.f32 %v977, %v2422
            %v2695 = vsub.f32 %v1328, %v2422
            %v2696 = vsub.f32 %v1330, %v2422
            %v2697 = vsub.f32 %v979, %v2427
            %v2698 = vsub.f32 %v981, %v2427
            %v2699 = vsub.f32 %v1332, %v2427
            %v2700 = vsub.f32 %v1334, %v2427
            %v2701 = vsub.f32 %v985, %v2432
            %v2702 = vsub.f32 %v987, %v2432
            %v2703 = vsub.f32 %v1338, %v2432
            %v2704 = vsub.f32 %v1340, %v2432
            %v2705 = vsub.f32 %v989, %v2437
            %v2706 = vsub.f32 %v991, %v2437
            %v2707 = vsub.f32 %v1342, %v2437
            %v2708 = vsub.f32 %v1344, %v2437
            %v2709 = vsub.f32 %v995, %v2442
            %v2710 = vsub.f32 %v997, %v2442
            %v2711 = vsub.f32 %v1348, %v2442
            %v2712 = vsub.f32 %v1350, %v2442
            %v2713 = vsub.f32 %v999, %v2447
            %v2714 = vsub.f32 %v1001, %v2447
            %v2715 = vsub.f32 %v1352, %v2447
            %v2716 = vsub.f32 %v1354, %v2447
            %v2717 = vsub.f32 %v1005, %v2452
            %v2718 = vsub.f32 %v1007, %v2452
            %v2719 = vsub.f32 %v1358, %v2452
            %v2720 = vsub.f32 %v1360, %v2452
            %v2721 = vsub.f32 %v1009, %v2457
            %v2722 = vsub.f32 %v1011, %v2457
            %v2723 = vsub.f32 %v1362, %v2457
            %v2724 = vsub.f32 %v1364, %v2457
            %v2725 = vsub.f32 %v1015, %v2462
            %v2726 = vsub.f32 %v1017, %v2462
            %v2727 = vsub.f32 %v1368, %v2462
            %v2728 = vsub.f32 %v1370, %v2462
            %v2729 = vsub.f32 %v1019, %v2467
            %v2730 = vsub.f32 %v1021, %v2467
            %v2731 = vsub.f32 %v1372, %v2467
            %v2732 = vsub.f32 %v1374, %v2467
            %v2733 = vsub.f32 %v1025, %v2472
            %v2734 = vsub.f32 %v1027, %v2472
            %v2735 = vsub.f32 %v1378, %v2472
            %v2736 = vsub.f32 %v1380, %v2472
            %v2737 = vsub.f32 %v1029, %v2477
            %v2738 = vsub.f32 %v1031, %v2477
            %v2739 = vsub.f32 %v1382, %v2477
            %v2740 = vsub.f32 %v1384, %v2477
            %v2741 = vsub.f32 %v1035, %v2482
            %v2742 = vsub.f32 %v1037, %v2482
            %v2743 = vsub.f32 %v1388, %v2482
            %v2744 = vsub.f32 %v1390, %v2482
            %v2745 = vsub.f32 %v1039, %v2487
            %v2746 = vsub.f32 %v1041, %v2487
            %v2747 = vsub.f32 %v1392, %v2487
            %v2748 = vsub.f32 %v1394, %v2487
            %v2749 = vsub.f32 %v1045, %v2492
            %v2750 = vsub.f32 %v1047, %v2492
            %v2751 = vsub.f32 %v1398, %v2492
            %v2752 = vsub.f32 %v1400, %v2492
            %v2753 = vsub.f32 %v1049, %v2497
            %v2754 = vsub.f32 %v1051, %v2497
            %v2755 = vsub.f32 %v1402, %v2497
            %v2756 = vsub.f32 %v1404, %v2497
            %v2757 = vsub.f32 %v1055, %v2502
            %v2758 = vsub.f32 %v1057, %v2502
            %v2759 = vsub.f32 %v1408, %v2502
            %v2760 = vsub.f32 %v1410, %v2502
            %v2761 = vsub.f32 %v1059, %v2507
            %v2762 = vsub.f32 %v1061, %v2507
            %v2763 = vsub.f32 %v1412, %v2507
            %v2764 = vsub.f32 %v1414, %v2507
            %v2765 = vmul.f32 %v2509, 1.442695
            %v2766 = vpow.pop %v2765
            %v2767 = vmul.f32 %v2510, 1.442695
            %v2768 = vpow.pop %v2767
            %v2769 = vmul.f32 %v2511, 1.442695
            %v2770 = vpow.pop %v2769
            %v2771 = vmul.f32 %v2512, 1.442695
            %v2772 = vpow.pop %v2771
            %v2773 = vmul.f32 %v2513, 1.442695
            %v2774 = vpow.pop %v2773
            %v2775 = vmul.f32 %v2514, 1.442695
            %v2776 = vpow.pop %v2775
            %v2777 = vmul.f32 %v2515, 1.442695
            %v2778 = vpow.pop %v2777
            %v2779 = vmul.f32 %v2516, 1.442695
            %v2780 = vpow.pop %v2779
            %v2781 = vmul.f32 %v2517, 1.442695
            %v2782 = vpow.pop %v2781
            %v2783 = vmul.f32 %v2518, 1.442695
            %v2784 = vpow.pop %v2783
            %v2785 = vmul.f32 %v2519, 1.442695
            %v2786 = vpow.pop %v2785
            %v2787 = vmul.f32 %v2520, 1.442695
            %v2788 = vpow.pop %v2787
            %v2789 = vmul.f32 %v2521, 1.442695
            %v2790 = vpow.pop %v2789
            %v2791 = vmul.f32 %v2522, 1.442695
            %v2792 = vpow.pop %v2791
            %v2793 = vmul.f32 %v2523, 1.442695
            %v2794 = vpow.pop %v2793
            %v2795 = vmul.f32 %v2524, 1.442695
            %v2796 = vpow.pop %v2795
            %v2797 = vmul.f32 %v2525, 1.442695
            %v2798 = vpow.pop %v2797
            %v2799 = vmul.f32 %v2526, 1.442695
            %v2800 = vpow.pop %v2799
            %v2801 = vmul.f32 %v2527, 1.442695
            %v2802 = vpow.pop %v2801
            %v2803 = vmul.f32 %v2528, 1.442695
            %v2804 = vpow.pop %v2803
            %v2805 = vmul.f32 %v2529, 1.442695
            %v2806 = vpow.pop %v2805
            %v2807 = vmul.f32 %v2530, 1.442695
            %v2808 = vpow.pop %v2807
            %v2809 = vmul.f32 %v2531, 1.442695
            %v2810 = vpow.pop %v2809
            %v2811 = vmul.f32 %v2532, 1.442695
            %v2812 = vpow.pop %v2811
            %v2813 = vmul.f32 %v2533, 1.442695
            %v2814 = vpow.pop %v2813
            %v2815 = vmul.f32 %v2534, 1.442695
            %v2816 = vpow.pop %v2815
            %v2817 = vmul.f32 %v2535, 1.442695
            %v2818 = vpow.pop %v2817
            %v2819 = vmul.f32 %v2536, 1.442695
            %v2820 = vpow.pop %v2819
            %v2821 = vmul.f32 %v2537, 1.442695
            %v2822 = vpow.pop %v2821
            %v2823 = vmul.f32 %v2538, 1.442695
            %v2824 = vpow.pop %v2823
            %v2825 = vmul.f32 %v2539, 1.442695
            %v2826 = vpow.pop %v2825
            %v2827 = vmul.f32 %v2540, 1.442695
            %v2828 = vpow.pop %v2827
            %v2829 = vmul.f32 %v2541, 1.442695
            %v2830 = vpow.pop %v2829
            %v2831 = vmul.f32 %v2542, 1.442695
            %v2832 = vpow.pop %v2831
            %v2833 = vmul.f32 %v2543, 1.442695
            %v2834 = vpow.pop %v2833
            %v2835 = vmul.f32 %v2544, 1.442695
            %v2836 = vpow.pop %v2835
            %v2837 = vmul.f32 %v2545, 1.442695
            %v2838 = vpow.pop %v2837
            %v2839 = vmul.f32 %v2546, 1.442695
            %v2840 = vpow.pop %v2839
            %v2841 = vmul.f32 %v2547, 1.442695
            %v2842 = vpow.pop %v2841
            %v2843 = vmul.f32 %v2548, 1.442695
            %v2844 = vpow.pop %v2843
            %v2845 = vmul.f32 %v2549, 1.442695
            %v2846 = vpow.pop %v2845
            %v2847 = vmul.f32 %v2550, 1.442695
            %v2848 = vpow.pop %v2847
            %v2849 = vmul.f32 %v2551, 1.442695
            %v2850 = vpow.pop %v2849
            %v2851 = vmul.f32 %v2552, 1.442695
            %v2852 = vpow.pop %v2851
            %v2853 = vmul.f32 %v2553, 1.442695
            %v2854 = vpow.pop %v2853
            %v2855 = vmul.f32 %v2554, 1.442695
            %v2856 = vpow.pop %v2855
            %v2857 = vmul.f32 %v2555, 1.442695
            %v2858 = vpow.pop %v2857
            %v2859 = vmul.f32 %v2556, 1.442695
            %v2860 = vpow.pop %v2859
            %v2861 = vmul.f32 %v2557, 1.442695
            %v2862 = vpow.pop %v2861
            %v2863 = vmul.f32 %v2558, 1.442695
            %v2864 = vpow.pop %v2863
            %v2865 = vmul.f32 %v2559, 1.442695
            %v2866 = vpow.pop %v2865
            %v2867 = vmul.f32 %v2560, 1.442695
            %v2868 = vpow.pop %v2867
            %v2869 = vmul.f32 %v2561, 1.442695
            %v2870 = vpow.pop %v2869
            %v2871 = vmul.f32 %v2562, 1.442695
            %v2872 = vpow.pop %v2871
            %v2873 = vmul.f32 %v2563, 1.442695
            %v2874 = vpow.pop %v2873
            %v2875 = vmul.f32 %v2564, 1.442695
            %v2876 = vpow.pop %v2875
            %v2877 = vmul.f32 %v2565, 1.442695
            %v2878 = vpow.pop %v2877
            %v2879 = vmul.f32 %v2566, 1.442695
            %v2880 = vpow.pop %v2879
            %v2881 = vmul.f32 %v2567, 1.442695
            %v2882 = vpow.pop %v2881
            %v2883 = vmul.f32 %v2568, 1.442695
            %v2884 = vpow.pop %v2883
            %v2885 = vmul.f32 %v2569, 1.442695
            %v2886 = vpow.pop %v2885
            %v2887 = vmul.f32 %v2570, 1.442695
            %v2888 = vpow.pop %v2887
            %v2889 = vmul.f32 %v2571, 1.442695
            %v2890 = vpow.pop %v2889
            %v2891 = vmul.f32 %v2572, 1.442695
            %v2892 = vpow.pop %v2891
            %v2893 = vmul.f32 %v2573, 1.442695
            %v2894 = vpow.pop %v2893
            %v2895 = vmul.f32 %v2574, 1.442695
            %v2896 = vpow.pop %v2895
            %v2897 = vmul.f32 %v2575, 1.442695
            %v2898 = vpow.pop %v2897
            %v2899 = vmul.f32 %v2576, 1.442695
            %v2900 = vpow.pop %v2899
            %v2901 = vmul.f32 %v2577, 1.442695
            %v2902 = vpow.pop %v2901
            %v2903 = vmul.f32 %v2578, 1.442695
            %v2904 = vpow.pop %v2903
            %v2905 = vmul.f32 %v2579, 1.442695
            %v2906 = vpow.pop %v2905
            %v2907 = vmul.f32 %v2580, 1.442695
            %v2908 = vpow.pop %v2907
            %v2909 = vmul.f32 %v2581, 1.442695
            %v2910 = vpow.pop %v2909
            %v2911 = vmul.f32 %v2582, 1.442695
            %v2912 = vpow.pop %v2911
            %v2913 = vmul.f32 %v2583, 1.442695
            %v2914 = vpow.pop %v2913
            %v2915 = vmul.f32 %v2584, 1.442695
            %v2916 = vpow.pop %v2915
            %v2917 = vmul.f32 %v2585, 1.442695
            %v2918 = vpow.pop %v2917
            %v2919 = vmul.f32 %v2586, 1.442695
            %v2920 = vpow.pop %v2919
            %v2921 = vmul.f32 %v2587, 1.442695
            %v2922 = vpow.pop %v2921
            %v2923 = vmul.f32 %v2588, 1.442695
            %v2924 = vpow.pop %v2923
            %v2925 = vmul.f32 %v2589, 1.442695
            %v2926 = vpow.pop %v2925
            %v2927 = vmul.f32 %v2590, 1.442695
            %v2928 = vpow.pop %v2927
            %v2929 = vmul.f32 %v2591, 1.442695
            %v2930 = vpow.pop %v2929
            %v2931 = vmul.f32 %v2592, 1.442695
            %v2932 = vpow.pop %v2931
            %v2933 = vmul.f32 %v2593, 1.442695
            %v2934 = vpow.pop %v2933
            %v2935 = vmul.f32 %v2594, 1.442695
            %v2936 = vpow.pop %v2935
            %v2937 = vmul.f32 %v2595, 1.442695
            %v2938 = vpow.pop %v2937
            %v2939 = vmul.f32 %v2596, 1.442695
            %v2940 = vpow.pop %v2939
            %v2941 = vmul.f32 %v2597, 1.442695
            %v2942 = vpow.pop %v2941
            %v2943 = vmul.f32 %v2598, 1.442695
            %v2944 = vpow.pop %v2943
            %v2945 = vmul.f32 %v2599, 1.442695
            %v2946 = vpow.pop %v2945
            %v2947 = vmul.f32 %v2600, 1.442695
            %v2948 = vpow.pop %v2947
            %v2949 = vmul.f32 %v2601, 1.442695
            %v2950 = vpow.pop %v2949
            %v2951 = vmul.f32 %v2602, 1.442695
            %v2952 = vpow.pop %v2951
            %v2953 = vmul.f32 %v2603, 1.442695
            %v2954 = vpow.pop %v2953
            %v2955 = vmul.f32 %v2604, 1.442695
            %v2956 = vpow.pop %v2955
            %v2957 = vmul.f32 %v2605, 1.442695
            %v2958 = vpow.pop %v2957
            %v2959 = vmul.f32 %v2606, 1.442695
            %v2960 = vpow.pop %v2959
            %v2961 = vmul.f32 %v2607, 1.442695
            %v2962 = vpow.pop %v2961
            %v2963 = vmul.f32 %v2608, 1.442695
            %v2964 = vpow.pop %v2963
            %v2965 = vmul.f32 %v2609, 1.442695
            %v2966 = vpow.pop %v2965
            %v2967 = vmul.f32 %v2610, 1.442695
            %v2968 = vpow.pop %v2967
            %v2969 = vmul.f32 %v2611, 1.442695
            %v2970 = vpow.pop %v2969
            %v2971 = vmul.f32 %v2612, 1.442695
            %v2972 = vpow.pop %v2971
            %v2973 = vmul.f32 %v2613, 1.442695
            %v2974 = vpow.pop %v2973
            %v2975 = vmul.f32 %v2614, 1.442695
            %v2976 = vpow.pop %v2975
            %v2977 = vmul.f32 %v2615, 1.442695
            %v2978 = vpow.pop %v2977
            %v2979 = vmul.f32 %v2616, 1.442695
            %v2980 = vpow.pop %v2979
            %v2981 = vmul.f32 %v2617, 1.442695
            %v2982 = vpow.pop %v2981
            %v2983 = vmul.f32 %v2618, 1.442695
            %v2984 = vpow.pop %v2983
            %v2985 = vmul.f32 %v2619, 1.442695
            %v2986 = vpow.pop %v2985
            %v2987 = vmul.f32 %v2620, 1.442695
            %v2988 = vpow.pop %v2987
            %v2989 = vmul.f32 %v2621, 1.442695
            %v2990 = vpow.pop %v2989
            %v2991 = vmul.f32 %v2622, 1.442695
            %v2992 = vpow.pop %v2991
            %v2993 = vmul.f32 %v2623, 1.442695
            %v2994 = vpow.pop %v2993
            %v2995 = vmul.f32 %v2624, 1.442695
            %v2996 = vpow.pop %v2995
            %v2997 = vmul.f32 %v2625, 1.442695
            %v2998 = vpow.pop %v2997
            %v2999 = vmul.f32 %v2626, 1.442695
            %v3000 = vpow.pop %v2999
            %v3001 = vmul.f32 %v2627, 1.442695
            %v3002 = vpow.pop %v3001
            %v3003 = vmul.f32 %v2628, 1.442695
            %v3004 = vpow.pop %v3003
            %v3005 = vmul.f32 %v2629, 1.442695
            %v3006 = vpow.pop %v3005
            %v3007 = vmul.f32 %v2630, 1.442695
            %v3008 = vpow.pop %v3007
            %v3009 = vmul.f32 %v2631, 1.442695
            %v3010 = vpow.pop %v3009
            %v3011 = vmul.f32 %v2632, 1.442695
            %v3012 = vpow.pop %v3011
            %v3013 = vmul.f32 %v2633, 1.442695
            %v3014 = vpow.pop %v3013
            %v3015 = vmul.f32 %v2634, 1.442695
            %v3016 = vpow.pop %v3015
            %v3017 = vmul.f32 %v2635, 1.442695
            %v3018 = vpow.pop %v3017
            %v3019 = vmul.f32 %v2636, 1.442695
            %v3020 = vpow.pop %v3019
            %v3021 = vmul.f32 %v2637, 1.442695
            %v3022 = vpow.pop %v3021
            %v3023 = vmul.f32 %v2638, 1.442695
            %v3024 = vpow.pop %v3023
            %v3025 = vmul.f32 %v2639, 1.442695
            %v3026 = vpow.pop %v3025
            %v3027 = vmul.f32 %v2640, 1.442695
            %v3028 = vpow.pop %v3027
            %v3029 = vmul.f32 %v2641, 1.442695
            %v3030 = vpow.pop %v3029
            %v3031 = vmul.f32 %v2642, 1.442695
            %v3032 = vpow.pop %v3031
            %v3033 = vmul.f32 %v2643, 1.442695
            %v3034 = vpow.pop %v3033
            %v3035 = vmul.f32 %v2644, 1.442695
            %v3036 = vpow.pop %v3035
            %v3037 = vmul.f32 %v2645, 1.442695
            %v3038 = vpow.pop %v3037
            %v3039 = vmul.f32 %v2646, 1.442695
            %v3040 = vpow.pop %v3039
            %v3041 = vmul.f32 %v2647, 1.442695
            %v3042 = vpow.pop %v3041
            %v3043 = vmul.f32 %v2648, 1.442695
            %v3044 = vpow.pop %v3043
            %v3045 = vmul.f32 %v2649, 1.442695
            %v3046 = vpow.pop %v3045
            %v3047 = vmul.f32 %v2650, 1.442695
            %v3048 = vpow.pop %v3047
            %v3049 = vmul.f32 %v2651, 1.442695
            %v3050 = vpow.pop %v3049
            %v3051 = vmul.f32 %v2652, 1.442695
            %v3052 = vpow.pop %v3051
            %v3053 = vmul.f32 %v2653, 1.442695
            %v3054 = vpow.pop %v3053
            %v3055 = vmul.f32 %v2654, 1.442695
            %v3056 = vpow.pop %v3055
            %v3057 = vmul.f32 %v2655, 1.442695
            %v3058 = vpow.pop %v3057
            %v3059 = vmul.f32 %v2656, 1.442695
            %v3060 = vpow.pop %v3059
            %v3061 = vmul.f32 %v2657, 1.442695
            %v3062 = vpow.pop %v3061
            %v3063 = vmul.f32 %v2658, 1.442695
            %v3064 = vpow.pop %v3063
            %v3065 = vmul.f32 %v2659, 1.442695
            %v3066 = vpow.pop %v3065
            %v3067 = vmul.f32 %v2660, 1.442695
            %v3068 = vpow.pop %v3067
            %v3069 = vmul.f32 %v2661, 1.442695
            %v3070 = vpow.pop %v3069
            %v3071 = vmul.f32 %v2662, 1.442695
            %v3072 = vpow.pop %v3071
            %v3073 = vmul.f32 %v2663, 1.442695
            %v3074 = vpow.pop %v3073
            %v3075 = vmul.f32 %v2664, 1.442695
            %v3076 = vpow.pop %v3075
            %v3077 = vmul.f32 %v2665, 1.442695
            %v3078 = vpow.pop %v3077
            %v3079 = vmul.f32 %v2666, 1.442695
            %v3080 = vpow.pop %v3079
            %v3081 = vmul.f32 %v2667, 1.442695
            %v3082 = vpow.pop %v3081
            %v3083 = vmul.f32 %v2668, 1.442695
            %v3084 = vpow.pop %v3083
            %v3085 = vmul.f32 %v2669, 1.442695
            %v3086 = vpow.pop %v3085
            %v3087 = vmul.f32 %v2670, 1.442695
            %v3088 = vpow.pop %v3087
            %v3089 = vmul.f32 %v2671, 1.442695
            %v3090 = vpow.pop %v3089
            %v3091 = vmul.f32 %v2672, 1.442695
            %v3092 = vpow.pop %v3091
            %v3093 = vmul.f32 %v2673, 1.442695
            %v3094 = vpow.pop %v3093
            %v3095 = vmul.f32 %v2674, 1.442695
            %v3096 = vpow.pop %v3095
            %v3097 = vmul.f32 %v2675, 1.442695
            %v3098 = vpow.pop %v3097
            %v3099 = vmul.f32 %v2676, 1.442695
            %v3100 = vpow.pop %v3099
            %v3101 = vmul.f32 %v2677, 1.442695
            %v3102 = vpow.pop %v3101
            %v3103 = vmul.f32 %v2678, 1.442695
            %v3104 = vpow.pop %v3103
            %v3105 = vmul.f32 %v2679, 1.442695
            %v3106 = vpow.pop %v3105
            %v3107 = vmul.f32 %v2680, 1.442695
            %v3108 = vpow.pop %v3107
            %v3109 = vmul.f32 %v2681, 1.442695
            %v3110 = vpow.pop %v3109
            %v3111 = vmul.f32 %v2682, 1.442695
            %v3112 = vpow.pop %v3111
            %v3113 = vmul.f32 %v2683, 1.442695
            %v3114 = vpow.pop %v3113
            %v3115 = vmul.f32 %v2684, 1.442695
            %v3116 = vpow.pop %v3115
            %v3117 = vmul.f32 %v2685, 1.442695
            %v3118 = vpow.pop %v3117
            %v3119 = vmul.f32 %v2686, 1.442695
            %v3120 = vpow.pop %v3119
            %v3121 = vmul.f32 %v2687, 1.442695
            %v3122 = vpow.pop %v3121
            %v3123 = vmul.f32 %v2688, 1.442695
            %v3124 = vpow.pop %v3123
            %v3125 = vmul.f32 %v2689, 1.442695
            %v3126 = vpow.pop %v3125
            %v3127 = vmul.f32 %v2690, 1.442695
            %v3128 = vpow.pop %v3127
            %v3129 = vmul.f32 %v2691, 1.442695
            %v3130 = vpow.pop %v3129
            %v3131 = vmul.f32 %v2692, 1.442695
            %v3132 = vpow.pop %v3131
            %v3133 = vmul.f32 %v2693, 1.442695
            %v3134 = vpow.pop %v3133
            %v3135 = vmul.f32 %v2694, 1.442695
            %v3136 = vpow.pop %v3135
            %v3137 = vmul.f32 %v2695, 1.442695
            %v3138 = vpow.pop %v3137
            %v3139 = vmul.f32 %v2696, 1.442695
            %v3140 = vpow.pop %v3139
            %v3141 = vmul.f32 %v2697, 1.442695
            %v3142 = vpow.pop %v3141
            %v3143 = vmul.f32 %v2698, 1.442695
            %v3144 = vpow.pop %v3143
            %v3145 = vmul.f32 %v2699, 1.442695
            %v3146 = vpow.pop %v3145
            %v3147 = vmul.f32 %v2700, 1.442695
            %v3148 = vpow.pop %v3147
            %v3149 = vmul.f32 %v2701, 1.442695
            %v3150 = vpow.pop %v3149
            %v3151 = vmul.f32 %v2702, 1.442695
            %v3152 = vpow.pop %v3151
            %v3153 = vmul.f32 %v2703, 1.442695
            %v3154 = vpow.pop %v3153
            %v3155 = vmul.f32 %v2704, 1.442695
            %v3156 = vpow.pop %v3155
            %v3157 = vmul.f32 %v2705, 1.442695
            %v3158 = vpow.pop %v3157
            %v3159 = vmul.f32 %v2706, 1.442695
            %v3160 = vpow.pop %v3159
            %v3161 = vmul.f32 %v2707, 1.442695
            %v3162 = vpow.pop %v3161
            %v3163 = vmul.f32 %v2708, 1.442695
            %v3164 = vpow.pop %v3163
            %v3165 = vmul.f32 %v2709, 1.442695
            %v3166 = vpow.pop %v3165
            %v3167 = vmul.f32 %v2710, 1.442695
            %v3168 = vpow.pop %v3167
            %v3169 = vmul.f32 %v2711, 1.442695
            %v3170 = vpow.pop %v3169
            %v3171 = vmul.f32 %v2712, 1.442695
            %v3172 = vpow.pop %v3171
            %v3173 = vmul.f32 %v2713, 1.442695
            %v3174 = vpow.pop %v3173
            %v3175 = vmul.f32 %v2714, 1.442695
            %v3176 = vpow.pop %v3175
            %v3177 = vmul.f32 %v2715, 1.442695
            %v3178 = vpow.pop %v3177
            %v3179 = vmul.f32 %v2716, 1.442695
            %v3180 = vpow.pop %v3179
            %v3181 = vmul.f32 %v2717, 1.442695
            %v3182 = vpow.pop %v3181
            %v3183 = vmul.f32 %v2718, 1.442695
            %v3184 = vpow.pop %v3183
            %v3185 = vmul.f32 %v2719, 1.442695
            %v3186 = vpow.pop %v3185
            %v3187 = vmul.f32 %v2720, 1.442695
            %v3188 = vpow.pop %v3187
            %v3189 = vmul.f32 %v2721, 1.442695
            %v3190 = vpow.pop %v3189
            %v3191 = vmul.f32 %v2722, 1.442695
            %v3192 = vpow.pop %v3191
            %v3193 = vmul.f32 %v2723, 1.442695
            %v3194 = vpow.pop %v3193
            %v3195 = vmul.f32 %v2724, 1.442695
            %v3196 = vpow.pop %v3195
            %v3197 = vmul.f32 %v2725, 1.442695
            %v3198 = vpow.pop %v3197
            %v3199 = vmul.f32 %v2726, 1.442695
            %v3200 = vpow.pop %v3199
            %v3201 = vmul.f32 %v2727, 1.442695
            %v3202 = vpow.pop %v3201
            %v3203 = vmul.f32 %v2728, 1.442695
            %v3204 = vpow.pop %v3203
            %v3205 = vmul.f32 %v2729, 1.442695
            %v3206 = vpow.pop %v3205
            %v3207 = vmul.f32 %v2730, 1.442695
            %v3208 = vpow.pop %v3207
            %v3209 = vmul.f32 %v2731, 1.442695
            %v3210 = vpow.pop %v3209
            %v3211 = vmul.f32 %v2732, 1.442695
            %v3212 = vpow.pop %v3211
            %v3213 = vmul.f32 %v2733, 1.442695
            %v3214 = vpow.pop %v3213
            %v3215 = vmul.f32 %v2734, 1.442695
            %v3216 = vpow.pop %v3215
            %v3217 = vmul.f32 %v2735, 1.442695
            %v3218 = vpow.pop %v3217
            %v3219 = vmul.f32 %v2736, 1.442695
            %v3220 = vpow.pop %v3219
            %v3221 = vmul.f32 %v2737, 1.442695
            %v3222 = vpow.pop %v3221
            %v3223 = vmul.f32 %v2738, 1.442695
            %v3224 = vpow.pop %v3223
            %v3225 = vmul.f32 %v2739, 1.442695
            %v3226 = vpow.pop %v3225
            %v3227 = vmul.f32 %v2740, 1.442695
            %v3228 = vpow.pop %v3227
            %v3229 = vmul.f32 %v2741, 1.442695
            %v3230 = vpow.pop %v3229
            %v3231 = vmul.f32 %v2742, 1.442695
            %v3232 = vpow.pop %v3231
            %v3233 = vmul.f32 %v2743, 1.442695
            %v3234 = vpow.pop %v3233
            %v3235 = vmul.f32 %v2744, 1.442695
            %v3236 = vpow.pop %v3235
            %v3237 = vmul.f32 %v2745, 1.442695
            %v3238 = vpow.pop %v3237
            %v3239 = vmul.f32 %v2746, 1.442695
            %v3240 = vpow.pop %v3239
            %v3241 = vmul.f32 %v2747, 1.442695
            %v3242 = vpow.pop %v3241
            %v3243 = vmul.f32 %v2748, 1.442695
            %v3244 = vpow.pop %v3243
            %v3245 = vmul.f32 %v2749, 1.442695
            %v3246 = vpow.pop %v3245
            %v3247 = vmul.f32 %v2750, 1.442695
            %v3248 = vpow.pop %v3247
            %v3249 = vmul.f32 %v2751, 1.442695
            %v3250 = vpow.pop %v3249
            %v3251 = vmul.f32 %v2752, 1.442695
            %v3252 = vpow.pop %v3251
            %v3253 = vmul.f32 %v2753, 1.442695
            %v3254 = vpow.pop %v3253
            %v3255 = vmul.f32 %v2754, 1.442695
            %v3256 = vpow.pop %v3255
            %v3257 = vmul.f32 %v2755, 1.442695
            %v3258 = vpow.pop %v3257
            %v3259 = vmul.f32 %v2756, 1.442695
            %v3260 = vpow.pop %v3259
            %v3261 = vmul.f32 %v2757, 1.442695
            %v3262 = vpow.pop %v3261
            %v3263 = vmul.f32 %v2758, 1.442695
            %v3264 = vpow.pop %v3263
            %v3265 = vmul.f32 %v2759, 1.442695
            %v3266 = vpow.pop %v3265
            %v3267 = vmul.f32 %v2760, 1.442695
            %v3268 = vpow.pop %v3267
            %v3269 = vmul.f32 %v2761, 1.442695
            %v3270 = vpow.pop %v3269
            %v3271 = vmul.f32 %v2762, 1.442695
            %v3272 = vpow.pop %v3271
            %v3273 = vmul.f32 %v2763, 1.442695
            %v3274 = vpow.pop %v3273
            %v3275 = vmul.f32 %v2764, 1.442695
            %v3276 = vpow.pop %v3275
            %v3277 = vadd.f32 %v2766, %v2768
            %v3278 = vadd.f32 %v3277, %v2770
            %v3279 = vadd.f32 %v3278, %v2772
            %3280 = vadd.xlane.f32.xlu0 %v3279
            %v3281 = vpop.xlane.xlu0 %3280
            %v3282 = vadd.f32 %v2774, %v2776
            %v3283 = vadd.f32 %v3282, %v2778
            %v3284 = vadd.f32 %v3283, %v2780
            %3285 = vadd.xlane.f32.xlu0 %v3284
            %v3286 = vpop.xlane.xlu0 %3285
            %v3287 = vadd.f32 %v2782, %v2784
            %v3288 = vadd.f32 %v3287, %v2786
            %v3289 = vadd.f32 %v3288, %v2788
            %3290 = vadd.xlane.f32.xlu0 %v3289
            %v3291 = vpop.xlane.xlu0 %3290
            %v3292 = vadd.f32 %v2790, %v2792
            %v3293 = vadd.f32 %v3292, %v2794
            %v3294 = vadd.f32 %v3293, %v2796
            %3295 = vadd.xlane.f32.xlu0 %v3294
            %v3296 = vpop.xlane.xlu0 %3295
            %v3297 = vadd.f32 %v2798, %v2800
            %v3298 = vadd.f32 %v3297, %v2802
            %v3299 = vadd.f32 %v3298, %v2804
            %3300 = vadd.xlane.f32.xlu0 %v3299
            %v3301 = vpop.xlane.xlu0 %3300
            %v3302 = vadd.f32 %v2806, %v2808
            %v3303 = vadd.f32 %v3302, %v2810
            %v3304 = vadd.f32 %v3303, %v2812
            %3305 = vadd.xlane.f32.xlu0 %v3304
            %v3306 = vpop.xlane.xlu0 %3305
            %v3307 = vadd.f32 %v2814, %v2816
            %v3308 = vadd.f32 %v3307, %v2818
            %v3309 = vadd.f32 %v3308, %v2820
            %3310 = vadd.xlane.f32.xlu0 %v3309
            %v3311 = vpop.xlane.xlu0 %3310
            %v3312 = vadd.f32 %v2822, %v2824
            %v3313 = vadd.f32 %v3312, %v2826
            %v3314 = vadd.f32 %v3313, %v2828
            %3315 = vadd.xlane.f32.xlu0 %v3314
            %v3316 = vpop.xlane.xlu0 %3315
            %v3317 = vadd.f32 %v2830, %v2832
            %v3318 = vadd.f32 %v3317, %v2834
            %v3319 = vadd.f32 %v3318, %v2836
            %3320 = vadd.xlane.f32.xlu0 %v3319
            %v3321 = vpop.xlane.xlu0 %3320
            %v3322 = vadd.f32 %v2838, %v2840
            %v3323 = vadd.f32 %v3322, %v2842
            %v3324 = vadd.f32 %v3323, %v2844
            %3325 = vadd.xlane.f32.xlu0 %v3324
            %v3326 = vpop.xlane.xlu0 %3325
            %v3327 = vadd.f32 %v2846, %v2848
            %v3328 = vadd.f32 %v3327, %v2850
            %v3329 = vadd.f32 %v3328, %v2852
            %3330 = vadd.xlane.f32.xlu0 %v3329
            %v3331 = vpop.xlane.xlu0 %3330
            %v3332 = vadd.f32 %v2854, %v2856
            %v3333 = vadd.f32 %v3332, %v2858
            %v3334 = vadd.f32 %v3333, %v2860
            %3335 = vadd.xlane.f32.xlu0 %v3334
            %v3336 = vpop.xlane.xlu0 %3335
            %v3337 = vadd.f32 %v2862, %v2864
            %v3338 = vadd.f32 %v3337, %v2866
            %v3339 = vadd.f32 %v3338, %v2868
            %3340 = vadd.xlane.f32.xlu0 %v3339
            %v3341 = vpop.xlane.xlu0 %3340
            %v3342 = vadd.f32 %v2870, %v2872
            %v3343 = vadd.f32 %v3342, %v2874
            %v3344 = vadd.f32 %v3343, %v2876
            %3345 = vadd.xlane.f32.xlu0 %v3344
            %v3346 = vpop.xlane.xlu0 %3345
            %v3347 = vadd.f32 %v2878, %v2880
            %v3348 = vadd.f32 %v3347, %v2882
            %v3349 = vadd.f32 %v3348, %v2884
            %3350 = vadd.xlane.f32.xlu0 %v3349
            %v3351 = vpop.xlane.xlu0 %3350
            %v3352 = vadd.f32 %v2886, %v2888
            %v3353 = vadd.f32 %v3352, %v2890
            %v3354 = vadd.f32 %v3353, %v2892
            %3355 = vadd.xlane.f32.xlu0 %v3354
            %v3356 = vpop.xlane.xlu0 %3355
            %v3357 = vadd.f32 %v2894, %v2896
            %v3358 = vadd.f32 %v3357, %v2898
            %v3359 = vadd.f32 %v3358, %v2900
            %3360 = vadd.xlane.f32.xlu0 %v3359
            %v3361 = vpop.xlane.xlu0 %3360
            %v3362 = vadd.f32 %v2902, %v2904
            %v3363 = vadd.f32 %v3362, %v2906
            %v3364 = vadd.f32 %v3363, %v2908
            %3365 = vadd.xlane.f32.xlu0 %v3364
            %v3366 = vpop.xlane.xlu0 %3365
            %v3367 = vadd.f32 %v2910, %v2912
            %v3368 = vadd.f32 %v3367, %v2914
            %v3369 = vadd.f32 %v3368, %v2916
            %3370 = vadd.xlane.f32.xlu0 %v3369
            %v3371 = vpop.xlane.xlu0 %3370
            %v3372 = vadd.f32 %v2918, %v2920
            %v3373 = vadd.f32 %v3372, %v2922
            %v3374 = vadd.f32 %v3373, %v2924
            %3375 = vadd.xlane.f32.xlu0 %v3374
            %v3376 = vpop.xlane.xlu0 %3375
            %v3377 = vadd.f32 %v2926, %v2928
            %v3378 = vadd.f32 %v3377, %v2930
            %v3379 = vadd.f32 %v3378, %v2932
            %3380 = vadd.xlane.f32.xlu0 %v3379
            %v3381 = vpop.xlane.xlu0 %3380
            %v3382 = vadd.f32 %v2934, %v2936
            %v3383 = vadd.f32 %v3382, %v2938
            %v3384 = vadd.f32 %v3383, %v2940
            %3385 = vadd.xlane.f32.xlu0 %v3384
            %v3386 = vpop.xlane.xlu0 %3385
            %v3387 = vadd.f32 %v2942, %v2944
            %v3388 = vadd.f32 %v3387, %v2946
            %v3389 = vadd.f32 %v3388, %v2948
            %3390 = vadd.xlane.f32.xlu0 %v3389
            %v3391 = vpop.xlane.xlu0 %3390
            %v3392 = vadd.f32 %v2950, %v2952
            %v3393 = vadd.f32 %v3392, %v2954
            %v3394 = vadd.f32 %v3393, %v2956
            %3395 = vadd.xlane.f32.xlu0 %v3394
            %v3396 = vpop.xlane.xlu0 %3395
            %v3397 = vadd.f32 %v2958, %v2960
            %v3398 = vadd.f32 %v3397, %v2962
            %v3399 = vadd.f32 %v3398, %v2964
            %3400 = vadd.xlane.f32.xlu0 %v3399
            %v3401 = vpop.xlane.xlu0 %3400
            %v3402 = vadd.f32 %v2966, %v2968
            %v3403 = vadd.f32 %v3402, %v2970
            %v3404 = vadd.f32 %v3403, %v2972
            %3405 = vadd.xlane.f32.xlu0 %v3404
            %v3406 = vpop.xlane.xlu0 %3405
            %v3407 = vadd.f32 %v2974, %v2976
            %v3408 = vadd.f32 %v3407, %v2978
            %v3409 = vadd.f32 %v3408, %v2980
            %3410 = vadd.xlane.f32.xlu0 %v3409
            %v3411 = vpop.xlane.xlu0 %3410
            %v3412 = vadd.f32 %v2982, %v2984
            %v3413 = vadd.f32 %v3412, %v2986
            %v3414 = vadd.f32 %v3413, %v2988
            %3415 = vadd.xlane.f32.xlu0 %v3414
            %v3416 = vpop.xlane.xlu0 %3415
            %v3417 = vadd.f32 %v2990, %v2992
            %v3418 = vadd.f32 %v3417, %v2994
            %v3419 = vadd.f32 %v3418, %v2996
            %3420 = vadd.xlane.f32.xlu0 %v3419
            %v3421 = vpop.xlane.xlu0 %3420
            %v3422 = vadd.f32 %v2998, %v3000
            %v3423 = vadd.f32 %v3422, %v3002
            %v3424 = vadd.f32 %v3423, %v3004
            %3425 = vadd.xlane.f32.xlu0 %v3424
            %v3426 = vpop.xlane.xlu0 %3425
            %v3427 = vadd.f32 %v3006, %v3008
            %v3428 = vadd.f32 %v3427, %v3010
            %v3429 = vadd.f32 %v3428, %v3012
            %3430 = vadd.xlane.f32.xlu0 %v3429
            %v3431 = vpop.xlane.xlu0 %3430
            %v3432 = vadd.f32 %v3014, %v3016
            %v3433 = vadd.f32 %v3432, %v3018
            %v3434 = vadd.f32 %v3433, %v3020
            %3435 = vadd.xlane.f32.xlu0 %v3434
            %v3436 = vpop.xlane.xlu0 %3435
            %v3437 = vadd.f32 %v3022, %v3024
            %v3438 = vadd.f32 %v3437, %v3026
            %v3439 = vadd.f32 %v3438, %v3028
            %3440 = vadd.xlane.f32.xlu0 %v3439
            %v3441 = vpop.xlane.xlu0 %3440
            %v3442 = vadd.f32 %v3030, %v3032
            %v3443 = vadd.f32 %v3442, %v3034
            %v3444 = vadd.f32 %v3443, %v3036
            %3445 = vadd.xlane.f32.xlu0 %v3444
            %v3446 = vpop.xlane.xlu0 %3445
            %v3447 = vadd.f32 %v3038, %v3040
            %v3448 = vadd.f32 %v3447, %v3042
            %v3449 = vadd.f32 %v3448, %v3044
            %3450 = vadd.xlane.f32.xlu0 %v3449
            %v3451 = vpop.xlane.xlu0 %3450
            %v3452 = vadd.f32 %v3046, %v3048
            %v3453 = vadd.f32 %v3452, %v3050
            %v3454 = vadd.f32 %v3453, %v3052
            %3455 = vadd.xlane.f32.xlu0 %v3454
            %v3456 = vpop.xlane.xlu0 %3455
            %v3457 = vadd.f32 %v3054, %v3056
            %v3458 = vadd.f32 %v3457, %v3058
            %v3459 = vadd.f32 %v3458, %v3060
            %3460 = vadd.xlane.f32.xlu0 %v3459
            %v3461 = vpop.xlane.xlu0 %3460
            %v3462 = vadd.f32 %v3062, %v3064
            %v3463 = vadd.f32 %v3462, %v3066
            %v3464 = vadd.f32 %v3463, %v3068
            %3465 = vadd.xlane.f32.xlu0 %v3464
            %v3466 = vpop.xlane.xlu0 %3465
            %v3467 = vadd.f32 %v3070, %v3072
            %v3468 = vadd.f32 %v3467, %v3074
            %v3469 = vadd.f32 %v3468, %v3076
            %3470 = vadd.xlane.f32.xlu0 %v3469
            %v3471 = vpop.xlane.xlu0 %3470
            %v3472 = vadd.f32 %v3078, %v3080
            %v3473 = vadd.f32 %v3472, %v3082
            %v3474 = vadd.f32 %v3473, %v3084
            %3475 = vadd.xlane.f32.xlu0 %v3474
            %v3476 = vpop.xlane.xlu0 %3475
            %v3477 = vadd.f32 %v3086, %v3088
            %v3478 = vadd.f32 %v3477, %v3090
            %v3479 = vadd.f32 %v3478, %v3092
            %3480 = vadd.xlane.f32.xlu0 %v3479
            %v3481 = vpop.xlane.xlu0 %3480
            %v3482 = vadd.f32 %v3094, %v3096
            %v3483 = vadd.f32 %v3482, %v3098
            %v3484 = vadd.f32 %v3483, %v3100
            %3485 = vadd.xlane.f32.xlu0 %v3484
            %v3486 = vpop.xlane.xlu0 %3485
            %v3487 = vadd.f32 %v3102, %v3104
            %v3488 = vadd.f32 %v3487, %v3106
            %v3489 = vadd.f32 %v3488, %v3108
            %3490 = vadd.xlane.f32.xlu0 %v3489
            %v3491 = vpop.xlane.xlu0 %3490
            %v3492 = vadd.f32 %v3110, %v3112
            %v3493 = vadd.f32 %v3492, %v3114
            %v3494 = vadd.f32 %v3493, %v3116
            %3495 = vadd.xlane.f32.xlu0 %v3494
            %v3496 = vpop.xlane.xlu0 %3495
            %v3497 = vadd.f32 %v3118, %v3120
            %v3498 = vadd.f32 %v3497, %v3122
            %v3499 = vadd.f32 %v3498, %v3124
            %3500 = vadd.xlane.f32.xlu0 %v3499
            %v3501 = vpop.xlane.xlu0 %3500
            %v3502 = vadd.f32 %v3126, %v3128
            %v3503 = vadd.f32 %v3502, %v3130
            %v3504 = vadd.f32 %v3503, %v3132
            %3505 = vadd.xlane.f32.xlu0 %v3504
            %v3506 = vpop.xlane.xlu0 %3505
            %v3507 = vadd.f32 %v3134, %v3136
            %v3508 = vadd.f32 %v3507, %v3138
            %v3509 = vadd.f32 %v3508, %v3140
            %3510 = vadd.xlane.f32.xlu0 %v3509
            %v3511 = vpop.xlane.xlu0 %3510
            %v3512 = vadd.f32 %v3142, %v3144
            %v3513 = vadd.f32 %v3512, %v3146
            %v3514 = vadd.f32 %v3513, %v3148
            %3515 = vadd.xlane.f32.xlu0 %v3514
            %v3516 = vpop.xlane.xlu0 %3515
            %v3517 = vadd.f32 %v3150, %v3152
            %v3518 = vadd.f32 %v3517, %v3154
            %v3519 = vadd.f32 %v3518, %v3156
            %3520 = vadd.xlane.f32.xlu0 %v3519
            %v3521 = vpop.xlane.xlu0 %3520
            %v3522 = vadd.f32 %v3158, %v3160
            %v3523 = vadd.f32 %v3522, %v3162
            %v3524 = vadd.f32 %v3523, %v3164
            %3525 = vadd.xlane.f32.xlu0 %v3524
            %v3526 = vpop.xlane.xlu0 %3525
            %v3527 = vadd.f32 %v3166, %v3168
            %v3528 = vadd.f32 %v3527, %v3170
            %v3529 = vadd.f32 %v3528, %v3172
            %3530 = vadd.xlane.f32.xlu0 %v3529
            %v3531 = vpop.xlane.xlu0 %3530
            %v3532 = vadd.f32 %v3174, %v3176
            %v3533 = vadd.f32 %v3532, %v3178
            %v3534 = vadd.f32 %v3533, %v3180
            %3535 = vadd.xlane.f32.xlu0 %v3534
            %v3536 = vpop.xlane.xlu0 %3535
            %v3537 = vadd.f32 %v3182, %v3184
            %v3538 = vadd.f32 %v3537, %v3186
            %v3539 = vadd.f32 %v3538, %v3188
            %3540 = vadd.xlane.f32.xlu0 %v3539
            %v3541 = vpop.xlane.xlu0 %3540
            %v3542 = vadd.f32 %v3190, %v3192
            %v3543 = vadd.f32 %v3542, %v3194
            %v3544 = vadd.f32 %v3543, %v3196
            %3545 = vadd.xlane.f32.xlu0 %v3544
            %v3546 = vpop.xlane.xlu0 %3545
            %v3547 = vadd.f32 %v3198, %v3200
            %v3548 = vadd.f32 %v3547, %v3202
            %v3549 = vadd.f32 %v3548, %v3204
            %3550 = vadd.xlane.f32.xlu0 %v3549
            %v3551 = vpop.xlane.xlu0 %3550
            %v3552 = vadd.f32 %v3206, %v3208
            %v3553 = vadd.f32 %v3552, %v3210
            %v3554 = vadd.f32 %v3553, %v3212
            %3555 = vadd.xlane.f32.xlu0 %v3554
            %v3556 = vpop.xlane.xlu0 %3555
            %v3557 = vadd.f32 %v3214, %v3216
            %v3558 = vadd.f32 %v3557, %v3218
            %v3559 = vadd.f32 %v3558, %v3220
            %3560 = vadd.xlane.f32.xlu0 %v3559
            %v3561 = vpop.xlane.xlu0 %3560
            %v3562 = vadd.f32 %v3222, %v3224
            %v3563 = vadd.f32 %v3562, %v3226
            %v3564 = vadd.f32 %v3563, %v3228
            %3565 = vadd.xlane.f32.xlu0 %v3564
            %v3566 = vpop.xlane.xlu0 %3565
            %v3567 = vadd.f32 %v3230, %v3232
            %v3568 = vadd.f32 %v3567, %v3234
            %v3569 = vadd.f32 %v3568, %v3236
            %3570 = vadd.xlane.f32.xlu0 %v3569
            %v3571 = vpop.xlane.xlu0 %3570
            %v3572 = vadd.f32 %v3238, %v3240
            %v3573 = vadd.f32 %v3572, %v3242
            %v3574 = vadd.f32 %v3573, %v3244
            %3575 = vadd.xlane.f32.xlu0 %v3574
            %v3576 = vpop.xlane.xlu0 %3575
            %v3577 = vadd.f32 %v3246, %v3248
            %v3578 = vadd.f32 %v3577, %v3250
            %v3579 = vadd.f32 %v3578, %v3252
            %3580 = vadd.xlane.f32.xlu0 %v3579
            %v3581 = vpop.xlane.xlu0 %3580
            %v3582 = vadd.f32 %v3254, %v3256
            %v3583 = vadd.f32 %v3582, %v3258
            %v3584 = vadd.f32 %v3583, %v3260
            %3585 = vadd.xlane.f32.xlu0 %v3584
            %v3586 = vpop.xlane.xlu0 %3585
            %v3587 = vadd.f32 %v3262, %v3264
            %v3588 = vadd.f32 %v3587, %v3266
            %v3589 = vadd.f32 %v3588, %v3268
            %3590 = vadd.xlane.f32.xlu0 %v3589
            %v3591 = vpop.xlane.xlu0 %3590
            %v3592 = vadd.f32 %v3270, %v3272
            %v3593 = vadd.f32 %v3592, %v3274
            %v3594 = vadd.f32 %v3593, %v3276
            %3595 = vadd.xlane.f32.xlu0 %v3594
            %v3596 = vpop.xlane.xlu0 %3595
            %v3597 = vadd.f32 %v2125, %v3281
            %v3598 = vadd.f32 %v2126, %v3286
            %v3599 = vadd.f32 %v2127, %v3291
            %v3600 = vadd.f32 %v2128, %v3296
            %v3601 = vadd.f32 %v2129, %v3301
            %v3602 = vadd.f32 %v2130, %v3306
            %v3603 = vadd.f32 %v2131, %v3311
            %v3604 = vadd.f32 %v2132, %v3316
            %v3605 = vadd.f32 %v2133, %v3321
            %v3606 = vadd.f32 %v2134, %v3326
            %v3607 = vadd.f32 %v2135, %v3331
            %v3608 = vadd.f32 %v2136, %v3336
            %v3609 = vadd.f32 %v2137, %v3341
            %v3610 = vadd.f32 %v2138, %v3346
            %v3611 = vadd.f32 %v2139, %v3351
            %v3612 = vadd.f32 %v2140, %v3356
            %v3613 = vadd.f32 %v2141, %v3361
            %v3614 = vadd.f32 %v2142, %v3366
            %v3615 = vadd.f32 %v2143, %v3371
            %v3616 = vadd.f32 %v2144, %v3376
            %v3617 = vadd.f32 %v2145, %v3381
            %v3618 = vadd.f32 %v2146, %v3386
            %v3619 = vadd.f32 %v2147, %v3391
            %v3620 = vadd.f32 %v2148, %v3396
            %v3621 = vadd.f32 %v2149, %v3401
            %v3622 = vadd.f32 %v2150, %v3406
            %v3623 = vadd.f32 %v2151, %v3411
            %v3624 = vadd.f32 %v2152, %v3416
            %v3625 = vadd.f32 %v2153, %v3421
            %v3626 = vadd.f32 %v2154, %v3426
            %v3627 = vadd.f32 %v2155, %v3431
            %v3628 = vadd.f32 %v2156, %v3436
            %v3629 = vadd.f32 %v2157, %v3441
            %v3630 = vadd.f32 %v2158, %v3446
            %v3631 = vadd.f32 %v2159, %v3451
            %v3632 = vadd.f32 %v2160, %v3456
            %v3633 = vadd.f32 %v2161, %v3461
            %v3634 = vadd.f32 %v2162, %v3466
            %v3635 = vadd.f32 %v2163, %v3471
            %v3636 = vadd.f32 %v2164, %v3476
            %v3637 = vadd.f32 %v2165, %v3481
            %v3638 = vadd.f32 %v2166, %v3486
            %v3639 = vadd.f32 %v2167, %v3491
            %v3640 = vadd.f32 %v2168, %v3496
            %v3641 = vadd.f32 %v2169, %v3501
            %v3642 = vadd.f32 %v2170, %v3506
            %v3643 = vadd.f32 %v2171, %v3511
            %v3644 = vadd.f32 %v2172, %v3516
            %v3645 = vadd.f32 %v2173, %v3521
            %v3646 = vadd.f32 %v2174, %v3526
            %v3647 = vadd.f32 %v2175, %v3531
            %v3648 = vadd.f32 %v2176, %v3536
            %v3649 = vadd.f32 %v2177, %v3541
            %v3650 = vadd.f32 %v2178, %v3546
            %v3651 = vadd.f32 %v2179, %v3551
            %v3652 = vadd.f32 %v2180, %v3556
            %v3653 = vadd.f32 %v2181, %v3561
            %v3654 = vadd.f32 %v2182, %v3566
            %v3655 = vadd.f32 %v2183, %v3571
            %v3656 = vadd.f32 %v2184, %v3576
            %v3657 = vadd.f32 %v2185, %v3581
            %v3658 = vadd.f32 %v2186, %v3586
            %v3659 = vadd.f32 %v2187, %v3591
            %v3660 = vadd.f32 %v2188, %v3596
            %vm3661 = vcmask 7168
            %3662 = vst.msk [vmem:[#allocation3] sm:$0xff] %vm3661, %v3597
            %3663 = vst.msk [vmem:[#allocation3 + $0x8] sm:$0xff] %vm3661, %v3598
            %3664 = vst.msk [vmem:[#allocation3 + $0x10] sm:$0xff] %vm3661, %v3599
            %3665 = vst.msk [vmem:[#allocation3 + $0x18] sm:$0xff] %vm3661, %v3600
            %3666 = vst.msk [vmem:[#allocation3 + $0x20] sm:$0xff] %vm3661, %v3601
            %3667 = vst.msk [vmem:[#allocation3 + $0x28] sm:$0xff] %vm3661, %v3602
            %3668 = vst.msk [vmem:[#allocation3 + $0x30] sm:$0xff] %vm3661, %v3603
            %3669 = vst.msk [vmem:[#allocation3 + $0x38] sm:$0xff] %vm3661, %v3604
            %3670 = vst.msk [vmem:[#allocation3 + $0x40] sm:$0xff] %vm3661, %v3605
            %3671 = vst.msk [vmem:[#allocation3 + $0x48] sm:$0xff] %vm3661, %v3606
            %3672 = vst.msk [vmem:[#allocation3 + $0x50] sm:$0xff] %vm3661, %v3607
            %3673 = vst.msk [vmem:[#allocation3 + $0x58] sm:$0xff] %vm3661, %v3608
            %3674 = vst.msk [vmem:[#allocation3 + $0x60] sm:$0xff] %vm3661, %v3609
            %3675 = vst.msk [vmem:[#allocation3 + $0x68] sm:$0xff] %vm3661, %v3610
            %3676 = vst.msk [vmem:[#allocation3 + $0x70] sm:$0xff] %vm3661, %v3611
            %3677 = vst.msk [vmem:[#allocation3 + $0x78] sm:$0xff] %vm3661, %v3612
            %3678 = vst.msk [vmem:[#allocation3 + $0x80] sm:$0xff] %vm3661, %v3613
            %3679 = vst.msk [vmem:[#allocation3 + $0x88] sm:$0xff] %vm3661, %v3614
            %3680 = vst.msk [vmem:[#allocation3 + $0x90] sm:$0xff] %vm3661, %v3615
            %3681 = vst.msk [vmem:[#allocation3 + $0x98] sm:$0xff] %vm3661, %v3616
            %3682 = vst.msk [vmem:[#allocation3 + $0xa0] sm:$0xff] %vm3661, %v3617
            %3683 = vst.msk [vmem:[#allocation3 + $0xa8] sm:$0xff] %vm3661, %v3618
            %3684 = vst.msk [vmem:[#allocation3 + $0xb0] sm:$0xff] %vm3661, %v3619
            %3685 = vst.msk [vmem:[#allocation3 + $0xb8] sm:$0xff] %vm3661, %v3620
            %3686 = vst.msk [vmem:[#allocation3 + $0xc0] sm:$0xff] %vm3661, %v3621
            %3687 = vst.msk [vmem:[#allocation3 + $0xc8] sm:$0xff] %vm3661, %v3622
            %3688 = vst.msk [vmem:[#allocation3 + $0xd0] sm:$0xff] %vm3661, %v3623
            %3689 = vst.msk [vmem:[#allocation3 + $0xd8] sm:$0xff] %vm3661, %v3624
            %3690 = vst.msk [vmem:[#allocation3 + $0xe0] sm:$0xff] %vm3661, %v3625
            %3691 = vst.msk [vmem:[#allocation3 + $0xe8] sm:$0xff] %vm3661, %v3626
            %3692 = vst.msk [vmem:[#allocation3 + $0xf0] sm:$0xff] %vm3661, %v3627
            %3693 = vst.msk [vmem:[#allocation3 + $0xf8] sm:$0xff] %vm3661, %v3628
            %3694 = vst.msk [vmem:[#allocation3 + $0x100] sm:$0xff] %vm3661, %v3629
            %3695 = vst.msk [vmem:[#allocation3 + $0x108] sm:$0xff] %vm3661, %v3630
            %3696 = vst.msk [vmem:[#allocation3 + $0x110] sm:$0xff] %vm3661, %v3631
            %3697 = vst.msk [vmem:[#allocation3 + $0x118] sm:$0xff] %vm3661, %v3632
            %3698 = vst.msk [vmem:[#allocation3 + $0x120] sm:$0xff] %vm3661, %v3633
            %3699 = vst.msk [vmem:[#allocation3 + $0x128] sm:$0xff] %vm3661, %v3634
            %3700 = vst.msk [vmem:[#allocation3 + $0x130] sm:$0xff] %vm3661, %v3635
            %3701 = vst.msk [vmem:[#allocation3 + $0x138] sm:$0xff] %vm3661, %v3636
            %3702 = vst.msk [vmem:[#allocation3 + $0x140] sm:$0xff] %vm3661, %v3637
            %3703 = vst.msk [vmem:[#allocation3 + $0x148] sm:$0xff] %vm3661, %v3638
            %3704 = vst.msk [vmem:[#allocation3 + $0x150] sm:$0xff] %vm3661, %v3639
            %3705 = vst.msk [vmem:[#allocation3 + $0x158] sm:$0xff] %vm3661, %v3640
            %3706 = vst.msk [vmem:[#allocation3 + $0x160] sm:$0xff] %vm3661, %v3641
            %3707 = vst.msk [vmem:[#allocation3 + $0x168] sm:$0xff] %vm3661, %v3642
            %3708 = vst.msk [vmem:[#allocation3 + $0x170] sm:$0xff] %vm3661, %v3643
            %3709 = vst.msk [vmem:[#allocation3 + $0x178] sm:$0xff] %vm3661, %v3644
            %3710 = vst.msk [vmem:[#allocation3 + $0x180] sm:$0xff] %vm3661, %v3645
            %3711 = vst.msk [vmem:[#allocation3 + $0x188] sm:$0xff] %vm3661, %v3646
            %3712 = vst.msk [vmem:[#allocation3 + $0x190] sm:$0xff] %vm3661, %v3647
            %3713 = vst.msk [vmem:[#allocation3 + $0x198] sm:$0xff] %vm3661, %v3648
            %3714 = vst.msk [vmem:[#allocation3 + $0x1a0] sm:$0xff] %vm3661, %v3649
            %3715 = vst.msk [vmem:[#allocation3 + $0x1a8] sm:$0xff] %vm3661, %v3650
            %3716 = vst.msk [vmem:[#allocation3 + $0x1b0] sm:$0xff] %vm3661, %v3651
            %3717 = vst.msk [vmem:[#allocation3 + $0x1b8] sm:$0xff] %vm3661, %v3652
            %3718 = vst.msk [vmem:[#allocation3 + $0x1c0] sm:$0xff] %vm3661, %v3653
            %3719 = vst.msk [vmem:[#allocation3 + $0x1c8] sm:$0xff] %vm3661, %v3654
            %3720 = vst.msk [vmem:[#allocation3 + $0x1d0] sm:$0xff] %vm3661, %v3655
            %3721 = vst.msk [vmem:[#allocation3 + $0x1d8] sm:$0xff] %vm3661, %v3656
            %3722 = vst.msk [vmem:[#allocation3 + $0x1e0] sm:$0xff] %vm3661, %v3657
            %3723 = vst.msk [vmem:[#allocation3 + $0x1e8] sm:$0xff] %vm3661, %v3658
            %3724 = vst.msk [vmem:[#allocation3 + $0x1f0] sm:$0xff] %vm3661, %v3659
            %3725 = vst.msk [vmem:[#allocation3 + $0x1f8] sm:$0xff] %vm3661, %v3660
            %3726 = vst.msk [vmem:[#allocation2] sm:$0xff] %vm3661, %v1805
            %3727 = vst.msk [vmem:[#allocation2 + $0x8] sm:$0xff] %vm3661, %v1806
            %3728 = vst.msk [vmem:[#allocation2 + $0x10] sm:$0xff] %vm3661, %v1807
            %3729 = vst.msk [vmem:[#allocation2 + $0x18] sm:$0xff] %vm3661, %v1808
            %3730 = vst.msk [vmem:[#allocation2 + $0x20] sm:$0xff] %vm3661, %v1809
            %3731 = vst.msk [vmem:[#allocation2 + $0x28] sm:$0xff] %vm3661, %v1810
            %3732 = vst.msk [vmem:[#allocation2 + $0x30] sm:$0xff] %vm3661, %v1811
            %3733 = vst.msk [vmem:[#allocation2 + $0x38] sm:$0xff] %vm3661, %v1812
            %3734 = vst.msk [vmem:[#allocation2 + $0x40] sm:$0xff] %vm3661, %v1813
            %3735 = vst.msk [vmem:[#allocation2 + $0x48] sm:$0xff] %vm3661, %v1814
            %3736 = vst.msk [vmem:[#allocation2 + $0x50] sm:$0xff] %vm3661, %v1815
            %3737 = vst.msk [vmem:[#allocation2 + $0x58] sm:$0xff] %vm3661, %v1816
            %3738 = vst.msk [vmem:[#allocation2 + $0x60] sm:$0xff] %vm3661, %v1817
            %3739 = vst.msk [vmem:[#allocation2 + $0x68] sm:$0xff] %vm3661, %v1818
            %3740 = vst.msk [vmem:[#allocation2 + $0x70] sm:$0xff] %vm3661, %v1819
            %3741 = vst.msk [vmem:[#allocation2 + $0x78] sm:$0xff] %vm3661, %v1820
            %3742 = vst.msk [vmem:[#allocation2 + $0x80] sm:$0xff] %vm3661, %v1821
            %3743 = vst.msk [vmem:[#allocation2 + $0x88] sm:$0xff] %vm3661, %v1822
            %3744 = vst.msk [vmem:[#allocation2 + $0x90] sm:$0xff] %vm3661, %v1823
            %3745 = vst.msk [vmem:[#allocation2 + $0x98] sm:$0xff] %vm3661, %v1824
            %3746 = vst.msk [vmem:[#allocation2 + $0xa0] sm:$0xff] %vm3661, %v1825
            %3747 = vst.msk [vmem:[#allocation2 + $0xa8] sm:$0xff] %vm3661, %v1826
            %3748 = vst.msk [vmem:[#allocation2 + $0xb0] sm:$0xff] %vm3661, %v1827
            %3749 = vst.msk [vmem:[#allocation2 + $0xb8] sm:$0xff] %vm3661, %v1828
            %3750 = vst.msk [vmem:[#allocation2 + $0xc0] sm:$0xff] %vm3661, %v1829
            %3751 = vst.msk [vmem:[#allocation2 + $0xc8] sm:$0xff] %vm3661, %v1830
            %3752 = vst.msk [vmem:[#allocation2 + $0xd0] sm:$0xff] %vm3661, %v1831
            %3753 = vst.msk [vmem:[#allocation2 + $0xd8] sm:$0xff] %vm3661, %v1832
            %3754 = vst.msk [vmem:[#allocation2 + $0xe0] sm:$0xff] %vm3661, %v1833
            %3755 = vst.msk [vmem:[#allocation2 + $0xe8] sm:$0xff] %vm3661, %v1834
            %3756 = vst.msk [vmem:[#allocation2 + $0xf0] sm:$0xff] %vm3661, %v1835
            %3757 = vst.msk [vmem:[#allocation2 + $0xf8] sm:$0xff] %vm3661, %v1836
            %3758 = vst.msk [vmem:[#allocation2 + $0x100] sm:$0xff] %vm3661, %v1837
            %3759 = vst.msk [vmem:[#allocation2 + $0x108] sm:$0xff] %vm3661, %v1838
            %3760 = vst.msk [vmem:[#allocation2 + $0x110] sm:$0xff] %vm3661, %v1839
            %3761 = vst.msk [vmem:[#allocation2 + $0x118] sm:$0xff] %vm3661, %v1840
            %3762 = vst.msk [vmem:[#allocation2 + $0x120] sm:$0xff] %vm3661, %v1841
            %3763 = vst.msk [vmem:[#allocation2 + $0x128] sm:$0xff] %vm3661, %v1842
            %3764 = vst.msk [vmem:[#allocation2 + $0x130] sm:$0xff] %vm3661, %v1843
            %3765 = vst.msk [vmem:[#allocation2 + $0x138] sm:$0xff] %vm3661, %v1844
            %3766 = vst.msk [vmem:[#allocation2 + $0x140] sm:$0xff] %vm3661, %v1845
            %3767 = vst.msk [vmem:[#allocation2 + $0x148] sm:$0xff] %vm3661, %v1846
            %3768 = vst.msk [vmem:[#allocation2 + $0x150] sm:$0xff] %vm3661, %v1847
            %3769 = vst.msk [vmem:[#allocation2 + $0x158] sm:$0xff] %vm3661, %v1848
            %3770 = vst.msk [vmem:[#allocation2 + $0x160] sm:$0xff] %vm3661, %v1849
            %3771 = vst.msk [vmem:[#allocation2 + $0x168] sm:$0xff] %vm3661, %v1850
            %3772 = vst.msk [vmem:[#allocation2 + $0x170] sm:$0xff] %vm3661, %v1851
            %3773 = vst.msk [vmem:[#allocation2 + $0x178] sm:$0xff] %vm3661, %v1852
            %3774 = vst.msk [vmem:[#allocation2 + $0x180] sm:$0xff] %vm3661, %v1853
            %3775 = vst.msk [vmem:[#allocation2 + $0x188] sm:$0xff] %vm3661, %v1854
            %3776 = vst.msk [vmem:[#allocation2 + $0x190] sm:$0xff] %vm3661, %v1855
            %3777 = vst.msk [vmem:[#allocation2 + $0x198] sm:$0xff] %vm3661, %v1856
            %3778 = vst.msk [vmem:[#allocation2 + $0x1a0] sm:$0xff] %vm3661, %v1857
            %3779 = vst.msk [vmem:[#allocation2 + $0x1a8] sm:$0xff] %vm3661, %v1858
            %3780 = vst.msk [vmem:[#allocation2 + $0x1b0] sm:$0xff] %vm3661, %v1859
            %3781 = vst.msk [vmem:[#allocation2 + $0x1b8] sm:$0xff] %vm3661, %v1860
            %3782 = vst.msk [vmem:[#allocation2 + $0x1c0] sm:$0xff] %vm3661, %v1861
            %3783 = vst.msk [vmem:[#allocation2 + $0x1c8] sm:$0xff] %vm3661, %v1862
            %3784 = vst.msk [vmem:[#allocation2 + $0x1d0] sm:$0xff] %vm3661, %v1863
            %3785 = vst.msk [vmem:[#allocation2 + $0x1d8] sm:$0xff] %vm3661, %v1864
            %3786 = vst.msk [vmem:[#allocation2 + $0x1e0] sm:$0xff] %vm3661, %v1865
            %3787 = vst.msk [vmem:[#allocation2 + $0x1e8] sm:$0xff] %vm3661, %v1866
            %3788 = vst.msk [vmem:[#allocation2 + $0x1f0] sm:$0xff] %vm3661, %v1867
            %3789 = vst.msk [vmem:[#allocation2 + $0x1f8] sm:$0xff] %vm3661, %v1868
          $region40: #{tpu_custom_call.1} parent=35 // pred_fallthru
            _
          %p3790 = scmp.gt.s32.totalorder %s1416, %s223
          // Predicated region
          $region41: #{tpu_custom_call.1} parent=35 // pred_check
            %p3791 = pneg %p3790
          $region42: #{tpu_custom_call.1} parent=35 // pred_check_branch
            %3793 = sbr.rel (%p3791) target = $region44
          $region43: #{tpu_custom_call.1} parent=35 // pred_region
            %v3794 = vlaneseq
            %v3795 = vand.u32 %v3794, 127
            %v3796 = vadd.s32 %v3795, 128
            %v3797 = vadd.s32 %v3795, 256
            %v3798 = vadd.s32 %v3795, 384
            %v3799 = vstv %s225
            %v3800 = vadd.s32 %v3799, %v3795
            %v3801 = vadd.s32 %v3799, %v3796
            %v3802 = vadd.s32 %v3799, %v3797
            %v3803 = vadd.s32 %v3799, %v3798
            %v3804 = vstv %s223
            %vm3805 = vcmp.lt.s32.totalorder %v3800, %v3804
            %vm3806 = vcmp.lt.s32.totalorder %v3801, %v3804
            %vm3807 = vcmp.lt.s32.totalorder %v3802, %v3804
            %vm3808 = vcmp.lt.s32.totalorder %v3803, %v3804
            %v3809 = vsel %vm3805, 1, 0
            %v3810 = vsel %vm3806, 1, 0
            %v3811 = vsel %vm3807, 1, 0
            %v3812 = vsel %vm3808, 1, 0
            %vm3813 = vcmp.eq.s32.totalorder %v3809, 1
            %vm3814 = vcmp.eq.s32.totalorder %v3810, 1
            %vm3815 = vcmp.eq.s32.totalorder %v3811, 1
            %vm3816 = vcmp.eq.s32.totalorder %v3812, 1
            %v3817 = vsel %vm3813, %v745, -1e+30
            %v3818 = vsel %vm3814, %v747, -1e+30
            %v3819 = vsel %vm3815, %v1098, -1e+30
            %v3820 = vsel %vm3816, %v1100, -1e+30
            %v3821 = vsel %vm3813, %v749, -1e+30
            %v3822 = vsel %vm3814, %v751, -1e+30
            %v3823 = vsel %vm3815, %v1102, -1e+30
            %v3824 = vsel %vm3816, %v1104, -1e+30
            %v3825 = vsel %vm3813, %v755, -1e+30
            %v3826 = vsel %vm3814, %v757, -1e+30
            %v3827 = vsel %vm3815, %v1108, -1e+30
            %v3828 = vsel %vm3816, %v1110, -1e+30
            %v3829 = vsel %vm3813, %v759, -1e+30
            %v3830 = vsel %vm3814, %v761, -1e+30
            %v3831 = vsel %vm3815, %v1112, -1e+30
            %v3832 = vsel %vm3816, %v1114, -1e+30
            %v3833 = vsel %vm3813, %v765, -1e+30
            %v3834 = vsel %vm3814, %v767, -1e+30
            %v3835 = vsel %vm3815, %v1118, -1e+30
            %v3836 = vsel %vm3816, %v1120, -1e+30
            %v3837 = vsel %vm3813, %v769, -1e+30
            %v3838 = vsel %vm3814, %v771, -1e+30
            %v3839 = vsel %vm3815, %v1122, -1e+30
            %v3840 = vsel %vm3816, %v1124, -1e+30
            %v3841 = vsel %vm3813, %v775, -1e+30
            %v3842 = vsel %vm3814, %v777, -1e+30
            %v3843 = vsel %vm3815, %v1128, -1e+30
            %v3844 = vsel %vm3816, %v1130, -1e+30
            %v3845 = vsel %vm3813, %v779, -1e+30
            %v3846 = vsel %vm3814, %v781, -1e+30
            %v3847 = vsel %vm3815, %v1132, -1e+30
            %v3848 = vsel %vm3816, %v1134, -1e+30
            %v3849 = vsel %vm3813, %v785, -1e+30
            %v3850 = vsel %vm3814, %v787, -1e+30
            %v3851 = vsel %vm3815, %v1138, -1e+30
            %v3852 = vsel %vm3816, %v1140, -1e+30
            %v3853 = vsel %vm3813, %v789, -1e+30
            %v3854 = vsel %vm3814, %v791, -1e+30
            %v3855 = vsel %vm3815, %v1142, -1e+30
            %v3856 = vsel %vm3816, %v1144, -1e+30
            %v3857 = vsel %vm3813, %v795, -1e+30
            %v3858 = vsel %vm3814, %v797, -1e+30
            %v3859 = vsel %vm3815, %v1148, -1e+30
            %v3860 = vsel %vm3816, %v1150, -1e+30
            %v3861 = vsel %vm3813, %v799, -1e+30
            %v3862 = vsel %vm3814, %v801, -1e+30
            %v3863 = vsel %vm3815, %v1152, -1e+30
            %v3864 = vsel %vm3816, %v1154, -1e+30
            %v3865 = vsel %vm3813, %v805, -1e+30
            %v3866 = vsel %vm3814, %v807, -1e+30
            %v3867 = vsel %vm3815, %v1158, -1e+30
            %v3868 = vsel %vm3816, %v1160, -1e+30
            %v3869 = vsel %vm3813, %v809, -1e+30
            %v3870 = vsel %vm3814, %v811, -1e+30
            %v3871 = vsel %vm3815, %v1162, -1e+30
            %v3872 = vsel %vm3816, %v1164, -1e+30
            %v3873 = vsel %vm3813, %v815, -1e+30
            %v3874 = vsel %vm3814, %v817, -1e+30
            %v3875 = vsel %vm3815, %v1168, -1e+30
            %v3876 = vsel %vm3816, %v1170, -1e+30
            %v3877 = vsel %vm3813, %v819, -1e+30
            %v3878 = vsel %vm3814, %v821, -1e+30
            %v3879 = vsel %vm3815, %v1172, -1e+30
            %v3880 = vsel %vm3816, %v1174, -1e+30
            %v3881 = vsel %vm3813, %v825, -1e+30
            %v3882 = vsel %vm3814, %v827, -1e+30
            %v3883 = vsel %vm3815, %v1178, -1e+30
            %v3884 = vsel %vm3816, %v1180, -1e+30
            %v3885 = vsel %vm3813, %v829, -1e+30
            %v3886 = vsel %vm3814, %v831, -1e+30
            %v3887 = vsel %vm3815, %v1182, -1e+30
            %v3888 = vsel %vm3816, %v1184, -1e+30
            %v3889 = vsel %vm3813, %v835, -1e+30
            %v3890 = vsel %vm3814, %v837, -1e+30
            %v3891 = vsel %vm3815, %v1188, -1e+30
            %v3892 = vsel %vm3816, %v1190, -1e+30
            %v3893 = vsel %vm3813, %v839, -1e+30
            %v3894 = vsel %vm3814, %v841, -1e+30
            %v3895 = vsel %vm3815, %v1192, -1e+30
            %v3896 = vsel %vm3816, %v1194, -1e+30
            %v3897 = vsel %vm3813, %v845, -1e+30
            %v3898 = vsel %vm3814, %v847, -1e+30
            %v3899 = vsel %vm3815, %v1198, -1e+30
            %v3900 = vsel %vm3816, %v1200, -1e+30
            %v3901 = vsel %vm3813, %v849, -1e+30
            %v3902 = vsel %vm3814, %v851, -1e+30
            %v3903 = vsel %vm3815, %v1202, -1e+30
            %v3904 = vsel %vm3816, %v1204, -1e+30
            %v3905 = vsel %vm3813, %v855, -1e+30
            %v3906 = vsel %vm3814, %v857, -1e+30
            %v3907 = vsel %vm3815, %v1208, -1e+30
            %v3908 = vsel %vm3816, %v1210, -1e+30
            %v3909 = vsel %vm3813, %v859, -1e+30
            %v3910 = vsel %vm3814, %v861, -1e+30
            %v3911 = vsel %vm3815, %v1212, -1e+30
            %v3912 = vsel %vm3816, %v1214, -1e+30
            %v3913 = vsel %vm3813, %v865, -1e+30
            %v3914 = vsel %vm3814, %v867, -1e+30
            %v3915 = vsel %vm3815, %v1218, -1e+30
            %v3916 = vsel %vm3816, %v1220, -1e+30
            %v3917 = vsel %vm3813, %v869, -1e+30
            %v3918 = vsel %vm3814, %v871, -1e+30
            %v3919 = vsel %vm3815, %v1222, -1e+30
            %v3920 = vsel %vm3816, %v1224, -1e+30
            %v3921 = vsel %vm3813, %v875, -1e+30
            %v3922 = vsel %vm3814, %v877, -1e+30
            %v3923 = vsel %vm3815, %v1228, -1e+30
            %v3924 = vsel %vm3816, %v1230, -1e+30
            %v3925 = vsel %vm3813, %v879, -1e+30
            %v3926 = vsel %vm3814, %v881, -1e+30
            %v3927 = vsel %vm3815, %v1232, -1e+30
            %v3928 = vsel %vm3816, %v1234, -1e+30
            %v3929 = vsel %vm3813, %v885, -1e+30
            %v3930 = vsel %vm3814, %v887, -1e+30
            %v3931 = vsel %vm3815, %v1238, -1e+30
            %v3932 = vsel %vm3816, %v1240, -1e+30
            %v3933 = vsel %vm3813, %v889, -1e+30
            %v3934 = vsel %vm3814, %v891, -1e+30
            %v3935 = vsel %vm3815, %v1242, -1e+30
            %v3936 = vsel %vm3816, %v1244, -1e+30
            %v3937 = vsel %vm3813, %v895, -1e+30
            %v3938 = vsel %vm3814, %v897, -1e+30
            %v3939 = vsel %vm3815, %v1248, -1e+30
            %v3940 = vsel %vm3816, %v1250, -1e+30
            %v3941 = vsel %vm3813, %v899, -1e+30
            %v3942 = vsel %vm3814, %v901, -1e+30
            %v3943 = vsel %vm3815, %v1252, -1e+30
            %v3944 = vsel %vm3816, %v1254, -1e+30
            %v3945 = vsel %vm3813, %v905, -1e+30
            %v3946 = vsel %vm3814, %v907, -1e+30
            %v3947 = vsel %vm3815, %v1258, -1e+30
            %v3948 = vsel %vm3816, %v1260, -1e+30
            %v3949 = vsel %vm3813, %v909, -1e+30
            %v3950 = vsel %vm3814, %v911, -1e+30
            %v3951 = vsel %vm3815, %v1262, -1e+30
            %v3952 = vsel %vm3816, %v1264, -1e+30
            %v3953 = vsel %vm3813, %v915, -1e+30
            %v3954 = vsel %vm3814, %v917, -1e+30
            %v3955 = vsel %vm3815, %v1268, -1e+30
            %v3956 = vsel %vm3816, %v1270, -1e+30
            %v3957 = vsel %vm3813, %v919, -1e+30
            %v3958 = vsel %vm3814, %v921, -1e+30
            %v3959 = vsel %vm3815, %v1272, -1e+30
            %v3960 = vsel %vm3816, %v1274, -1e+30
            %v3961 = vsel %vm3813, %v925, -1e+30
            %v3962 = vsel %vm3814, %v927, -1e+30
            %v3963 = vsel %vm3815, %v1278, -1e+30
            %v3964 = vsel %vm3816, %v1280, -1e+30
            %v3965 = vsel %vm3813, %v929, -1e+30
            %v3966 = vsel %vm3814, %v931, -1e+30
            %v3967 = vsel %vm3815, %v1282, -1e+30
            %v3968 = vsel %vm3816, %v1284, -1e+30
            %v3969 = vsel %vm3813, %v935, -1e+30
            %v3970 = vsel %vm3814, %v937, -1e+30
            %v3971 = vsel %vm3815, %v1288, -1e+30
            %v3972 = vsel %vm3816, %v1290, -1e+30
            %v3973 = vsel %vm3813, %v939, -1e+30
            %v3974 = vsel %vm3814, %v941, -1e+30
            %v3975 = vsel %vm3815, %v1292, -1e+30
            %v3976 = vsel %vm3816, %v1294, -1e+30
            %v3977 = vsel %vm3813, %v945, -1e+30
            %v3978 = vsel %vm3814, %v947, -1e+30
            %v3979 = vsel %vm3815, %v1298, -1e+30
            %v3980 = vsel %vm3816, %v1300, -1e+30
            %v3981 = vsel %vm3813, %v949, -1e+30
            %v3982 = vsel %vm3814, %v951, -1e+30
            %v3983 = vsel %vm3815, %v1302, -1e+30
            %v3984 = vsel %vm3816, %v1304, -1e+30
            %v3985 = vsel %vm3813, %v955, -1e+30
            %v3986 = vsel %vm3814, %v957, -1e+30
            %v3987 = vsel %vm3815, %v1308, -1e+30
            %v3988 = vsel %vm3816, %v1310, -1e+30
            %v3989 = vsel %vm3813, %v959, -1e+30
            %v3990 = vsel %vm3814, %v961, -1e+30
            %v3991 = vsel %vm3815, %v1312, -1e+30
            %v3992 = vsel %vm3816, %v1314, -1e+30
            %v3993 = vsel %vm3813, %v965, -1e+30
            %v3994 = vsel %vm3814, %v967, -1e+30
            %v3995 = vsel %vm3815, %v1318, -1e+30
            %v3996 = vsel %vm3816, %v1320, -1e+30
            %v3997 = vsel %vm3813, %v969, -1e+30
            %v3998 = vsel %vm3814, %v971, -1e+30
            %v3999 = vsel %vm3815, %v1322, -1e+30
            %v4000 = vsel %vm3816, %v1324, -1e+30
            %v4001 = vsel %vm3813, %v975, -1e+30
            %v4002 = vsel %vm3814, %v977, -1e+30
            %v4003 = vsel %vm3815, %v1328, -1e+30
            %v4004 = vsel %vm3816, %v1330, -1e+30
            %v4005 = vsel %vm3813, %v979, -1e+30
            %v4006 = vsel %vm3814, %v981, -1e+30
            %v4007 = vsel %vm3815, %v1332, -1e+30
            %v4008 = vsel %vm3816, %v1334, -1e+30
            %v4009 = vsel %vm3813, %v985, -1e+30
            %v4010 = vsel %vm3814, %v987, -1e+30
            %v4011 = vsel %vm3815, %v1338, -1e+30
            %v4012 = vsel %vm3816, %v1340, -1e+30
            %v4013 = vsel %vm3813, %v989, -1e+30
            %v4014 = vsel %vm3814, %v991, -1e+30
            %v4015 = vsel %vm3815, %v1342, -1e+30
            %v4016 = vsel %vm3816, %v1344, -1e+30
            %v4017 = vsel %vm3813, %v995, -1e+30
            %v4018 = vsel %vm3814, %v997, -1e+30
            %v4019 = vsel %vm3815, %v1348, -1e+30
            %v4020 = vsel %vm3816, %v1350, -1e+30
            %v4021 = vsel %vm3813, %v999, -1e+30
            %v4022 = vsel %vm3814, %v1001, -1e+30
            %v4023 = vsel %vm3815, %v1352, -1e+30
            %v4024 = vsel %vm3816, %v1354, -1e+30
            %v4025 = vsel %vm3813, %v1005, -1e+30
            %v4026 = vsel %vm3814, %v1007, -1e+30
            %v4027 = vsel %vm3815, %v1358, -1e+30
            %v4028 = vsel %vm3816, %v1360, -1e+30
            %v4029 = vsel %vm3813, %v1009, -1e+30
            %v4030 = vsel %vm3814, %v1011, -1e+30
            %v4031 = vsel %vm3815, %v1362, -1e+30
            %v4032 = vsel %vm3816, %v1364, -1e+30
            %v4033 = vsel %vm3813, %v1015, -1e+30
            %v4034 = vsel %vm3814, %v1017, -1e+30
            %v4035 = vsel %vm3815, %v1368, -1e+30
            %v4036 = vsel %vm3816, %v1370, -1e+30
            %v4037 = vsel %vm3813, %v1019, -1e+30
            %v4038 = vsel %vm3814, %v1021, -1e+30
            %v4039 = vsel %vm3815, %v1372, -1e+30
            %v4040 = vsel %vm3816, %v1374, -1e+30
            %v4041 = vsel %vm3813, %v1025, -1e+30
            %v4042 = vsel %vm3814, %v1027, -1e+30
            %v4043 = vsel %vm3815, %v1378, -1e+30
            %v4044 = vsel %vm3816, %v1380, -1e+30
            %v4045 = vsel %vm3813, %v1029, -1e+30
            %v4046 = vsel %vm3814, %v1031, -1e+30
            %v4047 = vsel %vm3815, %v1382, -1e+30
            %v4048 = vsel %vm3816, %v1384, -1e+30
            %v4049 = vsel %vm3813, %v1035, -1e+30
            %v4050 = vsel %vm3814, %v1037, -1e+30
            %v4051 = vsel %vm3815, %v1388, -1e+30
            %v4052 = vsel %vm3816, %v1390, -1e+30
            %v4053 = vsel %vm3813, %v1039, -1e+30
            %v4054 = vsel %vm3814, %v1041, -1e+30
            %v4055 = vsel %vm3815, %v1392, -1e+30
            %v4056 = vsel %vm3816, %v1394, -1e+30
            %v4057 = vsel %vm3813, %v1045, -1e+30
            %v4058 = vsel %vm3814, %v1047, -1e+30
            %v4059 = vsel %vm3815, %v1398, -1e+30
            %v4060 = vsel %vm3816, %v1400, -1e+30
            %v4061 = vsel %vm3813, %v1049, -1e+30
            %v4062 = vsel %vm3814, %v1051, -1e+30
            %v4063 = vsel %vm3815, %v1402, -1e+30
            %v4064 = vsel %vm3816, %v1404, -1e+30
            %v4065 = vsel %vm3813, %v1055, -1e+30
            %v4066 = vsel %vm3814, %v1057, -1e+30
            %v4067 = vsel %vm3815, %v1408, -1e+30
            %v4068 = vsel %vm3816, %v1410, -1e+30
            %v4069 = vsel %vm3813, %v1059, -1e+30
            %v4070 = vsel %vm3814, %v1061, -1e+30
            %v4071 = vsel %vm3815, %v1412, -1e+30
            %v4072 = vsel %vm3816, %v1414, -1e+30
            %v4073 = vld [vmem:[#allocation2] sm:$0xff]
            %v4074 = vld [vmem:[#allocation2 + $0x8] sm:$0xff]
            %v4075 = vld [vmem:[#allocation2 + $0x10] sm:$0xff]
            %v4076 = vld [vmem:[#allocation2 + $0x18] sm:$0xff]
            %v4077 = vld [vmem:[#allocation2 + $0x20] sm:$0xff]
            %v4078 = vld [vmem:[#allocation2 + $0x28] sm:$0xff]
            %v4079 = vld [vmem:[#allocation2 + $0x30] sm:$0xff]
            %v4080 = vld [vmem:[#allocation2 + $0x38] sm:$0xff]
            %v4081 = vld [vmem:[#allocation2 + $0x40] sm:$0xff]
            %v4082 = vld [vmem:[#allocation2 + $0x48] sm:$0xff]
            %v4083 = vld [vmem:[#allocation2 + $0x50] sm:$0xff]
            %v4084 = vld [vmem:[#allocation2 + $0x58] sm:$0xff]
            %v4085 = vld [vmem:[#allocation2 + $0x60] sm:$0xff]
            %v4086 = vld [vmem:[#allocation2 + $0x68] sm:$0xff]
            %v4087 = vld [vmem:[#allocation2 + $0x70] sm:$0xff]
            %v4088 = vld [vmem:[#allocation2 + $0x78] sm:$0xff]
            %v4089 = vld [vmem:[#allocation2 + $0x80] sm:$0xff]
            %v4090 = vld [vmem:[#allocation2 + $0x88] sm:$0xff]
            %v4091 = vld [vmem:[#allocation2 + $0x90] sm:$0xff]
            %v4092 = vld [vmem:[#allocation2 + $0x98] sm:$0xff]
            %v4093 = vld [vmem:[#allocation2 + $0xa0] sm:$0xff]
            %v4094 = vld [vmem:[#allocation2 + $0xa8] sm:$0xff]
            %v4095 = vld [vmem:[#allocation2 + $0xb0] sm:$0xff]
            %v4096 = vld [vmem:[#allocation2 + $0xb8] sm:$0xff]
            %v4097 = vld [vmem:[#allocation2 + $0xc0] sm:$0xff]
            %v4098 = vld [vmem:[#allocation2 + $0xc8] sm:$0xff]
            %v4099 = vld [vmem:[#allocation2 + $0xd0] sm:$0xff]
            %v4100 = vld [vmem:[#allocation2 + $0xd8] sm:$0xff]
            %v4101 = vld [vmem:[#allocation2 + $0xe0] sm:$0xff]
            %v4102 = vld [vmem:[#allocation2 + $0xe8] sm:$0xff]
            %v4103 = vld [vmem:[#allocation2 + $0xf0] sm:$0xff]
            %v4104 = vld [vmem:[#allocation2 + $0xf8] sm:$0xff]
            %v4105 = vld [vmem:[#allocation2 + $0x100] sm:$0xff]
            %v4106 = vld [vmem:[#allocation2 + $0x108] sm:$0xff]
            %v4107 = vld [vmem:[#allocation2 + $0x110] sm:$0xff]
            %v4108 = vld [vmem:[#allocation2 + $0x118] sm:$0xff]
            %v4109 = vld [vmem:[#allocation2 + $0x120] sm:$0xff]
            %v4110 = vld [vmem:[#allocation2 + $0x128] sm:$0xff]
            %v4111 = vld [vmem:[#allocation2 + $0x130] sm:$0xff]
            %v4112 = vld [vmem:[#allocation2 + $0x138] sm:$0xff]
            %v4113 = vld [vmem:[#allocation2 + $0x140] sm:$0xff]
            %v4114 = vld [vmem:[#allocation2 + $0x148] sm:$0xff]
            %v4115 = vld [vmem:[#allocation2 + $0x150] sm:$0xff]
            %v4116 = vld [vmem:[#allocation2 + $0x158] sm:$0xff]
            %v4117 = vld [vmem:[#allocation2 + $0x160] sm:$0xff]
            %v4118 = vld [vmem:[#allocation2 + $0x168] sm:$0xff]
            %v4119 = vld [vmem:[#allocation2 + $0x170] sm:$0xff]
            %v4120 = vld [vmem:[#allocation2 + $0x178] sm:$0xff]
            %v4121 = vld [vmem:[#allocation2 + $0x180] sm:$0xff]
            %v4122 = vld [vmem:[#allocation2 + $0x188] sm:$0xff]
            %v4123 = vld [vmem:[#allocation2 + $0x190] sm:$0xff]
            %v4124 = vld [vmem:[#allocation2 + $0x198] sm:$0xff]
            %v4125 = vld [vmem:[#allocation2 + $0x1a0] sm:$0xff]
            %v4126 = vld [vmem:[#allocation2 + $0x1a8] sm:$0xff]
            %v4127 = vld [vmem:[#allocation2 + $0x1b0] sm:$0xff]
            %v4128 = vld [vmem:[#allocation2 + $0x1b8] sm:$0xff]
            %v4129 = vld [vmem:[#allocation2 + $0x1c0] sm:$0xff]
            %v4130 = vld [vmem:[#allocation2 + $0x1c8] sm:$0xff]
            %v4131 = vld [vmem:[#allocation2 + $0x1d0] sm:$0xff]
            %v4132 = vld [vmem:[#allocation2 + $0x1d8] sm:$0xff]
            %v4133 = vld [vmem:[#allocation2 + $0x1e0] sm:$0xff]
            %v4134 = vld [vmem:[#allocation2 + $0x1e8] sm:$0xff]
            %v4135 = vld [vmem:[#allocation2 + $0x1f0] sm:$0xff]
            %v4136 = vld [vmem:[#allocation2 + $0x1f8] sm:$0xff]
            %v4137 = vmax.f32 %v3817, %v3818
            %v4138 = vmax.f32 %v4137, %v3819
            %v4139 = vmax.f32 %v4138, %v3820
            %4140 = vmax.xlane.f32.xlu0 %v4139
            %v4141 = vpop.xlane.xlu0 %4140
            %v4142 = vmax.f32 %v3821, %v3822
            %v4143 = vmax.f32 %v4142, %v3823
            %v4144 = vmax.f32 %v4143, %v3824
            %4145 = vmax.xlane.f32.xlu0 %v4144
            %v4146 = vpop.xlane.xlu0 %4145
            %v4147 = vmax.f32 %v3825, %v3826
            %v4148 = vmax.f32 %v4147, %v3827
            %v4149 = vmax.f32 %v4148, %v3828
            %4150 = vmax.xlane.f32.xlu0 %v4149
            %v4151 = vpop.xlane.xlu0 %4150
            %v4152 = vmax.f32 %v3829, %v3830
            %v4153 = vmax.f32 %v4152, %v3831
            %v4154 = vmax.f32 %v4153, %v3832
            %4155 = vmax.xlane.f32.xlu0 %v4154
            %v4156 = vpop.xlane.xlu0 %4155
            %v4157 = vmax.f32 %v3833, %v3834
            %v4158 = vmax.f32 %v4157, %v3835
            %v4159 = vmax.f32 %v4158, %v3836
            %4160 = vmax.xlane.f32.xlu0 %v4159
            %v4161 = vpop.xlane.xlu0 %4160
            %v4162 = vmax.f32 %v3837, %v3838
            %v4163 = vmax.f32 %v4162, %v3839
            %v4164 = vmax.f32 %v4163, %v3840
            %4165 = vmax.xlane.f32.xlu0 %v4164
            %v4166 = vpop.xlane.xlu0 %4165
            %v4167 = vmax.f32 %v3841, %v3842
            %v4168 = vmax.f32 %v4167, %v3843
            %v4169 = vmax.f32 %v4168, %v3844
            %4170 = vmax.xlane.f32.xlu0 %v4169
            %v4171 = vpop.xlane.xlu0 %4170
            %v4172 = vmax.f32 %v3845, %v3846
            %v4173 = vmax.f32 %v4172, %v3847
            %v4174 = vmax.f32 %v4173, %v3848
            %4175 = vmax.xlane.f32.xlu0 %v4174
            %v4176 = vpop.xlane.xlu0 %4175
            %v4177 = vmax.f32 %v3849, %v3850
            %v4178 = vmax.f32 %v4177, %v3851
            %v4179 = vmax.f32 %v4178, %v3852
            %4180 = vmax.xlane.f32.xlu0 %v4179
            %v4181 = vpop.xlane.xlu0 %4180
            %v4182 = vmax.f32 %v3853, %v3854
            %v4183 = vmax.f32 %v4182, %v3855
            %v4184 = vmax.f32 %v4183, %v3856
            %4185 = vmax.xlane.f32.xlu0 %v4184
            %v4186 = vpop.xlane.xlu0 %4185
            %v4187 = vmax.f32 %v3857, %v3858
            %v4188 = vmax.f32 %v4187, %v3859
            %v4189 = vmax.f32 %v4188, %v3860
            %4190 = vmax.xlane.f32.xlu0 %v4189
            %v4191 = vpop.xlane.xlu0 %4190
            %v4192 = vmax.f32 %v3861, %v3862
            %v4193 = vmax.f32 %v4192, %v3863
            %v4194 = vmax.f32 %v4193, %v3864
            %4195 = vmax.xlane.f32.xlu0 %v4194
            %v4196 = vpop.xlane.xlu0 %4195
            %v4197 = vmax.f32 %v3865, %v3866
            %v4198 = vmax.f32 %v4197, %v3867
            %v4199 = vmax.f32 %v4198, %v3868
            %4200 = vmax.xlane.f32.xlu0 %v4199
            %v4201 = vpop.xlane.xlu0 %4200
            %v4202 = vmax.f32 %v3869, %v3870
            %v4203 = vmax.f32 %v4202, %v3871
            %v4204 = vmax.f32 %v4203, %v3872
            %4205 = vmax.xlane.f32.xlu0 %v4204
            %v4206 = vpop.xlane.xlu0 %4205
            %v4207 = vmax.f32 %v3873, %v3874
            %v4208 = vmax.f32 %v4207, %v3875
            %v4209 = vmax.f32 %v4208, %v3876
            %4210 = vmax.xlane.f32.xlu0 %v4209
            %v4211 = vpop.xlane.xlu0 %4210
            %v4212 = vmax.f32 %v3877, %v3878
            %v4213 = vmax.f32 %v4212, %v3879
            %v4214 = vmax.f32 %v4213, %v3880
            %4215 = vmax.xlane.f32.xlu0 %v4214
            %v4216 = vpop.xlane.xlu0 %4215
            %v4217 = vmax.f32 %v3881, %v3882
            %v4218 = vmax.f32 %v4217, %v3883
            %v4219 = vmax.f32 %v4218, %v3884
            %4220 = vmax.xlane.f32.xlu0 %v4219
            %v4221 = vpop.xlane.xlu0 %4220
            %v4222 = vmax.f32 %v3885, %v3886
            %v4223 = vmax.f32 %v4222, %v3887
            %v4224 = vmax.f32 %v4223, %v3888
            %4225 = vmax.xlane.f32.xlu0 %v4224
            %v4226 = vpop.xlane.xlu0 %4225
            %v4227 = vmax.f32 %v3889, %v3890
            %v4228 = vmax.f32 %v4227, %v3891
            %v4229 = vmax.f32 %v4228, %v3892
            %4230 = vmax.xlane.f32.xlu0 %v4229
            %v4231 = vpop.xlane.xlu0 %4230
            %v4232 = vmax.f32 %v3893, %v3894
            %v4233 = vmax.f32 %v4232, %v3895
            %v4234 = vmax.f32 %v4233, %v3896
            %4235 = vmax.xlane.f32.xlu0 %v4234
            %v4236 = vpop.xlane.xlu0 %4235
            %v4237 = vmax.f32 %v3897, %v3898
            %v4238 = vmax.f32 %v4237, %v3899
            %v4239 = vmax.f32 %v4238, %v3900
            %4240 = vmax.xlane.f32.xlu0 %v4239
            %v4241 = vpop.xlane.xlu0 %4240
            %v4242 = vmax.f32 %v3901, %v3902
            %v4243 = vmax.f32 %v4242, %v3903
            %v4244 = vmax.f32 %v4243, %v3904
            %4245 = vmax.xlane.f32.xlu0 %v4244
            %v4246 = vpop.xlane.xlu0 %4245
            %v4247 = vmax.f32 %v3905, %v3906
            %v4248 = vmax.f32 %v4247, %v3907
            %v4249 = vmax.f32 %v4248, %v3908
            %4250 = vmax.xlane.f32.xlu0 %v4249
            %v4251 = vpop.xlane.xlu0 %4250
            %v4252 = vmax.f32 %v3909, %v3910
            %v4253 = vmax.f32 %v4252, %v3911
            %v4254 = vmax.f32 %v4253, %v3912
            %4255 = vmax.xlane.f32.xlu0 %v4254
            %v4256 = vpop.xlane.xlu0 %4255
            %v4257 = vmax.f32 %v3913, %v3914
            %v4258 = vmax.f32 %v4257, %v3915
            %v4259 = vmax.f32 %v4258, %v3916
            %4260 = vmax.xlane.f32.xlu0 %v4259
            %v4261 = vpop.xlane.xlu0 %4260
            %v4262 = vmax.f32 %v3917, %v3918
            %v4263 = vmax.f32 %v4262, %v3919
            %v4264 = vmax.f32 %v4263, %v3920
            %4265 = vmax.xlane.f32.xlu0 %v4264
            %v4266 = vpop.xlane.xlu0 %4265
            %v4267 = vmax.f32 %v3921, %v3922
            %v4268 = vmax.f32 %v4267, %v3923
            %v4269 = vmax.f32 %v4268, %v3924
            %4270 = vmax.xlane.f32.xlu0 %v4269
            %v4271 = vpop.xlane.xlu0 %4270
            %v4272 = vmax.f32 %v3925, %v3926
            %v4273 = vmax.f32 %v4272, %v3927
            %v4274 = vmax.f32 %v4273, %v3928
            %4275 = vmax.xlane.f32.xlu0 %v4274
            %v4276 = vpop.xlane.xlu0 %4275
            %v4277 = vmax.f32 %v3929, %v3930
            %v4278 = vmax.f32 %v4277, %v3931
            %v4279 = vmax.f32 %v4278, %v3932
            %4280 = vmax.xlane.f32.xlu0 %v4279
            %v4281 = vpop.xlane.xlu0 %4280
            %v4282 = vmax.f32 %v3933, %v3934
            %v4283 = vmax.f32 %v4282, %v3935
            %v4284 = vmax.f32 %v4283, %v3936
            %4285 = vmax.xlane.f32.xlu0 %v4284
            %v4286 = vpop.xlane.xlu0 %4285
            %v4287 = vmax.f32 %v3937, %v3938
            %v4288 = vmax.f32 %v4287, %v3939
            %v4289 = vmax.f32 %v4288, %v3940
            %4290 = vmax.xlane.f32.xlu0 %v4289
            %v4291 = vpop.xlane.xlu0 %4290
            %v4292 = vmax.f32 %v3941, %v3942
            %v4293 = vmax.f32 %v4292, %v3943
            %v4294 = vmax.f32 %v4293, %v3944
            %4295 = vmax.xlane.f32.xlu0 %v4294
            %v4296 = vpop.xlane.xlu0 %4295
            %v4297 = vmax.f32 %v3945, %v3946
            %v4298 = vmax.f32 %v4297, %v3947
            %v4299 = vmax.f32 %v4298, %v3948
            %4300 = vmax.xlane.f32.xlu0 %v4299
            %v4301 = vpop.xlane.xlu0 %4300
            %v4302 = vmax.f32 %v3949, %v3950
            %v4303 = vmax.f32 %v4302, %v3951
            %v4304 = vmax.f32 %v4303, %v3952
            %4305 = vmax.xlane.f32.xlu0 %v4304
            %v4306 = vpop.xlane.xlu0 %4305
            %v4307 = vmax.f32 %v3953, %v3954
            %v4308 = vmax.f32 %v4307, %v3955
            %v4309 = vmax.f32 %v4308, %v3956
            %4310 = vmax.xlane.f32.xlu0 %v4309
            %v4311 = vpop.xlane.xlu0 %4310
            %v4312 = vmax.f32 %v3957, %v3958
            %v4313 = vmax.f32 %v4312, %v3959
            %v4314 = vmax.f32 %v4313, %v3960
            %4315 = vmax.xlane.f32.xlu0 %v4314
            %v4316 = vpop.xlane.xlu0 %4315
            %v4317 = vmax.f32 %v3961, %v3962
            %v4318 = vmax.f32 %v4317, %v3963
            %v4319 = vmax.f32 %v4318, %v3964
            %4320 = vmax.xlane.f32.xlu0 %v4319
            %v4321 = vpop.xlane.xlu0 %4320
            %v4322 = vmax.f32 %v3965, %v3966
            %v4323 = vmax.f32 %v4322, %v3967
            %v4324 = vmax.f32 %v4323, %v3968
            %4325 = vmax.xlane.f32.xlu0 %v4324
            %v4326 = vpop.xlane.xlu0 %4325
            %v4327 = vmax.f32 %v3969, %v3970
            %v4328 = vmax.f32 %v4327, %v3971
            %v4329 = vmax.f32 %v4328, %v3972
            %4330 = vmax.xlane.f32.xlu0 %v4329
            %v4331 = vpop.xlane.xlu0 %4330
            %v4332 = vmax.f32 %v3973, %v3974
            %v4333 = vmax.f32 %v4332, %v3975
            %v4334 = vmax.f32 %v4333, %v3976
            %4335 = vmax.xlane.f32.xlu0 %v4334
            %v4336 = vpop.xlane.xlu0 %4335
            %v4337 = vmax.f32 %v3977, %v3978
            %v4338 = vmax.f32 %v4337, %v3979
            %v4339 = vmax.f32 %v4338, %v3980
            %4340 = vmax.xlane.f32.xlu0 %v4339
            %v4341 = vpop.xlane.xlu0 %4340
            %v4342 = vmax.f32 %v3981, %v3982
            %v4343 = vmax.f32 %v4342, %v3983
            %v4344 = vmax.f32 %v4343, %v3984
            %4345 = vmax.xlane.f32.xlu0 %v4344
            %v4346 = vpop.xlane.xlu0 %4345
            %v4347 = vmax.f32 %v3985, %v3986
            %v4348 = vmax.f32 %v4347, %v3987
            %v4349 = vmax.f32 %v4348, %v3988
            %4350 = vmax.xlane.f32.xlu0 %v4349
            %v4351 = vpop.xlane.xlu0 %4350
            %v4352 = vmax.f32 %v3989, %v3990
            %v4353 = vmax.f32 %v4352, %v3991
            %v4354 = vmax.f32 %v4353, %v3992
            %4355 = vmax.xlane.f32.xlu0 %v4354
            %v4356 = vpop.xlane.xlu0 %4355
            %v4357 = vmax.f32 %v3993, %v3994
            %v4358 = vmax.f32 %v4357, %v3995
            %v4359 = vmax.f32 %v4358, %v3996
            %4360 = vmax.xlane.f32.xlu0 %v4359
            %v4361 = vpop.xlane.xlu0 %4360
            %v4362 = vmax.f32 %v3997, %v3998
            %v4363 = vmax.f32 %v4362, %v3999
            %v4364 = vmax.f32 %v4363, %v4000
            %4365 = vmax.xlane.f32.xlu0 %v4364
            %v4366 = vpop.xlane.xlu0 %4365
            %v4367 = vmax.f32 %v4001, %v4002
            %v4368 = vmax.f32 %v4367, %v4003
            %v4369 = vmax.f32 %v4368, %v4004
            %4370 = vmax.xlane.f32.xlu0 %v4369
            %v4371 = vpop.xlane.xlu0 %4370
            %v4372 = vmax.f32 %v4005, %v4006
            %v4373 = vmax.f32 %v4372, %v4007
            %v4374 = vmax.f32 %v4373, %v4008
            %4375 = vmax.xlane.f32.xlu0 %v4374
            %v4376 = vpop.xlane.xlu0 %4375
            %v4377 = vmax.f32 %v4009, %v4010
            %v4378 = vmax.f32 %v4377, %v4011
            %v4379 = vmax.f32 %v4378, %v4012
            %4380 = vmax.xlane.f32.xlu0 %v4379
            %v4381 = vpop.xlane.xlu0 %4380
            %v4382 = vmax.f32 %v4013, %v4014
            %v4383 = vmax.f32 %v4382, %v4015
            %v4384 = vmax.f32 %v4383, %v4016
            %4385 = vmax.xlane.f32.xlu0 %v4384
            %v4386 = vpop.xlane.xlu0 %4385
            %v4387 = vmax.f32 %v4017, %v4018
            %v4388 = vmax.f32 %v4387, %v4019
            %v4389 = vmax.f32 %v4388, %v4020
            %4390 = vmax.xlane.f32.xlu0 %v4389
            %v4391 = vpop.xlane.xlu0 %4390
            %v4392 = vmax.f32 %v4021, %v4022
            %v4393 = vmax.f32 %v4392, %v4023
            %v4394 = vmax.f32 %v4393, %v4024
            %4395 = vmax.xlane.f32.xlu0 %v4394
            %v4396 = vpop.xlane.xlu0 %4395
            %v4397 = vmax.f32 %v4025, %v4026
            %v4398 = vmax.f32 %v4397, %v4027
            %v4399 = vmax.f32 %v4398, %v4028
            %4400 = vmax.xlane.f32.xlu0 %v4399
            %v4401 = vpop.xlane.xlu0 %4400
            %v4402 = vmax.f32 %v4029, %v4030
            %v4403 = vmax.f32 %v4402, %v4031
            %v4404 = vmax.f32 %v4403, %v4032
            %4405 = vmax.xlane.f32.xlu0 %v4404
            %v4406 = vpop.xlane.xlu0 %4405
            %v4407 = vmax.f32 %v4033, %v4034
            %v4408 = vmax.f32 %v4407, %v4035
            %v4409 = vmax.f32 %v4408, %v4036
            %4410 = vmax.xlane.f32.xlu0 %v4409
            %v4411 = vpop.xlane.xlu0 %4410
            %v4412 = vmax.f32 %v4037, %v4038
            %v4413 = vmax.f32 %v4412, %v4039
            %v4414 = vmax.f32 %v4413, %v4040
            %4415 = vmax.xlane.f32.xlu0 %v4414
            %v4416 = vpop.xlane.xlu0 %4415
            %v4417 = vmax.f32 %v4041, %v4042
            %v4418 = vmax.f32 %v4417, %v4043
            %v4419 = vmax.f32 %v4418, %v4044
            %4420 = vmax.xlane.f32.xlu0 %v4419
            %v4421 = vpop.xlane.xlu0 %4420
            %v4422 = vmax.f32 %v4045, %v4046
            %v4423 = vmax.f32 %v4422, %v4047
            %v4424 = vmax.f32 %v4423, %v4048
            %4425 = vmax.xlane.f32.xlu0 %v4424
            %v4426 = vpop.xlane.xlu0 %4425
            %v4427 = vmax.f32 %v4049, %v4050
            %v4428 = vmax.f32 %v4427, %v4051
            %v4429 = vmax.f32 %v4428, %v4052
            %4430 = vmax.xlane.f32.xlu0 %v4429
            %v4431 = vpop.xlane.xlu0 %4430
            %v4432 = vmax.f32 %v4053, %v4054
            %v4433 = vmax.f32 %v4432, %v4055
            %v4434 = vmax.f32 %v4433, %v4056
            %4435 = vmax.xlane.f32.xlu0 %v4434
            %v4436 = vpop.xlane.xlu0 %4435
            %v4437 = vmax.f32 %v4057, %v4058
            %v4438 = vmax.f32 %v4437, %v4059
            %v4439 = vmax.f32 %v4438, %v4060
            %4440 = vmax.xlane.f32.xlu0 %v4439
            %v4441 = vpop.xlane.xlu0 %4440
            %v4442 = vmax.f32 %v4061, %v4062
            %v4443 = vmax.f32 %v4442, %v4063
            %v4444 = vmax.f32 %v4443, %v4064
            %4445 = vmax.xlane.f32.xlu0 %v4444
            %v4446 = vpop.xlane.xlu0 %4445
            %v4447 = vmax.f32 %v4065, %v4066
            %v4448 = vmax.f32 %v4447, %v4067
            %v4449 = vmax.f32 %v4448, %v4068
            %4450 = vmax.xlane.f32.xlu0 %v4449
            %v4451 = vpop.xlane.xlu0 %4450
            %v4452 = vmax.f32 %v4069, %v4070
            %v4453 = vmax.f32 %v4452, %v4071
            %v4454 = vmax.f32 %v4453, %v4072
            %4455 = vmax.xlane.f32.xlu0 %v4454
            %v4456 = vpop.xlane.xlu0 %4455
            %v4457 = vmax.f32 %v4073, %v4141
            %v4458 = vmax.f32 %v4074, %v4146
            %v4459 = vmax.f32 %v4075, %v4151
            %v4460 = vmax.f32 %v4076, %v4156
            %v4461 = vmax.f32 %v4077, %v4161
            %v4462 = vmax.f32 %v4078, %v4166
            %v4463 = vmax.f32 %v4079, %v4171
            %v4464 = vmax.f32 %v4080, %v4176
            %v4465 = vmax.f32 %v4081, %v4181
            %v4466 = vmax.f32 %v4082, %v4186
            %v4467 = vmax.f32 %v4083, %v4191
            %v4468 = vmax.f32 %v4084, %v4196
            %v4469 = vmax.f32 %v4085, %v4201
            %v4470 = vmax.f32 %v4086, %v4206
            %v4471 = vmax.f32 %v4087, %v4211
            %v4472 = vmax.f32 %v4088, %v4216
            %v4473 = vmax.f32 %v4089, %v4221
            %v4474 = vmax.f32 %v4090, %v4226
            %v4475 = vmax.f32 %v4091, %v4231
            %v4476 = vmax.f32 %v4092, %v4236
            %v4477 = vmax.f32 %v4093, %v4241
            %v4478 = vmax.f32 %v4094, %v4246
            %v4479 = vmax.f32 %v4095, %v4251
            %v4480 = vmax.f32 %v4096, %v4256
            %v4481 = vmax.f32 %v4097, %v4261
            %v4482 = vmax.f32 %v4098, %v4266
            %v4483 = vmax.f32 %v4099, %v4271
            %v4484 = vmax.f32 %v4100, %v4276
            %v4485 = vmax.f32 %v4101, %v4281
            %v4486 = vmax.f32 %v4102, %v4286
            %v4487 = vmax.f32 %v4103, %v4291
            %v4488 = vmax.f32 %v4104, %v4296
            %v4489 = vmax.f32 %v4105, %v4301
            %v4490 = vmax.f32 %v4106, %v4306
            %v4491 = vmax.f32 %v4107, %v4311
            %v4492 = vmax.f32 %v4108, %v4316
            %v4493 = vmax.f32 %v4109, %v4321
            %v4494 = vmax.f32 %v4110, %v4326
            %v4495 = vmax.f32 %v4111, %v4331
            %v4496 = vmax.f32 %v4112, %v4336
            %v4497 = vmax.f32 %v4113, %v4341
            %v4498 = vmax.f32 %v4114, %v4346
            %v4499 = vmax.f32 %v4115, %v4351
            %v4500 = vmax.f32 %v4116, %v4356
            %v4501 = vmax.f32 %v4117, %v4361
            %v4502 = vmax.f32 %v4118, %v4366
            %v4503 = vmax.f32 %v4119, %v4371
            %v4504 = vmax.f32 %v4120, %v4376
            %v4505 = vmax.f32 %v4121, %v4381
            %v4506 = vmax.f32 %v4122, %v4386
            %v4507 = vmax.f32 %v4123, %v4391
            %v4508 = vmax.f32 %v4124, %v4396
            %v4509 = vmax.f32 %v4125, %v4401
            %v4510 = vmax.f32 %v4126, %v4406
            %v4511 = vmax.f32 %v4127, %v4411
            %v4512 = vmax.f32 %v4128, %v4416
            %v4513 = vmax.f32 %v4129, %v4421
            %v4514 = vmax.f32 %v4130, %v4426
            %v4515 = vmax.f32 %v4131, %v4431
            %v4516 = vmax.f32 %v4132, %v4436
            %v4517 = vmax.f32 %v4133, %v4441
            %v4518 = vmax.f32 %v4134, %v4446
            %v4519 = vmax.f32 %v4135, %v4451
            %v4520 = vmax.f32 %v4136, %v4456
            %v4521 = vld [vmem:[#allocation3] sm:$0xff]
            %v4522 = vld [vmem:[#allocation3 + $0x8] sm:$0xff]
            %v4523 = vld [vmem:[#allocation3 + $0x10] sm:$0xff]
            %v4524 = vld [vmem:[#allocation3 + $0x18] sm:$0xff]
            %v4525 = vld [vmem:[#allocation3 + $0x20] sm:$0xff]
            %v4526 = vld [vmem:[#allocation3 + $0x28] sm:$0xff]
            %v4527 = vld [vmem:[#allocation3 + $0x30] sm:$0xff]
            %v4528 = vld [vmem:[#allocation3 + $0x38] sm:$0xff]
            %v4529 = vld [vmem:[#allocation3 + $0x40] sm:$0xff]
            %v4530 = vld [vmem:[#allocation3 + $0x48] sm:$0xff]
            %v4531 = vld [vmem:[#allocation3 + $0x50] sm:$0xff]
            %v4532 = vld [vmem:[#allocation3 + $0x58] sm:$0xff]
            %v4533 = vld [vmem:[#allocation3 + $0x60] sm:$0xff]
            %v4534 = vld [vmem:[#allocation3 + $0x68] sm:$0xff]
            %v4535 = vld [vmem:[#allocation3 + $0x70] sm:$0xff]
            %v4536 = vld [vmem:[#allocation3 + $0x78] sm:$0xff]
            %v4537 = vld [vmem:[#allocation3 + $0x80] sm:$0xff]
            %v4538 = vld [vmem:[#allocation3 + $0x88] sm:$0xff]
            %v4539 = vld [vmem:[#allocation3 + $0x90] sm:$0xff]
            %v4540 = vld [vmem:[#allocation3 + $0x98] sm:$0xff]
            %v4541 = vld [vmem:[#allocation3 + $0xa0] sm:$0xff]
            %v4542 = vld [vmem:[#allocation3 + $0xa8] sm:$0xff]
            %v4543 = vld [vmem:[#allocation3 + $0xb0] sm:$0xff]
            %v4544 = vld [vmem:[#allocation3 + $0xb8] sm:$0xff]
            %v4545 = vld [vmem:[#allocation3 + $0xc0] sm:$0xff]
            %v4546 = vld [vmem:[#allocation3 + $0xc8] sm:$0xff]
            %v4547 = vld [vmem:[#allocation3 + $0xd0] sm:$0xff]
            %v4548 = vld [vmem:[#allocation3 + $0xd8] sm:$0xff]
            %v4549 = vld [vmem:[#allocation3 + $0xe0] sm:$0xff]
            %v4550 = vld [vmem:[#allocation3 + $0xe8] sm:$0xff]
            %v4551 = vld [vmem:[#allocation3 + $0xf0] sm:$0xff]
            %v4552 = vld [vmem:[#allocation3 + $0xf8] sm:$0xff]
            %v4553 = vld [vmem:[#allocation3 + $0x100] sm:$0xff]
            %v4554 = vld [vmem:[#allocation3 + $0x108] sm:$0xff]
            %v4555 = vld [vmem:[#allocation3 + $0x110] sm:$0xff]
            %v4556 = vld [vmem:[#allocation3 + $0x118] sm:$0xff]
            %v4557 = vld [vmem:[#allocation3 + $0x120] sm:$0xff]
            %v4558 = vld [vmem:[#allocation3 + $0x128] sm:$0xff]
            %v4559 = vld [vmem:[#allocation3 + $0x130] sm:$0xff]
            %v4560 = vld [vmem:[#allocation3 + $0x138] sm:$0xff]
            %v4561 = vld [vmem:[#allocation3 + $0x140] sm:$0xff]
            %v4562 = vld [vmem:[#allocation3 + $0x148] sm:$0xff]
            %v4563 = vld [vmem:[#allocation3 + $0x150] sm:$0xff]
            %v4564 = vld [vmem:[#allocation3 + $0x158] sm:$0xff]
            %v4565 = vld [vmem:[#allocation3 + $0x160] sm:$0xff]
            %v4566 = vld [vmem:[#allocation3 + $0x168] sm:$0xff]
            %v4567 = vld [vmem:[#allocation3 + $0x170] sm:$0xff]
            %v4568 = vld [vmem:[#allocation3 + $0x178] sm:$0xff]
            %v4569 = vld [vmem:[#allocation3 + $0x180] sm:$0xff]
            %v4570 = vld [vmem:[#allocation3 + $0x188] sm:$0xff]
            %v4571 = vld [vmem:[#allocation3 + $0x190] sm:$0xff]
            %v4572 = vld [vmem:[#allocation3 + $0x198] sm:$0xff]
            %v4573 = vld [vmem:[#allocation3 + $0x1a0] sm:$0xff]
            %v4574 = vld [vmem:[#allocation3 + $0x1a8] sm:$0xff]
            %v4575 = vld [vmem:[#allocation3 + $0x1b0] sm:$0xff]
            %v4576 = vld [vmem:[#allocation3 + $0x1b8] sm:$0xff]
            %v4577 = vld [vmem:[#allocation3 + $0x1c0] sm:$0xff]
            %v4578 = vld [vmem:[#allocation3 + $0x1c8] sm:$0xff]
            %v4579 = vld [vmem:[#allocation3 + $0x1d0] sm:$0xff]
            %v4580 = vld [vmem:[#allocation3 + $0x1d8] sm:$0xff]
            %v4581 = vld [vmem:[#allocation3 + $0x1e0] sm:$0xff]
            %v4582 = vld [vmem:[#allocation3 + $0x1e8] sm:$0xff]
            %v4583 = vld [vmem:[#allocation3 + $0x1f0] sm:$0xff]
            %v4584 = vld [vmem:[#allocation3 + $0x1f8] sm:$0xff]
            %v4585 = vsub.f32 %v4073, %v4457
            %v4586 = vsub.f32 %v4074, %v4458
            %v4587 = vsub.f32 %v4075, %v4459
            %v4588 = vsub.f32 %v4076, %v4460
            %v4589 = vsub.f32 %v4077, %v4461
            %v4590 = vsub.f32 %v4078, %v4462
            %v4591 = vsub.f32 %v4079, %v4463
            %v4592 = vsub.f32 %v4080, %v4464
            %v4593 = vsub.f32 %v4081, %v4465
            %v4594 = vsub.f32 %v4082, %v4466
            %v4595 = vsub.f32 %v4083, %v4467
            %v4596 = vsub.f32 %v4084, %v4468
            %v4597 = vsub.f32 %v4085, %v4469
            %v4598 = vsub.f32 %v4086, %v4470
            %v4599 = vsub.f32 %v4087, %v4471
            %v4600 = vsub.f32 %v4088, %v4472
            %v4601 = vsub.f32 %v4089, %v4473
            %v4602 = vsub.f32 %v4090, %v4474
            %v4603 = vsub.f32 %v4091, %v4475
            %v4604 = vsub.f32 %v4092, %v4476
            %v4605 = vsub.f32 %v4093, %v4477
            %v4606 = vsub.f32 %v4094, %v4478
            %v4607 = vsub.f32 %v4095, %v4479
            %v4608 = vsub.f32 %v4096, %v4480
            %v4609 = vsub.f32 %v4097, %v4481
            %v4610 = vsub.f32 %v4098, %v4482
            %v4611 = vsub.f32 %v4099, %v4483
            %v4612 = vsub.f32 %v4100, %v4484
            %v4613 = vsub.f32 %v4101, %v4485
            %v4614 = vsub.f32 %v4102, %v4486
            %v4615 = vsub.f32 %v4103, %v4487
            %v4616 = vsub.f32 %v4104, %v4488
            %v4617 = vsub.f32 %v4105, %v4489
            %v4618 = vsub.f32 %v4106, %v4490
            %v4619 = vsub.f32 %v4107, %v4491
            %v4620 = vsub.f32 %v4108, %v4492
            %v4621 = vsub.f32 %v4109, %v4493
            %v4622 = vsub.f32 %v4110, %v4494
            %v4623 = vsub.f32 %v4111, %v4495
            %v4624 = vsub.f32 %v4112, %v4496
            %v4625 = vsub.f32 %v4113, %v4497
            %v4626 = vsub.f32 %v4114, %v4498
            %v4627 = vsub.f32 %v4115, %v4499
            %v4628 = vsub.f32 %v4116, %v4500
            %v4629 = vsub.f32 %v4117, %v4501
            %v4630 = vsub.f32 %v4118, %v4502
            %v4631 = vsub.f32 %v4119, %v4503
            %v4632 = vsub.f32 %v4120, %v4504
            %v4633 = vsub.f32 %v4121, %v4505
            %v4634 = vsub.f32 %v4122, %v4506
            %v4635 = vsub.f32 %v4123, %v4507
            %v4636 = vsub.f32 %v4124, %v4508
            %v4637 = vsub.f32 %v4125, %v4509
            %v4638 = vsub.f32 %v4126, %v4510
            %v4639 = vsub.f32 %v4127, %v4511
            %v4640 = vsub.f32 %v4128, %v4512
            %v4641 = vsub.f32 %v4129, %v4513
            %v4642 = vsub.f32 %v4130, %v4514
            %v4643 = vsub.f32 %v4131, %v4515
            %v4644 = vsub.f32 %v4132, %v4516
            %v4645 = vsub.f32 %v4133, %v4517
            %v4646 = vsub.f32 %v4134, %v4518
            %v4647 = vsub.f32 %v4135, %v4519
            %v4648 = vsub.f32 %v4136, %v4520
            %v4649 = vmul.f32 %v4585, 1.442695
            %v4650 = vpow.pop %v4649
            %v4651 = vmul.f32 %v4586, 1.442695
            %v4652 = vpow.pop %v4651
            %v4653 = vmul.f32 %v4587, 1.442695
            %v4654 = vpow.pop %v4653
            %v4655 = vmul.f32 %v4588, 1.442695
            %v4656 = vpow.pop %v4655
            %v4657 = vmul.f32 %v4589, 1.442695
            %v4658 = vpow.pop %v4657
            %v4659 = vmul.f32 %v4590, 1.442695
            %v4660 = vpow.pop %v4659
            %v4661 = vmul.f32 %v4591, 1.442695
            %v4662 = vpow.pop %v4661
            %v4663 = vmul.f32 %v4592, 1.442695
            %v4664 = vpow.pop %v4663
            %v4665 = vmul.f32 %v4593, 1.442695
            %v4666 = vpow.pop %v4665
            %v4667 = vmul.f32 %v4594, 1.442695
            %v4668 = vpow.pop %v4667
            %v4669 = vmul.f32 %v4595, 1.442695
            %v4670 = vpow.pop %v4669
            %v4671 = vmul.f32 %v4596, 1.442695
            %v4672 = vpow.pop %v4671
            %v4673 = vmul.f32 %v4597, 1.442695
            %v4674 = vpow.pop %v4673
            %v4675 = vmul.f32 %v4598, 1.442695
            %v4676 = vpow.pop %v4675
            %v4677 = vmul.f32 %v4599, 1.442695
            %v4678 = vpow.pop %v4677
            %v4679 = vmul.f32 %v4600, 1.442695
            %v4680 = vpow.pop %v4679
            %v4681 = vmul.f32 %v4601, 1.442695
            %v4682 = vpow.pop %v4681
            %v4683 = vmul.f32 %v4602, 1.442695
            %v4684 = vpow.pop %v4683
            %v4685 = vmul.f32 %v4603, 1.442695
            %v4686 = vpow.pop %v4685
            %v4687 = vmul.f32 %v4604, 1.442695
            %v4688 = vpow.pop %v4687
            %v4689 = vmul.f32 %v4605, 1.442695
            %v4690 = vpow.pop %v4689
            %v4691 = vmul.f32 %v4606, 1.442695
            %v4692 = vpow.pop %v4691
            %v4693 = vmul.f32 %v4607, 1.442695
            %v4694 = vpow.pop %v4693
            %v4695 = vmul.f32 %v4608, 1.442695
            %v4696 = vpow.pop %v4695
            %v4697 = vmul.f32 %v4609, 1.442695
            %v4698 = vpow.pop %v4697
            %v4699 = vmul.f32 %v4610, 1.442695
            %v4700 = vpow.pop %v4699
            %v4701 = vmul.f32 %v4611, 1.442695
            %v4702 = vpow.pop %v4701
            %v4703 = vmul.f32 %v4612, 1.442695
            %v4704 = vpow.pop %v4703
            %v4705 = vmul.f32 %v4613, 1.442695
            %v4706 = vpow.pop %v4705
            %v4707 = vmul.f32 %v4614, 1.442695
            %v4708 = vpow.pop %v4707
            %v4709 = vmul.f32 %v4615, 1.442695
            %v4710 = vpow.pop %v4709
            %v4711 = vmul.f32 %v4616, 1.442695
            %v4712 = vpow.pop %v4711
            %v4713 = vmul.f32 %v4617, 1.442695
            %v4714 = vpow.pop %v4713
            %v4715 = vmul.f32 %v4618, 1.442695
            %v4716 = vpow.pop %v4715
            %v4717 = vmul.f32 %v4619, 1.442695
            %v4718 = vpow.pop %v4717
            %v4719 = vmul.f32 %v4620, 1.442695
            %v4720 = vpow.pop %v4719
            %v4721 = vmul.f32 %v4621, 1.442695
            %v4722 = vpow.pop %v4721
            %v4723 = vmul.f32 %v4622, 1.442695
            %v4724 = vpow.pop %v4723
            %v4725 = vmul.f32 %v4623, 1.442695
            %v4726 = vpow.pop %v4725
            %v4727 = vmul.f32 %v4624, 1.442695
            %v4728 = vpow.pop %v4727
            %v4729 = vmul.f32 %v4625, 1.442695
            %v4730 = vpow.pop %v4729
            %v4731 = vmul.f32 %v4626, 1.442695
            %v4732 = vpow.pop %v4731
            %v4733 = vmul.f32 %v4627, 1.442695
            %v4734 = vpow.pop %v4733
            %v4735 = vmul.f32 %v4628, 1.442695
            %v4736 = vpow.pop %v4735
            %v4737 = vmul.f32 %v4629, 1.442695
            %v4738 = vpow.pop %v4737
            %v4739 = vmul.f32 %v4630, 1.442695
            %v4740 = vpow.pop %v4739
            %v4741 = vmul.f32 %v4631, 1.442695
            %v4742 = vpow.pop %v4741
            %v4743 = vmul.f32 %v4632, 1.442695
            %v4744 = vpow.pop %v4743
            %v4745 = vmul.f32 %v4633, 1.442695
            %v4746 = vpow.pop %v4745
            %v4747 = vmul.f32 %v4634, 1.442695
            %v4748 = vpow.pop %v4747
            %v4749 = vmul.f32 %v4635, 1.442695
            %v4750 = vpow.pop %v4749
            %v4751 = vmul.f32 %v4636, 1.442695
            %v4752 = vpow.pop %v4751
            %v4753 = vmul.f32 %v4637, 1.442695
            %v4754 = vpow.pop %v4753
            %v4755 = vmul.f32 %v4638, 1.442695
            %v4756 = vpow.pop %v4755
            %v4757 = vmul.f32 %v4639, 1.442695
            %v4758 = vpow.pop %v4757
            %v4759 = vmul.f32 %v4640, 1.442695
            %v4760 = vpow.pop %v4759
            %v4761 = vmul.f32 %v4641, 1.442695
            %v4762 = vpow.pop %v4761
            %v4763 = vmul.f32 %v4642, 1.442695
            %v4764 = vpow.pop %v4763
            %v4765 = vmul.f32 %v4643, 1.442695
            %v4766 = vpow.pop %v4765
            %v4767 = vmul.f32 %v4644, 1.442695
            %v4768 = vpow.pop %v4767
            %v4769 = vmul.f32 %v4645, 1.442695
            %v4770 = vpow.pop %v4769
            %v4771 = vmul.f32 %v4646, 1.442695
            %v4772 = vpow.pop %v4771
            %v4773 = vmul.f32 %v4647, 1.442695
            %v4774 = vpow.pop %v4773
            %v4775 = vmul.f32 %v4648, 1.442695
            %v4776 = vpow.pop %v4775
            %v4777 = vmul.f32 %v4521, %v4650
            %v4778 = vmul.f32 %v4522, %v4652
            %v4779 = vmul.f32 %v4523, %v4654
            %v4780 = vmul.f32 %v4524, %v4656
            %v4781 = vmul.f32 %v4525, %v4658
            %v4782 = vmul.f32 %v4526, %v4660
            %v4783 = vmul.f32 %v4527, %v4662
            %v4784 = vmul.f32 %v4528, %v4664
            %v4785 = vmul.f32 %v4529, %v4666
            %v4786 = vmul.f32 %v4530, %v4668
            %v4787 = vmul.f32 %v4531, %v4670
            %v4788 = vmul.f32 %v4532, %v4672
            %v4789 = vmul.f32 %v4533, %v4674
            %v4790 = vmul.f32 %v4534, %v4676
            %v4791 = vmul.f32 %v4535, %v4678
            %v4792 = vmul.f32 %v4536, %v4680
            %v4793 = vmul.f32 %v4537, %v4682
            %v4794 = vmul.f32 %v4538, %v4684
            %v4795 = vmul.f32 %v4539, %v4686
            %v4796 = vmul.f32 %v4540, %v4688
            %v4797 = vmul.f32 %v4541, %v4690
            %v4798 = vmul.f32 %v4542, %v4692
            %v4799 = vmul.f32 %v4543, %v4694
            %v4800 = vmul.f32 %v4544, %v4696
            %v4801 = vmul.f32 %v4545, %v4698
            %v4802 = vmul.f32 %v4546, %v4700
            %v4803 = vmul.f32 %v4547, %v4702
            %v4804 = vmul.f32 %v4548, %v4704
            %v4805 = vmul.f32 %v4549, %v4706
            %v4806 = vmul.f32 %v4550, %v4708
            %v4807 = vmul.f32 %v4551, %v4710
            %v4808 = vmul.f32 %v4552, %v4712
            %v4809 = vmul.f32 %v4553, %v4714
            %v4810 = vmul.f32 %v4554, %v4716
            %v4811 = vmul.f32 %v4555, %v4718
            %v4812 = vmul.f32 %v4556, %v4720
            %v4813 = vmul.f32 %v4557, %v4722
            %v4814 = vmul.f32 %v4558, %v4724
            %v4815 = vmul.f32 %v4559, %v4726
            %v4816 = vmul.f32 %v4560, %v4728
            %v4817 = vmul.f32 %v4561, %v4730
            %v4818 = vmul.f32 %v4562, %v4732
            %v4819 = vmul.f32 %v4563, %v4734
            %v4820 = vmul.f32 %v4564, %v4736
            %v4821 = vmul.f32 %v4565, %v4738
            %v4822 = vmul.f32 %v4566, %v4740
            %v4823 = vmul.f32 %v4567, %v4742
            %v4824 = vmul.f32 %v4568, %v4744
            %v4825 = vmul.f32 %v4569, %v4746
            %v4826 = vmul.f32 %v4570, %v4748
            %v4827 = vmul.f32 %v4571, %v4750
            %v4828 = vmul.f32 %v4572, %v4752
            %v4829 = vmul.f32 %v4573, %v4754
            %v4830 = vmul.f32 %v4574, %v4756
            %v4831 = vmul.f32 %v4575, %v4758
            %v4832 = vmul.f32 %v4576, %v4760
            %v4833 = vmul.f32 %v4577, %v4762
            %v4834 = vmul.f32 %v4578, %v4764
            %v4835 = vmul.f32 %v4579, %v4766
            %v4836 = vmul.f32 %v4580, %v4768
            %v4837 = vmul.f32 %v4581, %v4770
            %v4838 = vmul.f32 %v4582, %v4772
            %v4839 = vmul.f32 %v4583, %v4774
            %v4840 = vmul.f32 %v4584, %v4776
            %4842 = vset.pattern.permute.xlu0 0
            %4843 = vperm.xlu0 %4842, %v4457
            %v4844 = vpop.permute.xlu0 %4843
            %4847 = vset.pattern.permute.xlu0 0
            %4848 = vperm.xlu0 %4847, %v4458
            %v4849 = vpop.permute.xlu0 %4848
            %4852 = vset.pattern.permute.xlu0 0
            %4853 = vperm.xlu0 %4852, %v4459
            %v4854 = vpop.permute.xlu0 %4853
            %4857 = vset.pattern.permute.xlu0 0
            %4858 = vperm.xlu0 %4857, %v4460
            %v4859 = vpop.permute.xlu0 %4858
            %4862 = vset.pattern.permute.xlu0 0
            %4863 = vperm.xlu0 %4862, %v4461
            %v4864 = vpop.permute.xlu0 %4863
            %4867 = vset.pattern.permute.xlu0 0
            %4868 = vperm.xlu0 %4867, %v4462
            %v4869 = vpop.permute.xlu0 %4868
            %4872 = vset.pattern.permute.xlu0 0
            %4873 = vperm.xlu0 %4872, %v4463
            %v4874 = vpop.permute.xlu0 %4873
            %4877 = vset.pattern.permute.xlu0 0
            %4878 = vperm.xlu0 %4877, %v4464
            %v4879 = vpop.permute.xlu0 %4878
            %4882 = vset.pattern.permute.xlu0 0
            %4883 = vperm.xlu0 %4882, %v4465
            %v4884 = vpop.permute.xlu0 %4883
            %4887 = vset.pattern.permute.xlu0 0
            %4888 = vperm.xlu0 %4887, %v4466
            %v4889 = vpop.permute.xlu0 %4888
            %4892 = vset.pattern.permute.xlu0 0
            %4893 = vperm.xlu0 %4892, %v4467
            %v4894 = vpop.permute.xlu0 %4893
            %4897 = vset.pattern.permute.xlu0 0
            %4898 = vperm.xlu0 %4897, %v4468
            %v4899 = vpop.permute.xlu0 %4898
            %4902 = vset.pattern.permute.xlu0 0
            %4903 = vperm.xlu0 %4902, %v4469
            %v4904 = vpop.permute.xlu0 %4903
            %4907 = vset.pattern.permute.xlu0 0
            %4908 = vperm.xlu0 %4907, %v4470
            %v4909 = vpop.permute.xlu0 %4908
            %4912 = vset.pattern.permute.xlu0 0
            %4913 = vperm.xlu0 %4912, %v4471
            %v4914 = vpop.permute.xlu0 %4913
            %4917 = vset.pattern.permute.xlu0 0
            %4918 = vperm.xlu0 %4917, %v4472
            %v4919 = vpop.permute.xlu0 %4918
            %4922 = vset.pattern.permute.xlu0 0
            %4923 = vperm.xlu0 %4922, %v4473
            %v4924 = vpop.permute.xlu0 %4923
            %4927 = vset.pattern.permute.xlu0 0
            %4928 = vperm.xlu0 %4927, %v4474
            %v4929 = vpop.permute.xlu0 %4928
            %4932 = vset.pattern.permute.xlu0 0
            %4933 = vperm.xlu0 %4932, %v4475
            %v4934 = vpop.permute.xlu0 %4933
            %4937 = vset.pattern.permute.xlu0 0
            %4938 = vperm.xlu0 %4937, %v4476
            %v4939 = vpop.permute.xlu0 %4938
            %4942 = vset.pattern.permute.xlu0 0
            %4943 = vperm.xlu0 %4942, %v4477
            %v4944 = vpop.permute.xlu0 %4943
            %4947 = vset.pattern.permute.xlu0 0
            %4948 = vperm.xlu0 %4947, %v4478
            %v4949 = vpop.permute.xlu0 %4948
            %4952 = vset.pattern.permute.xlu0 0
            %4953 = vperm.xlu0 %4952, %v4479
            %v4954 = vpop.permute.xlu0 %4953
            %4957 = vset.pattern.permute.xlu0 0
            %4958 = vperm.xlu0 %4957, %v4480
            %v4959 = vpop.permute.xlu0 %4958
            %4962 = vset.pattern.permute.xlu0 0
            %4963 = vperm.xlu0 %4962, %v4481
            %v4964 = vpop.permute.xlu0 %4963
            %4967 = vset.pattern.permute.xlu0 0
            %4968 = vperm.xlu0 %4967, %v4482
            %v4969 = vpop.permute.xlu0 %4968
            %4972 = vset.pattern.permute.xlu0 0
            %4973 = vperm.xlu0 %4972, %v4483
            %v4974 = vpop.permute.xlu0 %4973
            %4977 = vset.pattern.permute.xlu0 0
            %4978 = vperm.xlu0 %4977, %v4484
            %v4979 = vpop.permute.xlu0 %4978
            %4982 = vset.pattern.permute.xlu0 0
            %4983 = vperm.xlu0 %4982, %v4485
            %v4984 = vpop.permute.xlu0 %4983
            %4987 = vset.pattern.permute.xlu0 0
            %4988 = vperm.xlu0 %4987, %v4486
            %v4989 = vpop.permute.xlu0 %4988
            %4992 = vset.pattern.permute.xlu0 0
            %4993 = vperm.xlu0 %4992, %v4487
            %v4994 = vpop.permute.xlu0 %4993
            %4997 = vset.pattern.permute.xlu0 0
            %4998 = vperm.xlu0 %4997, %v4488
            %v4999 = vpop.permute.xlu0 %4998
            %5002 = vset.pattern.permute.xlu0 0
            %5003 = vperm.xlu0 %5002, %v4489
            %v5004 = vpop.permute.xlu0 %5003
            %5007 = vset.pattern.permute.xlu0 0
            %5008 = vperm.xlu0 %5007, %v4490
            %v5009 = vpop.permute.xlu0 %5008
            %5012 = vset.pattern.permute.xlu0 0
            %5013 = vperm.xlu0 %5012, %v4491
            %v5014 = vpop.permute.xlu0 %5013
            %5017 = vset.pattern.permute.xlu0 0
            %5018 = vperm.xlu0 %5017, %v4492
            %v5019 = vpop.permute.xlu0 %5018
            %5022 = vset.pattern.permute.xlu0 0
            %5023 = vperm.xlu0 %5022, %v4493
            %v5024 = vpop.permute.xlu0 %5023
            %5027 = vset.pattern.permute.xlu0 0
            %5028 = vperm.xlu0 %5027, %v4494
            %v5029 = vpop.permute.xlu0 %5028
            %5032 = vset.pattern.permute.xlu0 0
            %5033 = vperm.xlu0 %5032, %v4495
            %v5034 = vpop.permute.xlu0 %5033
            %5037 = vset.pattern.permute.xlu0 0
            %5038 = vperm.xlu0 %5037, %v4496
            %v5039 = vpop.permute.xlu0 %5038
            %5042 = vset.pattern.permute.xlu0 0
            %5043 = vperm.xlu0 %5042, %v4497
            %v5044 = vpop.permute.xlu0 %5043
            %5047 = vset.pattern.permute.xlu0 0
            %5048 = vperm.xlu0 %5047, %v4498
            %v5049 = vpop.permute.xlu0 %5048
            %5052 = vset.pattern.permute.xlu0 0
            %5053 = vperm.xlu0 %5052, %v4499
            %v5054 = vpop.permute.xlu0 %5053
            %5057 = vset.pattern.permute.xlu0 0
            %5058 = vperm.xlu0 %5057, %v4500
            %v5059 = vpop.permute.xlu0 %5058
            %5062 = vset.pattern.permute.xlu0 0
            %5063 = vperm.xlu0 %5062, %v4501
            %v5064 = vpop.permute.xlu0 %5063
            %5067 = vset.pattern.permute.xlu0 0
            %5068 = vperm.xlu0 %5067, %v4502
            %v5069 = vpop.permute.xlu0 %5068
            %5072 = vset.pattern.permute.xlu0 0
            %5073 = vperm.xlu0 %5072, %v4503
            %v5074 = vpop.permute.xlu0 %5073
            %5077 = vset.pattern.permute.xlu0 0
            %5078 = vperm.xlu0 %5077, %v4504
            %v5079 = vpop.permute.xlu0 %5078
            %5082 = vset.pattern.permute.xlu0 0
            %5083 = vperm.xlu0 %5082, %v4505
            %v5084 = vpop.permute.xlu0 %5083
            %5087 = vset.pattern.permute.xlu0 0
            %5088 = vperm.xlu0 %5087, %v4506
            %v5089 = vpop.permute.xlu0 %5088
            %5092 = vset.pattern.permute.xlu0 0
            %5093 = vperm.xlu0 %5092, %v4507
            %v5094 = vpop.permute.xlu0 %5093
            %5097 = vset.pattern.permute.xlu0 0
            %5098 = vperm.xlu0 %5097, %v4508
            %v5099 = vpop.permute.xlu0 %5098
            %5102 = vset.pattern.permute.xlu0 0
            %5103 = vperm.xlu0 %5102, %v4509
            %v5104 = vpop.permute.xlu0 %5103
            %5107 = vset.pattern.permute.xlu0 0
            %5108 = vperm.xlu0 %5107, %v4510
            %v5109 = vpop.permute.xlu0 %5108
            %5112 = vset.pattern.permute.xlu0 0
            %5113 = vperm.xlu0 %5112, %v4511
            %v5114 = vpop.permute.xlu0 %5113
            %5117 = vset.pattern.permute.xlu0 0
            %5118 = vperm.xlu0 %5117, %v4512
            %v5119 = vpop.permute.xlu0 %5118
            %5122 = vset.pattern.permute.xlu0 0
            %5123 = vperm.xlu0 %5122, %v4513
            %v5124 = vpop.permute.xlu0 %5123
            %5127 = vset.pattern.permute.xlu0 0
            %5128 = vperm.xlu0 %5127, %v4514
            %v5129 = vpop.permute.xlu0 %5128
            %5132 = vset.pattern.permute.xlu0 0
            %5133 = vperm.xlu0 %5132, %v4515
            %v5134 = vpop.permute.xlu0 %5133
            %5137 = vset.pattern.permute.xlu0 0
            %5138 = vperm.xlu0 %5137, %v4516
            %v5139 = vpop.permute.xlu0 %5138
            %5142 = vset.pattern.permute.xlu0 0
            %5143 = vperm.xlu0 %5142, %v4517
            %v5144 = vpop.permute.xlu0 %5143
            %5147 = vset.pattern.permute.xlu0 0
            %5148 = vperm.xlu0 %5147, %v4518
            %v5149 = vpop.permute.xlu0 %5148
            %5152 = vset.pattern.permute.xlu0 0
            %5153 = vperm.xlu0 %5152, %v4519
            %v5154 = vpop.permute.xlu0 %5153
            %5157 = vset.pattern.permute.xlu0 0
            %5158 = vperm.xlu0 %5157, %v4520
            %v5159 = vpop.permute.xlu0 %5158
            %v5161 = vsub.f32 %v3817, %v4844
            %v5162 = vsub.f32 %v3818, %v4844
            %v5163 = vsub.f32 %v3819, %v4844
            %v5164 = vsub.f32 %v3820, %v4844
            %v5165 = vsub.f32 %v3821, %v4849
            %v5166 = vsub.f32 %v3822, %v4849
            %v5167 = vsub.f32 %v3823, %v4849
            %v5168 = vsub.f32 %v3824, %v4849
            %v5169 = vsub.f32 %v3825, %v4854
            %v5170 = vsub.f32 %v3826, %v4854
            %v5171 = vsub.f32 %v3827, %v4854
            %v5172 = vsub.f32 %v3828, %v4854
            %v5173 = vsub.f32 %v3829, %v4859
            %v5174 = vsub.f32 %v3830, %v4859
            %v5175 = vsub.f32 %v3831, %v4859
            %v5176 = vsub.f32 %v3832, %v4859
            %v5177 = vsub.f32 %v3833, %v4864
            %v5178 = vsub.f32 %v3834, %v4864
            %v5179 = vsub.f32 %v3835, %v4864
            %v5180 = vsub.f32 %v3836, %v4864
            %v5181 = vsub.f32 %v3837, %v4869
            %v5182 = vsub.f32 %v3838, %v4869
            %v5183 = vsub.f32 %v3839, %v4869
            %v5184 = vsub.f32 %v3840, %v4869
            %v5185 = vsub.f32 %v3841, %v4874
            %v5186 = vsub.f32 %v3842, %v4874
            %v5187 = vsub.f32 %v3843, %v4874
            %v5188 = vsub.f32 %v3844, %v4874
            %v5189 = vsub.f32 %v3845, %v4879
            %v5190 = vsub.f32 %v3846, %v4879
            %v5191 = vsub.f32 %v3847, %v4879
            %v5192 = vsub.f32 %v3848, %v4879
            %v5193 = vsub.f32 %v3849, %v4884
            %v5194 = vsub.f32 %v3850, %v4884
            %v5195 = vsub.f32 %v3851, %v4884
            %v5196 = vsub.f32 %v3852, %v4884
            %v5197 = vsub.f32 %v3853, %v4889
            %v5198 = vsub.f32 %v3854, %v4889
            %v5199 = vsub.f32 %v3855, %v4889
            %v5200 = vsub.f32 %v3856, %v4889
            %v5201 = vsub.f32 %v3857, %v4894
            %v5202 = vsub.f32 %v3858, %v4894
            %v5203 = vsub.f32 %v3859, %v4894
            %v5204 = vsub.f32 %v3860, %v4894
            %v5205 = vsub.f32 %v3861, %v4899
            %v5206 = vsub.f32 %v3862, %v4899
            %v5207 = vsub.f32 %v3863, %v4899
            %v5208 = vsub.f32 %v3864, %v4899
            %v5209 = vsub.f32 %v3865, %v4904
            %v5210 = vsub.f32 %v3866, %v4904
            %v5211 = vsub.f32 %v3867, %v4904
            %v5212 = vsub.f32 %v3868, %v4904
            %v5213 = vsub.f32 %v3869, %v4909
            %v5214 = vsub.f32 %v3870, %v4909
            %v5215 = vsub.f32 %v3871, %v4909
            %v5216 = vsub.f32 %v3872, %v4909
            %v5217 = vsub.f32 %v3873, %v4914
            %v5218 = vsub.f32 %v3874, %v4914
            %v5219 = vsub.f32 %v3875, %v4914
            %v5220 = vsub.f32 %v3876, %v4914
            %v5221 = vsub.f32 %v3877, %v4919
            %v5222 = vsub.f32 %v3878, %v4919
            %v5223 = vsub.f32 %v3879, %v4919
            %v5224 = vsub.f32 %v3880, %v4919
            %v5225 = vsub.f32 %v3881, %v4924
            %v5226 = vsub.f32 %v3882, %v4924
            %v5227 = vsub.f32 %v3883, %v4924
            %v5228 = vsub.f32 %v3884, %v4924
            %v5229 = vsub.f32 %v3885, %v4929
            %v5230 = vsub.f32 %v3886, %v4929
            %v5231 = vsub.f32 %v3887, %v4929
            %v5232 = vsub.f32 %v3888, %v4929
            %v5233 = vsub.f32 %v3889, %v4934
            %v5234 = vsub.f32 %v3890, %v4934
            %v5235 = vsub.f32 %v3891, %v4934
            %v5236 = vsub.f32 %v3892, %v4934
            %v5237 = vsub.f32 %v3893, %v4939
            %v5238 = vsub.f32 %v3894, %v4939
            %v5239 = vsub.f32 %v3895, %v4939
            %v5240 = vsub.f32 %v3896, %v4939
            %v5241 = vsub.f32 %v3897, %v4944
            %v5242 = vsub.f32 %v3898, %v4944
            %v5243 = vsub.f32 %v3899, %v4944
            %v5244 = vsub.f32 %v3900, %v4944
            %v5245 = vsub.f32 %v3901, %v4949
            %v5246 = vsub.f32 %v3902, %v4949
            %v5247 = vsub.f32 %v3903, %v4949
            %v5248 = vsub.f32 %v3904, %v4949
            %v5249 = vsub.f32 %v3905, %v4954
            %v5250 = vsub.f32 %v3906, %v4954
            %v5251 = vsub.f32 %v3907, %v4954
            %v5252 = vsub.f32 %v3908, %v4954
            %v5253 = vsub.f32 %v3909, %v4959
            %v5254 = vsub.f32 %v3910, %v4959
            %v5255 = vsub.f32 %v3911, %v4959
            %v5256 = vsub.f32 %v3912, %v4959
            %v5257 = vsub.f32 %v3913, %v4964
            %v5258 = vsub.f32 %v3914, %v4964
            %v5259 = vsub.f32 %v3915, %v4964
            %v5260 = vsub.f32 %v3916, %v4964
            %v5261 = vsub.f32 %v3917, %v4969
            %v5262 = vsub.f32 %v3918, %v4969
            %v5263 = vsub.f32 %v3919, %v4969
            %v5264 = vsub.f32 %v3920, %v4969
            %v5265 = vsub.f32 %v3921, %v4974
            %v5266 = vsub.f32 %v3922, %v4974
            %v5267 = vsub.f32 %v3923, %v4974
            %v5268 = vsub.f32 %v3924, %v4974
            %v5269 = vsub.f32 %v3925, %v4979
            %v5270 = vsub.f32 %v3926, %v4979
            %v5271 = vsub.f32 %v3927, %v4979
            %v5272 = vsub.f32 %v3928, %v4979
            %v5273 = vsub.f32 %v3929, %v4984
            %v5274 = vsub.f32 %v3930, %v4984
            %v5275 = vsub.f32 %v3931, %v4984
            %v5276 = vsub.f32 %v3932, %v4984
            %v5277 = vsub.f32 %v3933, %v4989
            %v5278 = vsub.f32 %v3934, %v4989
            %v5279 = vsub.f32 %v3935, %v4989
            %v5280 = vsub.f32 %v3936, %v4989
            %v5281 = vsub.f32 %v3937, %v4994
            %v5282 = vsub.f32 %v3938, %v4994
            %v5283 = vsub.f32 %v3939, %v4994
            %v5284 = vsub.f32 %v3940, %v4994
            %v5285 = vsub.f32 %v3941, %v4999
            %v5286 = vsub.f32 %v3942, %v4999
            %v5287 = vsub.f32 %v3943, %v4999
            %v5288 = vsub.f32 %v3944, %v4999
            %v5289 = vsub.f32 %v3945, %v5004
            %v5290 = vsub.f32 %v3946, %v5004
            %v5291 = vsub.f32 %v3947, %v5004
            %v5292 = vsub.f32 %v3948, %v5004
            %v5293 = vsub.f32 %v3949, %v5009
            %v5294 = vsub.f32 %v3950, %v5009
            %v5295 = vsub.f32 %v3951, %v5009
            %v5296 = vsub.f32 %v3952, %v5009
            %v5297 = vsub.f32 %v3953, %v5014
            %v5298 = vsub.f32 %v3954, %v5014
            %v5299 = vsub.f32 %v3955, %v5014
            %v5300 = vsub.f32 %v3956, %v5014
            %v5301 = vsub.f32 %v3957, %v5019
            %v5302 = vsub.f32 %v3958, %v5019
            %v5303 = vsub.f32 %v3959, %v5019
            %v5304 = vsub.f32 %v3960, %v5019
            %v5305 = vsub.f32 %v3961, %v5024
            %v5306 = vsub.f32 %v3962, %v5024
            %v5307 = vsub.f32 %v3963, %v5024
            %v5308 = vsub.f32 %v3964, %v5024
            %v5309 = vsub.f32 %v3965, %v5029
            %v5310 = vsub.f32 %v3966, %v5029
            %v5311 = vsub.f32 %v3967, %v5029
            %v5312 = vsub.f32 %v3968, %v5029
            %v5313 = vsub.f32 %v3969, %v5034
            %v5314 = vsub.f32 %v3970, %v5034
            %v5315 = vsub.f32 %v3971, %v5034
            %v5316 = vsub.f32 %v3972, %v5034
            %v5317 = vsub.f32 %v3973, %v5039
            %v5318 = vsub.f32 %v3974, %v5039
            %v5319 = vsub.f32 %v3975, %v5039
            %v5320 = vsub.f32 %v3976, %v5039
            %v5321 = vsub.f32 %v3977, %v5044
            %v5322 = vsub.f32 %v3978, %v5044
            %v5323 = vsub.f32 %v3979, %v5044
            %v5324 = vsub.f32 %v3980, %v5044
            %v5325 = vsub.f32 %v3981, %v5049
            %v5326 = vsub.f32 %v3982, %v5049
            %v5327 = vsub.f32 %v3983, %v5049
            %v5328 = vsub.f32 %v3984, %v5049
            %v5329 = vsub.f32 %v3985, %v5054
            %v5330 = vsub.f32 %v3986, %v5054
            %v5331 = vsub.f32 %v3987, %v5054
            %v5332 = vsub.f32 %v3988, %v5054
            %v5333 = vsub.f32 %v3989, %v5059
            %v5334 = vsub.f32 %v3990, %v5059
            %v5335 = vsub.f32 %v3991, %v5059
            %v5336 = vsub.f32 %v3992, %v5059
            %v5337 = vsub.f32 %v3993, %v5064
            %v5338 = vsub.f32 %v3994, %v5064
            %v5339 = vsub.f32 %v3995, %v5064
            %v5340 = vsub.f32 %v3996, %v5064
            %v5341 = vsub.f32 %v3997, %v5069
            %v5342 = vsub.f32 %v3998, %v5069
            %v5343 = vsub.f32 %v3999, %v5069
            %v5344 = vsub.f32 %v4000, %v5069
            %v5345 = vsub.f32 %v4001, %v5074
            %v5346 = vsub.f32 %v4002, %v5074
            %v5347 = vsub.f32 %v4003, %v5074
            %v5348 = vsub.f32 %v4004, %v5074
            %v5349 = vsub.f32 %v4005, %v5079
            %v5350 = vsub.f32 %v4006, %v5079
            %v5351 = vsub.f32 %v4007, %v5079
            %v5352 = vsub.f32 %v4008, %v5079
            %v5353 = vsub.f32 %v4009, %v5084
            %v5354 = vsub.f32 %v4010, %v5084
            %v5355 = vsub.f32 %v4011, %v5084
            %v5356 = vsub.f32 %v4012, %v5084
            %v5357 = vsub.f32 %v4013, %v5089
            %v5358 = vsub.f32 %v4014, %v5089
            %v5359 = vsub.f32 %v4015, %v5089
            %v5360 = vsub.f32 %v4016, %v5089
            %v5361 = vsub.f32 %v4017, %v5094
            %v5362 = vsub.f32 %v4018, %v5094
            %v5363 = vsub.f32 %v4019, %v5094
            %v5364 = vsub.f32 %v4020, %v5094
            %v5365 = vsub.f32 %v4021, %v5099
            %v5366 = vsub.f32 %v4022, %v5099
            %v5367 = vsub.f32 %v4023, %v5099
            %v5368 = vsub.f32 %v4024, %v5099
            %v5369 = vsub.f32 %v4025, %v5104
            %v5370 = vsub.f32 %v4026, %v5104
            %v5371 = vsub.f32 %v4027, %v5104
            %v5372 = vsub.f32 %v4028, %v5104
            %v5373 = vsub.f32 %v4029, %v5109
            %v5374 = vsub.f32 %v4030, %v5109
            %v5375 = vsub.f32 %v4031, %v5109
            %v5376 = vsub.f32 %v4032, %v5109
            %v5377 = vsub.f32 %v4033, %v5114
            %v5378 = vsub.f32 %v4034, %v5114
            %v5379 = vsub.f32 %v4035, %v5114
            %v5380 = vsub.f32 %v4036, %v5114
            %v5381 = vsub.f32 %v4037, %v5119
            %v5382 = vsub.f32 %v4038, %v5119
            %v5383 = vsub.f32 %v4039, %v5119
            %v5384 = vsub.f32 %v4040, %v5119
            %v5385 = vsub.f32 %v4041, %v5124
            %v5386 = vsub.f32 %v4042, %v5124
            %v5387 = vsub.f32 %v4043, %v5124
            %v5388 = vsub.f32 %v4044, %v5124
            %v5389 = vsub.f32 %v4045, %v5129
            %v5390 = vsub.f32 %v4046, %v5129
            %v5391 = vsub.f32 %v4047, %v5129
            %v5392 = vsub.f32 %v4048, %v5129
            %v5393 = vsub.f32 %v4049, %v5134
            %v5394 = vsub.f32 %v4050, %v5134
            %v5395 = vsub.f32 %v4051, %v5134
            %v5396 = vsub.f32 %v4052, %v5134
            %v5397 = vsub.f32 %v4053, %v5139
            %v5398 = vsub.f32 %v4054, %v5139
            %v5399 = vsub.f32 %v4055, %v5139
            %v5400 = vsub.f32 %v4056, %v5139
            %v5401 = vsub.f32 %v4057, %v5144
            %v5402 = vsub.f32 %v4058, %v5144
            %v5403 = vsub.f32 %v4059, %v5144
            %v5404 = vsub.f32 %v4060, %v5144
            %v5405 = vsub.f32 %v4061, %v5149
            %v5406 = vsub.f32 %v4062, %v5149
            %v5407 = vsub.f32 %v4063, %v5149
            %v5408 = vsub.f32 %v4064, %v5149
            %v5409 = vsub.f32 %v4065, %v5154
            %v5410 = vsub.f32 %v4066, %v5154
            %v5411 = vsub.f32 %v4067, %v5154
            %v5412 = vsub.f32 %v4068, %v5154
            %v5413 = vsub.f32 %v4069, %v5159
            %v5414 = vsub.f32 %v4070, %v5159
            %v5415 = vsub.f32 %v4071, %v5159
            %v5416 = vsub.f32 %v4072, %v5159
            %v5417 = vmul.f32 %v5161, 1.442695
            %v5418 = vpow.pop %v5417
            %v5419 = vmul.f32 %v5162, 1.442695
            %v5420 = vpow.pop %v5419
            %v5421 = vmul.f32 %v5163, 1.442695
            %v5422 = vpow.pop %v5421
            %v5423 = vmul.f32 %v5164, 1.442695
            %v5424 = vpow.pop %v5423
            %v5425 = vmul.f32 %v5165, 1.442695
            %v5426 = vpow.pop %v5425
            %v5427 = vmul.f32 %v5166, 1.442695
            %v5428 = vpow.pop %v5427
            %v5429 = vmul.f32 %v5167, 1.442695
            %v5430 = vpow.pop %v5429
            %v5431 = vmul.f32 %v5168, 1.442695
            %v5432 = vpow.pop %v5431
            %v5433 = vmul.f32 %v5169, 1.442695
            %v5434 = vpow.pop %v5433
            %v5435 = vmul.f32 %v5170, 1.442695
            %v5436 = vpow.pop %v5435
            %v5437 = vmul.f32 %v5171, 1.442695
            %v5438 = vpow.pop %v5437
            %v5439 = vmul.f32 %v5172, 1.442695
            %v5440 = vpow.pop %v5439
            %v5441 = vmul.f32 %v5173, 1.442695
            %v5442 = vpow.pop %v5441
            %v5443 = vmul.f32 %v5174, 1.442695
            %v5444 = vpow.pop %v5443
            %v5445 = vmul.f32 %v5175, 1.442695
            %v5446 = vpow.pop %v5445
            %v5447 = vmul.f32 %v5176, 1.442695
            %v5448 = vpow.pop %v5447
            %v5449 = vmul.f32 %v5177, 1.442695
            %v5450 = vpow.pop %v5449
            %v5451 = vmul.f32 %v5178, 1.442695
            %v5452 = vpow.pop %v5451
            %v5453 = vmul.f32 %v5179, 1.442695
            %v5454 = vpow.pop %v5453
            %v5455 = vmul.f32 %v5180, 1.442695
            %v5456 = vpow.pop %v5455
            %v5457 = vmul.f32 %v5181, 1.442695
            %v5458 = vpow.pop %v5457
            %v5459 = vmul.f32 %v5182, 1.442695
            %v5460 = vpow.pop %v5459
            %v5461 = vmul.f32 %v5183, 1.442695
            %v5462 = vpow.pop %v5461
            %v5463 = vmul.f32 %v5184, 1.442695
            %v5464 = vpow.pop %v5463
            %v5465 = vmul.f32 %v5185, 1.442695
            %v5466 = vpow.pop %v5465
            %v5467 = vmul.f32 %v5186, 1.442695
            %v5468 = vpow.pop %v5467
            %v5469 = vmul.f32 %v5187, 1.442695
            %v5470 = vpow.pop %v5469
            %v5471 = vmul.f32 %v5188, 1.442695
            %v5472 = vpow.pop %v5471
            %v5473 = vmul.f32 %v5189, 1.442695
            %v5474 = vpow.pop %v5473
            %v5475 = vmul.f32 %v5190, 1.442695
            %v5476 = vpow.pop %v5475
            %v5477 = vmul.f32 %v5191, 1.442695
            %v5478 = vpow.pop %v5477
            %v5479 = vmul.f32 %v5192, 1.442695
            %v5480 = vpow.pop %v5479
            %v5481 = vmul.f32 %v5193, 1.442695
            %v5482 = vpow.pop %v5481
            %v5483 = vmul.f32 %v5194, 1.442695
            %v5484 = vpow.pop %v5483
            %v5485 = vmul.f32 %v5195, 1.442695
            %v5486 = vpow.pop %v5485
            %v5487 = vmul.f32 %v5196, 1.442695
            %v5488 = vpow.pop %v5487
            %v5489 = vmul.f32 %v5197, 1.442695
            %v5490 = vpow.pop %v5489
            %v5491 = vmul.f32 %v5198, 1.442695
            %v5492 = vpow.pop %v5491
            %v5493 = vmul.f32 %v5199, 1.442695
            %v5494 = vpow.pop %v5493
            %v5495 = vmul.f32 %v5200, 1.442695
            %v5496 = vpow.pop %v5495
            %v5497 = vmul.f32 %v5201, 1.442695
            %v5498 = vpow.pop %v5497
            %v5499 = vmul.f32 %v5202, 1.442695
            %v5500 = vpow.pop %v5499
            %v5501 = vmul.f32 %v5203, 1.442695
            %v5502 = vpow.pop %v5501
            %v5503 = vmul.f32 %v5204, 1.442695
            %v5504 = vpow.pop %v5503
            %v5505 = vmul.f32 %v5205, 1.442695
            %v5506 = vpow.pop %v5505
            %v5507 = vmul.f32 %v5206, 1.442695
            %v5508 = vpow.pop %v5507
            %v5509 = vmul.f32 %v5207, 1.442695
            %v5510 = vpow.pop %v5509
            %v5511 = vmul.f32 %v5208, 1.442695
            %v5512 = vpow.pop %v5511
            %v5513 = vmul.f32 %v5209, 1.442695
            %v5514 = vpow.pop %v5513
            %v5515 = vmul.f32 %v5210, 1.442695
            %v5516 = vpow.pop %v5515
            %v5517 = vmul.f32 %v5211, 1.442695
            %v5518 = vpow.pop %v5517
            %v5519 = vmul.f32 %v5212, 1.442695
            %v5520 = vpow.pop %v5519
            %v5521 = vmul.f32 %v5213, 1.442695
            %v5522 = vpow.pop %v5521
            %v5523 = vmul.f32 %v5214, 1.442695
            %v5524 = vpow.pop %v5523
            %v5525 = vmul.f32 %v5215, 1.442695
            %v5526 = vpow.pop %v5525
            %v5527 = vmul.f32 %v5216, 1.442695
            %v5528 = vpow.pop %v5527
            %v5529 = vmul.f32 %v5217, 1.442695
            %v5530 = vpow.pop %v5529
            %v5531 = vmul.f32 %v5218, 1.442695
            %v5532 = vpow.pop %v5531
            %v5533 = vmul.f32 %v5219, 1.442695
            %v5534 = vpow.pop %v5533
            %v5535 = vmul.f32 %v5220, 1.442695
            %v5536 = vpow.pop %v5535
            %v5537 = vmul.f32 %v5221, 1.442695
            %v5538 = vpow.pop %v5537
            %v5539 = vmul.f32 %v5222, 1.442695
            %v5540 = vpow.pop %v5539
            %v5541 = vmul.f32 %v5223, 1.442695
            %v5542 = vpow.pop %v5541
            %v5543 = vmul.f32 %v5224, 1.442695
            %v5544 = vpow.pop %v5543
            %v5545 = vmul.f32 %v5225, 1.442695
            %v5546 = vpow.pop %v5545
            %v5547 = vmul.f32 %v5226, 1.442695
            %v5548 = vpow.pop %v5547
            %v5549 = vmul.f32 %v5227, 1.442695
            %v5550 = vpow.pop %v5549
            %v5551 = vmul.f32 %v5228, 1.442695
            %v5552 = vpow.pop %v5551
            %v5553 = vmul.f32 %v5229, 1.442695
            %v5554 = vpow.pop %v5553
            %v5555 = vmul.f32 %v5230, 1.442695
            %v5556 = vpow.pop %v5555
            %v5557 = vmul.f32 %v5231, 1.442695
            %v5558 = vpow.pop %v5557
            %v5559 = vmul.f32 %v5232, 1.442695
            %v5560 = vpow.pop %v5559
            %v5561 = vmul.f32 %v5233, 1.442695
            %v5562 = vpow.pop %v5561
            %v5563 = vmul.f32 %v5234, 1.442695
            %v5564 = vpow.pop %v5563
            %v5565 = vmul.f32 %v5235, 1.442695
            %v5566 = vpow.pop %v5565
            %v5567 = vmul.f32 %v5236, 1.442695
            %v5568 = vpow.pop %v5567
            %v5569 = vmul.f32 %v5237, 1.442695
            %v5570 = vpow.pop %v5569
            %v5571 = vmul.f32 %v5238, 1.442695
            %v5572 = vpow.pop %v5571
            %v5573 = vmul.f32 %v5239, 1.442695
            %v5574 = vpow.pop %v5573
            %v5575 = vmul.f32 %v5240, 1.442695
            %v5576 = vpow.pop %v5575
            %v5577 = vmul.f32 %v5241, 1.442695
            %v5578 = vpow.pop %v5577
            %v5579 = vmul.f32 %v5242, 1.442695
            %v5580 = vpow.pop %v5579
            %v5581 = vmul.f32 %v5243, 1.442695
            %v5582 = vpow.pop %v5581
            %v5583 = vmul.f32 %v5244, 1.442695
            %v5584 = vpow.pop %v5583
            %v5585 = vmul.f32 %v5245, 1.442695
            %v5586 = vpow.pop %v5585
            %v5587 = vmul.f32 %v5246, 1.442695
            %v5588 = vpow.pop %v5587
            %v5589 = vmul.f32 %v5247, 1.442695
            %v5590 = vpow.pop %v5589
            %v5591 = vmul.f32 %v5248, 1.442695
            %v5592 = vpow.pop %v5591
            %v5593 = vmul.f32 %v5249, 1.442695
            %v5594 = vpow.pop %v5593
            %v5595 = vmul.f32 %v5250, 1.442695
            %v5596 = vpow.pop %v5595
            %v5597 = vmul.f32 %v5251, 1.442695
            %v5598 = vpow.pop %v5597
            %v5599 = vmul.f32 %v5252, 1.442695
            %v5600 = vpow.pop %v5599
            %v5601 = vmul.f32 %v5253, 1.442695
            %v5602 = vpow.pop %v5601
            %v5603 = vmul.f32 %v5254, 1.442695
            %v5604 = vpow.pop %v5603
            %v5605 = vmul.f32 %v5255, 1.442695
            %v5606 = vpow.pop %v5605
            %v5607 = vmul.f32 %v5256, 1.442695
            %v5608 = vpow.pop %v5607
            %v5609 = vmul.f32 %v5257, 1.442695
            %v5610 = vpow.pop %v5609
            %v5611 = vmul.f32 %v5258, 1.442695
            %v5612 = vpow.pop %v5611
            %v5613 = vmul.f32 %v5259, 1.442695
            %v5614 = vpow.pop %v5613
            %v5615 = vmul.f32 %v5260, 1.442695
            %v5616 = vpow.pop %v5615
            %v5617 = vmul.f32 %v5261, 1.442695
            %v5618 = vpow.pop %v5617
            %v5619 = vmul.f32 %v5262, 1.442695
            %v5620 = vpow.pop %v5619
            %v5621 = vmul.f32 %v5263, 1.442695
            %v5622 = vpow.pop %v5621
            %v5623 = vmul.f32 %v5264, 1.442695
            %v5624 = vpow.pop %v5623
            %v5625 = vmul.f32 %v5265, 1.442695
            %v5626 = vpow.pop %v5625
            %v5627 = vmul.f32 %v5266, 1.442695
            %v5628 = vpow.pop %v5627
            %v5629 = vmul.f32 %v5267, 1.442695
            %v5630 = vpow.pop %v5629
            %v5631 = vmul.f32 %v5268, 1.442695
            %v5632 = vpow.pop %v5631
            %v5633 = vmul.f32 %v5269, 1.442695
            %v5634 = vpow.pop %v5633
            %v5635 = vmul.f32 %v5270, 1.442695
            %v5636 = vpow.pop %v5635
            %v5637 = vmul.f32 %v5271, 1.442695
            %v5638 = vpow.pop %v5637
            %v5639 = vmul.f32 %v5272, 1.442695
            %v5640 = vpow.pop %v5639
            %v5641 = vmul.f32 %v5273, 1.442695
            %v5642 = vpow.pop %v5641
            %v5643 = vmul.f32 %v5274, 1.442695
            %v5644 = vpow.pop %v5643
            %v5645 = vmul.f32 %v5275, 1.442695
            %v5646 = vpow.pop %v5645
            %v5647 = vmul.f32 %v5276, 1.442695
            %v5648 = vpow.pop %v5647
            %v5649 = vmul.f32 %v5277, 1.442695
            %v5650 = vpow.pop %v5649
            %v5651 = vmul.f32 %v5278, 1.442695
            %v5652 = vpow.pop %v5651
            %v5653 = vmul.f32 %v5279, 1.442695
            %v5654 = vpow.pop %v5653
            %v5655 = vmul.f32 %v5280, 1.442695
            %v5656 = vpow.pop %v5655
            %v5657 = vmul.f32 %v5281, 1.442695
            %v5658 = vpow.pop %v5657
            %v5659 = vmul.f32 %v5282, 1.442695
            %v5660 = vpow.pop %v5659
            %v5661 = vmul.f32 %v5283, 1.442695
            %v5662 = vpow.pop %v5661
            %v5663 = vmul.f32 %v5284, 1.442695
            %v5664 = vpow.pop %v5663
            %v5665 = vmul.f32 %v5285, 1.442695
            %v5666 = vpow.pop %v5665
            %v5667 = vmul.f32 %v5286, 1.442695
            %v5668 = vpow.pop %v5667
            %v5669 = vmul.f32 %v5287, 1.442695
            %v5670 = vpow.pop %v5669
            %v5671 = vmul.f32 %v5288, 1.442695
            %v5672 = vpow.pop %v5671
            %v5673 = vmul.f32 %v5289, 1.442695
            %v5674 = vpow.pop %v5673
            %v5675 = vmul.f32 %v5290, 1.442695
            %v5676 = vpow.pop %v5675
            %v5677 = vmul.f32 %v5291, 1.442695
            %v5678 = vpow.pop %v5677
            %v5679 = vmul.f32 %v5292, 1.442695
            %v5680 = vpow.pop %v5679
            %v5681 = vmul.f32 %v5293, 1.442695
            %v5682 = vpow.pop %v5681
            %v5683 = vmul.f32 %v5294, 1.442695
            %v5684 = vpow.pop %v5683
            %v5685 = vmul.f32 %v5295, 1.442695
            %v5686 = vpow.pop %v5685
            %v5687 = vmul.f32 %v5296, 1.442695
            %v5688 = vpow.pop %v5687
            %v5689 = vmul.f32 %v5297, 1.442695
            %v5690 = vpow.pop %v5689
            %v5691 = vmul.f32 %v5298, 1.442695
            %v5692 = vpow.pop %v5691
            %v5693 = vmul.f32 %v5299, 1.442695
            %v5694 = vpow.pop %v5693
            %v5695 = vmul.f32 %v5300, 1.442695
            %v5696 = vpow.pop %v5695
            %v5697 = vmul.f32 %v5301, 1.442695
            %v5698 = vpow.pop %v5697
            %v5699 = vmul.f32 %v5302, 1.442695
            %v5700 = vpow.pop %v5699
            %v5701 = vmul.f32 %v5303, 1.442695
            %v5702 = vpow.pop %v5701
            %v5703 = vmul.f32 %v5304, 1.442695
            %v5704 = vpow.pop %v5703
            %v5705 = vmul.f32 %v5305, 1.442695
            %v5706 = vpow.pop %v5705
            %v5707 = vmul.f32 %v5306, 1.442695
            %v5708 = vpow.pop %v5707
            %v5709 = vmul.f32 %v5307, 1.442695
            %v5710 = vpow.pop %v5709
            %v5711 = vmul.f32 %v5308, 1.442695
            %v5712 = vpow.pop %v5711
            %v5713 = vmul.f32 %v5309, 1.442695
            %v5714 = vpow.pop %v5713
            %v5715 = vmul.f32 %v5310, 1.442695
            %v5716 = vpow.pop %v5715
            %v5717 = vmul.f32 %v5311, 1.442695
            %v5718 = vpow.pop %v5717
            %v5719 = vmul.f32 %v5312, 1.442695
            %v5720 = vpow.pop %v5719
            %v5721 = vmul.f32 %v5313, 1.442695
            %v5722 = vpow.pop %v5721
            %v5723 = vmul.f32 %v5314, 1.442695
            %v5724 = vpow.pop %v5723
            %v5725 = vmul.f32 %v5315, 1.442695
            %v5726 = vpow.pop %v5725
            %v5727 = vmul.f32 %v5316, 1.442695
            %v5728 = vpow.pop %v5727
            %v5729 = vmul.f32 %v5317, 1.442695
            %v5730 = vpow.pop %v5729
            %v5731 = vmul.f32 %v5318, 1.442695
            %v5732 = vpow.pop %v5731
            %v5733 = vmul.f32 %v5319, 1.442695
            %v5734 = vpow.pop %v5733
            %v5735 = vmul.f32 %v5320, 1.442695
            %v5736 = vpow.pop %v5735
            %v5737 = vmul.f32 %v5321, 1.442695
            %v5738 = vpow.pop %v5737
            %v5739 = vmul.f32 %v5322, 1.442695
            %v5740 = vpow.pop %v5739
            %v5741 = vmul.f32 %v5323, 1.442695
            %v5742 = vpow.pop %v5741
            %v5743 = vmul.f32 %v5324, 1.442695
            %v5744 = vpow.pop %v5743
            %v5745 = vmul.f32 %v5325, 1.442695
            %v5746 = vpow.pop %v5745
            %v5747 = vmul.f32 %v5326, 1.442695
            %v5748 = vpow.pop %v5747
            %v5749 = vmul.f32 %v5327, 1.442695
            %v5750 = vpow.pop %v5749
            %v5751 = vmul.f32 %v5328, 1.442695
            %v5752 = vpow.pop %v5751
            %v5753 = vmul.f32 %v5329, 1.442695
            %v5754 = vpow.pop %v5753
            %v5755 = vmul.f32 %v5330, 1.442695
            %v5756 = vpow.pop %v5755
            %v5757 = vmul.f32 %v5331, 1.442695
            %v5758 = vpow.pop %v5757
            %v5759 = vmul.f32 %v5332, 1.442695
            %v5760 = vpow.pop %v5759
            %v5761 = vmul.f32 %v5333, 1.442695
            %v5762 = vpow.pop %v5761
            %v5763 = vmul.f32 %v5334, 1.442695
            %v5764 = vpow.pop %v5763
            %v5765 = vmul.f32 %v5335, 1.442695
            %v5766 = vpow.pop %v5765
            %v5767 = vmul.f32 %v5336, 1.442695
            %v5768 = vpow.pop %v5767
            %v5769 = vmul.f32 %v5337, 1.442695
            %v5770 = vpow.pop %v5769
            %v5771 = vmul.f32 %v5338, 1.442695
            %v5772 = vpow.pop %v5771
            %v5773 = vmul.f32 %v5339, 1.442695
            %v5774 = vpow.pop %v5773
            %v5775 = vmul.f32 %v5340, 1.442695
            %v5776 = vpow.pop %v5775
            %v5777 = vmul.f32 %v5341, 1.442695
            %v5778 = vpow.pop %v5777
            %v5779 = vmul.f32 %v5342, 1.442695
            %v5780 = vpow.pop %v5779
            %v5781 = vmul.f32 %v5343, 1.442695
            %v5782 = vpow.pop %v5781
            %v5783 = vmul.f32 %v5344, 1.442695
            %v5784 = vpow.pop %v5783
            %v5785 = vmul.f32 %v5345, 1.442695
            %v5786 = vpow.pop %v5785
            %v5787 = vmul.f32 %v5346, 1.442695
            %v5788 = vpow.pop %v5787
            %v5789 = vmul.f32 %v5347, 1.442695
            %v5790 = vpow.pop %v5789
            %v5791 = vmul.f32 %v5348, 1.442695
            %v5792 = vpow.pop %v5791
            %v5793 = vmul.f32 %v5349, 1.442695
            %v5794 = vpow.pop %v5793
            %v5795 = vmul.f32 %v5350, 1.442695
            %v5796 = vpow.pop %v5795
            %v5797 = vmul.f32 %v5351, 1.442695
            %v5798 = vpow.pop %v5797
            %v5799 = vmul.f32 %v5352, 1.442695
            %v5800 = vpow.pop %v5799
            %v5801 = vmul.f32 %v5353, 1.442695
            %v5802 = vpow.pop %v5801
            %v5803 = vmul.f32 %v5354, 1.442695
            %v5804 = vpow.pop %v5803
            %v5805 = vmul.f32 %v5355, 1.442695
            %v5806 = vpow.pop %v5805
            %v5807 = vmul.f32 %v5356, 1.442695
            %v5808 = vpow.pop %v5807
            %v5809 = vmul.f32 %v5357, 1.442695
            %v5810 = vpow.pop %v5809
            %v5811 = vmul.f32 %v5358, 1.442695
            %v5812 = vpow.pop %v5811
            %v5813 = vmul.f32 %v5359, 1.442695
            %v5814 = vpow.pop %v5813
            %v5815 = vmul.f32 %v5360, 1.442695
            %v5816 = vpow.pop %v5815
            %v5817 = vmul.f32 %v5361, 1.442695
            %v5818 = vpow.pop %v5817
            %v5819 = vmul.f32 %v5362, 1.442695
            %v5820 = vpow.pop %v5819
            %v5821 = vmul.f32 %v5363, 1.442695
            %v5822 = vpow.pop %v5821
            %v5823 = vmul.f32 %v5364, 1.442695
            %v5824 = vpow.pop %v5823
            %v5825 = vmul.f32 %v5365, 1.442695
            %v5826 = vpow.pop %v5825
            %v5827 = vmul.f32 %v5366, 1.442695
            %v5828 = vpow.pop %v5827
            %v5829 = vmul.f32 %v5367, 1.442695
            %v5830 = vpow.pop %v5829
            %v5831 = vmul.f32 %v5368, 1.442695
            %v5832 = vpow.pop %v5831
            %v5833 = vmul.f32 %v5369, 1.442695
            %v5834 = vpow.pop %v5833
            %v5835 = vmul.f32 %v5370, 1.442695
            %v5836 = vpow.pop %v5835
            %v5837 = vmul.f32 %v5371, 1.442695
            %v5838 = vpow.pop %v5837
            %v5839 = vmul.f32 %v5372, 1.442695
            %v5840 = vpow.pop %v5839
            %v5841 = vmul.f32 %v5373, 1.442695
            %v5842 = vpow.pop %v5841
            %v5843 = vmul.f32 %v5374, 1.442695
            %v5844 = vpow.pop %v5843
            %v5845 = vmul.f32 %v5375, 1.442695
            %v5846 = vpow.pop %v5845
            %v5847 = vmul.f32 %v5376, 1.442695
            %v5848 = vpow.pop %v5847
            %v5849 = vmul.f32 %v5377, 1.442695
            %v5850 = vpow.pop %v5849
            %v5851 = vmul.f32 %v5378, 1.442695
            %v5852 = vpow.pop %v5851
            %v5853 = vmul.f32 %v5379, 1.442695
            %v5854 = vpow.pop %v5853
            %v5855 = vmul.f32 %v5380, 1.442695
            %v5856 = vpow.pop %v5855
            %v5857 = vmul.f32 %v5381, 1.442695
            %v5858 = vpow.pop %v5857
            %v5859 = vmul.f32 %v5382, 1.442695
            %v5860 = vpow.pop %v5859
            %v5861 = vmul.f32 %v5383, 1.442695
            %v5862 = vpow.pop %v5861
            %v5863 = vmul.f32 %v5384, 1.442695
            %v5864 = vpow.pop %v5863
            %v5865 = vmul.f32 %v5385, 1.442695
            %v5866 = vpow.pop %v5865
            %v5867 = vmul.f32 %v5386, 1.442695
            %v5868 = vpow.pop %v5867
            %v5869 = vmul.f32 %v5387, 1.442695
            %v5870 = vpow.pop %v5869
            %v5871 = vmul.f32 %v5388, 1.442695
            %v5872 = vpow.pop %v5871
            %v5873 = vmul.f32 %v5389, 1.442695
            %v5874 = vpow.pop %v5873
            %v5875 = vmul.f32 %v5390, 1.442695
            %v5876 = vpow.pop %v5875
            %v5877 = vmul.f32 %v5391, 1.442695
            %v5878 = vpow.pop %v5877
            %v5879 = vmul.f32 %v5392, 1.442695
            %v5880 = vpow.pop %v5879
            %v5881 = vmul.f32 %v5393, 1.442695
            %v5882 = vpow.pop %v5881
            %v5883 = vmul.f32 %v5394, 1.442695
            %v5884 = vpow.pop %v5883
            %v5885 = vmul.f32 %v5395, 1.442695
            %v5886 = vpow.pop %v5885
            %v5887 = vmul.f32 %v5396, 1.442695
            %v5888 = vpow.pop %v5887
            %v5889 = vmul.f32 %v5397, 1.442695
            %v5890 = vpow.pop %v5889
            %v5891 = vmul.f32 %v5398, 1.442695
            %v5892 = vpow.pop %v5891
            %v5893 = vmul.f32 %v5399, 1.442695
            %v5894 = vpow.pop %v5893
            %v5895 = vmul.f32 %v5400, 1.442695
            %v5896 = vpow.pop %v5895
            %v5897 = vmul.f32 %v5401, 1.442695
            %v5898 = vpow.pop %v5897
            %v5899 = vmul.f32 %v5402, 1.442695
            %v5900 = vpow.pop %v5899
            %v5901 = vmul.f32 %v5403, 1.442695
            %v5902 = vpow.pop %v5901
            %v5903 = vmul.f32 %v5404, 1.442695
            %v5904 = vpow.pop %v5903
            %v5905 = vmul.f32 %v5405, 1.442695
            %v5906 = vpow.pop %v5905
            %v5907 = vmul.f32 %v5406, 1.442695
            %v5908 = vpow.pop %v5907
            %v5909 = vmul.f32 %v5407, 1.442695
            %v5910 = vpow.pop %v5909
            %v5911 = vmul.f32 %v5408, 1.442695
            %v5912 = vpow.pop %v5911
            %v5913 = vmul.f32 %v5409, 1.442695
            %v5914 = vpow.pop %v5913
            %v5915 = vmul.f32 %v5410, 1.442695
            %v5916 = vpow.pop %v5915
            %v5917 = vmul.f32 %v5411, 1.442695
            %v5918 = vpow.pop %v5917
            %v5919 = vmul.f32 %v5412, 1.442695
            %v5920 = vpow.pop %v5919
            %v5921 = vmul.f32 %v5413, 1.442695
            %v5922 = vpow.pop %v5921
            %v5923 = vmul.f32 %v5414, 1.442695
            %v5924 = vpow.pop %v5923
            %v5925 = vmul.f32 %v5415, 1.442695
            %v5926 = vpow.pop %v5925
            %v5927 = vmul.f32 %v5416, 1.442695
            %v5928 = vpow.pop %v5927
            %v5929 = vadd.f32 %v5418, %v5420
            %v5930 = vadd.f32 %v5929, %v5422
            %v5931 = vadd.f32 %v5930, %v5424
            %5932 = vadd.xlane.f32.xlu0 %v5931
            %v5933 = vpop.xlane.xlu0 %5932
            %v5934 = vadd.f32 %v5426, %v5428
            %v5935 = vadd.f32 %v5934, %v5430
            %v5936 = vadd.f32 %v5935, %v5432
            %5937 = vadd.xlane.f32.xlu0 %v5936
            %v5938 = vpop.xlane.xlu0 %5937
            %v5939 = vadd.f32 %v5434, %v5436
            %v5940 = vadd.f32 %v5939, %v5438
            %v5941 = vadd.f32 %v5940, %v5440
            %5942 = vadd.xlane.f32.xlu0 %v5941
            %v5943 = vpop.xlane.xlu0 %5942
            %v5944 = vadd.f32 %v5442, %v5444
            %v5945 = vadd.f32 %v5944, %v5446
            %v5946 = vadd.f32 %v5945, %v5448
            %5947 = vadd.xlane.f32.xlu0 %v5946
            %v5948 = vpop.xlane.xlu0 %5947
            %v5949 = vadd.f32 %v5450, %v5452
            %v5950 = vadd.f32 %v5949, %v5454
            %v5951 = vadd.f32 %v5950, %v5456
            %5952 = vadd.xlane.f32.xlu0 %v5951
            %v5953 = vpop.xlane.xlu0 %5952
            %v5954 = vadd.f32 %v5458, %v5460
            %v5955 = vadd.f32 %v5954, %v5462
            %v5956 = vadd.f32 %v5955, %v5464
            %5957 = vadd.xlane.f32.xlu0 %v5956
            %v5958 = vpop.xlane.xlu0 %5957
            %v5959 = vadd.f32 %v5466, %v5468
            %v5960 = vadd.f32 %v5959, %v5470
            %v5961 = vadd.f32 %v5960, %v5472
            %5962 = vadd.xlane.f32.xlu0 %v5961
            %v5963 = vpop.xlane.xlu0 %5962
            %v5964 = vadd.f32 %v5474, %v5476
            %v5965 = vadd.f32 %v5964, %v5478
            %v5966 = vadd.f32 %v5965, %v5480
            %5967 = vadd.xlane.f32.xlu0 %v5966
            %v5968 = vpop.xlane.xlu0 %5967
            %v5969 = vadd.f32 %v5482, %v5484
            %v5970 = vadd.f32 %v5969, %v5486
            %v5971 = vadd.f32 %v5970, %v5488
            %5972 = vadd.xlane.f32.xlu0 %v5971
            %v5973 = vpop.xlane.xlu0 %5972
            %v5974 = vadd.f32 %v5490, %v5492
            %v5975 = vadd.f32 %v5974, %v5494
            %v5976 = vadd.f32 %v5975, %v5496
            %5977 = vadd.xlane.f32.xlu0 %v5976
            %v5978 = vpop.xlane.xlu0 %5977
            %v5979 = vadd.f32 %v5498, %v5500
            %v5980 = vadd.f32 %v5979, %v5502
            %v5981 = vadd.f32 %v5980, %v5504
            %5982 = vadd.xlane.f32.xlu0 %v5981
            %v5983 = vpop.xlane.xlu0 %5982
            %v5984 = vadd.f32 %v5506, %v5508
            %v5985 = vadd.f32 %v5984, %v5510
            %v5986 = vadd.f32 %v5985, %v5512
            %5987 = vadd.xlane.f32.xlu0 %v5986
            %v5988 = vpop.xlane.xlu0 %5987
            %v5989 = vadd.f32 %v5514, %v5516
            %v5990 = vadd.f32 %v5989, %v5518
            %v5991 = vadd.f32 %v5990, %v5520
            %5992 = vadd.xlane.f32.xlu0 %v5991
            %v5993 = vpop.xlane.xlu0 %5992
            %v5994 = vadd.f32 %v5522, %v5524
            %v5995 = vadd.f32 %v5994, %v5526
            %v5996 = vadd.f32 %v5995, %v5528
            %5997 = vadd.xlane.f32.xlu0 %v5996
            %v5998 = vpop.xlane.xlu0 %5997
            %v5999 = vadd.f32 %v5530, %v5532
            %v6000 = vadd.f32 %v5999, %v5534
            %v6001 = vadd.f32 %v6000, %v5536
            %6002 = vadd.xlane.f32.xlu0 %v6001
            %v6003 = vpop.xlane.xlu0 %6002
            %v6004 = vadd.f32 %v5538, %v5540
            %v6005 = vadd.f32 %v6004, %v5542
            %v6006 = vadd.f32 %v6005, %v5544
            %6007 = vadd.xlane.f32.xlu0 %v6006
            %v6008 = vpop.xlane.xlu0 %6007
            %v6009 = vadd.f32 %v5546, %v5548
            %v6010 = vadd.f32 %v6009, %v5550
            %v6011 = vadd.f32 %v6010, %v5552
            %6012 = vadd.xlane.f32.xlu0 %v6011
            %v6013 = vpop.xlane.xlu0 %6012
            %v6014 = vadd.f32 %v5554, %v5556
            %v6015 = vadd.f32 %v6014, %v5558
            %v6016 = vadd.f32 %v6015, %v5560
            %6017 = vadd.xlane.f32.xlu0 %v6016
            %v6018 = vpop.xlane.xlu0 %6017
            %v6019 = vadd.f32 %v5562, %v5564
            %v6020 = vadd.f32 %v6019, %v5566
            %v6021 = vadd.f32 %v6020, %v5568
            %6022 = vadd.xlane.f32.xlu0 %v6021
            %v6023 = vpop.xlane.xlu0 %6022
            %v6024 = vadd.f32 %v5570, %v5572
            %v6025 = vadd.f32 %v6024, %v5574
            %v6026 = vadd.f32 %v6025, %v5576
            %6027 = vadd.xlane.f32.xlu0 %v6026
            %v6028 = vpop.xlane.xlu0 %6027
            %v6029 = vadd.f32 %v5578, %v5580
            %v6030 = vadd.f32 %v6029, %v5582
            %v6031 = vadd.f32 %v6030, %v5584
            %6032 = vadd.xlane.f32.xlu0 %v6031
            %v6033 = vpop.xlane.xlu0 %6032
            %v6034 = vadd.f32 %v5586, %v5588
            %v6035 = vadd.f32 %v6034, %v5590
            %v6036 = vadd.f32 %v6035, %v5592
            %6037 = vadd.xlane.f32.xlu0 %v6036
            %v6038 = vpop.xlane.xlu0 %6037
            %v6039 = vadd.f32 %v5594, %v5596
            %v6040 = vadd.f32 %v6039, %v5598
            %v6041 = vadd.f32 %v6040, %v5600
            %6042 = vadd.xlane.f32.xlu0 %v6041
            %v6043 = vpop.xlane.xlu0 %6042
            %v6044 = vadd.f32 %v5602, %v5604
            %v6045 = vadd.f32 %v6044, %v5606
            %v6046 = vadd.f32 %v6045, %v5608
            %6047 = vadd.xlane.f32.xlu0 %v6046
            %v6048 = vpop.xlane.xlu0 %6047
            %v6049 = vadd.f32 %v5610, %v5612
            %v6050 = vadd.f32 %v6049, %v5614
            %v6051 = vadd.f32 %v6050, %v5616
            %6052 = vadd.xlane.f32.xlu0 %v6051
            %v6053 = vpop.xlane.xlu0 %6052
            %v6054 = vadd.f32 %v5618, %v5620
            %v6055 = vadd.f32 %v6054, %v5622
            %v6056 = vadd.f32 %v6055, %v5624
            %6057 = vadd.xlane.f32.xlu0 %v6056
            %v6058 = vpop.xlane.xlu0 %6057
            %v6059 = vadd.f32 %v5626, %v5628
            %v6060 = vadd.f32 %v6059, %v5630
            %v6061 = vadd.f32 %v6060, %v5632
            %6062 = vadd.xlane.f32.xlu0 %v6061
            %v6063 = vpop.xlane.xlu0 %6062
            %v6064 = vadd.f32 %v5634, %v5636
            %v6065 = vadd.f32 %v6064, %v5638
            %v6066 = vadd.f32 %v6065, %v5640
            %6067 = vadd.xlane.f32.xlu0 %v6066
            %v6068 = vpop.xlane.xlu0 %6067
            %v6069 = vadd.f32 %v5642, %v5644
            %v6070 = vadd.f32 %v6069, %v5646
            %v6071 = vadd.f32 %v6070, %v5648
            %6072 = vadd.xlane.f32.xlu0 %v6071
            %v6073 = vpop.xlane.xlu0 %6072
            %v6074 = vadd.f32 %v5650, %v5652
            %v6075 = vadd.f32 %v6074, %v5654
            %v6076 = vadd.f32 %v6075, %v5656
            %6077 = vadd.xlane.f32.xlu0 %v6076
            %v6078 = vpop.xlane.xlu0 %6077
            %v6079 = vadd.f32 %v5658, %v5660
            %v6080 = vadd.f32 %v6079, %v5662
            %v6081 = vadd.f32 %v6080, %v5664
            %6082 = vadd.xlane.f32.xlu0 %v6081
            %v6083 = vpop.xlane.xlu0 %6082
            %v6084 = vadd.f32 %v5666, %v5668
            %v6085 = vadd.f32 %v6084, %v5670
            %v6086 = vadd.f32 %v6085, %v5672
            %6087 = vadd.xlane.f32.xlu0 %v6086
            %v6088 = vpop.xlane.xlu0 %6087
            %v6089 = vadd.f32 %v5674, %v5676
            %v6090 = vadd.f32 %v6089, %v5678
            %v6091 = vadd.f32 %v6090, %v5680
            %6092 = vadd.xlane.f32.xlu0 %v6091
            %v6093 = vpop.xlane.xlu0 %6092
            %v6094 = vadd.f32 %v5682, %v5684
            %v6095 = vadd.f32 %v6094, %v5686
            %v6096 = vadd.f32 %v6095, %v5688
            %6097 = vadd.xlane.f32.xlu0 %v6096
            %v6098 = vpop.xlane.xlu0 %6097
            %v6099 = vadd.f32 %v5690, %v5692
            %v6100 = vadd.f32 %v6099, %v5694
            %v6101 = vadd.f32 %v6100, %v5696
            %6102 = vadd.xlane.f32.xlu0 %v6101
            %v6103 = vpop.xlane.xlu0 %6102
            %v6104 = vadd.f32 %v5698, %v5700
            %v6105 = vadd.f32 %v6104, %v5702
            %v6106 = vadd.f32 %v6105, %v5704
            %6107 = vadd.xlane.f32.xlu0 %v6106
            %v6108 = vpop.xlane.xlu0 %6107
            %v6109 = vadd.f32 %v5706, %v5708
            %v6110 = vadd.f32 %v6109, %v5710
            %v6111 = vadd.f32 %v6110, %v5712
            %6112 = vadd.xlane.f32.xlu0 %v6111
            %v6113 = vpop.xlane.xlu0 %6112
            %v6114 = vadd.f32 %v5714, %v5716
            %v6115 = vadd.f32 %v6114, %v5718
            %v6116 = vadd.f32 %v6115, %v5720
            %6117 = vadd.xlane.f32.xlu0 %v6116
            %v6118 = vpop.xlane.xlu0 %6117
            %v6119 = vadd.f32 %v5722, %v5724
            %v6120 = vadd.f32 %v6119, %v5726
            %v6121 = vadd.f32 %v6120, %v5728
            %6122 = vadd.xlane.f32.xlu0 %v6121
            %v6123 = vpop.xlane.xlu0 %6122
            %v6124 = vadd.f32 %v5730, %v5732
            %v6125 = vadd.f32 %v6124, %v5734
            %v6126 = vadd.f32 %v6125, %v5736
            %6127 = vadd.xlane.f32.xlu0 %v6126
            %v6128 = vpop.xlane.xlu0 %6127
            %v6129 = vadd.f32 %v5738, %v5740
            %v6130 = vadd.f32 %v6129, %v5742
            %v6131 = vadd.f32 %v6130, %v5744
            %6132 = vadd.xlane.f32.xlu0 %v6131
            %v6133 = vpop.xlane.xlu0 %6132
            %v6134 = vadd.f32 %v5746, %v5748
            %v6135 = vadd.f32 %v6134, %v5750
            %v6136 = vadd.f32 %v6135, %v5752
            %6137 = vadd.xlane.f32.xlu0 %v6136
            %v6138 = vpop.xlane.xlu0 %6137
            %v6139 = vadd.f32 %v5754, %v5756
            %v6140 = vadd.f32 %v6139, %v5758
            %v6141 = vadd.f32 %v6140, %v5760
            %6142 = vadd.xlane.f32.xlu0 %v6141
            %v6143 = vpop.xlane.xlu0 %6142
            %v6144 = vadd.f32 %v5762, %v5764
            %v6145 = vadd.f32 %v6144, %v5766
            %v6146 = vadd.f32 %v6145, %v5768
            %6147 = vadd.xlane.f32.xlu0 %v6146
            %v6148 = vpop.xlane.xlu0 %6147
            %v6149 = vadd.f32 %v5770, %v5772
            %v6150 = vadd.f32 %v6149, %v5774
            %v6151 = vadd.f32 %v6150, %v5776
            %6152 = vadd.xlane.f32.xlu0 %v6151
            %v6153 = vpop.xlane.xlu0 %6152
            %v6154 = vadd.f32 %v5778, %v5780
            %v6155 = vadd.f32 %v6154, %v5782
            %v6156 = vadd.f32 %v6155, %v5784
            %6157 = vadd.xlane.f32.xlu0 %v6156
            %v6158 = vpop.xlane.xlu0 %6157
            %v6159 = vadd.f32 %v5786, %v5788
            %v6160 = vadd.f32 %v6159, %v5790
            %v6161 = vadd.f32 %v6160, %v5792
            %6162 = vadd.xlane.f32.xlu0 %v6161
            %v6163 = vpop.xlane.xlu0 %6162
            %v6164 = vadd.f32 %v5794, %v5796
            %v6165 = vadd.f32 %v6164, %v5798
            %v6166 = vadd.f32 %v6165, %v5800
            %6167 = vadd.xlane.f32.xlu0 %v6166
            %v6168 = vpop.xlane.xlu0 %6167
            %v6169 = vadd.f32 %v5802, %v5804
            %v6170 = vadd.f32 %v6169, %v5806
            %v6171 = vadd.f32 %v6170, %v5808
            %6172 = vadd.xlane.f32.xlu0 %v6171
            %v6173 = vpop.xlane.xlu0 %6172
            %v6174 = vadd.f32 %v5810, %v5812
            %v6175 = vadd.f32 %v6174, %v5814
            %v6176 = vadd.f32 %v6175, %v5816
            %6177 = vadd.xlane.f32.xlu0 %v6176
            %v6178 = vpop.xlane.xlu0 %6177
            %v6179 = vadd.f32 %v5818, %v5820
            %v6180 = vadd.f32 %v6179, %v5822
            %v6181 = vadd.f32 %v6180, %v5824
            %6182 = vadd.xlane.f32.xlu0 %v6181
            %v6183 = vpop.xlane.xlu0 %6182
            %v6184 = vadd.f32 %v5826, %v5828
            %v6185 = vadd.f32 %v6184, %v5830
            %v6186 = vadd.f32 %v6185, %v5832
            %6187 = vadd.xlane.f32.xlu0 %v6186
            %v6188 = vpop.xlane.xlu0 %6187
            %v6189 = vadd.f32 %v5834, %v5836
            %v6190 = vadd.f32 %v6189, %v5838
            %v6191 = vadd.f32 %v6190, %v5840
            %6192 = vadd.xlane.f32.xlu0 %v6191
            %v6193 = vpop.xlane.xlu0 %6192
            %v6194 = vadd.f32 %v5842, %v5844
            %v6195 = vadd.f32 %v6194, %v5846
            %v6196 = vadd.f32 %v6195, %v5848
            %6197 = vadd.xlane.f32.xlu0 %v6196
            %v6198 = vpop.xlane.xlu0 %6197
            %v6199 = vadd.f32 %v5850, %v5852
            %v6200 = vadd.f32 %v6199, %v5854
            %v6201 = vadd.f32 %v6200, %v5856
            %6202 = vadd.xlane.f32.xlu0 %v6201
            %v6203 = vpop.xlane.xlu0 %6202
            %v6204 = vadd.f32 %v5858, %v5860
            %v6205 = vadd.f32 %v6204, %v5862
            %v6206 = vadd.f32 %v6205, %v5864
            %6207 = vadd.xlane.f32.xlu0 %v6206
            %v6208 = vpop.xlane.xlu0 %6207
            %v6209 = vadd.f32 %v5866, %v5868
            %v6210 = vadd.f32 %v6209, %v5870
            %v6211 = vadd.f32 %v6210, %v5872
            %6212 = vadd.xlane.f32.xlu0 %v6211
            %v6213 = vpop.xlane.xlu0 %6212
            %v6214 = vadd.f32 %v5874, %v5876
            %v6215 = vadd.f32 %v6214, %v5878
            %v6216 = vadd.f32 %v6215, %v5880
            %6217 = vadd.xlane.f32.xlu0 %v6216
            %v6218 = vpop.xlane.xlu0 %6217
            %v6219 = vadd.f32 %v5882, %v5884
            %v6220 = vadd.f32 %v6219, %v5886
            %v6221 = vadd.f32 %v6220, %v5888
            %6222 = vadd.xlane.f32.xlu0 %v6221
            %v6223 = vpop.xlane.xlu0 %6222
            %v6224 = vadd.f32 %v5890, %v5892
            %v6225 = vadd.f32 %v6224, %v5894
            %v6226 = vadd.f32 %v6225, %v5896
            %6227 = vadd.xlane.f32.xlu0 %v6226
            %v6228 = vpop.xlane.xlu0 %6227
            %v6229 = vadd.f32 %v5898, %v5900
            %v6230 = vadd.f32 %v6229, %v5902
            %v6231 = vadd.f32 %v6230, %v5904
            %6232 = vadd.xlane.f32.xlu0 %v6231
            %v6233 = vpop.xlane.xlu0 %6232
            %v6234 = vadd.f32 %v5906, %v5908
            %v6235 = vadd.f32 %v6234, %v5910
            %v6236 = vadd.f32 %v6235, %v5912
            %6237 = vadd.xlane.f32.xlu0 %v6236
            %v6238 = vpop.xlane.xlu0 %6237
            %v6239 = vadd.f32 %v5914, %v5916
            %v6240 = vadd.f32 %v6239, %v5918
            %v6241 = vadd.f32 %v6240, %v5920
            %6242 = vadd.xlane.f32.xlu0 %v6241
            %v6243 = vpop.xlane.xlu0 %6242
            %v6244 = vadd.f32 %v5922, %v5924
            %v6245 = vadd.f32 %v6244, %v5926
            %v6246 = vadd.f32 %v6245, %v5928
            %6247 = vadd.xlane.f32.xlu0 %v6246
            %v6248 = vpop.xlane.xlu0 %6247
            %v6249 = vadd.f32 %v4777, %v5933
            %v6250 = vadd.f32 %v4778, %v5938
            %v6251 = vadd.f32 %v4779, %v5943
            %v6252 = vadd.f32 %v4780, %v5948
            %v6253 = vadd.f32 %v4781, %v5953
            %v6254 = vadd.f32 %v4782, %v5958
            %v6255 = vadd.f32 %v4783, %v5963
            %v6256 = vadd.f32 %v4784, %v5968
            %v6257 = vadd.f32 %v4785, %v5973
            %v6258 = vadd.f32 %v4786, %v5978
            %v6259 = vadd.f32 %v4787, %v5983
            %v6260 = vadd.f32 %v4788, %v5988
            %v6261 = vadd.f32 %v4789, %v5993
            %v6262 = vadd.f32 %v4790, %v5998
            %v6263 = vadd.f32 %v4791, %v6003
            %v6264 = vadd.f32 %v4792, %v6008
            %v6265 = vadd.f32 %v4793, %v6013
            %v6266 = vadd.f32 %v4794, %v6018
            %v6267 = vadd.f32 %v4795, %v6023
            %v6268 = vadd.f32 %v4796, %v6028
            %v6269 = vadd.f32 %v4797, %v6033
            %v6270 = vadd.f32 %v4798, %v6038
            %v6271 = vadd.f32 %v4799, %v6043
            %v6272 = vadd.f32 %v4800, %v6048
            %v6273 = vadd.f32 %v4801, %v6053
            %v6274 = vadd.f32 %v4802, %v6058
            %v6275 = vadd.f32 %v4803, %v6063
            %v6276 = vadd.f32 %v4804, %v6068
            %v6277 = vadd.f32 %v4805, %v6073
            %v6278 = vadd.f32 %v4806, %v6078
            %v6279 = vadd.f32 %v4807, %v6083
            %v6280 = vadd.f32 %v4808, %v6088
            %v6281 = vadd.f32 %v4809, %v6093
            %v6282 = vadd.f32 %v4810, %v6098
            %v6283 = vadd.f32 %v4811, %v6103
            %v6284 = vadd.f32 %v4812, %v6108
            %v6285 = vadd.f32 %v4813, %v6113
            %v6286 = vadd.f32 %v4814, %v6118
            %v6287 = vadd.f32 %v4815, %v6123
            %v6288 = vadd.f32 %v4816, %v6128
            %v6289 = vadd.f32 %v4817, %v6133
            %v6290 = vadd.f32 %v4818, %v6138
            %v6291 = vadd.f32 %v4819, %v6143
            %v6292 = vadd.f32 %v4820, %v6148
            %v6293 = vadd.f32 %v4821, %v6153
            %v6294 = vadd.f32 %v4822, %v6158
            %v6295 = vadd.f32 %v4823, %v6163
            %v6296 = vadd.f32 %v4824, %v6168
            %v6297 = vadd.f32 %v4825, %v6173
            %v6298 = vadd.f32 %v4826, %v6178
            %v6299 = vadd.f32 %v4827, %v6183
            %v6300 = vadd.f32 %v4828, %v6188
            %v6301 = vadd.f32 %v4829, %v6193
            %v6302 = vadd.f32 %v4830, %v6198
            %v6303 = vadd.f32 %v4831, %v6203
            %v6304 = vadd.f32 %v4832, %v6208
            %v6305 = vadd.f32 %v4833, %v6213
            %v6306 = vadd.f32 %v4834, %v6218
            %v6307 = vadd.f32 %v4835, %v6223
            %v6308 = vadd.f32 %v4836, %v6228
            %v6309 = vadd.f32 %v4837, %v6233
            %v6310 = vadd.f32 %v4838, %v6238
            %v6311 = vadd.f32 %v4839, %v6243
            %v6312 = vadd.f32 %v4840, %v6248
            %vm6313 = vcmask 7168
            %6314 = vst.msk [vmem:[#allocation3] sm:$0xff] %vm6313, %v6249
            %6315 = vst.msk [vmem:[#allocation3 + $0x8] sm:$0xff] %vm6313, %v6250
            %6316 = vst.msk [vmem:[#allocation3 + $0x10] sm:$0xff] %vm6313, %v6251
            %6317 = vst.msk [vmem:[#allocation3 + $0x18] sm:$0xff] %vm6313, %v6252
            %6318 = vst.msk [vmem:[#allocation3 + $0x20] sm:$0xff] %vm6313, %v6253
            %6319 = vst.msk [vmem:[#allocation3 + $0x28] sm:$0xff] %vm6313, %v6254
            %6320 = vst.msk [vmem:[#allocation3 + $0x30] sm:$0xff] %vm6313, %v6255
            %6321 = vst.msk [vmem:[#allocation3 + $0x38] sm:$0xff] %vm6313, %v6256
            %6322 = vst.msk [vmem:[#allocation3 + $0x40] sm:$0xff] %vm6313, %v6257
            %6323 = vst.msk [vmem:[#allocation3 + $0x48] sm:$0xff] %vm6313, %v6258
            %6324 = vst.msk [vmem:[#allocation3 + $0x50] sm:$0xff] %vm6313, %v6259
            %6325 = vst.msk [vmem:[#allocation3 + $0x58] sm:$0xff] %vm6313, %v6260
            %6326 = vst.msk [vmem:[#allocation3 + $0x60] sm:$0xff] %vm6313, %v6261
            %6327 = vst.msk [vmem:[#allocation3 + $0x68] sm:$0xff] %vm6313, %v6262
            %6328 = vst.msk [vmem:[#allocation3 + $0x70] sm:$0xff] %vm6313, %v6263
            %6329 = vst.msk [vmem:[#allocation3 + $0x78] sm:$0xff] %vm6313, %v6264
            %6330 = vst.msk [vmem:[#allocation3 + $0x80] sm:$0xff] %vm6313, %v6265
            %6331 = vst.msk [vmem:[#allocation3 + $0x88] sm:$0xff] %vm6313, %v6266
            %6332 = vst.msk [vmem:[#allocation3 + $0x90] sm:$0xff] %vm6313, %v6267
            %6333 = vst.msk [vmem:[#allocation3 + $0x98] sm:$0xff] %vm6313, %v6268
            %6334 = vst.msk [vmem:[#allocation3 + $0xa0] sm:$0xff] %vm6313, %v6269
            %6335 = vst.msk [vmem:[#allocation3 + $0xa8] sm:$0xff] %vm6313, %v6270
            %6336 = vst.msk [vmem:[#allocation3 + $0xb0] sm:$0xff] %vm6313, %v6271
            %6337 = vst.msk [vmem:[#allocation3 + $0xb8] sm:$0xff] %vm6313, %v6272
            %6338 = vst.msk [vmem:[#allocation3 + $0xc0] sm:$0xff] %vm6313, %v6273
            %6339 = vst.msk [vmem:[#allocation3 + $0xc8] sm:$0xff] %vm6313, %v6274
            %6340 = vst.msk [vmem:[#allocation3 + $0xd0] sm:$0xff] %vm6313, %v6275
            %6341 = vst.msk [vmem:[#allocation3 + $0xd8] sm:$0xff] %vm6313, %v6276
            %6342 = vst.msk [vmem:[#allocation3 + $0xe0] sm:$0xff] %vm6313, %v6277
            %6343 = vst.msk [vmem:[#allocation3 + $0xe8] sm:$0xff] %vm6313, %v6278
            %6344 = vst.msk [vmem:[#allocation3 + $0xf0] sm:$0xff] %vm6313, %v6279
            %6345 = vst.msk [vmem:[#allocation3 + $0xf8] sm:$0xff] %vm6313, %v6280
            %6346 = vst.msk [vmem:[#allocation3 + $0x100] sm:$0xff] %vm6313, %v6281
            %6347 = vst.msk [vmem:[#allocation3 + $0x108] sm:$0xff] %vm6313, %v6282
            %6348 = vst.msk [vmem:[#allocation3 + $0x110] sm:$0xff] %vm6313, %v6283
            %6349 = vst.msk [vmem:[#allocation3 + $0x118] sm:$0xff] %vm6313, %v6284
            %6350 = vst.msk [vmem:[#allocation3 + $0x120] sm:$0xff] %vm6313, %v6285
            %6351 = vst.msk [vmem:[#allocation3 + $0x128] sm:$0xff] %vm6313, %v6286
            %6352 = vst.msk [vmem:[#allocation3 + $0x130] sm:$0xff] %vm6313, %v6287
            %6353 = vst.msk [vmem:[#allocation3 + $0x138] sm:$0xff] %vm6313, %v6288
            %6354 = vst.msk [vmem:[#allocation3 + $0x140] sm:$0xff] %vm6313, %v6289
            %6355 = vst.msk [vmem:[#allocation3 + $0x148] sm:$0xff] %vm6313, %v6290
            %6356 = vst.msk [vmem:[#allocation3 + $0x150] sm:$0xff] %vm6313, %v6291
            %6357 = vst.msk [vmem:[#allocation3 + $0x158] sm:$0xff] %vm6313, %v6292
            %6358 = vst.msk [vmem:[#allocation3 + $0x160] sm:$0xff] %vm6313, %v6293
            %6359 = vst.msk [vmem:[#allocation3 + $0x168] sm:$0xff] %vm6313, %v6294
            %6360 = vst.msk [vmem:[#allocation3 + $0x170] sm:$0xff] %vm6313, %v6295
            %6361 = vst.msk [vmem:[#allocation3 + $0x178] sm:$0xff] %vm6313, %v6296
            %6362 = vst.msk [vmem:[#allocation3 + $0x180] sm:$0xff] %vm6313, %v6297
            %6363 = vst.msk [vmem:[#allocation3 + $0x188] sm:$0xff] %vm6313, %v6298
            %6364 = vst.msk [vmem:[#allocation3 + $0x190] sm:$0xff] %vm6313, %v6299
            %6365 = vst.msk [vmem:[#allocation3 + $0x198] sm:$0xff] %vm6313, %v6300
            %6366 = vst.msk [vmem:[#allocation3 + $0x1a0] sm:$0xff] %vm6313, %v6301
            %6367 = vst.msk [vmem:[#allocation3 + $0x1a8] sm:$0xff] %vm6313, %v6302
            %6368 = vst.msk [vmem:[#allocation3 + $0x1b0] sm:$0xff] %vm6313, %v6303
            %6369 = vst.msk [vmem:[#allocation3 + $0x1b8] sm:$0xff] %vm6313, %v6304
            %6370 = vst.msk [vmem:[#allocation3 + $0x1c0] sm:$0xff] %vm6313, %v6305
            %6371 = vst.msk [vmem:[#allocation3 + $0x1c8] sm:$0xff] %vm6313, %v6306
            %6372 = vst.msk [vmem:[#allocation3 + $0x1d0] sm:$0xff] %vm6313, %v6307
            %6373 = vst.msk [vmem:[#allocation3 + $0x1d8] sm:$0xff] %vm6313, %v6308
            %6374 = vst.msk [vmem:[#allocation3 + $0x1e0] sm:$0xff] %vm6313, %v6309
            %6375 = vst.msk [vmem:[#allocation3 + $0x1e8] sm:$0xff] %vm6313, %v6310
            %6376 = vst.msk [vmem:[#allocation3 + $0x1f0] sm:$0xff] %vm6313, %v6311
            %6377 = vst.msk [vmem:[#allocation3 + $0x1f8] sm:$0xff] %vm6313, %v6312
            %6378 = vst.msk [vmem:[#allocation2] sm:$0xff] %vm6313, %v4457
            %6379 = vst.msk [vmem:[#allocation2 + $0x8] sm:$0xff] %vm6313, %v4458
            %6380 = vst.msk [vmem:[#allocation2 + $0x10] sm:$0xff] %vm6313, %v4459
            %6381 = vst.msk [vmem:[#allocation2 + $0x18] sm:$0xff] %vm6313, %v4460
            %6382 = vst.msk [vmem:[#allocation2 + $0x20] sm:$0xff] %vm6313, %v4461
            %6383 = vst.msk [vmem:[#allocation2 + $0x28] sm:$0xff] %vm6313, %v4462
            %6384 = vst.msk [vmem:[#allocation2 + $0x30] sm:$0xff] %vm6313, %v4463
            %6385 = vst.msk [vmem:[#allocation2 + $0x38] sm:$0xff] %vm6313, %v4464
            %6386 = vst.msk [vmem:[#allocation2 + $0x40] sm:$0xff] %vm6313, %v4465
            %6387 = vst.msk [vmem:[#allocation2 + $0x48] sm:$0xff] %vm6313, %v4466
            %6388 = vst.msk [vmem:[#allocation2 + $0x50] sm:$0xff] %vm6313, %v4467
            %6389 = vst.msk [vmem:[#allocation2 + $0x58] sm:$0xff] %vm6313, %v4468
            %6390 = vst.msk [vmem:[#allocation2 + $0x60] sm:$0xff] %vm6313, %v4469
            %6391 = vst.msk [vmem:[#allocation2 + $0x68] sm:$0xff] %vm6313, %v4470
            %6392 = vst.msk [vmem:[#allocation2 + $0x70] sm:$0xff] %vm6313, %v4471
            %6393 = vst.msk [vmem:[#allocation2 + $0x78] sm:$0xff] %vm6313, %v4472
            %6394 = vst.msk [vmem:[#allocation2 + $0x80] sm:$0xff] %vm6313, %v4473
            %6395 = vst.msk [vmem:[#allocation2 + $0x88] sm:$0xff] %vm6313, %v4474
            %6396 = vst.msk [vmem:[#allocation2 + $0x90] sm:$0xff] %vm6313, %v4475
            %6397 = vst.msk [vmem:[#allocation2 + $0x98] sm:$0xff] %vm6313, %v4476
            %6398 = vst.msk [vmem:[#allocation2 + $0xa0] sm:$0xff] %vm6313, %v4477
            %6399 = vst.msk [vmem:[#allocation2 + $0xa8] sm:$0xff] %vm6313, %v4478
            %6400 = vst.msk [vmem:[#allocation2 + $0xb0] sm:$0xff] %vm6313, %v4479
            %6401 = vst.msk [vmem:[#allocation2 + $0xb8] sm:$0xff] %vm6313, %v4480
            %6402 = vst.msk [vmem:[#allocation2 + $0xc0] sm:$0xff] %vm6313, %v4481
            %6403 = vst.msk [vmem:[#allocation2 + $0xc8] sm:$0xff] %vm6313, %v4482
            %6404 = vst.msk [vmem:[#allocation2 + $0xd0] sm:$0xff] %vm6313, %v4483
            %6405 = vst.msk [vmem:[#allocation2 + $0xd8] sm:$0xff] %vm6313, %v4484
            %6406 = vst.msk [vmem:[#allocation2 + $0xe0] sm:$0xff] %vm6313, %v4485
            %6407 = vst.msk [vmem:[#allocation2 + $0xe8] sm:$0xff] %vm6313, %v4486
            %6408 = vst.msk [vmem:[#allocation2 + $0xf0] sm:$0xff] %vm6313, %v4487
            %6409 = vst.msk [vmem:[#allocation2 + $0xf8] sm:$0xff] %vm6313, %v4488
            %6410 = vst.msk [vmem:[#allocation2 + $0x100] sm:$0xff] %vm6313, %v4489
            %6411 = vst.msk [vmem:[#allocation2 + $0x108] sm:$0xff] %vm6313, %v4490
            %6412 = vst.msk [vmem:[#allocation2 + $0x110] sm:$0xff] %vm6313, %v4491
            %6413 = vst.msk [vmem:[#allocation2 + $0x118] sm:$0xff] %vm6313, %v4492
            %6414 = vst.msk [vmem:[#allocation2 + $0x120] sm:$0xff] %vm6313, %v4493
            %6415 = vst.msk [vmem:[#allocation2 + $0x128] sm:$0xff] %vm6313, %v4494
            %6416 = vst.msk [vmem:[#allocation2 + $0x130] sm:$0xff] %vm6313, %v4495
            %6417 = vst.msk [vmem:[#allocation2 + $0x138] sm:$0xff] %vm6313, %v4496
            %6418 = vst.msk [vmem:[#allocation2 + $0x140] sm:$0xff] %vm6313, %v4497
            %6419 = vst.msk [vmem:[#allocation2 + $0x148] sm:$0xff] %vm6313, %v4498
            %6420 = vst.msk [vmem:[#allocation2 + $0x150] sm:$0xff] %vm6313, %v4499
            %6421 = vst.msk [vmem:[#allocation2 + $0x158] sm:$0xff] %vm6313, %v4500
            %6422 = vst.msk [vmem:[#allocation2 + $0x160] sm:$0xff] %vm6313, %v4501
            %6423 = vst.msk [vmem:[#allocation2 + $0x168] sm:$0xff] %vm6313, %v4502
            %6424 = vst.msk [vmem:[#allocation2 + $0x170] sm:$0xff] %vm6313, %v4503
            %6425 = vst.msk [vmem:[#allocation2 + $0x178] sm:$0xff] %vm6313, %v4504
            %6426 = vst.msk [vmem:[#allocation2 + $0x180] sm:$0xff] %vm6313, %v4505
            %6427 = vst.msk [vmem:[#allocation2 + $0x188] sm:$0xff] %vm6313, %v4506
            %6428 = vst.msk [vmem:[#allocation2 + $0x190] sm:$0xff] %vm6313, %v4507
            %6429 = vst.msk [vmem:[#allocation2 + $0x198] sm:$0xff] %vm6313, %v4508
            %6430 = vst.msk [vmem:[#allocation2 + $0x1a0] sm:$0xff] %vm6313, %v4509
            %6431 = vst.msk [vmem:[#allocation2 + $0x1a8] sm:$0xff] %vm6313, %v4510
            %6432 = vst.msk [vmem:[#allocation2 + $0x1b0] sm:$0xff] %vm6313, %v4511
            %6433 = vst.msk [vmem:[#allocation2 + $0x1b8] sm:$0xff] %vm6313, %v4512
            %6434 = vst.msk [vmem:[#allocation2 + $0x1c0] sm:$0xff] %vm6313, %v4513
            %6435 = vst.msk [vmem:[#allocation2 + $0x1c8] sm:$0xff] %vm6313, %v4514
            %6436 = vst.msk [vmem:[#allocation2 + $0x1d0] sm:$0xff] %vm6313, %v4515
            %6437 = vst.msk [vmem:[#allocation2 + $0x1d8] sm:$0xff] %vm6313, %v4516
            %6438 = vst.msk [vmem:[#allocation2 + $0x1e0] sm:$0xff] %vm6313, %v4517
            %6439 = vst.msk [vmem:[#allocation2 + $0x1e8] sm:$0xff] %vm6313, %v4518
            %6440 = vst.msk [vmem:[#allocation2 + $0x1f0] sm:$0xff] %vm6313, %v4519
            %6441 = vst.msk [vmem:[#allocation2 + $0x1f8] sm:$0xff] %vm6313, %v4520
          $region44: #{tpu_custom_call.1} parent=35 // pred_fallthru
            _
        $region36: #{tpu_custom_call.1} parent=27 // pred_fallthru
          _
        // Predicated region
        $region45: #{tpu_custom_call.1} parent=27 // pred_check
          %p6442 = pneg %p226
        $region46: #{tpu_custom_call.1} parent=27 // pred_check_branch
          %6444 = sbr.rel (%p6442) target = $region48
        $region47: #{tpu_custom_call.1} parent=27 // pred_region
          %v6445 = vld [vmem:[#allocation2] sm:$0xff]
          %v6446 = vld [vmem:[#allocation2 + $0x8] sm:$0xff]
          %v6447 = vld [vmem:[#allocation2 + $0x10] sm:$0xff]
          %v6448 = vld [vmem:[#allocation2 + $0x18] sm:$0xff]
          %v6449 = vld [vmem:[#allocation2 + $0x20] sm:$0xff]
          %v6450 = vld [vmem:[#allocation2 + $0x28] sm:$0xff]
          %v6451 = vld [vmem:[#allocation2 + $0x30] sm:$0xff]
          %v6452 = vld [vmem:[#allocation2 + $0x38] sm:$0xff]
          %v6453 = vld [vmem:[#allocation2 + $0x40] sm:$0xff]
          %v6454 = vld [vmem:[#allocation2 + $0x48] sm:$0xff]
          %v6455 = vld [vmem:[#allocation2 + $0x50] sm:$0xff]
          %v6456 = vld [vmem:[#allocation2 + $0x58] sm:$0xff]
          %v6457 = vld [vmem:[#allocation2 + $0x60] sm:$0xff]
          %v6458 = vld [vmem:[#allocation2 + $0x68] sm:$0xff]
          %v6459 = vld [vmem:[#allocation2 + $0x70] sm:$0xff]
          %v6460 = vld [vmem:[#allocation2 + $0x78] sm:$0xff]
          %v6461 = vld [vmem:[#allocation2 + $0x80] sm:$0xff]
          %v6462 = vld [vmem:[#allocation2 + $0x88] sm:$0xff]
          %v6463 = vld [vmem:[#allocation2 + $0x90] sm:$0xff]
          %v6464 = vld [vmem:[#allocation2 + $0x98] sm:$0xff]
          %v6465 = vld [vmem:[#allocation2 + $0xa0] sm:$0xff]
          %v6466 = vld [vmem:[#allocation2 + $0xa8] sm:$0xff]
          %v6467 = vld [vmem:[#allocation2 + $0xb0] sm:$0xff]
          %v6468 = vld [vmem:[#allocation2 + $0xb8] sm:$0xff]
          %v6469 = vld [vmem:[#allocation2 + $0xc0] sm:$0xff]
          %v6470 = vld [vmem:[#allocation2 + $0xc8] sm:$0xff]
          %v6471 = vld [vmem:[#allocation2 + $0xd0] sm:$0xff]
          %v6472 = vld [vmem:[#allocation2 + $0xd8] sm:$0xff]
          %v6473 = vld [vmem:[#allocation2 + $0xe0] sm:$0xff]
          %v6474 = vld [vmem:[#allocation2 + $0xe8] sm:$0xff]
          %v6475 = vld [vmem:[#allocation2 + $0xf0] sm:$0xff]
          %v6476 = vld [vmem:[#allocation2 + $0xf8] sm:$0xff]
          %v6477 = vld [vmem:[#allocation2 + $0x100] sm:$0xff]
          %v6478 = vld [vmem:[#allocation2 + $0x108] sm:$0xff]
          %v6479 = vld [vmem:[#allocation2 + $0x110] sm:$0xff]
          %v6480 = vld [vmem:[#allocation2 + $0x118] sm:$0xff]
          %v6481 = vld [vmem:[#allocation2 + $0x120] sm:$0xff]
          %v6482 = vld [vmem:[#allocation2 + $0x128] sm:$0xff]
          %v6483 = vld [vmem:[#allocation2 + $0x130] sm:$0xff]
          %v6484 = vld [vmem:[#allocation2 + $0x138] sm:$0xff]
          %v6485 = vld [vmem:[#allocation2 + $0x140] sm:$0xff]
          %v6486 = vld [vmem:[#allocation2 + $0x148] sm:$0xff]
          %v6487 = vld [vmem:[#allocation2 + $0x150] sm:$0xff]
          %v6488 = vld [vmem:[#allocation2 + $0x158] sm:$0xff]
          %v6489 = vld [vmem:[#allocation2 + $0x160] sm:$0xff]
          %v6490 = vld [vmem:[#allocation2 + $0x168] sm:$0xff]
          %v6491 = vld [vmem:[#allocation2 + $0x170] sm:$0xff]
          %v6492 = vld [vmem:[#allocation2 + $0x178] sm:$0xff]
          %v6493 = vld [vmem:[#allocation2 + $0x180] sm:$0xff]
          %v6494 = vld [vmem:[#allocation2 + $0x188] sm:$0xff]
          %v6495 = vld [vmem:[#allocation2 + $0x190] sm:$0xff]
          %v6496 = vld [vmem:[#allocation2 + $0x198] sm:$0xff]
          %v6497 = vld [vmem:[#allocation2 + $0x1a0] sm:$0xff]
          %v6498 = vld [vmem:[#allocation2 + $0x1a8] sm:$0xff]
          %v6499 = vld [vmem:[#allocation2 + $0x1b0] sm:$0xff]
          %v6500 = vld [vmem:[#allocation2 + $0x1b8] sm:$0xff]
          %v6501 = vld [vmem:[#allocation2 + $0x1c0] sm:$0xff]
          %v6502 = vld [vmem:[#allocation2 + $0x1c8] sm:$0xff]
          %v6503 = vld [vmem:[#allocation2 + $0x1d0] sm:$0xff]
          %v6504 = vld [vmem:[#allocation2 + $0x1d8] sm:$0xff]
          %v6505 = vld [vmem:[#allocation2 + $0x1e0] sm:$0xff]
          %v6506 = vld [vmem:[#allocation2 + $0x1e8] sm:$0xff]
          %v6507 = vld [vmem:[#allocation2 + $0x1f0] sm:$0xff]
          %v6508 = vld [vmem:[#allocation2 + $0x1f8] sm:$0xff]
          %v6509 = vld [vmem:[#allocation3] sm:$0xff]
          %v6510 = vld [vmem:[#allocation3 + $0x8] sm:$0xff]
          %v6511 = vld [vmem:[#allocation3 + $0x10] sm:$0xff]
          %v6512 = vld [vmem:[#allocation3 + $0x18] sm:$0xff]
          %v6513 = vld [vmem:[#allocation3 + $0x20] sm:$0xff]
          %v6514 = vld [vmem:[#allocation3 + $0x28] sm:$0xff]
          %v6515 = vld [vmem:[#allocation3 + $0x30] sm:$0xff]
          %v6516 = vld [vmem:[#allocation3 + $0x38] sm:$0xff]
          %v6517 = vld [vmem:[#allocation3 + $0x40] sm:$0xff]
          %v6518 = vld [vmem:[#allocation3 + $0x48] sm:$0xff]
          %v6519 = vld [vmem:[#allocation3 + $0x50] sm:$0xff]
          %v6520 = vld [vmem:[#allocation3 + $0x58] sm:$0xff]
          %v6521 = vld [vmem:[#allocation3 + $0x60] sm:$0xff]
          %v6522 = vld [vmem:[#allocation3 + $0x68] sm:$0xff]
          %v6523 = vld [vmem:[#allocation3 + $0x70] sm:$0xff]
          %v6524 = vld [vmem:[#allocation3 + $0x78] sm:$0xff]
          %v6525 = vld [vmem:[#allocation3 + $0x80] sm:$0xff]
          %v6526 = vld [vmem:[#allocation3 + $0x88] sm:$0xff]
          %v6527 = vld [vmem:[#allocation3 + $0x90] sm:$0xff]
          %v6528 = vld [vmem:[#allocation3 + $0x98] sm:$0xff]
          %v6529 = vld [vmem:[#allocation3 + $0xa0] sm:$0xff]
          %v6530 = vld [vmem:[#allocation3 + $0xa8] sm:$0xff]
          %v6531 = vld [vmem:[#allocation3 + $0xb0] sm:$0xff]
          %v6532 = vld [vmem:[#allocation3 + $0xb8] sm:$0xff]
          %v6533 = vld [vmem:[#allocation3 + $0xc0] sm:$0xff]
          %v6534 = vld [vmem:[#allocation3 + $0xc8] sm:$0xff]
          %v6535 = vld [vmem:[#allocation3 + $0xd0] sm:$0xff]
          %v6536 = vld [vmem:[#allocation3 + $0xd8] sm:$0xff]
          %v6537 = vld [vmem:[#allocation3 + $0xe0] sm:$0xff]
          %v6538 = vld [vmem:[#allocation3 + $0xe8] sm:$0xff]
          %v6539 = vld [vmem:[#allocation3 + $0xf0] sm:$0xff]
          %v6540 = vld [vmem:[#allocation3 + $0xf8] sm:$0xff]
          %v6541 = vld [vmem:[#allocation3 + $0x100] sm:$0xff]
          %v6542 = vld [vmem:[#allocation3 + $0x108] sm:$0xff]
          %v6543 = vld [vmem:[#allocation3 + $0x110] sm:$0xff]
          %v6544 = vld [vmem:[#allocation3 + $0x118] sm:$0xff]
          %v6545 = vld [vmem:[#allocation3 + $0x120] sm:$0xff]
          %v6546 = vld [vmem:[#allocation3 + $0x128] sm:$0xff]
          %v6547 = vld [vmem:[#allocation3 + $0x130] sm:$0xff]
          %v6548 = vld [vmem:[#allocation3 + $0x138] sm:$0xff]
          %v6549 = vld [vmem:[#allocation3 + $0x140] sm:$0xff]
          %v6550 = vld [vmem:[#allocation3 + $0x148] sm:$0xff]
          %v6551 = vld [vmem:[#allocation3 + $0x150] sm:$0xff]
          %v6552 = vld [vmem:[#allocation3 + $0x158] sm:$0xff]
          %v6553 = vld [vmem:[#allocation3 + $0x160] sm:$0xff]
          %v6554 = vld [vmem:[#allocation3 + $0x168] sm:$0xff]
          %v6555 = vld [vmem:[#allocation3 + $0x170] sm:$0xff]
          %v6556 = vld [vmem:[#allocation3 + $0x178] sm:$0xff]
          %v6557 = vld [vmem:[#allocation3 + $0x180] sm:$0xff]
          %v6558 = vld [vmem:[#allocation3 + $0x188] sm:$0xff]
          %v6559 = vld [vmem:[#allocation3 + $0x190] sm:$0xff]
          %v6560 = vld [vmem:[#allocation3 + $0x198] sm:$0xff]
          %v6561 = vld [vmem:[#allocation3 + $0x1a0] sm:$0xff]
          %v6562 = vld [vmem:[#allocation3 + $0x1a8] sm:$0xff]
          %v6563 = vld [vmem:[#allocation3 + $0x1b0] sm:$0xff]
          %v6564 = vld [vmem:[#allocation3 + $0x1b8] sm:$0xff]
          %v6565 = vld [vmem:[#allocation3 + $0x1c0] sm:$0xff]
          %v6566 = vld [vmem:[#allocation3 + $0x1c8] sm:$0xff]
          %v6567 = vld [vmem:[#allocation3 + $0x1d0] sm:$0xff]
          %v6568 = vld [vmem:[#allocation3 + $0x1d8] sm:$0xff]
          %v6569 = vld [vmem:[#allocation3 + $0x1e0] sm:$0xff]
          %v6570 = vld [vmem:[#allocation3 + $0x1e8] sm:$0xff]
          %v6571 = vld [vmem:[#allocation3 + $0x1f0] sm:$0xff]
          %v6572 = vld [vmem:[#allocation3 + $0x1f8] sm:$0xff]
          %v6573 = vmax.f32 %v6509, 1e-37
          %v6574 = vmax.f32 %v6510, 1e-37
          %v6575 = vmax.f32 %v6511, 1e-37
          %v6576 = vmax.f32 %v6512, 1e-37
          %v6577 = vmax.f32 %v6513, 1e-37
          %v6578 = vmax.f32 %v6514, 1e-37
          %v6579 = vmax.f32 %v6515, 1e-37
          %v6580 = vmax.f32 %v6516, 1e-37
          %v6581 = vmax.f32 %v6517, 1e-37
          %v6582 = vmax.f32 %v6518, 1e-37
          %v6583 = vmax.f32 %v6519, 1e-37
          %v6584 = vmax.f32 %v6520, 1e-37
          %v6585 = vmax.f32 %v6521, 1e-37
          %v6586 = vmax.f32 %v6522, 1e-37
          %v6587 = vmax.f32 %v6523, 1e-37
          %v6588 = vmax.f32 %v6524, 1e-37
          %v6589 = vmax.f32 %v6525, 1e-37
          %v6590 = vmax.f32 %v6526, 1e-37
          %v6591 = vmax.f32 %v6527, 1e-37
          %v6592 = vmax.f32 %v6528, 1e-37
          %v6593 = vmax.f32 %v6529, 1e-37
          %v6594 = vmax.f32 %v6530, 1e-37
          %v6595 = vmax.f32 %v6531, 1e-37
          %v6596 = vmax.f32 %v6532, 1e-37
          %v6597 = vmax.f32 %v6533, 1e-37
          %v6598 = vmax.f32 %v6534, 1e-37
          %v6599 = vmax.f32 %v6535, 1e-37
          %v6600 = vmax.f32 %v6536, 1e-37
          %v6601 = vmax.f32 %v6537, 1e-37
          %v6602 = vmax.f32 %v6538, 1e-37
          %v6603 = vmax.f32 %v6539, 1e-37
          %v6604 = vmax.f32 %v6540, 1e-37
          %v6605 = vmax.f32 %v6541, 1e-37
          %v6606 = vmax.f32 %v6542, 1e-37
          %v6607 = vmax.f32 %v6543, 1e-37
          %v6608 = vmax.f32 %v6544, 1e-37
          %v6609 = vmax.f32 %v6545, 1e-37
          %v6610 = vmax.f32 %v6546, 1e-37
          %v6611 = vmax.f32 %v6547, 1e-37
          %v6612 = vmax.f32 %v6548, 1e-37
          %v6613 = vmax.f32 %v6549, 1e-37
          %v6614 = vmax.f32 %v6550, 1e-37
          %v6615 = vmax.f32 %v6551, 1e-37
          %v6616 = vmax.f32 %v6552, 1e-37
          %v6617 = vmax.f32 %v6553, 1e-37
          %v6618 = vmax.f32 %v6554, 1e-37
          %v6619 = vmax.f32 %v6555, 1e-37
          %v6620 = vmax.f32 %v6556, 1e-37
          %v6621 = vmax.f32 %v6557, 1e-37
          %v6622 = vmax.f32 %v6558, 1e-37
          %v6623 = vmax.f32 %v6559, 1e-37
          %v6624 = vmax.f32 %v6560, 1e-37
          %v6625 = vmax.f32 %v6561, 1e-37
          %v6626 = vmax.f32 %v6562, 1e-37
          %v6627 = vmax.f32 %v6563, 1e-37
          %v6628 = vmax.f32 %v6564, 1e-37
          %v6629 = vmax.f32 %v6565, 1e-37
          %v6630 = vmax.f32 %v6566, 1e-37
          %v6631 = vmax.f32 %v6567, 1e-37
          %v6632 = vmax.f32 %v6568, 1e-37
          %v6633 = vmax.f32 %v6569, 1e-37
          %v6634 = vmax.f32 %v6570, 1e-37
          %v6635 = vmax.f32 %v6571, 1e-37
          %v6636 = vmax.f32 %v6572, 1e-37
          %v6637 = vlog2.pop %v6573
          %v6638 = vmul.f32 %v6637, 0.6931472
          %v6639 = vlog2.pop %v6574
          %v6640 = vmul.f32 %v6639, 0.6931472
          %v6641 = vlog2.pop %v6575
          %v6642 = vmul.f32 %v6641, 0.6931472
          %v6643 = vlog2.pop %v6576
          %v6644 = vmul.f32 %v6643, 0.6931472
          %v6645 = vlog2.pop %v6577
          %v6646 = vmul.f32 %v6645, 0.6931472
          %v6647 = vlog2.pop %v6578
          %v6648 = vmul.f32 %v6647, 0.6931472
          %v6649 = vlog2.pop %v6579
          %v6650 = vmul.f32 %v6649, 0.6931472
          %v6651 = vlog2.pop %v6580
          %v6652 = vmul.f32 %v6651, 0.6931472
          %v6653 = vlog2.pop %v6581
          %v6654 = vmul.f32 %v6653, 0.6931472
          %v6655 = vlog2.pop %v6582
          %v6656 = vmul.f32 %v6655, 0.6931472
          %v6657 = vlog2.pop %v6583
          %v6658 = vmul.f32 %v6657, 0.6931472
          %v6659 = vlog2.pop %v6584
          %v6660 = vmul.f32 %v6659, 0.6931472
          %v6661 = vlog2.pop %v6585
          %v6662 = vmul.f32 %v6661, 0.6931472
          %v6663 = vlog2.pop %v6586
          %v6664 = vmul.f32 %v6663, 0.6931472
          %v6665 = vlog2.pop %v6587
          %v6666 = vmul.f32 %v6665, 0.6931472
          %v6667 = vlog2.pop %v6588
          %v6668 = vmul.f32 %v6667, 0.6931472
          %v6669 = vlog2.pop %v6589
          %v6670 = vmul.f32 %v6669, 0.6931472
          %v6671 = vlog2.pop %v6590
          %v6672 = vmul.f32 %v6671, 0.6931472
          %v6673 = vlog2.pop %v6591
          %v6674 = vmul.f32 %v6673, 0.6931472
          %v6675 = vlog2.pop %v6592
          %v6676 = vmul.f32 %v6675, 0.6931472
          %v6677 = vlog2.pop %v6593
          %v6678 = vmul.f32 %v6677, 0.6931472
          %v6679 = vlog2.pop %v6594
          %v6680 = vmul.f32 %v6679, 0.6931472
          %v6681 = vlog2.pop %v6595
          %v6682 = vmul.f32 %v6681, 0.6931472
          %v6683 = vlog2.pop %v6596
          %v6684 = vmul.f32 %v6683, 0.6931472
          %v6685 = vlog2.pop %v6597
          %v6686 = vmul.f32 %v6685, 0.6931472
          %v6687 = vlog2.pop %v6598
          %v6688 = vmul.f32 %v6687, 0.6931472
          %v6689 = vlog2.pop %v6599
          %v6690 = vmul.f32 %v6689, 0.6931472
          %v6691 = vlog2.pop %v6600
          %v6692 = vmul.f32 %v6691, 0.6931472
          %v6693 = vlog2.pop %v6601
          %v6694 = vmul.f32 %v6693, 0.6931472
          %v6695 = vlog2.pop %v6602
          %v6696 = vmul.f32 %v6695, 0.6931472
          %v6697 = vlog2.pop %v6603
          %v6698 = vmul.f32 %v6697, 0.6931472
          %v6699 = vlog2.pop %v6604
          %v6700 = vmul.f32 %v6699, 0.6931472
          %v6701 = vlog2.pop %v6605
          %v6702 = vmul.f32 %v6701, 0.6931472
          %v6703 = vlog2.pop %v6606
          %v6704 = vmul.f32 %v6703, 0.6931472
          %v6705 = vlog2.pop %v6607
          %v6706 = vmul.f32 %v6705, 0.6931472
          %v6707 = vlog2.pop %v6608
          %v6708 = vmul.f32 %v6707, 0.6931472
          %v6709 = vlog2.pop %v6609
          %v6710 = vmul.f32 %v6709, 0.6931472
          %v6711 = vlog2.pop %v6610
          %v6712 = vmul.f32 %v6711, 0.6931472
          %v6713 = vlog2.pop %v6611
          %v6714 = vmul.f32 %v6713, 0.6931472
          %v6715 = vlog2.pop %v6612
          %v6716 = vmul.f32 %v6715, 0.6931472
          %v6717 = vlog2.pop %v6613
          %v6718 = vmul.f32 %v6717, 0.6931472
          %v6719 = vlog2.pop %v6614
          %v6720 = vmul.f32 %v6719, 0.6931472
          %v6721 = vlog2.pop %v6615
          %v6722 = vmul.f32 %v6721, 0.6931472
          %v6723 = vlog2.pop %v6616
          %v6724 = vmul.f32 %v6723, 0.6931472
          %v6725 = vlog2.pop %v6617
          %v6726 = vmul.f32 %v6725, 0.6931472
          %v6727 = vlog2.pop %v6618
          %v6728 = vmul.f32 %v6727, 0.6931472
          %v6729 = vlog2.pop %v6619
          %v6730 = vmul.f32 %v6729, 0.6931472
          %v6731 = vlog2.pop %v6620
          %v6732 = vmul.f32 %v6731, 0.6931472
          %v6733 = vlog2.pop %v6621
          %v6734 = vmul.f32 %v6733, 0.6931472
          %v6735 = vlog2.pop %v6622
          %v6736 = vmul.f32 %v6735, 0.6931472
          %v6737 = vlog2.pop %v6623
          %v6738 = vmul.f32 %v6737, 0.6931472
          %v6739 = vlog2.pop %v6624
          %v6740 = vmul.f32 %v6739, 0.6931472
          %v6741 = vlog2.pop %v6625
          %v6742 = vmul.f32 %v6741, 0.6931472
          %v6743 = vlog2.pop %v6626
          %v6744 = vmul.f32 %v6743, 0.6931472
          %v6745 = vlog2.pop %v6627
          %v6746 = vmul.f32 %v6745, 0.6931472
          %v6747 = vlog2.pop %v6628
          %v6748 = vmul.f32 %v6747, 0.6931472
          %v6749 = vlog2.pop %v6629
          %v6750 = vmul.f32 %v6749, 0.6931472
          %v6751 = vlog2.pop %v6630
          %v6752 = vmul.f32 %v6751, 0.6931472
          %v6753 = vlog2.pop %v6631
          %v6754 = vmul.f32 %v6753, 0.6931472
          %v6755 = vlog2.pop %v6632
          %v6756 = vmul.f32 %v6755, 0.6931472
          %v6757 = vlog2.pop %v6633
          %v6758 = vmul.f32 %v6757, 0.6931472
          %v6759 = vlog2.pop %v6634
          %v6760 = vmul.f32 %v6759, 0.6931472
          %v6761 = vlog2.pop %v6635
          %v6762 = vmul.f32 %v6761, 0.6931472
          %v6763 = vlog2.pop %v6636
          %v6764 = vmul.f32 %v6763, 0.6931472
          %v6765 = vadd.f32 %v6445, %v6638
          %v6766 = vadd.f32 %v6446, %v6640
          %v6767 = vadd.f32 %v6447, %v6642
          %v6768 = vadd.f32 %v6448, %v6644
          %v6769 = vadd.f32 %v6449, %v6646
          %v6770 = vadd.f32 %v6450, %v6648
          %v6771 = vadd.f32 %v6451, %v6650
          %v6772 = vadd.f32 %v6452, %v6652
          %v6773 = vadd.f32 %v6453, %v6654
          %v6774 = vadd.f32 %v6454, %v6656
          %v6775 = vadd.f32 %v6455, %v6658
          %v6776 = vadd.f32 %v6456, %v6660
          %v6777 = vadd.f32 %v6457, %v6662
          %v6778 = vadd.f32 %v6458, %v6664
          %v6779 = vadd.f32 %v6459, %v6666
          %v6780 = vadd.f32 %v6460, %v6668
          %v6781 = vadd.f32 %v6461, %v6670
          %v6782 = vadd.f32 %v6462, %v6672
          %v6783 = vadd.f32 %v6463, %v6674
          %v6784 = vadd.f32 %v6464, %v6676
          %v6785 = vadd.f32 %v6465, %v6678
          %v6786 = vadd.f32 %v6466, %v6680
          %v6787 = vadd.f32 %v6467, %v6682
          %v6788 = vadd.f32 %v6468, %v6684
          %v6789 = vadd.f32 %v6469, %v6686
          %v6790 = vadd.f32 %v6470, %v6688
          %v6791 = vadd.f32 %v6471, %v6690
          %v6792 = vadd.f32 %v6472, %v6692
          %v6793 = vadd.f32 %v6473, %v6694
          %v6794 = vadd.f32 %v6474, %v6696
          %v6795 = vadd.f32 %v6475, %v6698
          %v6796 = vadd.f32 %v6476, %v6700
          %v6797 = vadd.f32 %v6477, %v6702
          %v6798 = vadd.f32 %v6478, %v6704
          %v6799 = vadd.f32 %v6479, %v6706
          %v6800 = vadd.f32 %v6480, %v6708
          %v6801 = vadd.f32 %v6481, %v6710
          %v6802 = vadd.f32 %v6482, %v6712
          %v6803 = vadd.f32 %v6483, %v6714
          %v6804 = vadd.f32 %v6484, %v6716
          %v6805 = vadd.f32 %v6485, %v6718
          %v6806 = vadd.f32 %v6486, %v6720
          %v6807 = vadd.f32 %v6487, %v6722
          %v6808 = vadd.f32 %v6488, %v6724
          %v6809 = vadd.f32 %v6489, %v6726
          %v6810 = vadd.f32 %v6490, %v6728
          %v6811 = vadd.f32 %v6491, %v6730
          %v6812 = vadd.f32 %v6492, %v6732
          %v6813 = vadd.f32 %v6493, %v6734
          %v6814 = vadd.f32 %v6494, %v6736
          %v6815 = vadd.f32 %v6495, %v6738
          %v6816 = vadd.f32 %v6496, %v6740
          %v6817 = vadd.f32 %v6497, %v6742
          %v6818 = vadd.f32 %v6498, %v6744
          %v6819 = vadd.f32 %v6499, %v6746
          %v6820 = vadd.f32 %v6500, %v6748
          %v6821 = vadd.f32 %v6501, %v6750
          %v6822 = vadd.f32 %v6502, %v6752
          %v6823 = vadd.f32 %v6503, %v6754
          %v6824 = vadd.f32 %v6504, %v6756
          %v6825 = vadd.f32 %v6505, %v6758
          %v6826 = vadd.f32 %v6506, %v6760
          %v6827 = vadd.f32 %v6507, %v6762
          %v6828 = vadd.f32 %v6508, %v6764
          %v6829 = vlaneseq
          %v6830 = vshrl.u32 %v6829, 7
          %v6831 = vadd.s32 %v6830, 8
          %v6832 = vadd.s32 %v6830, 16
          %v6833 = vadd.s32 %v6830, 24
          %v6834 = vadd.s32 %v6830, 32
          %v6835 = vadd.s32 %v6830, 40
          %v6836 = vadd.s32 %v6830, 48
          %v6837 = vadd.s32 %v6830, 56
          %v6838 = vadd.s32 %v6830, 64
          %v6839 = vadd.s32 %v6830, 72
          %v6840 = vadd.s32 %v6830, 80
          %v6841 = vadd.s32 %v6830, 88
          %v6842 = vadd.s32 %v6830, 96
          %v6843 = vadd.s32 %v6830, 104
          %v6844 = vadd.s32 %v6830, 112
          %v6845 = vadd.s32 %v6830, 120
          %v6846 = vadd.s32 %v6830, 128
          %v6847 = vadd.s32 %v6830, 136
          %v6848 = vadd.s32 %v6830, 144
          %v6849 = vadd.s32 %v6830, 152
          %v6850 = vadd.s32 %v6830, 160
          %v6851 = vadd.s32 %v6830, 168
          %v6852 = vadd.s32 %v6830, 176
          %v6853 = vadd.s32 %v6830, 184
          %v6854 = vadd.s32 %v6830, 192
          %v6855 = vadd.s32 %v6830, 200
          %v6856 = vadd.s32 %v6830, 208
          %v6857 = vadd.s32 %v6830, 216
          %v6858 = vadd.s32 %v6830, 224
          %v6859 = vadd.s32 %v6830, 232
          %v6860 = vadd.s32 %v6830, 240
          %v6861 = vadd.s32 %v6830, 248
          %v6862 = vadd.s32 %v6830, 256
          %v6863 = vadd.s32 %v6830, 264
          %v6864 = vadd.s32 %v6830, 272
          %v6865 = vadd.s32 %v6830, 280
          %v6866 = vadd.s32 %v6830, 288
          %v6867 = vadd.s32 %v6830, 296
          %v6868 = vadd.s32 %v6830, 304
          %v6869 = vadd.s32 %v6830, 312
          %v6870 = vadd.s32 %v6830, 320
          %v6871 = vadd.s32 %v6830, 328
          %v6872 = vadd.s32 %v6830, 336
          %v6873 = vadd.s32 %v6830, 344
          %v6874 = vadd.s32 %v6830, 352
          %v6875 = vadd.s32 %v6830, 360
          %v6876 = vadd.s32 %v6830, 368
          %v6877 = vadd.s32 %v6830, 376
          %v6878 = vadd.s32 %v6830, 384
          %v6879 = vadd.s32 %v6830, 392
          %v6880 = vadd.s32 %v6830, 400
          %v6881 = vadd.s32 %v6830, 408
          %v6882 = vadd.s32 %v6830, 416
          %v6883 = vadd.s32 %v6830, 424
          %v6884 = vadd.s32 %v6830, 432
          %v6885 = vadd.s32 %v6830, 440
          %v6886 = vadd.s32 %v6830, 448
          %v6887 = vadd.s32 %v6830, 456
          %v6888 = vadd.s32 %v6830, 464
          %v6889 = vadd.s32 %v6830, 472
          %v6890 = vadd.s32 %v6830, 480
          %v6891 = vadd.s32 %v6830, 488
          %v6892 = vadd.s32 %v6830, 496
          %v6893 = vadd.s32 %v6830, 504
          %v6894 = vstv %s224
          %v6895 = vadd.s32 %v6894, %v6830
          %v6896 = vadd.s32 %v6894, %v6831
          %v6897 = vadd.s32 %v6894, %v6832
          %v6898 = vadd.s32 %v6894, %v6833
          %v6899 = vadd.s32 %v6894, %v6834
          %v6900 = vadd.s32 %v6894, %v6835
          %v6901 = vadd.s32 %v6894, %v6836
          %v6902 = vadd.s32 %v6894, %v6837
          %v6903 = vadd.s32 %v6894, %v6838
          %v6904 = vadd.s32 %v6894, %v6839
          %v6905 = vadd.s32 %v6894, %v6840
          %v6906 = vadd.s32 %v6894, %v6841
          %v6907 = vadd.s32 %v6894, %v6842
          %v6908 = vadd.s32 %v6894, %v6843
          %v6909 = vadd.s32 %v6894, %v6844
          %v6910 = vadd.s32 %v6894, %v6845
          %v6911 = vadd.s32 %v6894, %v6846
          %v6912 = vadd.s32 %v6894, %v6847
          %v6913 = vadd.s32 %v6894, %v6848
          %v6914 = vadd.s32 %v6894, %v6849
          %v6915 = vadd.s32 %v6894, %v6850
          %v6916 = vadd.s32 %v6894, %v6851
          %v6917 = vadd.s32 %v6894, %v6852
          %v6918 = vadd.s32 %v6894, %v6853
          %v6919 = vadd.s32 %v6894, %v6854
          %v6920 = vadd.s32 %v6894, %v6855
          %v6921 = vadd.s32 %v6894, %v6856
          %v6922 = vadd.s32 %v6894, %v6857
          %v6923 = vadd.s32 %v6894, %v6858
          %v6924 = vadd.s32 %v6894, %v6859
          %v6925 = vadd.s32 %v6894, %v6860
          %v6926 = vadd.s32 %v6894, %v6861
          %v6927 = vadd.s32 %v6894, %v6862
          %v6928 = vadd.s32 %v6894, %v6863
          %v6929 = vadd.s32 %v6894, %v6864
          %v6930 = vadd.s32 %v6894, %v6865
          %v6931 = vadd.s32 %v6894, %v6866
          %v6932 = vadd.s32 %v6894, %v6867
          %v6933 = vadd.s32 %v6894, %v6868
          %v6934 = vadd.s32 %v6894, %v6869
          %v6935 = vadd.s32 %v6894, %v6870
          %v6936 = vadd.s32 %v6894, %v6871
          %v6937 = vadd.s32 %v6894, %v6872
          %v6938 = vadd.s32 %v6894, %v6873
          %v6939 = vadd.s32 %v6894, %v6874
          %v6940 = vadd.s32 %v6894, %v6875
          %v6941 = vadd.s32 %v6894, %v6876
          %v6942 = vadd.s32 %v6894, %v6877
          %v6943 = vadd.s32 %v6894, %v6878
          %v6944 = vadd.s32 %v6894, %v6879
          %v6945 = vadd.s32 %v6894, %v6880
          %v6946 = vadd.s32 %v6894, %v6881
          %v6947 = vadd.s32 %v6894, %v6882
          %v6948 = vadd.s32 %v6894, %v6883
          %v6949 = vadd.s32 %v6894, %v6884
          %v6950 = vadd.s32 %v6894, %v6885
          %v6951 = vadd.s32 %v6894, %v6886
          %v6952 = vadd.s32 %v6894, %v6887
          %v6953 = vadd.s32 %v6894, %v6888
          %v6954 = vadd.s32 %v6894, %v6889
          %v6955 = vadd.s32 %v6894, %v6890
          %v6956 = vadd.s32 %v6894, %v6891
          %v6957 = vadd.s32 %v6894, %v6892
          %v6958 = vadd.s32 %v6894, %v6893
          %v6959 = vstv %s223
          %vm6960 = vcmp.lt.s32.totalorder %v6895, %v6959
          %vm6961 = vcmp.lt.s32.totalorder %v6896, %v6959
          %vm6962 = vcmp.lt.s32.totalorder %v6897, %v6959
          %vm6963 = vcmp.lt.s32.totalorder %v6898, %v6959
          %vm6964 = vcmp.lt.s32.totalorder %v6899, %v6959
          %vm6965 = vcmp.lt.s32.totalorder %v6900, %v6959
          %vm6966 = vcmp.lt.s32.totalorder %v6901, %v6959
          %vm6967 = vcmp.lt.s32.totalorder %v6902, %v6959
          %vm6968 = vcmp.lt.s32.totalorder %v6903, %v6959
          %vm6969 = vcmp.lt.s32.totalorder %v6904, %v6959
          %vm6970 = vcmp.lt.s32.totalorder %v6905, %v6959
          %vm6971 = vcmp.lt.s32.totalorder %v6906, %v6959
          %vm6972 = vcmp.lt.s32.totalorder %v6907, %v6959
          %vm6973 = vcmp.lt.s32.totalorder %v6908, %v6959
          %vm6974 = vcmp.lt.s32.totalorder %v6909, %v6959
          %vm6975 = vcmp.lt.s32.totalorder %v6910, %v6959
          %vm6976 = vcmp.lt.s32.totalorder %v6911, %v6959
          %vm6977 = vcmp.lt.s32.totalorder %v6912, %v6959
          %vm6978 = vcmp.lt.s32.totalorder %v6913, %v6959
          %vm6979 = vcmp.lt.s32.totalorder %v6914, %v6959
          %vm6980 = vcmp.lt.s32.totalorder %v6915, %v6959
          %vm6981 = vcmp.lt.s32.totalorder %v6916, %v6959
          %vm6982 = vcmp.lt.s32.totalorder %v6917, %v6959
          %vm6983 = vcmp.lt.s32.totalorder %v6918, %v6959
          %vm6984 = vcmp.lt.s32.totalorder %v6919, %v6959
          %vm6985 = vcmp.lt.s32.totalorder %v6920, %v6959
          %vm6986 = vcmp.lt.s32.totalorder %v6921, %v6959
          %vm6987 = vcmp.lt.s32.totalorder %v6922, %v6959
          %vm6988 = vcmp.lt.s32.totalorder %v6923, %v6959
          %vm6989 = vcmp.lt.s32.totalorder %v6924, %v6959
          %vm6990 = vcmp.lt.s32.totalorder %v6925, %v6959
          %vm6991 = vcmp.lt.s32.totalorder %v6926, %v6959
          %vm6992 = vcmp.lt.s32.totalorder %v6927, %v6959
          %vm6993 = vcmp.lt.s32.totalorder %v6928, %v6959
          %vm6994 = vcmp.lt.s32.totalorder %v6929, %v6959
          %vm6995 = vcmp.lt.s32.totalorder %v6930, %v6959
          %vm6996 = vcmp.lt.s32.totalorder %v6931, %v6959
          %vm6997 = vcmp.lt.s32.totalorder %v6932, %v6959
          %vm6998 = vcmp.lt.s32.totalorder %v6933, %v6959
          %vm6999 = vcmp.lt.s32.totalorder %v6934, %v6959
          %vm7000 = vcmp.lt.s32.totalorder %v6935, %v6959
          %vm7001 = vcmp.lt.s32.totalorder %v6936, %v6959
          %vm7002 = vcmp.lt.s32.totalorder %v6937, %v6959
          %vm7003 = vcmp.lt.s32.totalorder %v6938, %v6959
          %vm7004 = vcmp.lt.s32.totalorder %v6939, %v6959
          %vm7005 = vcmp.lt.s32.totalorder %v6940, %v6959
          %vm7006 = vcmp.lt.s32.totalorder %v6941, %v6959
          %vm7007 = vcmp.lt.s32.totalorder %v6942, %v6959
          %vm7008 = vcmp.lt.s32.totalorder %v6943, %v6959
          %vm7009 = vcmp.lt.s32.totalorder %v6944, %v6959
          %vm7010 = vcmp.lt.s32.totalorder %v6945, %v6959
          %vm7011 = vcmp.lt.s32.totalorder %v6946, %v6959
          %vm7012 = vcmp.lt.s32.totalorder %v6947, %v6959
          %vm7013 = vcmp.lt.s32.totalorder %v6948, %v6959
          %vm7014 = vcmp.lt.s32.totalorder %v6949, %v6959
          %vm7015 = vcmp.lt.s32.totalorder %v6950, %v6959
          %vm7016 = vcmp.lt.s32.totalorder %v6951, %v6959
          %vm7017 = vcmp.lt.s32.totalorder %v6952, %v6959
          %vm7018 = vcmp.lt.s32.totalorder %v6953, %v6959
          %vm7019 = vcmp.lt.s32.totalorder %v6954, %v6959
          %vm7020 = vcmp.lt.s32.totalorder %v6955, %v6959
          %vm7021 = vcmp.lt.s32.totalorder %v6956, %v6959
          %vm7022 = vcmp.lt.s32.totalorder %v6957, %v6959
          %vm7023 = vcmp.lt.s32.totalorder %v6958, %v6959
          %v7024 = vsel %vm6960, %v6765, 0.0
          %v7025 = vsel %vm6961, %v6766, 0.0
          %v7026 = vsel %vm6962, %v6767, 0.0
          %v7027 = vsel %vm6963, %v6768, 0.0
          %v7028 = vsel %vm6964, %v6769, 0.0
          %v7029 = vsel %vm6965, %v6770, 0.0
          %v7030 = vsel %vm6966, %v6771, 0.0
          %v7031 = vsel %vm6967, %v6772, 0.0
          %v7032 = vsel %vm6968, %v6773, 0.0
          %v7033 = vsel %vm6969, %v6774, 0.0
          %v7034 = vsel %vm6970, %v6775, 0.0
          %v7035 = vsel %vm6971, %v6776, 0.0
          %v7036 = vsel %vm6972, %v6777, 0.0
          %v7037 = vsel %vm6973, %v6778, 0.0
          %v7038 = vsel %vm6974, %v6779, 0.0
          %v7039 = vsel %vm6975, %v6780, 0.0
          %v7040 = vsel %vm6976, %v6781, 0.0
          %v7041 = vsel %vm6977, %v6782, 0.0
          %v7042 = vsel %vm6978, %v6783, 0.0
          %v7043 = vsel %vm6979, %v6784, 0.0
          %v7044 = vsel %vm6980, %v6785, 0.0
          %v7045 = vsel %vm6981, %v6786, 0.0
          %v7046 = vsel %vm6982, %v6787, 0.0
          %v7047 = vsel %vm6983, %v6788, 0.0
          %v7048 = vsel %vm6984, %v6789, 0.0
          %v7049 = vsel %vm6985, %v6790, 0.0
          %v7050 = vsel %vm6986, %v6791, 0.0
          %v7051 = vsel %vm6987, %v6792, 0.0
          %v7052 = vsel %vm6988, %v6793, 0.0
          %v7053 = vsel %vm6989, %v6794, 0.0
          %v7054 = vsel %vm6990, %v6795, 0.0
          %v7055 = vsel %vm6991, %v6796, 0.0
          %v7056 = vsel %vm6992, %v6797, 0.0
          %v7057 = vsel %vm6993, %v6798, 0.0
          %v7058 = vsel %vm6994, %v6799, 0.0
          %v7059 = vsel %vm6995, %v6800, 0.0
          %v7060 = vsel %vm6996, %v6801, 0.0
          %v7061 = vsel %vm6997, %v6802, 0.0
          %v7062 = vsel %vm6998, %v6803, 0.0
          %v7063 = vsel %vm6999, %v6804, 0.0
          %v7064 = vsel %vm7000, %v6805, 0.0
          %v7065 = vsel %vm7001, %v6806, 0.0
          %v7066 = vsel %vm7002, %v6807, 0.0
          %v7067 = vsel %vm7003, %v6808, 0.0
          %v7068 = vsel %vm7004, %v6809, 0.0
          %v7069 = vsel %vm7005, %v6810, 0.0
          %v7070 = vsel %vm7006, %v6811, 0.0
          %v7071 = vsel %vm7007, %v6812, 0.0
          %v7072 = vsel %vm7008, %v6813, 0.0
          %v7073 = vsel %vm7009, %v6814, 0.0
          %v7074 = vsel %vm7010, %v6815, 0.0
          %v7075 = vsel %vm7011, %v6816, 0.0
          %v7076 = vsel %vm7012, %v6817, 0.0
          %v7077 = vsel %vm7013, %v6818, 0.0
          %v7078 = vsel %vm7014, %v6819, 0.0
          %v7079 = vsel %vm7015, %v6820, 0.0
          %v7080 = vsel %vm7016, %v6821, 0.0
          %v7081 = vsel %vm7017, %v6822, 0.0
          %v7082 = vsel %vm7018, %v6823, 0.0
          %v7083 = vsel %vm7019, %v6824, 0.0
          %v7084 = vsel %vm7020, %v6825, 0.0
          %v7085 = vsel %vm7021, %v6826, 0.0
          %v7086 = vsel %vm7022, %v6827, 0.0
          %v7087 = vsel %vm7023, %v6828, 0.0
          %vm7088 = vcmask 7168
          %v7089 = vsel %vm7088, %v7024, 0.0
          %v7090 = vsel %vm7088, %v7025, 0.0
          %v7091 = vadd.f32 %v7089, %v7090
          %v7092 = vsel %vm7088, %v7026, 0.0
          %v7093 = vadd.f32 %v7091, %v7092
          %v7094 = vsel %vm7088, %v7027, 0.0
          %v7095 = vadd.f32 %v7093, %v7094
          %v7096 = vsel %vm7088, %v7028, 0.0
          %v7097 = vadd.f32 %v7095, %v7096
          %v7098 = vsel %vm7088, %v7029, 0.0
          %v7099 = vadd.f32 %v7097, %v7098
          %v7100 = vsel %vm7088, %v7030, 0.0
          %v7101 = vadd.f32 %v7099, %v7100
          %v7102 = vsel %vm7088, %v7031, 0.0
          %v7103 = vadd.f32 %v7101, %v7102
          %v7104 = vsel %vm7088, %v7032, 0.0
          %v7105 = vadd.f32 %v7103, %v7104
          %v7106 = vsel %vm7088, %v7033, 0.0
          %v7107 = vadd.f32 %v7105, %v7106
          %v7108 = vsel %vm7088, %v7034, 0.0
          %v7109 = vadd.f32 %v7107, %v7108
          %v7110 = vsel %vm7088, %v7035, 0.0
          %v7111 = vadd.f32 %v7109, %v7110
          %v7112 = vsel %vm7088, %v7036, 0.0
          %v7113 = vadd.f32 %v7111, %v7112
          %v7114 = vsel %vm7088, %v7037, 0.0
          %v7115 = vadd.f32 %v7113, %v7114
          %v7116 = vsel %vm7088, %v7038, 0.0
          %v7117 = vadd.f32 %v7115, %v7116
          %v7118 = vsel %vm7088, %v7039, 0.0
          %v7119 = vadd.f32 %v7117, %v7118
          %v7120 = vsel %vm7088, %v7040, 0.0
          %v7121 = vadd.f32 %v7119, %v7120
          %v7122 = vsel %vm7088, %v7041, 0.0
          %v7123 = vadd.f32 %v7121, %v7122
          %v7124 = vsel %vm7088, %v7042, 0.0
          %v7125 = vadd.f32 %v7123, %v7124
          %v7126 = vsel %vm7088, %v7043, 0.0
          %v7127 = vadd.f32 %v7125, %v7126
          %v7128 = vsel %vm7088, %v7044, 0.0
          %v7129 = vadd.f32 %v7127, %v7128
          %v7130 = vsel %vm7088, %v7045, 0.0
          %v7131 = vadd.f32 %v7129, %v7130
          %v7132 = vsel %vm7088, %v7046, 0.0
          %v7133 = vadd.f32 %v7131, %v7132
          %v7134 = vsel %vm7088, %v7047, 0.0
          %v7135 = vadd.f32 %v7133, %v7134
          %v7136 = vsel %vm7088, %v7048, 0.0
          %v7137 = vadd.f32 %v7135, %v7136
          %v7138 = vsel %vm7088, %v7049, 0.0
          %v7139 = vadd.f32 %v7137, %v7138
          %v7140 = vsel %vm7088, %v7050, 0.0
          %v7141 = vadd.f32 %v7139, %v7140
          %v7142 = vsel %vm7088, %v7051, 0.0
          %v7143 = vadd.f32 %v7141, %v7142
          %v7144 = vsel %vm7088, %v7052, 0.0
          %v7145 = vadd.f32 %v7143, %v7144
          %v7146 = vsel %vm7088, %v7053, 0.0
          %v7147 = vadd.f32 %v7145, %v7146
          %v7148 = vsel %vm7088, %v7054, 0.0
          %v7149 = vadd.f32 %v7147, %v7148
          %v7150 = vsel %vm7088, %v7055, 0.0
          %v7151 = vadd.f32 %v7149, %v7150
          %v7152 = vsel %vm7088, %v7056, 0.0
          %v7153 = vadd.f32 %v7151, %v7152
          %v7154 = vsel %vm7088, %v7057, 0.0
          %v7155 = vadd.f32 %v7153, %v7154
          %v7156 = vsel %vm7088, %v7058, 0.0
          %v7157 = vadd.f32 %v7155, %v7156
          %v7158 = vsel %vm7088, %v7059, 0.0
          %v7159 = vadd.f32 %v7157, %v7158
          %v7160 = vsel %vm7088, %v7060, 0.0
          %v7161 = vadd.f32 %v7159, %v7160
          %v7162 = vsel %vm7088, %v7061, 0.0
          %v7163 = vadd.f32 %v7161, %v7162
          %v7164 = vsel %vm7088, %v7062, 0.0
          %v7165 = vadd.f32 %v7163, %v7164
          %v7166 = vsel %vm7088, %v7063, 0.0
          %v7167 = vadd.f32 %v7165, %v7166
          %v7168 = vsel %vm7088, %v7064, 0.0
          %v7169 = vadd.f32 %v7167, %v7168
          %v7170 = vsel %vm7088, %v7065, 0.0
          %v7171 = vadd.f32 %v7169, %v7170
          %v7172 = vsel %vm7088, %v7066, 0.0
          %v7173 = vadd.f32 %v7171, %v7172
          %v7174 = vsel %vm7088, %v7067, 0.0
          %v7175 = vadd.f32 %v7173, %v7174
          %v7176 = vsel %vm7088, %v7068, 0.0
          %v7177 = vadd.f32 %v7175, %v7176
          %v7178 = vsel %vm7088, %v7069, 0.0
          %v7179 = vadd.f32 %v7177, %v7178
          %v7180 = vsel %vm7088, %v7070, 0.0
          %v7181 = vadd.f32 %v7179, %v7180
          %v7182 = vsel %vm7088, %v7071, 0.0
          %v7183 = vadd.f32 %v7181, %v7182
          %v7184 = vsel %vm7088, %v7072, 0.0
          %v7185 = vadd.f32 %v7183, %v7184
          %v7186 = vsel %vm7088, %v7073, 0.0
          %v7187 = vadd.f32 %v7185, %v7186
          %v7188 = vsel %vm7088, %v7074, 0.0
          %v7189 = vadd.f32 %v7187, %v7188
          %v7190 = vsel %vm7088, %v7075, 0.0
          %v7191 = vadd.f32 %v7189, %v7190
          %v7192 = vsel %vm7088, %v7076, 0.0
          %v7193 = vadd.f32 %v7191, %v7192
          %v7194 = vsel %vm7088, %v7077, 0.0
          %v7195 = vadd.f32 %v7193, %v7194
          %v7196 = vsel %vm7088, %v7078, 0.0
          %v7197 = vadd.f32 %v7195, %v7196
          %v7198 = vsel %vm7088, %v7079, 0.0
          %v7199 = vadd.f32 %v7197, %v7198
          %v7200 = vsel %vm7088, %v7080, 0.0
          %v7201 = vadd.f32 %v7199, %v7200
          %v7202 = vsel %vm7088, %v7081, 0.0
          %v7203 = vadd.f32 %v7201, %v7202
          %v7204 = vsel %vm7088, %v7082, 0.0
          %v7205 = vadd.f32 %v7203, %v7204
          %v7206 = vsel %vm7088, %v7083, 0.0
          %v7207 = vadd.f32 %v7205, %v7206
          %v7208 = vsel %vm7088, %v7084, 0.0
          %v7209 = vadd.f32 %v7207, %v7208
          %v7210 = vsel %vm7088, %v7085, 0.0
          %v7211 = vadd.f32 %v7209, %v7210
          %v7212 = vsel %vm7088, %v7086, 0.0
          %v7213 = vadd.f32 %v7211, %v7212
          %v7214 = vsel %vm7088, %v7087, 0.0
          %v7215 = vadd.f32 %v7213, %v7214
          %7216 = vadd.xlane.f32.xlu0 %v7215
          %v7217 = vpop.xlane.xlu0 %7216
          %v7218 = vrot.slane %v7217, 4
          %v7219 = vadd.f32 %v7217, %v7218
          %v7220 = vrot.slane %v7219, 2
          %v7221 = vadd.f32 %v7219, %v7220
          %v7222 = vrot.slane %v7221, 1
          %v7223 = vadd.f32 %v7221, %v7222
          %s7224 = vtos %v7223
          %v7225 = vstv %s7224
          %7226 = vst [vmem:[%s201] sm:$0xff] %v7225
        $region48: #{tpu_custom_call.1} parent=27 // pred_fallthru
          _
        %s7227 = sand.u32 %s108, 1
        %s7228 = scalar_lea.sflag [#allocation7], %s7227
        %s7229 = sand.u32 %s108, 1
        %s7230 = smul.addr %s7229, 8
        %s7231 = scalar_lea.vmem [#allocation6], %s7230
        // Predicated region
        $region49: #{tpu_custom_call.1} parent=27 // pred_check
          %p7232 = pneg %p118
        $region50: #{tpu_custom_call.1} parent=27 // pred_check_branch
          %7234 = sbr.rel (%p7232) target = $region52
        $region51: #{tpu_custom_call.1} parent=27 // pred_region
          %s7236 = ssub.s32 128, 128
          %7237 = vsyncadd %s7228, %s7236
          %s7238 = sadd.s32 %s29, %s28
          %s7239 = smul.addr %s7238, 128
          %s7240 = scalar_lea.hbm %s3, %s7239
          %s7242 = sshll.u32 %s7231, 4
          %s7243 = int_to_ptr.vmem [resolvable:$true] %s7242
          %7245 = dma.vmem_to_hbm [thread:$0]  %s7243, 128, %s7240, %s7228
        $region52: #{tpu_custom_call.1} parent=27 // pred_fallthru
          _
      $region28: #{tpu_custom_call.1} parent=5 // pred_fallthru
        _
      %p7246 = scmp.le.s32.totalorder 2, %s18
      // Predicated region
      $region53: #{tpu_custom_call.1} parent=5 // pred_check
        %p7247 = pneg %p7246
      $region54: #{tpu_custom_call.1} parent=5 // pred_check_branch
        %7249 = sbr.rel (%p7247) target = $region56
      $region55: #{tpu_custom_call.1} parent=5 // pred_region
        %s7250 = ssub.s32 %s18, 2
        // Predicated region
        $region57: #{tpu_custom_call.1} parent=55 // pred_check
          %p7251 = pneg %p124
        $region58: #{tpu_custom_call.1} parent=55 // pred_check_branch
          %7253 = sbr.rel (%p7251) target = $region60
        $region59: #{tpu_custom_call.1} parent=55 // pred_region
          %s7254 = sand.u32 %s109, 1
          %s7255 = scalar_lea.sflag [#allocation7], %s7254
          %s7256 = sand.u32 %s109, 1
          %s7257 = smul.addr %s7256, 8
          %s7258 = scalar_lea.vmem [#allocation6], %s7257
          %7259 = dma.done %s7255, 128
        $region60: #{tpu_custom_call.1} parent=55 // pred_fallthru
          _
      $region56: #{tpu_custom_call.1} parent=5 // pred_fallthru
        _
    $region6: #{tpu_custom_call.1} parent=1 // loop_footer
      %s22 = sadd.s32 1, %s18
    $region7: #{tpu_custom_call.1} parent=1 // loop_footer_branch
      %17 = sbr.rel target = $region3
    $region8: #{tpu_custom_call.1} parent=1 // loop_exit
      _
    %7260 = vsyncpa [#allocation7], 1
    %s7261 = scalar_lea.sflag [#allocation7], 1
    %7262 = vsyncpa %s7261, 1

</llo_original>
